<compile_context>
chip_gen: v7x
topology: tpu7x:2x2x1
jax: 0.10.0
libtpu: 0.0.40
codegen_flags: <defaults>
</compile_context>

<pallas_src>
import math

import numpy as np
import jax
import jax.numpy as jnp
from jax import lax
from jax.experimental import pallas as pl
from jax.experimental.pallas import tpu as pltpu

# ----------------- hyper-parameters (small but forward-consistent) ----------------
VOCAB_SIZE = 50            # module builds vocab_size + 1 embedding rows
GLOVE_DIM = 300            # fixed in __init__
IMG_DIM = 64
HIST_DIM = 32              # d_model
LAYER_NUM = 2
HEADS = 8                  # Encoder default
D_K = HIST_DIM // HEADS
D_FF = 1024                # FeedForward default
ATTR_NUM = 10
EPS = 1e-6

B = 2                      # batch
L_TEXT = 8                 # text tokens
N_ATTR = 4                 # attributes per example
SEQ = 1 + L_TEXT + N_ATTR + 1      # [sp] + text + attr + img = 14
SEQ_ALL = B * SEQ                   # 28  (batch-flattened sequence)
QPAD = 32                           # per-head key stride (multiple of 8 >= SEQ_ALL)
QROWS = HEADS * QPAD                # 256 (sublane-stacked head rows / score lanes)

SQRT_H = math.sqrt(float(HIST_DIM))
INV_SQRT_DK = 1.0 / math.sqrt(float(D_K))


# =============================== host-side constants ===============================
def _build_np_constants():
    """All data-independent operands, built once at import time with numpy."""
    s_text = np.zeros((SEQ_ALL, B * L_TEXT), np.float32)
    s_attr = np.zeros((SEQ_ALL, B * N_ATTR), np.float32)
    s_img = np.zeros((SEQ_ALL, B), np.float32)
    sp_rows = np.zeros((SEQ_ALL, 1), np.float32)
    for b in range(B):
        base = b * SEQ
        sp_rows[base, 0] = 1.0
        for t in range(L_TEXT):
            s_text[base + 1 + t, b * L_TEXT + t] = SQRT_H      # sqrt(d_model) folded in
        for a in range(N_ATTR):
            s_attr[base + 1 + L_TEXT + a, b * N_ATTR + a] = SQRT_H
        s_img[base + SEQ - 1, b] = SQRT_H

    # rep stacks the 28 flattened key/value rows into each head's 32-row block;
    # qmask keeps only that head's d_k lanes; sega/segb implement the
    # per-(query, head) softmax segment-sum + broadcast as two tiny matmuls.
    rep = np.zeros((QROWS, SEQ_ALL), np.float32)
    qmask = np.zeros((QROWS, HIST_DIM), np.float32)
    sega = np.zeros((QROWS, HEADS), np.float32)
    segb = np.zeros((HEADS, QROWS), np.float32)
    for h in range(HEADS):
        for j in range(QPAD):
            r = h * QPAD + j
            if j < SEQ_ALL:
                rep[r, j] = 1.0
            qmask[r, h * D_K:(h + 1) * D_K] = 1.0
            sega[r, h] = 1.0
            segb[h, r] = 1.0

    # additive score bias: 0 inside the same example's keys, -1e9 for
    # cross-example keys and for the 4 padding slots of every head block.
    bias = np.full((SEQ_ALL, QROWS), -1e9, np.float32)
    for i in range(SEQ_ALL):
        b = i // SEQ
        for h in range(HEADS):
            for j in range(SEQ):
                bias[i, h * QPAD + b * SEQ + j] = 0.0

    msel = np.zeros((B, SEQ_ALL), np.float32)
    for b in range(B):
        msel[b, b * SEQ:(b + 1) * SEQ] = 1.0 / SEQ

    return dict(s_text=s_text, s_attr=s_attr, s_img=s_img, sp_rows=sp_rows,
                rep=rep, qmask=qmask, sega=sega, segb=segb, bias=bias, msel=msel)


_NPC = _build_np_constants()


def _norm_k(x, alpha, bias):
    """PyTorch `Norm` (UNBIASED std) inside the kernel; single rsqrt on the EUP."""
    d = x.shape[-1]
    mean = jnp.mean(x, axis=-1, keepdims=True)
    xc = x - mean
    var = jnp.sum(xc * xc, axis=-1, keepdims=True) * (1.0 / (d - 1))
    # eps placement rsqrt(var + eps) vs 1/(sqrt(var)+eps): negligible here.
    return alpha * xc * lax.rsqrt(var + EPS) + bias


def _norm_ref(x, alpha, bias):
    """Pure-JAX reference Norm (exact PyTorch formula)."""
    d = x.shape[-1]
    mean = jnp.mean(x, axis=-1, keepdims=True)
    xc = x - mean
    var = jnp.sum(xc * xc, axis=-1, keepdims=True) / (d - 1)
    return alpha * xc / (jnp.sqrt(var) + EPS) + bias


# =============================== fused Pallas kernel ===============================
def fused_kernel(text_g_ref, image_ref, attr_raw_ref, base_ref,
                 s_text_ref, s_attr_ref, s_img_ref,
                 rep_ref, qmask_ref, sega_ref, segb_ref, bias_ref, msel_ref,
                 Wt_ref, bt_ref, tn_a_ref, tn_b_ref,
                 Wi_ref, in_a_ref, in_b_ref,
                 an_a_ref, an_b_ref,
                 ln1_a_ref, ln1_b_ref, ln2_a_ref, ln2_b_ref,
                 Wqkv_ref, bqkv_ref, Wo_ref, bo_ref,
                 W1_ref, b1_ref, W2_ref, b2_ref,
                 fn_a_ref, fn_b_ref, Wout_ref, bout_ref,
                 out_ref):
    f32 = jnp.float32

    # ---- embedding projections + Norms (sp token row pre-baked into base_ref) ----
    text_n = _norm_k(jnp.dot(text_g_ref[...], Wt_ref[...],
                             preferred_element_type=f32) + bt_ref[...],
                     tn_a_ref[...], tn_b_ref[...])                  # (B*L_TEXT, H)
    attr_n = _norm_k(attr_raw_ref[...], an_a_ref[...], an_b_ref[...])   # (B*N_ATTR, H)
    img_n = _norm_k(jnp.dot(image_ref[...], Wi_ref[...],
                            preferred_element_type=f32),
                    in_a_ref[...], in_b_ref[...])                   # (B, H)

    # ---- assemble x = sqrt(H)*full_input + pe via scatter matmuls (no scratch) ----
    x = (base_ref[...]
         + jnp.dot(s_text_ref[...], text_n, preferred_element_type=f32)
         + jnp.dot(s_attr_ref[...], attr_n, preferred_element_type=f32)
         + jnp.dot(s_img_ref[...], img_n, preferred_element_type=f32))     # (28, 32)

    rep = rep_ref[...]
    qmask = qmask_ref[...]
    sega = sega_ref[...]
    segb = segb_ref[...]
    bias = bias_ref[...]

    for l in range(LAYER_NUM):              # static unroll
        # ---- pre-norm + fused QKV projection (1/sqrt(d_k) folded into Wq/bq) ----
        x2 = _norm_k(x, ln1_a_ref[l:l + 1, :], ln1_b_ref[l:l + 1, :])
        qkv = jnp.dot(x2, Wqkv_ref[l],
                      preferred_element_type=f32) + bqkv_ref[l:l + 1, :]   # (28, 96)
        q = qkv[:, :HIST_DIM]
        k = qkv[:, HIST_DIM:2 * HIST_DIM]
        v = qkv[:, 2 * HIST_DIM:]

        # ---- head-stack K and V on sublanes (MXU replicate + lane mask) ----
        ks = jnp.dot(rep, k, preferred_element_type=f32) * qmask    # (256, 32)
        vs = jnp.dot(rep, v, preferred_element_type=f32) * qmask    # (256, 32)

        # ---- lane-dense scores: lane r = head*32 + key, 2 full 128-lane tiles ----
        s = lax.dot_general(q, ks, (((1,), (1,)), ((), ())),
                            preferred_element_type=f32) + bias       # (28, 256)
        # per-query-row max (over all heads/keys) is an exact softmax stabilizer
        s = s - jnp.max(s, axis=-1, keepdims=True)
        e = jnp.exp(s)
        # per-(query, head) denominators: segment-sum + broadcast on the MXU,
        # reciprocal on the EUP.
        denom_inv = jnp.dot(
            pl.reciprocal(jnp.dot(e, sega, preferred_element_type=f32), approx=True),
            segb, preferred_element_type=f32)                        # (28, 256)
        p = e * denom_inv

        # ---- one P @ V (heads already on the right lanes via vs) ----
        attn = jnp.dot(p, vs, preferred_element_type=f32)            # (28, 32)
        x = x + jnp.dot(attn, Wo_ref[l],
                        preferred_element_type=f32) + bo_ref[l:l + 1, :]

        # ---- pre-norm + feed-forward (bf16 weights, f32 accumulate) ----
        x2 = _norm_k(x, ln2_a_ref[l:l + 1, :], ln2_b_ref[l:l + 1, :])
        h1 = jnp.maximum(
            jnp.dot(x2.astype(jnp.bfloat16), W1_ref[l],
                    preferred_element_type=f32) + b1_ref[l:l + 1, :], 0.0)
        x = x + jnp.dot(h1.astype(jnp.bfloat16), W2_ref[l],
                        preferred_element_type=f32) + b2_ref[l:l + 1, :]

    # ---- final norm, per-example mean (selection matmul), relu, out_linear ----
    x = _norm_k(x, fn_a_ref[...], fn_b_ref[...])
    m = jnp.dot(msel_ref[...], x, preferred_element_type=f32)        # (B, H)
    out_ref[...] = jnp.dot(jnp.maximum(m, 0.0), Wout_ref[...],
                           preferred_element_type=f32) + bout_ref[...]


# =============================== wrapper ===========================================
def _full_spec(arr):
    nd = arr.ndim
    return pl.BlockSpec(arr.shape, lambda i, _nd=nd: (0,) * _nd)


def retriever_forward(params, text, image, attribute):
    # plain-JAX glue: embedding-table gathers + one-time weight packing
    text_g = params["word_emb"][text].reshape(B * L_TEXT, GLOVE_DIM)
    attr_raw = params["attr_emb"][attribute].reshape(B * N_ATTR, HIST_DIM)

    # base = tiled positional encoding + sqrt(H) * sp-token rows (Norm(0) == tn_b)
    base = jnp.tile(params["pe"], (B, 1)) + \
        SQRT_H * jnp.asarray(_NPC["sp_rows"]) * params["tn_b"]

    # fuse Q/K/V weights; fold 1/sqrt(d_k) into the Q projection (zero kernel cost)
    Wqkv = jnp.concatenate([params["Wq"] * INV_SQRT_DK, params["Wk"], params["Wv"]],
                           axis=-1)
    bqkv = jnp.concatenate([params["bq"] * INV_SQRT_DK, params["bk"], params["bv"]],
                           axis=-1)

    # bf16 FF weights (f32 accumulate in-kernel): halves the dominant weight DMA
    W1 = params["W1"].astype(jnp.bfloat16)
    W2 = params["W2"].astype(jnp.bfloat16)

    args = (text_g, image, attr_raw, base,
            jnp.asarray(_NPC["s_text"]), jnp.asarray(_NPC["s_attr"]),
            jnp.asarray(_NPC["s_img"]),
            jnp.asarray(_NPC["rep"]), jnp.asarray(_NPC["qmask"]),
            jnp.asarray(_NPC["sega"]), jnp.asarray(_NPC["segb"]),
            jnp.asarray(_NPC["bias"]), jnp.asarray(_NPC["msel"]),
            params["Wt"], params["bt"], params["tn_a"], params["tn_b"],
            params["Wi"], params["in_a"], params["in_b"],
            params["an_a"], params["an_b"],
            params["ln1_a"], params["ln1_b"], params["ln2_a"], params["ln2_b"],
            Wqkv, bqkv, params["Wo"], params["bo"],
            W1, params["b1"], W2, params["b2"],
            params["fn_a"], params["fn_b"], params["Wout"], params["bout"])

    # TODO(synk): on v7x use grid=(B,) with dimension_semantics=("parallel",) and
    # per-example BlockSpecs to occupy both TensorCores; grid=(1,) is right for
    # the single-core v5e/v6e.
    return pl.pallas_call(
        fused_kernel,
        grid=(1,),
        in_specs=[_full_spec(a) for a in args],
        out_specs=pl.BlockSpec((B, HIST_DIM), lambda i: (0, 0)),
        out_shape=jax.ShapeDtypeStruct((B, HIST_DIM), jnp.float32),
        compiler_params=pltpu.CompilerParams(dimension_semantics=("arbitrary",)),
    )(*args)


# =============================== parameters ========================================
def init_params(key):
    ks = iter(jax.random.split(key, 64))

    def nrm(shape, scale=0.05):
        return (scale * jax.random.normal(next(ks), shape)).astype(jnp.float32)

    p = {}
    p["word_emb"] = nrm((VOCAB_SIZE + 1, GLOVE_DIM), 0.1)   # frozen glove matrix
    p["attr_emb"] = nrm((ATTR_NUM, HIST_DIM), 0.1)
    p["Wt"] = nrm((GLOVE_DIM, HIST_DIM)); p["bt"] = nrm((1, HIST_DIM), 0.02)
    p["Wi"] = nrm((IMG_DIM, HIST_DIM))                       # img_emb has no bias
    for n in ("tn", "in", "an", "fn"):                       # Norm alpha / bias
        p[n + "_a"] = jnp.ones((1, HIST_DIM), jnp.float32) + nrm((1, HIST_DIM), 0.02)
        p[n + "_b"] = nrm((1, HIST_DIM), 0.02)
    p["ln1_a"] = jnp.ones((LAYER_NUM, HIST_DIM), jnp.float32) + nrm((LAYER_NUM, HIST_DIM), 0.02)
    p["ln1_b"] = nrm((LAYER_NUM, HIST_DIM), 0.02)
    p["ln2_a"] = jnp.ones((LAYER_NUM, HIST_DIM), jnp.float32) + nrm((LAYER_NUM, HIST_DIM), 0.02)
    p["ln2_b"] = nrm((LAYER_NUM, HIST_DIM), 0.02)
    for n in ("Wq", "Wk", "Wv", "Wo"):
        p[n] = nrm((LAYER_NUM, HIST_DIM, HIST_DIM))
    for n in ("bq", "bk", "bv", "bo"):
        p[n] = nrm((LAYER_NUM, HIST_DIM), 0.02)
    p["W1"] = nrm((LAYER_NUM, HIST_DIM, D_FF))
    p["b1"] = nrm((LAYER_NUM, D_FF), 0.02)
    p["W2"] = nrm((LAYER_NUM, D_FF, HIST_DIM))
    p["b2"] = nrm((LAYER_NUM, HIST_DIM), 0.02)
    p["Wout"] = nrm((HIST_DIM, HIST_DIM)); p["bout"] = nrm((1, HIST_DIM), 0.02)

    # positional encoding table (exact formula from PositionalEncoder.__init__)
    pe = [[0.0] * HIST_DIM for _ in range(SEQ)]
    for pos in range(SEQ):
        for i in range(0, HIST_DIM, 2):
            pe[pos][i] = math.sin(pos / (10000 ** (2 * i / HIST_DIM)))
            pe[pos][i + 1] = math.cos(pos / (10000 ** (2 * (i + 1) / HIST_DIM)))
    p["pe"] = jnp.array(pe, dtype=jnp.float32)
    return p


# =============================== pure-JAX reference ================================
def reference_forward(params, text, image, attribute):
    sp = _norm_ref(jnp.zeros((B, 1, HIST_DIM), jnp.float32), params["tn_a"], params["tn_b"])
    te = params["word_emb"][text] @ params["Wt"] + params["bt"][0]
    te = _norm_ref(te, params["tn_a"], params["tn_b"])
    ae = _norm_ref(params["attr_emb"][attribute], params["an_a"], params["an_b"])
    ie = _norm_ref(image @ params["Wi"], params["in_a"], params["in_b"])[:, None, :]
    x = jnp.concatenate([sp, te, ae, ie], axis=1)
    x = x * math.sqrt(HIST_DIM) + params["pe"][None]
    for l in range(LAYER_NUM):
        x2 = _norm_ref(x, params["ln1_a"][l], params["ln1_b"][l])
        q = x2 @ params["Wq"][l] + params["bq"][l]
        k = x2 @ params["Wk"][l] + params["bk"][l]
        v = x2 @ params["Wv"][l] + params["bv"][l]
        qh = q.reshape(B, SEQ, HEADS, D_K).transpose(0, 2, 1, 3)
        kh = k.reshape(B, SEQ, HEADS, D_K).transpose(0, 2, 1, 3)
        vh = v.reshape(B, SEQ, HEADS, D_K).transpose(0, 2, 1, 3)
        scores = jnp.einsum("bhqd,bhkd->bhqk", qh, kh) / math.sqrt(D_K)
        pr = jax.nn.softmax(scores, axis=-1)
        o = jnp.einsum("bhqk,bhkd->bhqd", pr, vh)
        concat = o.transpose(0, 2, 1, 3).reshape(B, SEQ, HIST_DIM)
        x = x + concat @ params["Wo"][l] + params["bo"][l]
        x2 = _norm_ref(x, params["ln2_a"][l], params["ln2_b"][l])
        x = x + jnp.maximum(x2 @ params["W1"][l] + params["b1"][l], 0.0) @ params["W2"][l] + params["b2"][l]
    x = _norm_ref(x, params["fn_a"], params["fn_b"])
    return jnp.maximum(x.mean(axis=1), 0.0) @ params["Wout"] + params["bout"][0]


# =============================== main ==============================================
if __name__ == "__main__":
    key = jax.random.PRNGKey(0)
    pkey, tkey, ikey, akey = jax.random.split(key, 4)
    params = init_params(pkey)

    text = jax.random.randint(tkey, (B, L_TEXT), 0, VOCAB_SIZE + 1)
    image = (0.1 * jax.random.normal(ikey, (B, IMG_DIM))).astype(jnp.float32)
    attribute = jax.random.randint(akey, (B, N_ATTR), 0, ATTR_NUM)

    out = retriever_forward(params, text, image, attribute)
    out = jax.block_until_ready(out)

    ref = jax.block_until_ready(reference_forward(params, text, image, attribute))
    max_err = float(jnp.max(jnp.abs(out - ref)))
    assert out.shape == (B, HIST_DIM)
    # Norm now uses an exact rsqrt (no approx reciprocal), so the remaining
    # deviation from the f32 reference is dominated by the bf16 feed-forward
    # weights (observed errors are a few 1e-4); 3e-3 leaves comfortable margin.
    assert max_err < 3e-3, f"mismatch vs pure-JAX reference: {max_err}"

    print("KERNEL_OK")
</pallas_src>

<mosaic_0001>
module attributes {stable_mosaic.version = 11 : i64} {
  func.func @fused_kernel(%arg0: i32, %arg1: memref<16x300xf32, #tpu.memory_space<vmem>>, %arg2: memref<2x64xf32, #tpu.memory_space<vmem>>, %arg3: memref<8x32xf32, #tpu.memory_space<vmem>>, %arg4: memref<28x32xf32, #tpu.memory_space<vmem>>, %arg5: memref<28x16xf32, #tpu.memory_space<vmem>>, %arg6: memref<28x8xf32, #tpu.memory_space<vmem>>, %arg7: memref<28x2xf32, #tpu.memory_space<vmem>>, %arg8: memref<256x28xf32, #tpu.memory_space<vmem>>, %arg9: memref<256x32xf32, #tpu.memory_space<vmem>>, %arg10: memref<256x8xf32, #tpu.memory_space<vmem>>, %arg11: memref<8x256xf32, #tpu.memory_space<vmem>>, %arg12: memref<28x256xf32, #tpu.memory_space<vmem>>, %arg13: memref<2x28xf32, #tpu.memory_space<vmem>>, %arg14: memref<300x32xf32, #tpu.memory_space<vmem>>, %arg15: memref<1x32xf32, #tpu.memory_space<vmem>>, %arg16: memref<1x32xf32, #tpu.memory_space<vmem>>, %arg17: memref<1x32xf32, #tpu.memory_space<vmem>>, %arg18: memref<64x32xf32, #tpu.memory_space<vmem>>, %arg19: memref<1x32xf32, #tpu.memory_space<vmem>>, %arg20: memref<1x32xf32, #tpu.memory_space<vmem>>, %arg21: memref<1x32xf32, #tpu.memory_space<vmem>>, %arg22: memref<1x32xf32, #tpu.memory_space<vmem>>, %arg23: memref<2x32xf32, #tpu.memory_space<vmem>>, %arg24: memref<2x32xf32, #tpu.memory_space<vmem>>, %arg25: memref<2x32xf32, #tpu.memory_space<vmem>>, %arg26: memref<2x32xf32, #tpu.memory_space<vmem>>, %arg27: memref<2x32x96xf32, #tpu.memory_space<vmem>>, %arg28: memref<2x96xf32, #tpu.memory_space<vmem>>, %arg29: memref<2x32x32xf32, #tpu.memory_space<vmem>>, %arg30: memref<2x32xf32, #tpu.memory_space<vmem>>, %arg31: memref<2x32x1024xbf16, #tpu.memory_space<vmem>>, %arg32: memref<2x1024xf32, #tpu.memory_space<vmem>>, %arg33: memref<2x1024x32xbf16, #tpu.memory_space<vmem>>, %arg34: memref<2x32xf32, #tpu.memory_space<vmem>>, %arg35: memref<1x32xf32, #tpu.memory_space<vmem>>, %arg36: memref<1x32xf32, #tpu.memory_space<vmem>>, %arg37: memref<32x32xf32, #tpu.memory_space<vmem>>, %arg38: memref<1x32xf32, #tpu.memory_space<vmem>>, %arg39: memref<2x32xf32, #tpu.memory_space<vmem>>) attributes {dimension_semantics = [#tpu.dimension_semantics<arbitrary>], iteration_bounds = array<i64: 1>, scalar_prefetch = 0 : i64, scratch_operands = 0 : i64, tpu.core_type = #tpu.core_type<tc>, window_params = [{pipeline_mode = #tpu.pipeline_mode<synchronous>, transform_indices = @transform_0, window_bounds = array<i64: 16, 300>}, {pipeline_mode = #tpu.pipeline_mode<synchronous>, transform_indices = @transform_1, window_bounds = array<i64: 2, 64>}, {pipeline_mode = #tpu.pipeline_mode<synchronous>, transform_indices = @transform_2, window_bounds = array<i64: 8, 32>}, {pipeline_mode = #tpu.pipeline_mode<synchronous>, transform_indices = @transform_3, window_bounds = array<i64: 28, 32>}, {pipeline_mode = #tpu.pipeline_mode<synchronous>, transform_indices = @transform_4, window_bounds = array<i64: 28, 16>}, {pipeline_mode = #tpu.pipeline_mode<synchronous>, transform_indices = @transform_5, window_bounds = array<i64: 28, 8>}, {pipeline_mode = #tpu.pipeline_mode<synchronous>, transform_indices = @transform_6, window_bounds = array<i64: 28, 2>}, {pipeline_mode = #tpu.pipeline_mode<synchronous>, transform_indices = @transform_7, window_bounds = array<i64: 256, 28>}, {pipeline_mode = #tpu.pipeline_mode<synchronous>, transform_indices = @transform_8, window_bounds = array<i64: 256, 32>}, {pipeline_mode = #tpu.pipeline_mode<synchronous>, transform_indices = @transform_9, window_bounds = array<i64: 256, 8>}, {pipeline_mode = #tpu.pipeline_mode<synchronous>, transform_indices = @transform_10, window_bounds = array<i64: 8, 256>}, {pipeline_mode = #tpu.pipeline_mode<synchronous>, transform_indices = @transform_11, window_bounds = array<i64: 28, 256>}, {pipeline_mode = #tpu.pipeline_mode<synchronous>, transform_indices = @transform_12, window_bounds = array<i64: 2, 28>}, {pipeline_mode = #tpu.pipeline_mode<synchronous>, transform_indices = @transform_13, window_bounds = array<i64: 300, 32>}, {pipeline_mode = #tpu.pipeline_mode<synchronous>, transform_indices = @transform_14, window_bounds = array<i64: 1, 32>}, {pipeline_mode = #tpu.pipeline_mode<synchronous>, transform_indices = @transform_15, window_bounds = array<i64: 1, 32>}, {pipeline_mode = #tpu.pipeline_mode<synchronous>, transform_indices = @transform_16, window_bounds = array<i64: 1, 32>}, {pipeline_mode = #tpu.pipeline_mode<synchronous>, transform_indices = @transform_17, window_bounds = array<i64: 64, 32>}, {pipeline_mode = #tpu.pipeline_mode<synchronous>, transform_indices = @transform_18, window_bounds = array<i64: 1, 32>}, {pipeline_mode = #tpu.pipeline_mode<synchronous>, transform_indices = @transform_19, window_bounds = array<i64: 1, 32>}, {pipeline_mode = #tpu.pipeline_mode<synchronous>, transform_indices = @transform_20, window_bounds = array<i64: 1, 32>}, {pipeline_mode = #tpu.pipeline_mode<synchronous>, transform_indices = @transform_21, window_bounds = array<i64: 1, 32>}, {pipeline_mode = #tpu.pipeline_mode<synchronous>, transform_indices = @transform_22, window_bounds = array<i64: 2, 32>}, {pipeline_mode = #tpu.pipeline_mode<synchronous>, transform_indices = @transform_23, window_bounds = array<i64: 2, 32>}, {pipeline_mode = #tpu.pipeline_mode<synchronous>, transform_indices = @transform_24, window_bounds = array<i64: 2, 32>}, {pipeline_mode = #tpu.pipeline_mode<synchronous>, transform_indices = @transform_25, window_bounds = array<i64: 2, 32>}, {pipeline_mode = #tpu.pipeline_mode<synchronous>, transform_indices = @transform_26, window_bounds = array<i64: 2, 32, 96>}, {pipeline_mode = #tpu.pipeline_mode<synchronous>, transform_indices = @transform_27, window_bounds = array<i64: 2, 96>}, {pipeline_mode = #tpu.pipeline_mode<synchronous>, transform_indices = @transform_28, window_bounds = array<i64: 2, 32, 32>}, {pipeline_mode = #tpu.pipeline_mode<synchronous>, transform_indices = @transform_29, window_bounds = array<i64: 2, 32>}, {pipeline_mode = #tpu.pipeline_mode<synchronous>, transform_indices = @transform_30, window_bounds = array<i64: 2, 32, 1024>}, {pipeline_mode = #tpu.pipeline_mode<synchronous>, transform_indices = @transform_31, window_bounds = array<i64: 2, 1024>}, {pipeline_mode = #tpu.pipeline_mode<synchronous>, transform_indices = @transform_32, window_bounds = array<i64: 2, 1024, 32>}, {pipeline_mode = #tpu.pipeline_mode<synchronous>, transform_indices = @transform_33, window_bounds = array<i64: 2, 32>}, {pipeline_mode = #tpu.pipeline_mode<synchronous>, transform_indices = @transform_34, window_bounds = array<i64: 1, 32>}, {pipeline_mode = #tpu.pipeline_mode<synchronous>, transform_indices = @transform_35, window_bounds = array<i64: 1, 32>}, {pipeline_mode = #tpu.pipeline_mode<synchronous>, transform_indices = @transform_36, window_bounds = array<i64: 32, 32>}, {pipeline_mode = #tpu.pipeline_mode<synchronous>, transform_indices = @transform_37, window_bounds = array<i64: 1, 32>}, {pipeline_mode = #tpu.pipeline_mode<synchronous>, transform_indices = @transform_38, window_bounds = array<i64: 2, 32>}]} {
    %c0 = arith.constant 0 : index
    %c0_0 = arith.constant 0 : index
    %0 = vector.load %arg1[%c0, %c0_0] : memref<16x300xf32, #tpu.memory_space<vmem>>, vector<16x300xf32>
    %c0_1 = arith.constant 0 : index
    %c0_2 = arith.constant 0 : index
    %1 = vector.load %arg14[%c0_1, %c0_2] : memref<300x32xf32, #tpu.memory_space<vmem>>, vector<300x32xf32>
    %cst = arith.constant dense<0.000000e+00> : vector<16x32xf32>
    %2 = tpu.matmul %0, %1, %cst {dimension_numbers = #tpu.dot_dimension_numbers<[1], [0], [0], [1], [0, 0, 1, 1], [], []>} : vector<16x300xf32>, vector<300x32xf32>, vector<16x32xf32> -> vector<16x32xf32>
    %c0_3 = arith.constant 0 : index
    %c0_4 = arith.constant 0 : index
    %3 = vector.load %arg15[%c0_3, %c0_4] : memref<1x32xf32, #tpu.memory_space<vmem>>, vector<1x32xf32>
    %4 = vector.broadcast %3 : vector<1x32xf32> to vector<16x32xf32>
    %5 = arith.addf %2, %4 : vector<16x32xf32>
    %c0_5 = arith.constant 0 : index
    %c0_6 = arith.constant 0 : index
    %6 = vector.load %arg16[%c0_5, %c0_6] : memref<1x32xf32, #tpu.memory_space<vmem>>, vector<1x32xf32>
    %c0_7 = arith.constant 0 : index
    %c0_8 = arith.constant 0 : index
    %7 = vector.load %arg17[%c0_7, %c0_8] : memref<1x32xf32, #tpu.memory_space<vmem>>, vector<1x32xf32>
    %cst_9 = arith.constant dense<0.000000e+00> : vector<16xf32>
    %8 = vector.multi_reduction <add>, %5, %cst_9 [1] : vector<16x32xf32> to vector<16xf32>
    %9 = vector.shape_cast %8 : vector<16xf32> to vector<16x1xf32>
    %cst_10 = arith.constant 3.200000e+01 : f32
    %10 = vector.broadcast %cst_10 : f32 to vector<16x1xf32>
    %11 = arith.divf %9, %10 : vector<16x1xf32>
    %12 = vector.broadcast %11 : vector<16x1xf32> to vector<16x32xf32>
    %13 = arith.subf %5, %12 : vector<16x32xf32>
    %14 = arith.mulf %13, %13 : vector<16x32xf32>
    %cst_11 = arith.constant dense<0.000000e+00> : vector<16xf32>
    %15 = vector.multi_reduction <add>, %14, %cst_11 [1] : vector<16x32xf32> to vector<16xf32>
    %16 = vector.shape_cast %15 : vector<16xf32> to vector<16x1xf32>
    %cst_12 = arith.constant 0.0322580636 : f32
    %17 = vector.broadcast %cst_12 : f32 to vector<16x1xf32>
    %18 = arith.mulf %16, %17 : vector<16x1xf32>
    %19 = vector.broadcast %6 : vector<1x32xf32> to vector<16x32xf32>
    %20 = arith.mulf %19, %13 : vector<16x32xf32>
    %cst_13 = arith.constant 9.99999997E-7 : f32
    %21 = vector.broadcast %cst_13 : f32 to vector<16x1xf32>
    %22 = arith.addf %18, %21 : vector<16x1xf32>
    %23 = math.rsqrt %22 : vector<16x1xf32>
    %24 = vector.broadcast %23 : vector<16x1xf32> to vector<16x32xf32>
    %25 = arith.mulf %20, %24 : vector<16x32xf32>
    %26 = vector.broadcast %7 : vector<1x32xf32> to vector<16x32xf32>
    %27 = arith.addf %25, %26 : vector<16x32xf32>
    %c0_14 = arith.constant 0 : index
    %c0_15 = arith.constant 0 : index
    %28 = vector.load %arg3[%c0_14, %c0_15] : memref<8x32xf32, #tpu.memory_space<vmem>>, vector<8x32xf32>
    %c0_16 = arith.constant 0 : index
    %c0_17 = arith.constant 0 : index
    %29 = vector.load %arg21[%c0_16, %c0_17] : memref<1x32xf32, #tpu.memory_space<vmem>>, vector<1x32xf32>
    %c0_18 = arith.constant 0 : index
    %c0_19 = arith.constant 0 : index
    %30 = vector.load %arg22[%c0_18, %c0_19] : memref<1x32xf32, #tpu.memory_space<vmem>>, vector<1x32xf32>
    %cst_20 = arith.constant dense<0.000000e+00> : vector<8xf32>
    %31 = vector.multi_reduction <add>, %28, %cst_20 [1] : vector<8x32xf32> to vector<8xf32>
    %32 = vector.shape_cast %31 : vector<8xf32> to vector<8x1xf32>
    %cst_21 = arith.constant 3.200000e+01 : f32
    %33 = vector.broadcast %cst_21 : f32 to vector<8x1xf32>
    %34 = arith.divf %32, %33 : vector<8x1xf32>
    %35 = vector.broadcast %34 : vector<8x1xf32> to vector<8x32xf32>
    %36 = arith.subf %28, %35 : vector<8x32xf32>
    %37 = arith.mulf %36, %36 : vector<8x32xf32>
    %cst_22 = arith.constant dense<0.000000e+00> : vector<8xf32>
    %38 = vector.multi_reduction <add>, %37, %cst_22 [1] : vector<8x32xf32> to vector<8xf32>
    %39 = vector.shape_cast %38 : vector<8xf32> to vector<8x1xf32>
    %cst_23 = arith.constant 0.0322580636 : f32
    %40 = vector.broadcast %cst_23 : f32 to vector<8x1xf32>
    %41 = arith.mulf %39, %40 : vector<8x1xf32>
    %42 = vector.broadcast %29 : vector<1x32xf32> to vector<8x32xf32>
    %43 = arith.mulf %42, %36 : vector<8x32xf32>
    %cst_24 = arith.constant 9.99999997E-7 : f32
    %44 = vector.broadcast %cst_24 : f32 to vector<8x1xf32>
    %45 = arith.addf %41, %44 : vector<8x1xf32>
    %46 = math.rsqrt %45 : vector<8x1xf32>
    %47 = vector.broadcast %46 : vector<8x1xf32> to vector<8x32xf32>
    %48 = arith.mulf %43, %47 : vector<8x32xf32>
    %49 = vector.broadcast %30 : vector<1x32xf32> to vector<8x32xf32>
    %50 = arith.addf %48, %49 : vector<8x32xf32>
    %c0_25 = arith.constant 0 : index
    %c0_26 = arith.constant 0 : index
    %51 = vector.load %arg2[%c0_25, %c0_26] : memref<2x64xf32, #tpu.memory_space<vmem>>, vector<2x64xf32>
    %c0_27 = arith.constant 0 : index
    %c0_28 = arith.constant 0 : index
    %52 = vector.load %arg18[%c0_27, %c0_28] : memref<64x32xf32, #tpu.memory_space<vmem>>, vector<64x32xf32>
    %cst_29 = arith.constant dense<0.000000e+00> : vector<2x32xf32>
    %53 = tpu.matmul %51, %52, %cst_29 {dimension_numbers = #tpu.dot_dimension_numbers<[1], [0], [0], [1], [0, 0, 1, 1], [], []>} : vector<2x64xf32>, vector<64x32xf32>, vector<2x32xf32> -> vector<2x32xf32>
    %c0_30 = arith.constant 0 : index
    %c0_31 = arith.constant 0 : index
    %54 = vector.load %arg19[%c0_30, %c0_31] : memref<1x32xf32, #tpu.memory_space<vmem>>, vector<1x32xf32>
    %c0_32 = arith.constant 0 : index
    %c0_33 = arith.constant 0 : index
    %55 = vector.load %arg20[%c0_32, %c0_33] : memref<1x32xf32, #tpu.memory_space<vmem>>, vector<1x32xf32>
    %cst_34 = arith.constant dense<0.000000e+00> : vector<2xf32>
    %56 = vector.multi_reduction <add>, %53, %cst_34 [1] : vector<2x32xf32> to vector<2xf32>
    %57 = vector.shape_cast %56 : vector<2xf32> to vector<2x1xf32>
    %cst_35 = arith.constant 3.200000e+01 : f32
    %58 = vector.broadcast %cst_35 : f32 to vector<2x1xf32>
    %59 = arith.divf %57, %58 : vector<2x1xf32>
    %60 = vector.broadcast %59 : vector<2x1xf32> to vector<2x32xf32>
    %61 = arith.subf %53, %60 : vector<2x32xf32>
    %62 = arith.mulf %61, %61 : vector<2x32xf32>
    %cst_36 = arith.constant dense<0.000000e+00> : vector<2xf32>
    %63 = vector.multi_reduction <add>, %62, %cst_36 [1] : vector<2x32xf32> to vector<2xf32>
    %64 = vector.shape_cast %63 : vector<2xf32> to vector<2x1xf32>
    %cst_37 = arith.constant 0.0322580636 : f32
    %65 = vector.broadcast %cst_37 : f32 to vector<2x1xf32>
    %66 = arith.mulf %64, %65 : vector<2x1xf32>
    %67 = vector.broadcast %54 : vector<1x32xf32> to vector<2x32xf32>
    %68 = arith.mulf %67, %61 : vector<2x32xf32>
    %cst_38 = arith.constant 9.99999997E-7 : f32
    %69 = vector.broadcast %cst_38 : f32 to vector<2x1xf32>
    %70 = arith.addf %66, %69 : vector<2x1xf32>
    %71 = math.rsqrt %70 : vector<2x1xf32>
    %72 = vector.broadcast %71 : vector<2x1xf32> to vector<2x32xf32>
    %73 = arith.mulf %68, %72 : vector<2x32xf32>
    %74 = vector.broadcast %55 : vector<1x32xf32> to vector<2x32xf32>
    %75 = arith.addf %73, %74 : vector<2x32xf32>
    %c0_39 = arith.constant 0 : index
    %c0_40 = arith.constant 0 : index
    %76 = vector.load %arg4[%c0_39, %c0_40] : memref<28x32xf32, #tpu.memory_space<vmem>>, vector<28x32xf32>
    %c0_41 = arith.constant 0 : index
    %c0_42 = arith.constant 0 : index
    %77 = vector.load %arg5[%c0_41, %c0_42] : memref<28x16xf32, #tpu.memory_space<vmem>>, vector<28x16xf32>
    %cst_43 = arith.constant dense<0.000000e+00> : vector<28x32xf32>
    %78 = tpu.matmul %77, %27, %cst_43 {dimension_numbers = #tpu.dot_dimension_numbers<[1], [0], [0], [1], [0, 0, 1, 1], [], []>} : vector<28x16xf32>, vector<16x32xf32>, vector<28x32xf32> -> vector<28x32xf32>
    %79 = arith.addf %76, %78 : vector<28x32xf32>
    %c0_44 = arith.constant 0 : index
    %c0_45 = arith.constant 0 : index
    %80 = vector.load %arg6[%c0_44, %c0_45] : memref<28x8xf32, #tpu.memory_space<vmem>>, vector<28x8xf32>
    %cst_46 = arith.constant dense<0.000000e+00> : vector<28x32xf32>
    %81 = tpu.matmul %80, %50, %cst_46 {dimension_numbers = #tpu.dot_dimension_numbers<[1], [0], [0], [1], [0, 0, 1, 1], [], []>} : vector<28x8xf32>, vector<8x32xf32>, vector<28x32xf32> -> vector<28x32xf32>
    %82 = arith.addf %79, %81 : vector<28x32xf32>
    %c0_47 = arith.constant 0 : index
    %c0_48 = arith.constant 0 : index
    %83 = vector.load %arg7[%c0_47, %c0_48] : memref<28x2xf32, #tpu.memory_space<vmem>>, vector<28x2xf32>
    %cst_49 = arith.constant dense<0.000000e+00> : vector<28x32xf32>
    %84 = tpu.matmul %83, %75, %cst_49 {dimension_numbers = #tpu.dot_dimension_numbers<[1], [0], [0], [1], [0, 0, 1, 1], [], []>} : vector<28x2xf32>, vector<2x32xf32>, vector<28x32xf32> -> vector<28x32xf32>
    %85 = arith.addf %82, %84 : vector<28x32xf32>
    %c0_50 = arith.constant 0 : index
    %c0_51 = arith.constant 0 : index
    %86 = vector.load %arg8[%c0_50, %c0_51] : memref<256x28xf32, #tpu.memory_space<vmem>>, vector<256x28xf32>
    %c0_52 = arith.constant 0 : index
    %c0_53 = arith.constant 0 : index
    %87 = vector.load %arg9[%c0_52, %c0_53] : memref<256x32xf32, #tpu.memory_space<vmem>>, vector<256x32xf32>
    %c0_54 = arith.constant 0 : index
    %c0_55 = arith.constant 0 : index
    %88 = vector.load %arg10[%c0_54, %c0_55] : memref<256x8xf32, #tpu.memory_space<vmem>>, vector<256x8xf32>
    %c0_56 = arith.constant 0 : index
    %c0_57 = arith.constant 0 : index
    %89 = vector.load %arg11[%c0_56, %c0_57] : memref<8x256xf32, #tpu.memory_space<vmem>>, vector<8x256xf32>
    %c0_58 = arith.constant 0 : index
    %c0_59 = arith.constant 0 : index
    %90 = vector.load %arg12[%c0_58, %c0_59] : memref<28x256xf32, #tpu.memory_space<vmem>>, vector<28x256xf32>
    %c0_60 = arith.constant 0 : index
    %c0_61 = arith.constant 0 : index
    %91 = vector.load %arg23[%c0_60, %c0_61] : memref<2x32xf32, #tpu.memory_space<vmem>>, vector<1x32xf32>
    %c0_62 = arith.constant 0 : index
    %c0_63 = arith.constant 0 : index
    %92 = vector.load %arg24[%c0_62, %c0_63] : memref<2x32xf32, #tpu.memory_space<vmem>>, vector<1x32xf32>
    %cst_64 = arith.constant dense<0.000000e+00> : vector<28xf32>
    %93 = vector.multi_reduction <add>, %85, %cst_64 [1] : vector<28x32xf32> to vector<28xf32>
    %94 = vector.shape_cast %93 : vector<28xf32> to vector<28x1xf32>
    %cst_65 = arith.constant 3.200000e+01 : f32
    %95 = vector.broadcast %cst_65 : f32 to vector<28x1xf32>
    %96 = arith.divf %94, %95 : vector<28x1xf32>
    %97 = vector.broadcast %96 : vector<28x1xf32> to vector<28x32xf32>
    %98 = arith.subf %85, %97 : vector<28x32xf32>
    %99 = arith.mulf %98, %98 : vector<28x32xf32>
    %cst_66 = arith.constant dense<0.000000e+00> : vector<28xf32>
    %100 = vector.multi_reduction <add>, %99, %cst_66 [1] : vector<28x32xf32> to vector<28xf32>
    %101 = vector.shape_cast %100 : vector<28xf32> to vector<28x1xf32>
    %cst_67 = arith.constant 0.0322580636 : f32
    %102 = vector.broadcast %cst_67 : f32 to vector<28x1xf32>
    %103 = arith.mulf %101, %102 : vector<28x1xf32>
    %104 = vector.broadcast %91 : vector<1x32xf32> to vector<28x32xf32>
    %105 = arith.mulf %104, %98 : vector<28x32xf32>
    %cst_68 = arith.constant 9.99999997E-7 : f32
    %106 = vector.broadcast %cst_68 : f32 to vector<28x1xf32>
    %107 = arith.addf %103, %106 : vector<28x1xf32>
    %108 = math.rsqrt %107 : vector<28x1xf32>
    %109 = vector.broadcast %108 : vector<28x1xf32> to vector<28x32xf32>
    %110 = arith.mulf %105, %109 : vector<28x32xf32>
    %111 = vector.broadcast %92 : vector<1x32xf32> to vector<28x32xf32>
    %112 = arith.addf %110, %111 : vector<28x32xf32>
    %c0_69 = arith.constant 0 : index
    %c0_70 = arith.constant 0 : index
    %c0_71 = arith.constant 0 : index
    %113 = vector.load %arg27[%c0_69, %c0_70, %c0_71] : memref<2x32x96xf32, #tpu.memory_space<vmem>>, vector<1x32x96xf32>
    %114 = vector.shape_cast %113 : vector<1x32x96xf32> to vector<32x96xf32>
    %cst_72 = arith.constant dense<0.000000e+00> : vector<28x96xf32>
    %115 = tpu.matmul %112, %114, %cst_72 {dimension_numbers = #tpu.dot_dimension_numbers<[1], [0], [0], [1], [0, 0, 1, 1], [], []>} : vector<28x32xf32>, vector<32x96xf32>, vector<28x96xf32> -> vector<28x96xf32>
    %c0_73 = arith.constant 0 : index
    %c0_74 = arith.constant 0 : index
    %116 = vector.load %arg28[%c0_73, %c0_74] : memref<2x96xf32, #tpu.memory_space<vmem>>, vector<1x96xf32>
    %117 = vector.broadcast %116 : vector<1x96xf32> to vector<28x96xf32>
    %118 = arith.addf %115, %117 : vector<28x96xf32>
    %119 = vector.extract_strided_slice %118 {offsets = [0, 0], sizes = [28, 32], strides = [1, 1]} : vector<28x96xf32> to vector<28x32xf32>
    %120 = vector.extract_strided_slice %118 {offsets = [0, 32], sizes = [28, 32], strides = [1, 1]} : vector<28x96xf32> to vector<28x32xf32>
    %121 = vector.extract_strided_slice %118 {offsets = [0, 64], sizes = [28, 32], strides = [1, 1]} : vector<28x96xf32> to vector<28x32xf32>
    %cst_75 = arith.constant dense<0.000000e+00> : vector<256x32xf32>
    %122 = tpu.matmul %86, %120, %cst_75 {dimension_numbers = #tpu.dot_dimension_numbers<[1], [0], [0], [1], [0, 0, 1, 1], [], []>} : vector<256x28xf32>, vector<28x32xf32>, vector<256x32xf32> -> vector<256x32xf32>
    %123 = arith.mulf %122, %87 : vector<256x32xf32>
    %cst_76 = arith.constant dense<0.000000e+00> : vector<256x32xf32>
    %124 = tpu.matmul %86, %121, %cst_76 {dimension_numbers = #tpu.dot_dimension_numbers<[1], [0], [0], [1], [0, 0, 1, 1], [], []>} : vector<256x28xf32>, vector<28x32xf32>, vector<256x32xf32> -> vector<256x32xf32>
    %125 = arith.mulf %124, %87 : vector<256x32xf32>
    %cst_77 = arith.constant dense<0.000000e+00> : vector<28x256xf32>
    %126 = tpu.matmul %119, %123, %cst_77 {dimension_numbers = #tpu.dot_dimension_numbers<[1], [1], [0], [0], [0, 0, 1, 0], [], []>} : vector<28x32xf32>, vector<256x32xf32>, vector<28x256xf32> -> vector<28x256xf32>
    %127 = arith.addf %126, %90 : vector<28x256xf32>
    %cst_78 = arith.constant dense<0xFF800000> : vector<28xf32>
    %128 = vector.multi_reduction <maximumf>, %127, %cst_78 [1] : vector<28x256xf32> to vector<28xf32>
    %129 = vector.shape_cast %128 : vector<28xf32> to vector<28x1xf32>
    %130 = vector.broadcast %129 : vector<28x1xf32> to vector<28x256xf32>
    %131 = arith.subf %127, %130 : vector<28x256xf32>
    %132 = math.exp %131 : vector<28x256xf32>
    %cst_79 = arith.constant dense<0.000000e+00> : vector<28x8xf32>
    %133 = tpu.matmul %132, %88, %cst_79 {dimension_numbers = #tpu.dot_dimension_numbers<[1], [0], [0], [1], [0, 0, 1, 1], [], []>} : vector<28x256xf32>, vector<256x8xf32>, vector<28x8xf32> -> vector<28x8xf32>
    %134 = tpu.reciprocal %133 {approx = true} : vector<28x8xf32> -> vector<28x8xf32>
    %cst_80 = arith.constant dense<0.000000e+00> : vector<28x256xf32>
    %135 = tpu.matmul %134, %89, %cst_80 {dimension_numbers = #tpu.dot_dimension_numbers<[1], [0], [0], [1], [0, 0, 1, 1], [], []>} : vector<28x8xf32>, vector<8x256xf32>, vector<28x256xf32> -> vector<28x256xf32>
    %136 = arith.mulf %132, %135 : vector<28x256xf32>
    %cst_81 = arith.constant dense<0.000000e+00> : vector<28x32xf32>
    %137 = tpu.matmul %136, %125, %cst_81 {dimension_numbers = #tpu.dot_dimension_numbers<[1], [0], [0], [1], [0, 0, 1, 1], [], []>} : vector<28x256xf32>, vector<256x32xf32>, vector<28x32xf32> -> vector<28x32xf32>
    %c0_82 = arith.constant 0 : index
    %c0_83 = arith.constant 0 : index
    %c0_84 = arith.constant 0 : index
    %138 = vector.load %arg29[%c0_82, %c0_83, %c0_84] : memref<2x32x32xf32, #tpu.memory_space<vmem>>, vector<1x32x32xf32>
    %139 = vector.shape_cast %138 : vector<1x32x32xf32> to vector<32x32xf32>
    %cst_85 = arith.constant dense<0.000000e+00> : vector<28x32xf32>
    %140 = tpu.matmul %137, %139, %cst_85 {dimension_numbers = #tpu.dot_dimension_numbers<[1], [0], [0], [1], [0, 0, 1, 1], [], []>} : vector<28x32xf32>, vector<32x32xf32>, vector<28x32xf32> -> vector<28x32xf32>
    %141 = arith.addf %85, %140 : vector<28x32xf32>
    %c0_86 = arith.constant 0 : index
    %c0_87 = arith.constant 0 : index
    %142 = vector.load %arg30[%c0_86, %c0_87] : memref<2x32xf32, #tpu.memory_space<vmem>>, vector<1x32xf32>
    %143 = vector.broadcast %142 : vector<1x32xf32> to vector<28x32xf32>
    %144 = arith.addf %141, %143 : vector<28x32xf32>
    %c0_88 = arith.constant 0 : index
    %c0_89 = arith.constant 0 : index
    %145 = vector.load %arg25[%c0_88, %c0_89] : memref<2x32xf32, #tpu.memory_space<vmem>>, vector<1x32xf32>
    %c0_90 = arith.constant 0 : index
    %c0_91 = arith.constant 0 : index
    %146 = vector.load %arg26[%c0_90, %c0_91] : memref<2x32xf32, #tpu.memory_space<vmem>>, vector<1x32xf32>
    %cst_92 = arith.constant dense<0.000000e+00> : vector<28xf32>
    %147 = vector.multi_reduction <add>, %144, %cst_92 [1] : vector<28x32xf32> to vector<28xf32>
    %148 = vector.shape_cast %147 : vector<28xf32> to vector<28x1xf32>
    %cst_93 = arith.constant 3.200000e+01 : f32
    %149 = vector.broadcast %cst_93 : f32 to vector<28x1xf32>
    %150 = arith.divf %148, %149 : vector<28x1xf32>
    %151 = vector.broadcast %150 : vector<28x1xf32> to vector<28x32xf32>
    %152 = arith.subf %144, %151 : vector<28x32xf32>
    %153 = arith.mulf %152, %152 : vector<28x32xf32>
    %cst_94 = arith.constant dense<0.000000e+00> : vector<28xf32>
    %154 = vector.multi_reduction <add>, %153, %cst_94 [1] : vector<28x32xf32> to vector<28xf32>
    %155 = vector.shape_cast %154 : vector<28xf32> to vector<28x1xf32>
    %cst_95 = arith.constant 0.0322580636 : f32
    %156 = vector.broadcast %cst_95 : f32 to vector<28x1xf32>
    %157 = arith.mulf %155, %156 : vector<28x1xf32>
    %158 = vector.broadcast %145 : vector<1x32xf32> to vector<28x32xf32>
    %159 = arith.mulf %158, %152 : vector<28x32xf32>
    %cst_96 = arith.constant 9.99999997E-7 : f32
    %160 = vector.broadcast %cst_96 : f32 to vector<28x1xf32>
    %161 = arith.addf %157, %160 : vector<28x1xf32>
    %162 = math.rsqrt %161 : vector<28x1xf32>
    %163 = vector.broadcast %162 : vector<28x1xf32> to vector<28x32xf32>
    %164 = arith.mulf %159, %163 : vector<28x32xf32>
    %165 = vector.broadcast %146 : vector<1x32xf32> to vector<28x32xf32>
    %166 = arith.addf %164, %165 : vector<28x32xf32>
    %167 = arith.truncf %166 : vector<28x32xf32> to vector<28x32xbf16>
    %c0_97 = arith.constant 0 : index
    %c0_98 = arith.constant 0 : index
    %c0_99 = arith.constant 0 : index
    %168 = vector.load %arg31[%c0_97, %c0_98, %c0_99] : memref<2x32x1024xbf16, #tpu.memory_space<vmem>>, vector<1x32x1024xbf16>
    %169 = vector.shape_cast %168 : vector<1x32x1024xbf16> to vector<32x1024xbf16>
    %cst_100 = arith.constant dense<0.000000e+00> : vector<28x1024xf32>
    %170 = tpu.matmul %167, %169, %cst_100 {dimension_numbers = #tpu.dot_dimension_numbers<[1], [0], [0], [1], [0, 0, 1, 1], [], []>} : vector<28x32xbf16>, vector<32x1024xbf16>, vector<28x1024xf32> -> vector<28x1024xf32>
    %c0_101 = arith.constant 0 : index
    %c0_102 = arith.constant 0 : index
    %171 = vector.load %arg32[%c0_101, %c0_102] : memref<2x1024xf32, #tpu.memory_space<vmem>>, vector<1x1024xf32>
    %172 = vector.broadcast %171 : vector<1x1024xf32> to vector<28x1024xf32>
    %173 = arith.addf %170, %172 : vector<28x1024xf32>
    %cst_103 = arith.constant 0.000000e+00 : f32
    %174 = vector.broadcast %cst_103 : f32 to vector<28x1024xf32>
    %175 = arith.maximumf %173, %174 : vector<28x1024xf32>
    %176 = arith.truncf %175 : vector<28x1024xf32> to vector<28x1024xbf16>
    %c0_104 = arith.constant 0 : index
    %c0_105 = arith.constant 0 : index
    %c0_106 = arith.constant 0 : index
    %177 = vector.load %arg33[%c0_104, %c0_105, %c0_106] : memref<2x1024x32xbf16, #tpu.memory_space<vmem>>, vector<1x1024x32xbf16>
    %178 = vector.shape_cast %177 : vector<1x1024x32xbf16> to vector<1024x32xbf16>
    %cst_107 = arith.constant dense<0.000000e+00> : vector<28x32xf32>
    %179 = tpu.matmul %176, %178, %cst_107 {dimension_numbers = #tpu.dot_dimension_numbers<[1], [0], [0], [1], [0, 0, 1, 1], [], []>} : vector<28x1024xbf16>, vector<1024x32xbf16>, vector<28x32xf32> -> vector<28x32xf32>
    %180 = arith.addf %144, %179 : vector<28x32xf32>
    %c0_108 = arith.constant 0 : index
    %c0_109 = arith.constant 0 : index
    %181 = vector.load %arg34[%c0_108, %c0_109] : memref<2x32xf32, #tpu.memory_space<vmem>>, vector<1x32xf32>
    %182 = vector.broadcast %181 : vector<1x32xf32> to vector<28x32xf32>
    %183 = arith.addf %180, %182 : vector<28x32xf32>
    %c1 = arith.constant 1 : index
    %c0_110 = arith.constant 0 : index
    %184 = vector.load %arg23[%c1, %c0_110] : memref<2x32xf32, #tpu.memory_space<vmem>>, vector<1x32xf32>
    %c1_111 = arith.constant 1 : index
    %c0_112 = arith.constant 0 : index
    %185 = vector.load %arg24[%c1_111, %c0_112] : memref<2x32xf32, #tpu.memory_space<vmem>>, vector<1x32xf32>
    %cst_113 = arith.constant dense<0.000000e+00> : vector<28xf32>
    %186 = vector.multi_reduction <add>, %183, %cst_113 [1] : vector<28x32xf32> to vector<28xf32>
    %187 = vector.shape_cast %186 : vector<28xf32> to vector<28x1xf32>
    %cst_114 = arith.constant 3.200000e+01 : f32
    %188 = vector.broadcast %cst_114 : f32 to vector<28x1xf32>
    %189 = arith.divf %187, %188 : vector<28x1xf32>
    %190 = vector.broadcast %189 : vector<28x1xf32> to vector<28x32xf32>
    %191 = arith.subf %183, %190 : vector<28x32xf32>
    %192 = arith.mulf %191, %191 : vector<28x32xf32>
    %cst_115 = arith.constant dense<0.000000e+00> : vector<28xf32>
    %193 = vector.multi_reduction <add>, %192, %cst_115 [1] : vector<28x32xf32> to vector<28xf32>
    %194 = vector.shape_cast %193 : vector<28xf32> to vector<28x1xf32>
    %cst_116 = arith.constant 0.0322580636 : f32
    %195 = vector.broadcast %cst_116 : f32 to vector<28x1xf32>
    %196 = arith.mulf %194, %195 : vector<28x1xf32>
    %197 = vector.broadcast %184 : vector<1x32xf32> to vector<28x32xf32>
    %198 = arith.mulf %197, %191 : vector<28x32xf32>
    %cst_117 = arith.constant 9.99999997E-7 : f32
    %199 = vector.broadcast %cst_117 : f32 to vector<28x1xf32>
    %200 = arith.addf %196, %199 : vector<28x1xf32>
    %201 = math.rsqrt %200 : vector<28x1xf32>
    %202 = vector.broadcast %201 : vector<28x1xf32> to vector<28x32xf32>
    %203 = arith.mulf %198, %202 : vector<28x32xf32>
    %204 = vector.broadcast %185 : vector<1x32xf32> to vector<28x32xf32>
    %205 = arith.addf %203, %204 : vector<28x32xf32>
    %c1_118 = arith.constant 1 : index
    %c0_119 = arith.constant 0 : index
    %c0_120 = arith.constant 0 : index
    %206 = vector.load %arg27[%c1_118, %c0_119, %c0_120] : memref<2x32x96xf32, #tpu.memory_space<vmem>>, vector<1x32x96xf32>
    %207 = vector.shape_cast %206 : vector<1x32x96xf32> to vector<32x96xf32>
    %cst_121 = arith.constant dense<0.000000e+00> : vector<28x96xf32>
    %208 = tpu.matmul %205, %207, %cst_121 {dimension_numbers = #tpu.dot_dimension_numbers<[1], [0], [0], [1], [0, 0, 1, 1], [], []>} : vector<28x32xf32>, vector<32x96xf32>, vector<28x96xf32> -> vector<28x96xf32>
    %c1_122 = arith.constant 1 : index
    %c0_123 = arith.constant 0 : index
    %209 = vector.load %arg28[%c1_122, %c0_123] : memref<2x96xf32, #tpu.memory_space<vmem>>, vector<1x96xf32>
    %210 = vector.broadcast %209 : vector<1x96xf32> to vector<28x96xf32>
    %211 = arith.addf %208, %210 : vector<28x96xf32>
    %212 = vector.extract_strided_slice %211 {offsets = [0, 0], sizes = [28, 32], strides = [1, 1]} : vector<28x96xf32> to vector<28x32xf32>
    %213 = vector.extract_strided_slice %211 {offsets = [0, 32], sizes = [28, 32], strides = [1, 1]} : vector<28x96xf32> to vector<28x32xf32>
    %214 = vector.extract_strided_slice %211 {offsets = [0, 64], sizes = [28, 32], strides = [1, 1]} : vector<28x96xf32> to vector<28x32xf32>
    %cst_124 = arith.constant dense<0.000000e+00> : vector<256x32xf32>
    %215 = tpu.matmul %86, %213, %cst_124 {dimension_numbers = #tpu.dot_dimension_numbers<[1], [0], [0], [1], [0, 0, 1, 1], [], []>} : vector<256x28xf32>, vector<28x32xf32>, vector<256x32xf32> -> vector<256x32xf32>
    %216 = arith.mulf %215, %87 : vector<256x32xf32>
    %cst_125 = arith.constant dense<0.000000e+00> : vector<256x32xf32>
    %217 = tpu.matmul %86, %214, %cst_125 {dimension_numbers = #tpu.dot_dimension_numbers<[1], [0], [0], [1], [0, 0, 1, 1], [], []>} : vector<256x28xf32>, vector<28x32xf32>, vector<256x32xf32> -> vector<256x32xf32>
    %218 = arith.mulf %217, %87 : vector<256x32xf32>
    %cst_126 = arith.constant dense<0.000000e+00> : vector<28x256xf32>
    %219 = tpu.matmul %212, %216, %cst_126 {dimension_numbers = #tpu.dot_dimension_numbers<[1], [1], [0], [0], [0, 0, 1, 0], [], []>} : vector<28x32xf32>, vector<256x32xf32>, vector<28x256xf32> -> vector<28x256xf32>
    %220 = arith.addf %219, %90 : vector<28x256xf32>
    %cst_127 = arith.constant dense<0xFF800000> : vector<28xf32>
    %221 = vector.multi_reduction <maximumf>, %220, %cst_127 [1] : vector<28x256xf32> to vector<28xf32>
    %222 = vector.shape_cast %221 : vector<28xf32> to vector<28x1xf32>
    %223 = vector.broadcast %222 : vector<28x1xf32> to vector<28x256xf32>
    %224 = arith.subf %220, %223 : vector<28x256xf32>
    %225 = math.exp %224 : vector<28x256xf32>
    %cst_128 = arith.constant dense<0.000000e+00> : vector<28x8xf32>
    %226 = tpu.matmul %225, %88, %cst_128 {dimension_numbers = #tpu.dot_dimension_numbers<[1], [0], [0], [1], [0, 0, 1, 1], [], []>} : vector<28x256xf32>, vector<256x8xf32>, vector<28x8xf32> -> vector<28x8xf32>
    %227 = tpu.reciprocal %226 {approx = true} : vector<28x8xf32> -> vector<28x8xf32>
    %cst_129 = arith.constant dense<0.000000e+00> : vector<28x256xf32>
    %228 = tpu.matmul %227, %89, %cst_129 {dimension_numbers = #tpu.dot_dimension_numbers<[1], [0], [0], [1], [0, 0, 1, 1], [], []>} : vector<28x8xf32>, vector<8x256xf32>, vector<28x256xf32> -> vector<28x256xf32>
    %229 = arith.mulf %225, %228 : vector<28x256xf32>
    %cst_130 = arith.constant dense<0.000000e+00> : vector<28x32xf32>
    %230 = tpu.matmul %229, %218, %cst_130 {dimension_numbers = #tpu.dot_dimension_numbers<[1], [0], [0], [1], [0, 0, 1, 1], [], []>} : vector<28x256xf32>, vector<256x32xf32>, vector<28x32xf32> -> vector<28x32xf32>
    %c1_131 = arith.constant 1 : index
    %c0_132 = arith.constant 0 : index
    %c0_133 = arith.constant 0 : index
    %231 = vector.load %arg29[%c1_131, %c0_132, %c0_133] : memref<2x32x32xf32, #tpu.memory_space<vmem>>, vector<1x32x32xf32>
    %232 = vector.shape_cast %231 : vector<1x32x32xf32> to vector<32x32xf32>
    %cst_134 = arith.constant dense<0.000000e+00> : vector<28x32xf32>
    %233 = tpu.matmul %230, %232, %cst_134 {dimension_numbers = #tpu.dot_dimension_numbers<[1], [0], [0], [1], [0, 0, 1, 1], [], []>} : vector<28x32xf32>, vector<32x32xf32>, vector<28x32xf32> -> vector<28x32xf32>
    %234 = arith.addf %183, %233 : vector<28x32xf32>
    %c1_135 = arith.constant 1 : index
    %c0_136 = arith.constant 0 : index
    %235 = vector.load %arg30[%c1_135, %c0_136] : memref<2x32xf32, #tpu.memory_space<vmem>>, vector<1x32xf32>
    %236 = vector.broadcast %235 : vector<1x32xf32> to vector<28x32xf32>
    %237 = arith.addf %234, %236 : vector<28x32xf32>
    %c1_137 = arith.constant 1 : index
    %c0_138 = arith.constant 0 : index
    %238 = vector.load %arg25[%c1_137, %c0_138] : memref<2x32xf32, #tpu.memory_space<vmem>>, vector<1x32xf32>
    %c1_139 = arith.constant 1 : index
    %c0_140 = arith.constant 0 : index
    %239 = vector.load %arg26[%c1_139, %c0_140] : memref<2x32xf32, #tpu.memory_space<vmem>>, vector<1x32xf32>
    %cst_141 = arith.constant dense<0.000000e+00> : vector<28xf32>
    %240 = vector.multi_reduction <add>, %237, %cst_141 [1] : vector<28x32xf32> to vector<28xf32>
    %241 = vector.shape_cast %240 : vector<28xf32> to vector<28x1xf32>
    %cst_142 = arith.constant 3.200000e+01 : f32
    %242 = vector.broadcast %cst_142 : f32 to vector<28x1xf32>
    %243 = arith.divf %241, %242 : vector<28x1xf32>
    %244 = vector.broadcast %243 : vector<28x1xf32> to vector<28x32xf32>
    %245 = arith.subf %237, %244 : vector<28x32xf32>
    %246 = arith.mulf %245, %245 : vector<28x32xf32>
    %cst_143 = arith.constant dense<0.000000e+00> : vector<28xf32>
    %247 = vector.multi_reduction <add>, %246, %cst_143 [1] : vector<28x32xf32> to vector<28xf32>
    %248 = vector.shape_cast %247 : vector<28xf32> to vector<28x1xf32>
    %cst_144 = arith.constant 0.0322580636 : f32
    %249 = vector.broadcast %cst_144 : f32 to vector<28x1xf32>
    %250 = arith.mulf %248, %249 : vector<28x1xf32>
    %251 = vector.broadcast %238 : vector<1x32xf32> to vector<28x32xf32>
    %252 = arith.mulf %251, %245 : vector<28x32xf32>
    %cst_145 = arith.constant 9.99999997E-7 : f32
    %253 = vector.broadcast %cst_145 : f32 to vector<28x1xf32>
    %254 = arith.addf %250, %253 : vector<28x1xf32>
    %255 = math.rsqrt %254 : vector<28x1xf32>
    %256 = vector.broadcast %255 : vector<28x1xf32> to vector<28x32xf32>
    %257 = arith.mulf %252, %256 : vector<28x32xf32>
    %258 = vector.broadcast %239 : vector<1x32xf32> to vector<28x32xf32>
    %259 = arith.addf %257, %258 : vector<28x32xf32>
    %260 = arith.truncf %259 : vector<28x32xf32> to vector<28x32xbf16>
    %c1_146 = arith.constant 1 : index
    %c0_147 = arith.constant 0 : index
    %c0_148 = arith.constant 0 : index
    %261 = vector.load %arg31[%c1_146, %c0_147, %c0_148] : memref<2x32x1024xbf16, #tpu.memory_space<vmem>>, vector<1x32x1024xbf16>
    %262 = vector.shape_cast %261 : vector<1x32x1024xbf16> to vector<32x1024xbf16>
    %cst_149 = arith.constant dense<0.000000e+00> : vector<28x1024xf32>
    %263 = tpu.matmul %260, %262, %cst_149 {dimension_numbers = #tpu.dot_dimension_numbers<[1], [0], [0], [1], [0, 0, 1, 1], [], []>} : vector<28x32xbf16>, vector<32x1024xbf16>, vector<28x1024xf32> -> vector<28x1024xf32>
    %c1_150 = arith.constant 1 : index
    %c0_151 = arith.constant 0 : index
    %264 = vector.load %arg32[%c1_150, %c0_151] : memref<2x1024xf32, #tpu.memory_space<vmem>>, vector<1x1024xf32>
    %265 = vector.broadcast %264 : vector<1x1024xf32> to vector<28x1024xf32>
    %266 = arith.addf %263, %265 : vector<28x1024xf32>
    %cst_152 = arith.constant 0.000000e+00 : f32
    %267 = vector.broadcast %cst_152 : f32 to vector<28x1024xf32>
    %268 = arith.maximumf %266, %267 : vector<28x1024xf32>
    %269 = arith.truncf %268 : vector<28x1024xf32> to vector<28x1024xbf16>
    %c1_153 = arith.constant 1 : index
    %c0_154 = arith.constant 0 : index
    %c0_155 = arith.constant 0 : index
    %270 = vector.load %arg33[%c1_153, %c0_154, %c0_155] : memref<2x1024x32xbf16, #tpu.memory_space<vmem>>, vector<1x1024x32xbf16>
    %271 = vector.shape_cast %270 : vector<1x1024x32xbf16> to vector<1024x32xbf16>
    %cst_156 = arith.constant dense<0.000000e+00> : vector<28x32xf32>
    %272 = tpu.matmul %269, %271, %cst_156 {dimension_numbers = #tpu.dot_dimension_numbers<[1], [0], [0], [1], [0, 0, 1, 1], [], []>} : vector<28x1024xbf16>, vector<1024x32xbf16>, vector<28x32xf32> -> vector<28x32xf32>
    %273 = arith.addf %237, %272 : vector<28x32xf32>
    %c1_157 = arith.constant 1 : index
    %c0_158 = arith.constant 0 : index
    %274 = vector.load %arg34[%c1_157, %c0_158] : memref<2x32xf32, #tpu.memory_space<vmem>>, vector<1x32xf32>
    %275 = vector.broadcast %274 : vector<1x32xf32> to vector<28x32xf32>
    %276 = arith.addf %273, %275 : vector<28x32xf32>
    %c0_159 = arith.constant 0 : index
    %c0_160 = arith.constant 0 : index
    %277 = vector.load %arg35[%c0_159, %c0_160] : memref<1x32xf32, #tpu.memory_space<vmem>>, vector<1x32xf32>
    %c0_161 = arith.constant 0 : index
    %c0_162 = arith.constant 0 : index
    %278 = vector.load %arg36[%c0_161, %c0_162] : memref<1x32xf32, #tpu.memory_space<vmem>>, vector<1x32xf32>
    %cst_163 = arith.constant dense<0.000000e+00> : vector<28xf32>
    %279 = vector.multi_reduction <add>, %276, %cst_163 [1] : vector<28x32xf32> to vector<28xf32>
    %280 = vector.shape_cast %279 : vector<28xf32> to vector<28x1xf32>
    %cst_164 = arith.constant 3.200000e+01 : f32
    %281 = vector.broadcast %cst_164 : f32 to vector<28x1xf32>
    %282 = arith.divf %280, %281 : vector<28x1xf32>
    %283 = vector.broadcast %282 : vector<28x1xf32> to vector<28x32xf32>
    %284 = arith.subf %276, %283 : vector<28x32xf32>
    %285 = arith.mulf %284, %284 : vector<28x32xf32>
    %cst_165 = arith.constant dense<0.000000e+00> : vector<28xf32>
    %286 = vector.multi_reduction <add>, %285, %cst_165 [1] : vector<28x32xf32> to vector<28xf32>
    %287 = vector.shape_cast %286 : vector<28xf32> to vector<28x1xf32>
    %cst_166 = arith.constant 0.0322580636 : f32
    %288 = vector.broadcast %cst_166 : f32 to vector<28x1xf32>
    %289 = arith.mulf %287, %288 : vector<28x1xf32>
    %290 = vector.broadcast %277 : vector<1x32xf32> to vector<28x32xf32>
    %291 = arith.mulf %290, %284 : vector<28x32xf32>
    %cst_167 = arith.constant 9.99999997E-7 : f32
    %292 = vector.broadcast %cst_167 : f32 to vector<28x1xf32>
    %293 = arith.addf %289, %292 : vector<28x1xf32>
    %294 = math.rsqrt %293 : vector<28x1xf32>
    %295 = vector.broadcast %294 : vector<28x1xf32> to vector<28x32xf32>
    %296 = arith.mulf %291, %295 : vector<28x32xf32>
    %297 = vector.broadcast %278 : vector<1x32xf32> to vector<28x32xf32>
    %298 = arith.addf %296, %297 : vector<28x32xf32>
    %c0_168 = arith.constant 0 : index
    %c0_169 = arith.constant 0 : index
    %299 = vector.load %arg13[%c0_168, %c0_169] : memref<2x28xf32, #tpu.memory_space<vmem>>, vector<2x28xf32>
    %cst_170 = arith.constant dense<0.000000e+00> : vector<2x32xf32>
    %300 = tpu.matmul %299, %298, %cst_170 {dimension_numbers = #tpu.dot_dimension_numbers<[1], [0], [0], [1], [0, 0, 1, 1], [], []>} : vector<2x28xf32>, vector<28x32xf32>, vector<2x32xf32> -> vector<2x32xf32>
    %cst_171 = arith.constant 0.000000e+00 : f32
    %301 = vector.broadcast %cst_171 : f32 to vector<2x32xf32>
    %302 = arith.maximumf %300, %301 : vector<2x32xf32>
    %c0_172 = arith.constant 0 : index
    %c0_173 = arith.constant 0 : index
    %303 = vector.load %arg37[%c0_172, %c0_173] : memref<32x32xf32, #tpu.memory_space<vmem>>, vector<32x32xf32>
    %cst_174 = arith.constant dense<0.000000e+00> : vector<2x32xf32>
    %304 = tpu.matmul %302, %303, %cst_174 {dimension_numbers = #tpu.dot_dimension_numbers<[1], [0], [0], [1], [0, 0, 1, 1], [], []>} : vector<2x32xf32>, vector<32x32xf32>, vector<2x32xf32> -> vector<2x32xf32>
    %c0_175 = arith.constant 0 : index
    %c0_176 = arith.constant 0 : index
    %305 = vector.load %arg38[%c0_175, %c0_176] : memref<1x32xf32, #tpu.memory_space<vmem>>, vector<1x32xf32>
    %306 = vector.broadcast %305 : vector<1x32xf32> to vector<2x32xf32>
    %307 = arith.addf %304, %306 : vector<2x32xf32>
    %c0_177 = arith.constant 0 : index
    %c0_178 = arith.constant 0 : index
    %308 = vector.load %arg39[%c0_177, %c0_178] : memref<2x32xf32, #tpu.memory_space<vmem>>, vector<2x32xf32>
    tpu.vector_store %arg39[%c0_177, %c0_178], %307 {strides = array<i32>} : memref<2x32xf32, #tpu.memory_space<vmem>>, vector<2x32xf32>,
    return
  }
  func.func @transform_0(%arg0: i32) -> (i32, i32) {
    %c0_i32 = arith.constant 0 : i32
    %c0_i32_0 = arith.constant 0 : i32
    %c0_i32_1 = arith.constant 0 : i32
    return %c0_i32, %c0_i32_0 : i32, i32
  }
  func.func @transform_1(%arg0: i32) -> (i32, i32) {
    %c0_i32 = arith.constant 0 : i32
    %c0_i32_0 = arith.constant 0 : i32
    %c0_i32_1 = arith.constant 0 : i32
    return %c0_i32, %c0_i32_0 : i32, i32
  }
  func.func @transform_2(%arg0: i32) -> (i32, i32) {
    %c0_i32 = arith.constant 0 : i32
    %c0_i32_0 = arith.constant 0 : i32
    %c0_i32_1 = arith.constant 0 : i32
    return %c0_i32, %c0_i32_0 : i32, i32
  }
  func.func @transform_3(%arg0: i32) -> (i32, i32) {
    %c0_i32 = arith.constant 0 : i32
    %c0_i32_0 = arith.constant 0 : i32
    %c0_i32_1 = arith.constant 0 : i32
    return %c0_i32, %c0_i32_0 : i32, i32
  }
  func.func @transform_4(%arg0: i32) -> (i32, i32) {
    %c0_i32 = arith.constant 0 : i32
    %c0_i32_0 = arith.constant 0 : i32
    %c0_i32_1 = arith.constant 0 : i32
    return %c0_i32, %c0_i32_0 : i32, i32
  }
  func.func @transform_5(%arg0: i32) -> (i32, i32) {
    %c0_i32 = arith.constant 0 : i32
    %c0_i32_0 = arith.constant 0 : i32
    %c0_i32_1 = arith.constant 0 : i32
    return %c0_i32, %c0_i32_0 : i32, i32
  }
  func.func @transform_6(%arg0: i32) -> (i32, i32) {
    %c0_i32 = arith.constant 0 : i32
    %c0_i32_0 = arith.constant 0 : i32
    %c0_i32_1 = arith.constant 0 : i32
    return %c0_i32, %c0_i32_0 : i32, i32
  }
  func.func @transform_7(%arg0: i32) -> (i32, i32) {
    %c0_i32 = arith.constant 0 : i32
    %c0_i32_0 = arith.constant 0 : i32
    %c0_i32_1 = arith.constant 0 : i32
    return %c0_i32, %c0_i32_0 : i32, i32
  }
  func.func @transform_8(%arg0: i32) -> (i32, i32) {
    %c0_i32 = arith.constant 0 : i32
    %c0_i32_0 = arith.constant 0 : i32
    %c0_i32_1 = arith.constant 0 : i32
    return %c0_i32, %c0_i32_0 : i32, i32
  }
  func.func @transform_9(%arg0: i32) -> (i32, i32) {
    %c0_i32 = arith.constant 0 : i32
    %c0_i32_0 = arith.constant 0 : i32
    %c0_i32_1 = arith.constant 0 : i32
    return %c0_i32, %c0_i32_0 : i32, i32
  }
  func.func @transform_10(%arg0: i32) -> (i32, i32) {
    %c0_i32 = arith.constant 0 : i32
    %c0_i32_0 = arith.constant 0 : i32
    %c0_i32_1 = arith.constant 0 : i32
    return %c0_i32, %c0_i32_0 : i32, i32
  }
  func.func @transform_11(%arg0: i32) -> (i32, i32) {
    %c0_i32 = arith.constant 0 : i32
    %c0_i32_0 = arith.constant 0 : i32
    %c0_i32_1 = arith.constant 0 : i32
    return %c0_i32, %c0_i32_0 : i32, i32
  }
  func.func @transform_12(%arg0: i32) -> (i32, i32) {
    %c0_i32 = arith.constant 0 : i32
    %c0_i32_0 = arith.constant 0 : i32
    %c0_i32_1 = arith.constant 0 : i32
    return %c0_i32, %c0_i32_0 : i32, i32
  }
  func.func @transform_13(%arg0: i32) -> (i32, i32) {
    %c0_i32 = arith.constant 0 : i32
    %c0_i32_0 = arith.constant 0 : i32
    %c0_i32_1 = arith.constant 0 : i32
    return %c0_i32, %c0_i32_0 : i32, i32
  }
  func.func @transform_14(%arg0: i32) -> (i32, i32) {
    %c0_i32 = arith.constant 0 : i32
    %c0_i32_0 = arith.constant 0 : i32
    %c0_i32_1 = arith.constant 0 : i32
    return %c0_i32, %c0_i32_0 : i32, i32
  }
  func.func @transform_15(%arg0: i32) -> (i32, i32) {
    %c0_i32 = arith.constant 0 : i32
    %c0_i32_0 = arith.constant 0 : i32
    %c0_i32_1 = arith.constant 0 : i32
    return %c0_i32, %c0_i32_0 : i32, i32
  }
  func.func @transform_16(%arg0: i32) -> (i32, i32) {
    %c0_i32 = arith.constant 0 : i32
    %c0_i32_0 = arith.constant 0 : i32
    %c0_i32_1 = arith.constant 0 : i32
    return %c0_i32, %c0_i32_0 : i32, i32
  }
  func.func @transform_17(%arg0: i32) -> (i32, i32) {
    %c0_i32 = arith.constant 0 : i32
    %c0_i32_0 = arith.constant 0 : i32
    %c0_i32_1 = arith.constant 0 : i32
    return %c0_i32, %c0_i32_0 : i32, i32
  }
  func.func @transform_18(%arg0: i32) -> (i32, i32) {
    %c0_i32 = arith.constant 0 : i32
    %c0_i32_0 = arith.constant 0 : i32
    %c0_i32_1 = arith.constant 0 : i32
    return %c0_i32, %c0_i32_0 : i32, i32
  }
  func.func @transform_19(%arg0: i32) -> (i32, i32) {
    %c0_i32 = arith.constant 0 : i32
    %c0_i32_0 = arith.constant 0 : i32
    %c0_i32_1 = arith.constant 0 : i32
    return %c0_i32, %c0_i32_0 : i32, i32
  }
  func.func @transform_20(%arg0: i32) -> (i32, i32) {
    %c0_i32 = arith.constant 0 : i32
    %c0_i32_0 = arith.constant 0 : i32
    %c0_i32_1 = arith.constant 0 : i32
    return %c0_i32, %c0_i32_0 : i32, i32
  }
  func.func @transform_21(%arg0: i32) -> (i32, i32) {
    %c0_i32 = arith.constant 0 : i32
    %c0_i32_0 = arith.constant 0 : i32
    %c0_i32_1 = arith.constant 0 : i32
    return %c0_i32, %c0_i32_0 : i32, i32
  }
  func.func @transform_22(%arg0: i32) -> (i32, i32) {
    %c0_i32 = arith.constant 0 : i32
    %c0_i32_0 = arith.constant 0 : i32
    %c0_i32_1 = arith.constant 0 : i32
    return %c0_i32, %c0_i32_0 : i32, i32
  }
  func.func @transform_23(%arg0: i32) -> (i32, i32) {
    %c0_i32 = arith.constant 0 : i32
    %c0_i32_0 = arith.constant 0 : i32
    %c0_i32_1 = arith.constant 0 : i32
    return %c0_i32, %c0_i32_0 : i32, i32
  }
  func.func @transform_24(%arg0: i32) -> (i32, i32) {
    %c0_i32 = arith.constant 0 : i32
    %c0_i32_0 = arith.constant 0 : i32
    %c0_i32_1 = arith.constant 0 : i32
    return %c0_i32, %c0_i32_0 : i32, i32
  }
  func.func @transform_25(%arg0: i32) -> (i32, i32) {
    %c0_i32 = arith.constant 0 : i32
    %c0_i32_0 = arith.constant 0 : i32
    %c0_i32_1 = arith.constant 0 : i32
    return %c0_i32, %c0_i32_0 : i32, i32
  }
  func.func @transform_26(%arg0: i32) -> (i32, i32, i32) {
    %c0_i32 = arith.constant 0 : i32
    %c0_i32_0 = arith.constant 0 : i32
    %c0_i32_1 = arith.constant 0 : i32
    %c0_i32_2 = arith.constant 0 : i32
    return %c0_i32, %c0_i32_0, %c0_i32_1 : i32, i32, i32
  }
  func.func @transform_27(%arg0: i32) -> (i32, i32) {
    %c0_i32 = arith.constant 0 : i32
    %c0_i32_0 = arith.constant 0 : i32
    %c0_i32_1 = arith.constant 0 : i32
    return %c0_i32, %c0_i32_0 : i32, i32
  }
  func.func @transform_28(%arg0: i32) -> (i32, i32, i32) {
    %c0_i32 = arith.constant 0 : i32
    %c0_i32_0 = arith.constant 0 : i32
    %c0_i32_1 = arith.constant 0 : i32
    %c0_i32_2 = arith.constant 0 : i32
    return %c0_i32, %c0_i32_0, %c0_i32_1 : i32, i32, i32
  }
  func.func @transform_29(%arg0: i32) -> (i32, i32) {
    %c0_i32 = arith.constant 0 : i32
    %c0_i32_0 = arith.constant 0 : i32
    %c0_i32_1 = arith.constant 0 : i32
    return %c0_i32, %c0_i32_0 : i32, i32
  }
  func.func @transform_30(%arg0: i32) -> (i32, i32, i32) {
    %c0_i32 = arith.constant 0 : i32
    %c0_i32_0 = arith.constant 0 : i32
    %c0_i32_1 = arith.constant 0 : i32
    %c0_i32_2 = arith.constant 0 : i32
    return %c0_i32, %c0_i32_0, %c0_i32_1 : i32, i32, i32
  }
  func.func @transform_31(%arg0: i32) -> (i32, i32) {
    %c0_i32 = arith.constant 0 : i32
    %c0_i32_0 = arith.constant 0 : i32
    %c0_i32_1 = arith.constant 0 : i32
    return %c0_i32, %c0_i32_0 : i32, i32
  }
  func.func @transform_32(%arg0: i32) -> (i32, i32, i32) {
    %c0_i32 = arith.constant 0 : i32
    %c0_i32_0 = arith.constant 0 : i32
    %c0_i32_1 = arith.constant 0 : i32
    %c0_i32_2 = arith.constant 0 : i32
    return %c0_i32, %c0_i32_0, %c0_i32_1 : i32, i32, i32
  }
  func.func @transform_33(%arg0: i32) -> (i32, i32) {
    %c0_i32 = arith.constant 0 : i32
    %c0_i32_0 = arith.constant 0 : i32
    %c0_i32_1 = arith.constant 0 : i32
    return %c0_i32, %c0_i32_0 : i32, i32
  }
  func.func @transform_34(%arg0: i32) -> (i32, i32) {
    %c0_i32 = arith.constant 0 : i32
    %c0_i32_0 = arith.constant 0 : i32
    %c0_i32_1 = arith.constant 0 : i32
    return %c0_i32, %c0_i32_0 : i32, i32
  }
  func.func @transform_35(%arg0: i32) -> (i32, i32) {
    %c0_i32 = arith.constant 0 : i32
    %c0_i32_0 = arith.constant 0 : i32
    %c0_i32_1 = arith.constant 0 : i32
    return %c0_i32, %c0_i32_0 : i32, i32
  }
  func.func @transform_36(%arg0: i32) -> (i32, i32) {
    %c0_i32 = arith.constant 0 : i32
    %c0_i32_0 = arith.constant 0 : i32
    %c0_i32_1 = arith.constant 0 : i32
    return %c0_i32, %c0_i32_0 : i32, i32
  }
  func.func @transform_37(%arg0: i32) -> (i32, i32) {
    %c0_i32 = arith.constant 0 : i32
    %c0_i32_0 = arith.constant 0 : i32
    %c0_i32_1 = arith.constant 0 : i32
    return %c0_i32, %c0_i32_0 : i32, i32
  }
  func.func @transform_38(%arg0: i32) -> (i32, i32) {
    %c0_i32 = arith.constant 0 : i32
    %c0_i32_0 = arith.constant 0 : i32
    %c0_i32_1 = arith.constant 0 : i32
    return %c0_i32, %c0_i32_0 : i32, i32
  }
}

</mosaic_0001>

<llo_original>
// kernel: tpu_custom_call.1
$region0: #{tpu_custom_call.1}
  #allocation0 [shape = 'u32[]', space=smem, size = 0x4, offset = 0x4, fixed_abs, tag = 'smem constant byte address 0x4 - core index']
  #allocation1 [shape = 'u32[144,128]{1,0:T(1,128)}', space=vmem, size = 0x12000, scoped, tag = 'internal scratch']
  %s0 = inlined_call_operand.smem [shape: u32[39], index: -1, kind: input, shape index: {}]
  %s1 = sld [smem:[%s0]]
  %s2 = scalar_lea.smem %s0, 1
  %s3 = sld [smem:[%s2]]
  %s4 = scalar_lea.smem %s0, 2
  %s5 = sld [smem:[%s4]]
  %s6 = scalar_lea.smem %s0, 3
  %s7 = sld [smem:[%s6]]
  %s8 = scalar_lea.smem %s0, 4
  %s9 = sld [smem:[%s8]]
  %s10 = scalar_lea.smem %s0, 5
  %s11 = sld [smem:[%s10]]
  %s12 = scalar_lea.smem %s0, 6
  %s13 = sld [smem:[%s12]]
  %s14 = scalar_lea.smem %s0, 7
  %s15 = sld [smem:[%s14]]
  %s16 = scalar_lea.smem %s0, 8
  %s17 = sld [smem:[%s16]]
  %s18 = scalar_lea.smem %s0, 9
  %s19 = sld [smem:[%s18]]
  %s20 = scalar_lea.smem %s0, 10
  %s21 = sld [smem:[%s20]]
  %s22 = scalar_lea.smem %s0, 11
  %s23 = sld [smem:[%s22]]
  %s24 = scalar_lea.smem %s0, 12
  %s25 = sld [smem:[%s24]]
  %s26 = scalar_lea.smem %s0, 13
  %s27 = sld [smem:[%s26]]
  %s28 = scalar_lea.smem %s0, 14
  %s29 = sld [smem:[%s28]]
  %s30 = scalar_lea.smem %s0, 15
  %s31 = sld [smem:[%s30]]
  %s32 = scalar_lea.smem %s0, 16
  %s33 = sld [smem:[%s32]]
  %s34 = scalar_lea.smem %s0, 17
  %s35 = sld [smem:[%s34]]
  %s36 = scalar_lea.smem %s0, 18
  %s37 = sld [smem:[%s36]]
  %s38 = scalar_lea.smem %s0, 19
  %s39 = sld [smem:[%s38]]
  %s40 = scalar_lea.smem %s0, 20
  %s41 = sld [smem:[%s40]]
  %s42 = scalar_lea.smem %s0, 21
  %s43 = sld [smem:[%s42]]
  %s44 = scalar_lea.smem %s0, 22
  %s45 = sld [smem:[%s44]]
  %s46 = scalar_lea.smem %s0, 23
  %s47 = sld [smem:[%s46]]
  %s48 = scalar_lea.smem %s0, 24
  %s49 = sld [smem:[%s48]]
  %s50 = scalar_lea.smem %s0, 25
  %s51 = sld [smem:[%s50]]
  %s52 = scalar_lea.smem %s0, 26
  %s53 = sld [smem:[%s52]]
  %s54 = scalar_lea.smem %s0, 27
  %s55 = sld [smem:[%s54]]
  %s56 = scalar_lea.smem %s0, 28
  %s57 = sld [smem:[%s56]]
  %s58 = scalar_lea.smem %s0, 29
  %s59 = sld [smem:[%s58]]
  %s60 = scalar_lea.smem %s0, 30
  %s61 = sld [smem:[%s60]]
  %s62 = scalar_lea.smem %s0, 31
  %s63 = sld [smem:[%s62]]
  %s64 = scalar_lea.smem %s0, 32
  %s65 = sld [smem:[%s64]]
  %s66 = scalar_lea.smem %s0, 33
  %s67 = sld [smem:[%s66]]
  %s68 = scalar_lea.smem %s0, 34
  %s69 = sld [smem:[%s68]]
  %s70 = scalar_lea.smem %s0, 35
  %s71 = sld [smem:[%s70]]
  %s72 = scalar_lea.smem %s0, 36
  %s73 = sld [smem:[%s72]]
  %s74 = scalar_lea.smem %s0, 37
  %s75 = sld [smem:[%s74]]
  %s76 = scalar_lea.smem %s0, 38
  %s77 = sld [smem:[%s76]]
  %s78 = sld [smem:[#allocation0]]
  $region162: #{tpu_custom_call.1} parent=0
    _
  %s80 = ssub.s32 1, %s78
  %s81 = scalar_select 0, %s80, %s78
  $region1: #{tpu_custom_call.1} parent=0
    #allocation2 [shape = 'u8[1024]{0}', space=vmem, size = 0x400, scoped, tag = 'output window, operand 0, single buffered']
    #allocation3 [shape = 's32[1]{0}', space=sflag, size = 0x4, scoped, tag = 'scoped memory for tpu_custom_call.1']
    %82 = vsyncpa [#allocation3], 0
    // Predicated region
    $region2: #{tpu_custom_call.1} parent=1 // pred_check
      _
    $region3: #{tpu_custom_call.1} parent=1 // pred_check_branch
      %84 = sbr.rel (0) target = $region5
    $region4: #{tpu_custom_call.1} parent=1 // pred_region
      _
    $region5: #{tpu_custom_call.1} parent=1 // pred_fallthru
      _
    // Predicated region
    $region6: #{tpu_custom_call.1} parent=1 // pred_check
      _
    $region7: #{tpu_custom_call.1} parent=1 // pred_check_branch
      %86 = sbr.rel (0) target = $region9
    $region8: #{tpu_custom_call.1} parent=1 // pred_region
      _
    $region9: #{tpu_custom_call.1} parent=1 // pred_fallthru
      _
    // Predicated region
    $region10: #{tpu_custom_call.1} parent=1 // pred_check
      _
    $region11: #{tpu_custom_call.1} parent=1 // pred_check_branch
      %88 = sbr.rel (0) target = $region13
    $region12: #{tpu_custom_call.1} parent=1 // pred_region
      _
    $region13: #{tpu_custom_call.1} parent=1 // pred_fallthru
      _
    // Predicated region
    $region14: #{tpu_custom_call.1} parent=1 // pred_check
      _
    $region15: #{tpu_custom_call.1} parent=1 // pred_check_branch
      %90 = sbr.rel (0) target = $region17
    $region16: #{tpu_custom_call.1} parent=1 // pred_region
      _
    $region17: #{tpu_custom_call.1} parent=1 // pred_fallthru
      _
    // Predicated region
    $region18: #{tpu_custom_call.1} parent=1 // pred_check
      _
    $region19: #{tpu_custom_call.1} parent=1 // pred_check_branch
      %92 = sbr.rel (0) target = $region21
    $region20: #{tpu_custom_call.1} parent=1 // pred_region
      _
    $region21: #{tpu_custom_call.1} parent=1 // pred_fallthru
      _
    // Predicated region
    $region22: #{tpu_custom_call.1} parent=1 // pred_check
      _
    $region23: #{tpu_custom_call.1} parent=1 // pred_check_branch
      %94 = sbr.rel (0) target = $region25
    $region24: #{tpu_custom_call.1} parent=1 // pred_region
      _
    $region25: #{tpu_custom_call.1} parent=1 // pred_fallthru
      _
    // Predicated region
    $region26: #{tpu_custom_call.1} parent=1 // pred_check
      _
    $region27: #{tpu_custom_call.1} parent=1 // pred_check_branch
      %96 = sbr.rel (0) target = $region29
    $region28: #{tpu_custom_call.1} parent=1 // pred_region
      _
    $region29: #{tpu_custom_call.1} parent=1 // pred_fallthru
      _
    // Predicated region
    $region30: #{tpu_custom_call.1} parent=1 // pred_check
      _
    $region31: #{tpu_custom_call.1} parent=1 // pred_check_branch
      %98 = sbr.rel (0) target = $region33
    $region32: #{tpu_custom_call.1} parent=1 // pred_region
      _
    $region33: #{tpu_custom_call.1} parent=1 // pred_fallthru
      _
    // Predicated region
    $region34: #{tpu_custom_call.1} parent=1 // pred_check
      _
    $region35: #{tpu_custom_call.1} parent=1 // pred_check_branch
      %100 = sbr.rel (0) target = $region37
    $region36: #{tpu_custom_call.1} parent=1 // pred_region
      _
    $region37: #{tpu_custom_call.1} parent=1 // pred_fallthru
      _
    // Predicated region
    $region38: #{tpu_custom_call.1} parent=1 // pred_check
      _
    $region39: #{tpu_custom_call.1} parent=1 // pred_check_branch
      %102 = sbr.rel (0) target = $region41
    $region40: #{tpu_custom_call.1} parent=1 // pred_region
      _
    $region41: #{tpu_custom_call.1} parent=1 // pred_fallthru
      _
    // Predicated region
    $region42: #{tpu_custom_call.1} parent=1 // pred_check
      _
    $region43: #{tpu_custom_call.1} parent=1 // pred_check_branch
      %104 = sbr.rel (0) target = $region45
    $region44: #{tpu_custom_call.1} parent=1 // pred_region
      _
    $region45: #{tpu_custom_call.1} parent=1 // pred_fallthru
      _
    // Predicated region
    $region46: #{tpu_custom_call.1} parent=1 // pred_check
      _
    $region47: #{tpu_custom_call.1} parent=1 // pred_check_branch
      %106 = sbr.rel (0) target = $region49
    $region48: #{tpu_custom_call.1} parent=1 // pred_region
      _
    $region49: #{tpu_custom_call.1} parent=1 // pred_fallthru
      _
    // Predicated region
    $region50: #{tpu_custom_call.1} parent=1 // pred_check
      _
    $region51: #{tpu_custom_call.1} parent=1 // pred_check_branch
      %108 = sbr.rel (0) target = $region53
    $region52: #{tpu_custom_call.1} parent=1 // pred_region
      _
    $region53: #{tpu_custom_call.1} parent=1 // pred_fallthru
      _
    // Predicated region
    $region54: #{tpu_custom_call.1} parent=1 // pred_check
      _
    $region55: #{tpu_custom_call.1} parent=1 // pred_check_branch
      %110 = sbr.rel (0) target = $region57
    $region56: #{tpu_custom_call.1} parent=1 // pred_region
      _
    $region57: #{tpu_custom_call.1} parent=1 // pred_fallthru
      _
    // Predicated region
    $region58: #{tpu_custom_call.1} parent=1 // pred_check
      _
    $region59: #{tpu_custom_call.1} parent=1 // pred_check_branch
      %112 = sbr.rel (0) target = $region61
    $region60: #{tpu_custom_call.1} parent=1 // pred_region
      _
    $region61: #{tpu_custom_call.1} parent=1 // pred_fallthru
      _
    // Predicated region
    $region62: #{tpu_custom_call.1} parent=1 // pred_check
      _
    $region63: #{tpu_custom_call.1} parent=1 // pred_check_branch
      %114 = sbr.rel (0) target = $region65
    $region64: #{tpu_custom_call.1} parent=1 // pred_region
      _
    $region65: #{tpu_custom_call.1} parent=1 // pred_fallthru
      _
    // Predicated region
    $region66: #{tpu_custom_call.1} parent=1 // pred_check
      _
    $region67: #{tpu_custom_call.1} parent=1 // pred_check_branch
      %116 = sbr.rel (0) target = $region69
    $region68: #{tpu_custom_call.1} parent=1 // pred_region
      _
    $region69: #{tpu_custom_call.1} parent=1 // pred_fallthru
      _
    // Predicated region
    $region70: #{tpu_custom_call.1} parent=1 // pred_check
      _
    $region71: #{tpu_custom_call.1} parent=1 // pred_check_branch
      %118 = sbr.rel (0) target = $region73
    $region72: #{tpu_custom_call.1} parent=1 // pred_region
      _
    $region73: #{tpu_custom_call.1} parent=1 // pred_fallthru
      _
    // Predicated region
    $region74: #{tpu_custom_call.1} parent=1 // pred_check
      _
    $region75: #{tpu_custom_call.1} parent=1 // pred_check_branch
      %120 = sbr.rel (0) target = $region77
    $region76: #{tpu_custom_call.1} parent=1 // pred_region
      _
    $region77: #{tpu_custom_call.1} parent=1 // pred_fallthru
      _
    // Predicated region
    $region78: #{tpu_custom_call.1} parent=1 // pred_check
      _
    $region79: #{tpu_custom_call.1} parent=1 // pred_check_branch
      %122 = sbr.rel (0) target = $region81
    $region80: #{tpu_custom_call.1} parent=1 // pred_region
      _
    $region81: #{tpu_custom_call.1} parent=1 // pred_fallthru
      _
    // Predicated region
    $region82: #{tpu_custom_call.1} parent=1 // pred_check
      _
    $region83: #{tpu_custom_call.1} parent=1 // pred_check_branch
      %124 = sbr.rel (0) target = $region85
    $region84: #{tpu_custom_call.1} parent=1 // pred_region
      _
    $region85: #{tpu_custom_call.1} parent=1 // pred_fallthru
      _
    // Predicated region
    $region86: #{tpu_custom_call.1} parent=1 // pred_check
      _
    $region87: #{tpu_custom_call.1} parent=1 // pred_check_branch
      %126 = sbr.rel (0) target = $region89
    $region88: #{tpu_custom_call.1} parent=1 // pred_region
      _
    $region89: #{tpu_custom_call.1} parent=1 // pred_fallthru
      _
    // Predicated region
    $region90: #{tpu_custom_call.1} parent=1 // pred_check
      _
    $region91: #{tpu_custom_call.1} parent=1 // pred_check_branch
      %128 = sbr.rel (0) target = $region93
    $region92: #{tpu_custom_call.1} parent=1 // pred_region
      _
    $region93: #{tpu_custom_call.1} parent=1 // pred_fallthru
      _
    // Predicated region
    $region94: #{tpu_custom_call.1} parent=1 // pred_check
      _
    $region95: #{tpu_custom_call.1} parent=1 // pred_check_branch
      %130 = sbr.rel (0) target = $region97
    $region96: #{tpu_custom_call.1} parent=1 // pred_region
      _
    $region97: #{tpu_custom_call.1} parent=1 // pred_fallthru
      _
    // Predicated region
    $region98: #{tpu_custom_call.1} parent=1 // pred_check
      _
    $region99: #{tpu_custom_call.1} parent=1 // pred_check_branch
      %132 = sbr.rel (0) target = $region101
    $region100: #{tpu_custom_call.1} parent=1 // pred_region
      _
    $region101: #{tpu_custom_call.1} parent=1 // pred_fallthru
      _
    // Predicated region
    $region102: #{tpu_custom_call.1} parent=1 // pred_check
      _
    $region103: #{tpu_custom_call.1} parent=1 // pred_check_branch
      %134 = sbr.rel (0) target = $region105
    $region104: #{tpu_custom_call.1} parent=1 // pred_region
      _
    $region105: #{tpu_custom_call.1} parent=1 // pred_fallthru
      _
    // Predicated region
    $region106: #{tpu_custom_call.1} parent=1 // pred_check
      _
    $region107: #{tpu_custom_call.1} parent=1 // pred_check_branch
      %136 = sbr.rel (0) target = $region109
    $region108: #{tpu_custom_call.1} parent=1 // pred_region
      _
    $region109: #{tpu_custom_call.1} parent=1 // pred_fallthru
      _
    // Predicated region
    $region110: #{tpu_custom_call.1} parent=1 // pred_check
      _
    $region111: #{tpu_custom_call.1} parent=1 // pred_check_branch
      %138 = sbr.rel (0) target = $region113
    $region112: #{tpu_custom_call.1} parent=1 // pred_region
      _
    $region113: #{tpu_custom_call.1} parent=1 // pred_fallthru
      _
    // Predicated region
    $region114: #{tpu_custom_call.1} parent=1 // pred_check
      _
    $region115: #{tpu_custom_call.1} parent=1 // pred_check_branch
      %140 = sbr.rel (0) target = $region117
    $region116: #{tpu_custom_call.1} parent=1 // pred_region
      _
    $region117: #{tpu_custom_call.1} parent=1 // pred_fallthru
      _
    // Predicated region
    $region118: #{tpu_custom_call.1} parent=1 // pred_check
      _
    $region119: #{tpu_custom_call.1} parent=1 // pred_check_branch
      %142 = sbr.rel (0) target = $region121
    $region120: #{tpu_custom_call.1} parent=1 // pred_region
      _
    $region121: #{tpu_custom_call.1} parent=1 // pred_fallthru
      _
    // Predicated region
    $region122: #{tpu_custom_call.1} parent=1 // pred_check
      _
    $region123: #{tpu_custom_call.1} parent=1 // pred_check_branch
      %144 = sbr.rel (0) target = $region125
    $region124: #{tpu_custom_call.1} parent=1 // pred_region
      _
    $region125: #{tpu_custom_call.1} parent=1 // pred_fallthru
      _
    // Predicated region
    $region126: #{tpu_custom_call.1} parent=1 // pred_check
      _
    $region127: #{tpu_custom_call.1} parent=1 // pred_check_branch
      %146 = sbr.rel (0) target = $region129
    $region128: #{tpu_custom_call.1} parent=1 // pred_region
      _
    $region129: #{tpu_custom_call.1} parent=1 // pred_fallthru
      _
    // Predicated region
    $region130: #{tpu_custom_call.1} parent=1 // pred_check
      _
    $region131: #{tpu_custom_call.1} parent=1 // pred_check_branch
      %148 = sbr.rel (0) target = $region133
    $region132: #{tpu_custom_call.1} parent=1 // pred_region
      _
    $region133: #{tpu_custom_call.1} parent=1 // pred_fallthru
      _
    // Predicated region
    $region134: #{tpu_custom_call.1} parent=1 // pred_check
      _
    $region135: #{tpu_custom_call.1} parent=1 // pred_check_branch
      %150 = sbr.rel (0) target = $region137
    $region136: #{tpu_custom_call.1} parent=1 // pred_region
      _
    $region137: #{tpu_custom_call.1} parent=1 // pred_fallthru
      _
    // Predicated region
    $region138: #{tpu_custom_call.1} parent=1 // pred_check
      _
    $region139: #{tpu_custom_call.1} parent=1 // pred_check_branch
      %152 = sbr.rel (0) target = $region141
    $region140: #{tpu_custom_call.1} parent=1 // pred_region
      _
    $region141: #{tpu_custom_call.1} parent=1 // pred_fallthru
      _
    // Predicated region
    $region142: #{tpu_custom_call.1} parent=1 // pred_check
      _
    $region143: #{tpu_custom_call.1} parent=1 // pred_check_branch
      %154 = sbr.rel (0) target = $region145
    $region144: #{tpu_custom_call.1} parent=1 // pred_region
      _
    $region145: #{tpu_custom_call.1} parent=1 // pred_fallthru
      _
    // Predicated region
    $region146: #{tpu_custom_call.1} parent=1 // pred_check
      _
    $region147: #{tpu_custom_call.1} parent=1 // pred_check_branch
      %156 = sbr.rel (0) target = $region149
    $region148: #{tpu_custom_call.1} parent=1 // pred_region
      _
    $region149: #{tpu_custom_call.1} parent=1 // pred_fallthru
      _
    // Predicated region
    $region150: #{tpu_custom_call.1} parent=1 // pred_check
      _
    $region151: #{tpu_custom_call.1} parent=1 // pred_check_branch
      %158 = sbr.rel (0) target = $region153
    $region152: #{tpu_custom_call.1} parent=1 // pred_region
      _
    $region153: #{tpu_custom_call.1} parent=1 // pred_fallthru
      _
    %v160 = vld [vmem:[%s1] sm:$0xff]
    %v161 = vld [vmem:[%s1 + $0x8] sm:$0xff]
    %v162 = vld [vmem:[%s1 + $0x10] sm:$0xff]
    %v163 = vld [vmem:[%s1 + $0x18] sm:$0xff]
    %v164 = vld [vmem:[%s1 + $0x20] sm:$0xff]
    %v165 = vld [vmem:[%s1 + $0x28] sm:$0xff]
    %v166 = vld [vmem:[%s27] sm:$0xff]
    %v167 = vld [vmem:[%s27 + $0x8] sm:$0xff]
    %v168 = vld [vmem:[%s27 + $0x10] sm:$0xff]
    %v169 = vld [vmem:[%s27 + $0x18] sm:$0xff]
    %v170 = vld [vmem:[%s27 + $0x20] sm:$0xff]
    %v171 = vld [vmem:[%s27 + $0x28] sm:$0xff]
    %v172 = vld [vmem:[%s27 + $0x30] sm:$0xff]
    %v173 = vld [vmem:[%s27 + $0x38] sm:$0xff]
    %v174 = vld [vmem:[%s27 + $0x40] sm:$0xff]
    %v175 = vld [vmem:[%s27 + $0x48] sm:$0xff]
    %v176 = vld [vmem:[%s27 + $0x50] sm:$0xff]
    %v177 = vld [vmem:[%s27 + $0x58] sm:$0xff]
    %v178 = vld [vmem:[%s27 + $0x60] sm:$0xff]
    %v179 = vld [vmem:[%s27 + $0x68] sm:$0xff]
    %v180 = vld [vmem:[%s27 + $0x70] sm:$0xff]
    %v181 = vld [vmem:[%s27 + $0x78] sm:$0xff]
    %v182 = vld [vmem:[%s27 + $0x80] sm:$0xff]
    %v183 = vld [vmem:[%s27 + $0x88] sm:$0xff]
    %v184 = vld [vmem:[%s27 + $0x90] sm:$0xff]
    %v185 = vld [vmem:[%s27 + $0x98] sm:$0xff]
    %v186 = vld [vmem:[%s27 + $0xa0] sm:$0xff]
    %v187 = vld [vmem:[%s27 + $0xa8] sm:$0xff]
    %v188 = vld [vmem:[%s27 + $0xb0] sm:$0xff]
    %v189 = vld [vmem:[%s27 + $0xb8] sm:$0xff]
    %v190 = vld [vmem:[%s27 + $0xc0] sm:$0xff]
    %v191 = vld [vmem:[%s27 + $0xc8] sm:$0xff]
    %v192 = vld [vmem:[%s27 + $0xd0] sm:$0xff]
    %v193 = vld [vmem:[%s27 + $0xd8] sm:$0xff]
    %v194 = vld [vmem:[%s27 + $0xe0] sm:$0xff]
    %v195 = vld [vmem:[%s27 + $0xe8] sm:$0xff]
    %v196 = vld [vmem:[%s27 + $0xf0] sm:$0xff]
    %v197 = vld [vmem:[%s27 + $0xf8] sm:$0xff]
    %v198 = vld [vmem:[%s27 + $0x100] sm:$0xff]
    %v199 = vld [vmem:[%s27 + $0x108] sm:$0xff]
    %v200 = vld [vmem:[%s27 + $0x110] sm:$0xff]
    %v201 = vld [vmem:[%s27 + $0x118] sm:$0xff]
    %v202 = vld [vmem:[%s27 + $0x120] sm:$0xff]
    %v203 = vld [vmem:[%s27 + $0x128] sm:$0xf]
    %v204 = vld [vmem:[%s29] sm:$0x1]
    %v206 = vlaneseq
    %v207 = vshrl.u32 %v206, 7
    %v208 = vsub.s32 0, %v207
    %v209 = vrot.slane %v204, %v208
    %vm211 = vcmask 359424
    %v213 = vsel %vm211, %v162, 0
    %v216 = vsel %vm211, %v165, 0
    %vm218 = vcmask 1043456
    %v220 = vsel %vm218, %v203, 0
    %222 = vmatprep.subr.mxu0 0.0
    %223 = vmatpush1.msra.mxu0 %v166
    %224 = vmatprep.subr.mxu0 0.0
    %225 = vmatpush1.msra.mxu0 %v167
    %226 = vmatprep.subr.mxu0 0.0
    %227 = vmatpush1.msra.mxu0 %v168
    %228 = vmatprep.subr.mxu0 0.0
    %229 = vmatpush1.msra.mxu0 %v169
    %230 = vmatprep.subr.mxu0 0.0
    %231 = vmatpush1.msra.mxu0 %v170
    %232 = vmatprep.subr.mxu0 0.0
    %233 = vmatpush1.msra.mxu0 %v171
    %234 = vmatprep.subr.mxu0 0.0
    %235 = vmatpush1.msra.mxu0 %v172
    %236 = vmatprep.subr.mxu0 0.0
    %237 = vmatpush1.msra.mxu0 %v173
    %238 = vmatprep.subr.mxu0 0.0
    %239 = vmatpush1.msra.mxu0 %v174
    %240 = vmatprep.subr.mxu0 0.0
    %241 = vmatpush1.msra.mxu0 %v175
    %242 = vmatprep.subr.mxu0 0.0
    %243 = vmatpush1.msra.mxu0 %v176
    %244 = vmatprep.subr.mxu0 0.0
    %245 = vmatpush1.msra.mxu0 %v177
    %246 = vmatprep.subr.mxu0 0.0
    %247 = vmatpush1.msra.mxu0 %v178
    %248 = vmatprep.subr.mxu0 0.0
    %249 = vmatpush1.msra.mxu0 %v179
    %250 = vmatprep.subr.mxu0 0.0
    %251 = vmatpush1.msra.mxu0 %v180
    %252 = vmatprep.subr.mxu0 0.0
    %253 = vmatpush1.msra.mxu0 %v181
    %254 = vmatprep.subr.mxu0 0.0
    %255 = vmatpush1.msra.mxu0 %v182
    %256 = vmatprep.subr.mxu0 0.0
    %257 = vmatpush1.msra.mxu0 %v183
    %258 = vmatprep.subr.mxu0 0.0
    %259 = vmatpush1.msra.mxu0 %v184
    %260 = vmatprep.subr.mxu0 0.0
    %261 = vmatpush1.msra.mxu0 %v185
    %262 = vmatprep.subr.mxu0 0.0
    %263 = vmatpush1.msra.mxu0 %v186
    %264 = vmatprep.subr.mxu0 0.0
    %265 = vmatpush1.msra.mxu0 %v187
    %266 = vmatprep.subr.mxu0 0.0
    %267 = vmatpush1.msra.mxu0 %v188
    %268 = vmatprep.subr.mxu0 0.0
    %269 = vmatpush1.msra.mxu0 %v189
    %270 = vmatprep.subr.mxu0 0.0
    %271 = vmatpush1.msra.mxu0 %v190
    %272 = vmatprep.subr.mxu0 0.0
    %273 = vmatpush1.msra.mxu0 %v191
    %274 = vmatprep.subr.mxu0 0.0
    %275 = vmatpush1.msra.mxu0 %v192
    %276 = vmatprep.subr.mxu0 0.0
    %277 = vmatpush1.msra.mxu0 %v193
    %278 = vmatprep.subr.mxu0 0.0
    %279 = vmatpush1.msra.mxu0 %v194
    %280 = vmatprep.subr.mxu0 0.0
    %281 = vmatpush1.msra.mxu0 %v195
    %282 = vmatprep.subr.mxu0 0.0
    %283 = vmatpush1.msra.mxu0 %v196
    %284 = vmatprep.subr.mxu0 0.0
    %285 = vmatpush1.msra.mxu0 %v197
    %286 = vmatprep.mubr.f32.mxu0 %v161
    %287 = vmatmul.mubr.f32.gmra.mrb[0].mxu0 %v160
    %v288 = vpop.f32.mrb[0].mxu0
    %v289 = vadd.f32 %v209, %v288
    %v290 = vpop.f32.mrb[0].mxu0
    %291 = vmatprep.mubr.f32.mxu0 %v164
    %292 = vmatmul.mubr.f32.gmra.mrb[0].mxu0 %v163
    %v293 = vpop.f32.mrb[0].mxu0
    %v294 = vadd.f32 %v209, %v293
    %v295 = vpop.f32.mrb[0].mxu0
    %296 = vdwg.mxu0
    %297 = vmatprep.subr.mxu0 0.0
    %298 = vmatpush1.msra.mxu0 %v198
    %299 = vmatprep.subr.mxu0 0.0
    %300 = vmatpush1.msra.mxu0 %v199
    %301 = vmatprep.subr.mxu0 0.0
    %302 = vmatpush1.msra.mxu0 %v200
    %303 = vmatprep.subr.mxu0 0.0
    %304 = vmatpush1.msra.mxu0 %v201
    %305 = vmatprep.subr.mxu0 0.0
    %306 = vmatpush1.msra.mxu0 %v202
    %307 = vmatprep.subr.mxu0 0.0
    %308 = vmatpush1.msra.mxu0 %v220
    %309 = vmatprep.subr.mxu0 0.0
    %310 = vmatpush1.msra.mxu0 0.0
    %311 = vmatprep.subr.mxu0 0.0
    %312 = vmatpush1.msra.mxu0 0.0
    %313 = vmatprep.subr.mxu0 0.0
    %314 = vmatpush1.msra.mxu0 0.0
    %315 = vmatprep.subr.mxu0 0.0
    %316 = vmatpush1.msra.mxu0 0.0
    %317 = vmatprep.subr.mxu0 0.0
    %318 = vmatpush1.msra.mxu0 0.0
    %319 = vmatprep.subr.mxu0 0.0
    %320 = vmatpush1.msra.mxu0 0.0
    %321 = vmatprep.subr.mxu0 0.0
    %322 = vmatpush1.msra.mxu0 0.0
    %323 = vmatprep.subr.mxu0 0.0
    %324 = vmatpush1.msra.mxu0 0.0
    %325 = vmatprep.subr.mxu0 0.0
    %326 = vmatpush1.msra.mxu0 0.0
    %327 = vmatprep.subr.mxu0 0.0
    %328 = vmatpush1.msra.mxu0 0.0
    %329 = vmatprep.subr.mxu0 0.0
    %330 = vmatpush1.msra.mxu0 0.0
    %331 = vmatprep.subr.mxu0 0.0
    %332 = vmatpush1.msra.mxu0 0.0
    %333 = vmatprep.subr.mxu0 0.0
    %334 = vmatpush1.msra.mxu0 0.0
    %335 = vmatprep.subr.mxu0 0.0
    %336 = vmatpush1.msra.mxu0 0.0
    %337 = vmatprep.subr.mxu0 0.0
    %338 = vmatpush1.msra.mxu0 0.0
    %339 = vmatprep.subr.mxu0 0.0
    %340 = vmatpush1.msra.mxu0 0.0
    %341 = vmatprep.subr.mxu0 0.0
    %342 = vmatpush1.msra.mxu0 0.0
    %343 = vmatprep.subr.mxu0 0.0
    %344 = vmatpush1.msra.mxu0 0.0
    %345 = vmatprep.subr.mxu0 0.0
    %346 = vmatpush1.msra.mxu0 0.0
    %347 = vmatprep.subr.mxu0 0.0
    %348 = vmatpush1.msra.mxu0 0.0
    %349 = vmatprep.subr.mxu0 0.0
    %350 = vmatpush1.msra.mxu0 0.0
    %351 = vmatprep.subr.mxu0 0.0
    %352 = vmatpush1.msra.mxu0 0.0
    %353 = vmatprep.subr.mxu0 0.0
    %354 = vmatpush1.msra.mxu0 0.0
    %355 = vmatprep.subr.mxu0 0.0
    %356 = vmatpush1.msra.mxu0 0.0
    %357 = vmatprep.subr.mxu0 0.0
    %358 = vmatpush1.msra.mxu0 0.0
    %359 = vmatprep.subr.mxu0 0.0
    %360 = vmatpush1.msra.mxu0 0.0
    %361 = vmatprep.mubr.f32.mxu0 0.0
    %362 = vmatmul.mubr.f32.gmra.mrb[0].mxu0 %v213
    %v363 = vpop.f32.mrb[0].mxu0
    %v364 = vadd.f32 %v289, %v363
    %v365 = vpop.f32.mrb[0].mxu0
    %366 = vmatprep.mubr.f32.mxu0 0.0
    %367 = vmatmul.mubr.f32.gmra.mrb[0].mxu0 %v216
    %v368 = vpop.f32.mrb[0].mxu0
    %v369 = vadd.f32 %v294, %v368
    %v370 = vpop.f32.mrb[0].mxu0
    %371 = vdwg.mxu0
    %v372 = vld [vmem:[%s31] sm:$0x1]
    %v373 = vld [vmem:[%s33] sm:$0x1]
    %vm374 = vcmask 261120
    %v375 = vsel %vm374, %v364, 0.0
    %376 = vadd.xlane.f32.xlu0 %v375
    %v377 = vpop.xlane.xlu0 %376
    %v378 = vsel %vm374, %v369, 0.0
    %379 = vadd.xlane.f32.xlu0 %v378
    %v380 = vpop.xlane.xlu0 %379
    %v381 = vrcp.pop 32.0
    %v382 = vmul.f32 %v377, %v381
    %v383 = vmul.f32 %v380, %v381
    %v384 = vsub.f32 %v364, %v382
    %v385 = vsub.f32 %v369, %v383
    %v386 = vmul.f32 %v384, %v384
    %v387 = vmul.f32 %v385, %v385
    %v388 = vsel %vm374, %v386, 0.0
    %389 = vadd.xlane.f32.xlu0 %v388
    %v390 = vpop.xlane.xlu0 %389
    %v391 = vsel %vm374, %v387, 0.0
    %392 = vadd.xlane.f32.xlu0 %v391
    %v393 = vpop.xlane.xlu0 %392
    %v394 = vmul.f32 %v390, 0.032258064
    %v395 = vmul.f32 %v393, 0.032258064
    %v397 = vlaneseq
    %v398 = vshrl.u32 %v397, 7
    %v399 = vsub.s32 0, %v398
    %v400 = vrot.slane %v372, %v399
    %v402 = vmul.f32 %v400, %v384
    %v403 = vmul.f32 %v400, %v385
    %v404 = vadd.f32 %v394, 1e-06
    %v405 = vadd.f32 %v395, 1e-06
    %v406 = vrsqrt.pop %v404
    %v407 = vrsqrt.pop %v405
    %v408 = vmul.f32 %v402, %v406
    %v409 = vmul.f32 %v403, %v407
    %v411 = vlaneseq
    %v412 = vshrl.u32 %v411, 7
    %v413 = vsub.s32 0, %v412
    %v414 = vrot.slane %v373, %v413
    %v416 = vadd.f32 %v408, %v414
    %v417 = vadd.f32 %v409, %v414
    %v418 = vld [vmem:[%s5] sm:$0xff]
    %v419 = vld [vmem:[%s41] sm:$0x1]
    %v420 = vld [vmem:[%s43] sm:$0x1]
    %v421 = vsel %vm374, %v418, 0.0
    %422 = vadd.xlane.f32.xlu0 %v421
    %v423 = vpop.xlane.xlu0 %422
    %v424 = vmul.f32 %v423, %v381
    %v425 = vsub.f32 %v418, %v424
    %v426 = vmul.f32 %v425, %v425
    %v427 = vsel %vm374, %v426, 0.0
    %428 = vadd.xlane.f32.xlu0 %v427
    %v429 = vpop.xlane.xlu0 %428
    %v430 = vmul.f32 %v429, 0.032258064
    %v432 = vlaneseq
    %v433 = vshrl.u32 %v432, 7
    %v434 = vsub.s32 0, %v433
    %v435 = vrot.slane %v419, %v434
    %v437 = vmul.f32 %v435, %v425
    %v438 = vadd.f32 %v430, 1e-06
    %v439 = vrsqrt.pop %v438
    %v440 = vmul.f32 %v437, %v439
    %v442 = vlaneseq
    %v443 = vshrl.u32 %v442, 7
    %v444 = vsub.s32 0, %v443
    %v445 = vrot.slane %v420, %v444
    %v447 = vadd.f32 %v440, %v445
    %v448 = vld [vmem:[%s3] sm:$0x3]
    %v449 = vld [vmem:[%s35] sm:$0xff]
    %v450 = vld [vmem:[%s35 + $0x8] sm:$0xff]
    %v451 = vld [vmem:[%s35 + $0x10] sm:$0xff]
    %v452 = vld [vmem:[%s35 + $0x18] sm:$0xff]
    %v453 = vld [vmem:[%s35 + $0x20] sm:$0xff]
    %v454 = vld [vmem:[%s35 + $0x28] sm:$0xff]
    %v455 = vld [vmem:[%s35 + $0x30] sm:$0xff]
    %v456 = vld [vmem:[%s35 + $0x38] sm:$0xff]
    %vm457 = vcmask 523264
    %v459 = vsel %vm457, %v448, 0
    %461 = vmatprep.subr.mxu0 0.0
    %462 = vmatpush1.msra.mxu0 %v449
    %463 = vmatprep.subr.mxu0 0.0
    %464 = vmatpush1.msra.mxu0 %v450
    %465 = vmatprep.subr.mxu0 0.0
    %466 = vmatpush1.msra.mxu0 %v451
    %467 = vmatprep.subr.mxu0 0.0
    %468 = vmatpush1.msra.mxu0 %v452
    %469 = vmatprep.subr.mxu0 0.0
    %470 = vmatpush1.msra.mxu0 %v453
    %471 = vmatprep.subr.mxu0 0.0
    %472 = vmatpush1.msra.mxu0 %v454
    %473 = vmatprep.subr.mxu0 0.0
    %474 = vmatpush1.msra.mxu0 %v455
    %475 = vmatprep.subr.mxu0 0.0
    %476 = vmatpush1.msra.mxu0 %v456
    %477 = vmatprep.subr.mxu0 0.0
    %478 = vmatpush1.msra.mxu0 0.0
    %479 = vmatprep.subr.mxu0 0.0
    %480 = vmatpush1.msra.mxu0 0.0
    %481 = vmatprep.subr.mxu0 0.0
    %482 = vmatpush1.msra.mxu0 0.0
    %483 = vmatprep.subr.mxu0 0.0
    %484 = vmatpush1.msra.mxu0 0.0
    %485 = vmatprep.subr.mxu0 0.0
    %486 = vmatpush1.msra.mxu0 0.0
    %487 = vmatprep.subr.mxu0 0.0
    %488 = vmatpush1.msra.mxu0 0.0
    %489 = vmatprep.subr.mxu0 0.0
    %490 = vmatpush1.msra.mxu0 0.0
    %491 = vmatprep.subr.mxu0 0.0
    %492 = vmatpush1.msra.mxu0 0.0
    %493 = vmatprep.subr.mxu0 0.0
    %494 = vmatpush1.msra.mxu0 0.0
    %495 = vmatprep.subr.mxu0 0.0
    %496 = vmatpush1.msra.mxu0 0.0
    %497 = vmatprep.subr.mxu0 0.0
    %498 = vmatpush1.msra.mxu0 0.0
    %499 = vmatprep.subr.mxu0 0.0
    %500 = vmatpush1.msra.mxu0 0.0
    %501 = vmatprep.subr.mxu0 0.0
    %502 = vmatpush1.msra.mxu0 0.0
    %503 = vmatprep.subr.mxu0 0.0
    %504 = vmatpush1.msra.mxu0 0.0
    %505 = vmatprep.subr.mxu0 0.0
    %506 = vmatpush1.msra.mxu0 0.0
    %507 = vmatprep.subr.mxu0 0.0
    %508 = vmatpush1.msra.mxu0 0.0
    %509 = vmatprep.subr.mxu0 0.0
    %510 = vmatpush1.msra.mxu0 0.0
    %511 = vmatprep.subr.mxu0 0.0
    %512 = vmatpush1.msra.mxu0 0.0
    %513 = vmatprep.subr.mxu0 0.0
    %514 = vmatpush1.msra.mxu0 0.0
    %515 = vmatprep.subr.mxu0 0.0
    %516 = vmatpush1.msra.mxu0 0.0
    %517 = vmatprep.subr.mxu0 0.0
    %518 = vmatpush1.msra.mxu0 0.0
    %519 = vmatprep.subr.mxu0 0.0
    %520 = vmatpush1.msra.mxu0 0.0
    %521 = vmatprep.subr.mxu0 0.0
    %522 = vmatpush1.msra.mxu0 0.0
    %523 = vmatprep.subr.mxu0 0.0
    %524 = vmatpush1.msra.mxu0 0.0
    %525 = vmatprep.mubr.f32.mxu0 0.0
    %526 = vmatmul.mubr.f32.gmra.mrb[0].mxu0 %v459
    %v527 = vpop.f32.mrb[0].mxu0
    %v528 = vadd.f32 0.0, %v527
    %v529 = vpop.f32.mrb[0].mxu0
    %530 = vdwg.mxu0
    %v531 = vld [vmem:[%s37] sm:$0x1]
    %v532 = vld [vmem:[%s39] sm:$0x1]
    %vm533 = vcmask 254976
    %v534 = vsel %vm533, %v528, 0.0
    %535 = vadd.xlane.f32.xlu0 %v534
    %v536 = vpop.xlane.xlu0 %535
    %v537 = vmul.f32 %v536, %v381
    %v538 = vsub.f32 %v528, %v537
    %v539 = vmul.f32 %v538, %v538
    %v540 = vsel %vm533, %v539, 0.0
    %541 = vadd.xlane.f32.xlu0 %v540
    %v542 = vpop.xlane.xlu0 %541
    %v543 = vmul.f32 %v542, 0.032258064
    %v545 = vlaneseq
    %v546 = vshrl.u32 %v545, 7
    %v547 = vsub.s32 0, %v546
    %v548 = vrot.slane %v531, %v547
    %v550 = vmul.f32 %v548, %v538
    %v551 = vadd.f32 %v543, 1e-06
    %v552 = vrsqrt.pop %v551
    %v553 = vmul.f32 %v550, %v552
    %v555 = vlaneseq
    %v556 = vshrl.u32 %v555, 7
    %v557 = vsub.s32 0, %v556
    %v558 = vrot.slane %v532, %v557
    %v560 = vadd.f32 %v553, %v558
    %v561 = vld [vmem:[%s7] sm:$0xff]
    %v562 = vld [vmem:[%s7 + $0x8] sm:$0xff]
    %v563 = vld [vmem:[%s7 + $0x10] sm:$0xff]
    %v564 = vld [vmem:[%s7 + $0x18] sm:$0xf]
    %v565 = vld [vmem:[%s9] sm:$0xff]
    %v566 = vld [vmem:[%s9 + $0x8] sm:$0xff]
    %v567 = vld [vmem:[%s9 + $0x10] sm:$0xff]
    %v568 = vld [vmem:[%s9 + $0x18] sm:$0xf]
    %vm569 = vcmask 130048
    %v571 = vsel %vm569, %v565, 0
    %v574 = vsel %vm569, %v566, 0
    %v577 = vsel %vm569, %v567, 0
    %v580 = vsel %vm569, %v568, 0
    %582 = vmatprep.subr.mxu0 0.0
    %583 = vmatpush1.msra.mxu0 %v416
    %584 = vmatprep.subr.mxu0 0.0
    %585 = vmatpush1.msra.mxu0 %v417
    %586 = vmatprep.subr.mxu0 0.0
    %587 = vmatpush1.msra.mxu0 0.0
    %588 = vmatprep.subr.mxu0 0.0
    %589 = vmatpush1.msra.mxu0 0.0
    %590 = vmatprep.subr.mxu0 0.0
    %591 = vmatpush1.msra.mxu0 0.0
    %592 = vmatprep.subr.mxu0 0.0
    %593 = vmatpush1.msra.mxu0 0.0
    %594 = vmatprep.subr.mxu0 0.0
    %595 = vmatpush1.msra.mxu0 0.0
    %596 = vmatprep.subr.mxu0 0.0
    %597 = vmatpush1.msra.mxu0 0.0
    %598 = vmatprep.subr.mxu0 0.0
    %599 = vmatpush1.msra.mxu0 0.0
    %600 = vmatprep.subr.mxu0 0.0
    %601 = vmatpush1.msra.mxu0 0.0
    %602 = vmatprep.subr.mxu0 0.0
    %603 = vmatpush1.msra.mxu0 0.0
    %604 = vmatprep.subr.mxu0 0.0
    %605 = vmatpush1.msra.mxu0 0.0
    %606 = vmatprep.subr.mxu0 0.0
    %607 = vmatpush1.msra.mxu0 0.0
    %608 = vmatprep.subr.mxu0 0.0
    %609 = vmatpush1.msra.mxu0 0.0
    %610 = vmatprep.subr.mxu0 0.0
    %611 = vmatpush1.msra.mxu0 0.0
    %612 = vmatprep.subr.mxu0 0.0
    %613 = vmatpush1.msra.mxu0 0.0
    %614 = vmatprep.subr.mxu0 0.0
    %615 = vmatpush1.msra.mxu0 0.0
    %616 = vmatprep.subr.mxu0 0.0
    %617 = vmatpush1.msra.mxu0 0.0
    %618 = vmatprep.subr.mxu0 0.0
    %619 = vmatpush1.msra.mxu0 0.0
    %620 = vmatprep.subr.mxu0 0.0
    %621 = vmatpush1.msra.mxu0 0.0
    %622 = vmatprep.subr.mxu0 0.0
    %623 = vmatpush1.msra.mxu0 0.0
    %624 = vmatprep.subr.mxu0 0.0
    %625 = vmatpush1.msra.mxu0 0.0
    %626 = vmatprep.subr.mxu0 0.0
    %627 = vmatpush1.msra.mxu0 0.0
    %628 = vmatprep.subr.mxu0 0.0
    %629 = vmatpush1.msra.mxu0 0.0
    %630 = vmatprep.subr.mxu0 0.0
    %631 = vmatpush1.msra.mxu0 0.0
    %632 = vmatprep.subr.mxu0 0.0
    %633 = vmatpush1.msra.mxu0 0.0
    %634 = vmatprep.subr.mxu0 0.0
    %635 = vmatpush1.msra.mxu0 0.0
    %636 = vmatprep.subr.mxu0 0.0
    %637 = vmatpush1.msra.mxu0 0.0
    %638 = vmatprep.subr.mxu0 0.0
    %639 = vmatpush1.msra.mxu0 0.0
    %640 = vmatprep.subr.mxu0 0.0
    %641 = vmatpush1.msra.mxu0 0.0
    %642 = vmatprep.subr.mxu0 0.0
    %643 = vmatpush1.msra.mxu0 0.0
    %644 = vmatprep.subr.mxu0 0.0
    %645 = vmatpush1.msra.mxu0 0.0
    %646 = vmatprep.mubr.f32.mxu0 0.0
    %647 = vmatmul.mubr.f32.gmra.mrb[0].mxu0 %v571
    %v648 = vpop.f32.mrb[0].mxu0
    %v649 = vadd.f32 0.0, %v648
    %v650 = vpop.f32.mrb[0].mxu0
    %651 = vmatprep.mubr.f32.mxu0 0.0
    %652 = vmatmul.mubr.f32.gmra.mrb[0].mxu0 %v574
    %v653 = vpop.f32.mrb[0].mxu0
    %v654 = vadd.f32 0.0, %v653
    %v655 = vpop.f32.mrb[0].mxu0
    %656 = vmatprep.mubr.f32.mxu0 0.0
    %657 = vmatmul.mubr.f32.gmra.mrb[0].mxu0 %v577
    %v658 = vpop.f32.mrb[0].mxu0
    %v659 = vadd.f32 0.0, %v658
    %v660 = vpop.f32.mrb[0].mxu0
    %661 = vmatprep.mubr.f32.mxu0 0.0
    %662 = vmatmul.mubr.f32.gmra.mrb[0].mxu0 %v580
    %v663 = vpop.f32.mrb[0].mxu0
    %v664 = vadd.f32 0.0, %v663
    %v665 = vpop.f32.mrb[0].mxu0
    %666 = vdwg.mxu0
    %v667 = vadd.f32 %v561, %v649
    %v668 = vadd.f32 %v562, %v654
    %v669 = vadd.f32 %v563, %v659
    %v670 = vadd.f32 %v564, %v664
    %v671 = vld [vmem:[%s11] sm:$0xff]
    %v672 = vld [vmem:[%s11 + $0x8] sm:$0xff]
    %v673 = vld [vmem:[%s11 + $0x10] sm:$0xff]
    %v674 = vld [vmem:[%s11 + $0x18] sm:$0xf]
    %vm675 = vcmask 64512
    %v677 = vsel %vm675, %v671, 0
    %v680 = vsel %vm675, %v672, 0
    %v683 = vsel %vm675, %v673, 0
    %v686 = vsel %vm675, %v674, 0
    %688 = vmatprep.subr.mxu0 0.0
    %689 = vmatpush1.msra.mxu0 %v447
    %690 = vmatprep.subr.mxu0 0.0
    %691 = vmatpush1.msra.mxu0 0.0
    %692 = vmatprep.subr.mxu0 0.0
    %693 = vmatpush1.msra.mxu0 0.0
    %694 = vmatprep.subr.mxu0 0.0
    %695 = vmatpush1.msra.mxu0 0.0
    %696 = vmatprep.subr.mxu0 0.0
    %697 = vmatpush1.msra.mxu0 0.0
    %698 = vmatprep.subr.mxu0 0.0
    %699 = vmatpush1.msra.mxu0 0.0
    %700 = vmatprep.subr.mxu0 0.0
    %701 = vmatpush1.msra.mxu0 0.0
    %702 = vmatprep.subr.mxu0 0.0
    %703 = vmatpush1.msra.mxu0 0.0
    %704 = vmatprep.subr.mxu0 0.0
    %705 = vmatpush1.msra.mxu0 0.0
    %706 = vmatprep.subr.mxu0 0.0
    %707 = vmatpush1.msra.mxu0 0.0
    %708 = vmatprep.subr.mxu0 0.0
    %709 = vmatpush1.msra.mxu0 0.0
    %710 = vmatprep.subr.mxu0 0.0
    %711 = vmatpush1.msra.mxu0 0.0
    %712 = vmatprep.subr.mxu0 0.0
    %713 = vmatpush1.msra.mxu0 0.0
    %714 = vmatprep.subr.mxu0 0.0
    %715 = vmatpush1.msra.mxu0 0.0
    %716 = vmatprep.subr.mxu0 0.0
    %717 = vmatpush1.msra.mxu0 0.0
    %718 = vmatprep.subr.mxu0 0.0
    %719 = vmatpush1.msra.mxu0 0.0
    %720 = vmatprep.subr.mxu0 0.0
    %721 = vmatpush1.msra.mxu0 0.0
    %722 = vmatprep.subr.mxu0 0.0
    %723 = vmatpush1.msra.mxu0 0.0
    %724 = vmatprep.subr.mxu0 0.0
    %725 = vmatpush1.msra.mxu0 0.0
    %726 = vmatprep.subr.mxu0 0.0
    %727 = vmatpush1.msra.mxu0 0.0
    %728 = vmatprep.subr.mxu0 0.0
    %729 = vmatpush1.msra.mxu0 0.0
    %730 = vmatprep.subr.mxu0 0.0
    %731 = vmatpush1.msra.mxu0 0.0
    %732 = vmatprep.subr.mxu0 0.0
    %733 = vmatpush1.msra.mxu0 0.0
    %734 = vmatprep.subr.mxu0 0.0
    %735 = vmatpush1.msra.mxu0 0.0
    %736 = vmatprep.subr.mxu0 0.0
    %737 = vmatpush1.msra.mxu0 0.0
    %738 = vmatprep.subr.mxu0 0.0
    %739 = vmatpush1.msra.mxu0 0.0
    %740 = vmatprep.subr.mxu0 0.0
    %741 = vmatpush1.msra.mxu0 0.0
    %742 = vmatprep.subr.mxu0 0.0
    %743 = vmatpush1.msra.mxu0 0.0
    %744 = vmatprep.subr.mxu0 0.0
    %745 = vmatpush1.msra.mxu0 0.0
    %746 = vmatprep.subr.mxu0 0.0
    %747 = vmatpush1.msra.mxu0 0.0
    %748 = vmatprep.subr.mxu0 0.0
    %749 = vmatpush1.msra.mxu0 0.0
    %750 = vmatprep.subr.mxu0 0.0
    %751 = vmatpush1.msra.mxu0 0.0
    %752 = vmatprep.mubr.f32.mxu0 0.0
    %753 = vmatmul.mubr.f32.gmra.mrb[0].mxu0 %v677
    %v754 = vpop.f32.mrb[0].mxu0
    %v755 = vadd.f32 0.0, %v754
    %v756 = vpop.f32.mrb[0].mxu0
    %757 = vmatprep.mubr.f32.mxu0 0.0
    %758 = vmatmul.mubr.f32.gmra.mrb[0].mxu0 %v680
    %v759 = vpop.f32.mrb[0].mxu0
    %v760 = vadd.f32 0.0, %v759
    %v761 = vpop.f32.mrb[0].mxu0
    %762 = vmatprep.mubr.f32.mxu0 0.0
    %763 = vmatmul.mubr.f32.gmra.mrb[0].mxu0 %v683
    %v764 = vpop.f32.mrb[0].mxu0
    %v765 = vadd.f32 0.0, %v764
    %v766 = vpop.f32.mrb[0].mxu0
    %767 = vmatprep.mubr.f32.mxu0 0.0
    %768 = vmatmul.mubr.f32.gmra.mrb[0].mxu0 %v686
    %v769 = vpop.f32.mrb[0].mxu0
    %v770 = vadd.f32 0.0, %v769
    %v771 = vpop.f32.mrb[0].mxu0
    %772 = vdwg.mxu0
    %v773 = vadd.f32 %v667, %v755
    %v774 = vadd.f32 %v668, %v760
    %v775 = vadd.f32 %v669, %v765
    %v776 = vadd.f32 %v670, %v770
    %v777 = vld [vmem:[%s13] sm:$0xff]
    %v778 = vld [vmem:[%s13 + $0x8] sm:$0xff]
    %v779 = vld [vmem:[%s13 + $0x10] sm:$0xff]
    %v780 = vld [vmem:[%s13 + $0x18] sm:$0xf]
    %vm781 = vcmask 15360
    %v783 = vsel %vm781, %v777, 0
    %v786 = vsel %vm781, %v778, 0
    %v789 = vsel %vm781, %v779, 0
    %v792 = vsel %vm781, %v780, 0
    %vm794 = vcmask 1041408
    %v796 = vsel %vm794, %v560, 0
    %798 = vmatprep.subr.mxu0 0.0
    %799 = vmatpush1.msra.mxu0 %v796
    %800 = vmatprep.subr.mxu0 0.0
    %801 = vmatpush1.msra.mxu0 0.0
    %802 = vmatprep.subr.mxu0 0.0
    %803 = vmatpush1.msra.mxu0 0.0
    %804 = vmatprep.subr.mxu0 0.0
    %805 = vmatpush1.msra.mxu0 0.0
    %806 = vmatprep.subr.mxu0 0.0
    %807 = vmatpush1.msra.mxu0 0.0
    %808 = vmatprep.subr.mxu0 0.0
    %809 = vmatpush1.msra.mxu0 0.0
    %810 = vmatprep.subr.mxu0 0.0
    %811 = vmatpush1.msra.mxu0 0.0
    %812 = vmatprep.subr.mxu0 0.0
    %813 = vmatpush1.msra.mxu0 0.0
    %814 = vmatprep.subr.mxu0 0.0
    %815 = vmatpush1.msra.mxu0 0.0
    %816 = vmatprep.subr.mxu0 0.0
    %817 = vmatpush1.msra.mxu0 0.0
    %818 = vmatprep.subr.mxu0 0.0
    %819 = vmatpush1.msra.mxu0 0.0
    %820 = vmatprep.subr.mxu0 0.0
    %821 = vmatpush1.msra.mxu0 0.0
    %822 = vmatprep.subr.mxu0 0.0
    %823 = vmatpush1.msra.mxu0 0.0
    %824 = vmatprep.subr.mxu0 0.0
    %825 = vmatpush1.msra.mxu0 0.0
    %826 = vmatprep.subr.mxu0 0.0
    %827 = vmatpush1.msra.mxu0 0.0
    %828 = vmatprep.subr.mxu0 0.0
    %829 = vmatpush1.msra.mxu0 0.0
    %830 = vmatprep.subr.mxu0 0.0
    %831 = vmatpush1.msra.mxu0 0.0
    %832 = vmatprep.subr.mxu0 0.0
    %833 = vmatpush1.msra.mxu0 0.0
    %834 = vmatprep.subr.mxu0 0.0
    %835 = vmatpush1.msra.mxu0 0.0
    %836 = vmatprep.subr.mxu0 0.0
    %837 = vmatpush1.msra.mxu0 0.0
    %838 = vmatprep.subr.mxu0 0.0
    %839 = vmatpush1.msra.mxu0 0.0
    %840 = vmatprep.subr.mxu0 0.0
    %841 = vmatpush1.msra.mxu0 0.0
    %842 = vmatprep.subr.mxu0 0.0
    %843 = vmatpush1.msra.mxu0 0.0
    %844 = vmatprep.subr.mxu0 0.0
    %845 = vmatpush1.msra.mxu0 0.0
    %846 = vmatprep.subr.mxu0 0.0
    %847 = vmatpush1.msra.mxu0 0.0
    %848 = vmatprep.subr.mxu0 0.0
    %849 = vmatpush1.msra.mxu0 0.0
    %850 = vmatprep.subr.mxu0 0.0
    %851 = vmatpush1.msra.mxu0 0.0
    %852 = vmatprep.subr.mxu0 0.0
    %853 = vmatpush1.msra.mxu0 0.0
    %854 = vmatprep.subr.mxu0 0.0
    %855 = vmatpush1.msra.mxu0 0.0
    %856 = vmatprep.subr.mxu0 0.0
    %857 = vmatpush1.msra.mxu0 0.0
    %858 = vmatprep.subr.mxu0 0.0
    %859 = vmatpush1.msra.mxu0 0.0
    %860 = vmatprep.subr.mxu0 0.0
    %861 = vmatpush1.msra.mxu0 0.0
    %862 = vmatprep.mubr.f32.mxu0 0.0
    %863 = vmatmul.mubr.f32.gmra.mrb[0].mxu0 %v783
    %v864 = vpop.f32.mrb[0].mxu0
    %v865 = vadd.f32 0.0, %v864
    %v866 = vpop.f32.mrb[0].mxu0
    %867 = vmatprep.mubr.f32.mxu0 0.0
    %868 = vmatmul.mubr.f32.gmra.mrb[0].mxu0 %v786
    %v869 = vpop.f32.mrb[0].mxu0
    %v870 = vadd.f32 0.0, %v869
    %v871 = vpop.f32.mrb[0].mxu0
    %872 = vmatprep.mubr.f32.mxu0 0.0
    %873 = vmatmul.mubr.f32.gmra.mrb[0].mxu0 %v789
    %v874 = vpop.f32.mrb[0].mxu0
    %v875 = vadd.f32 0.0, %v874
    %v876 = vpop.f32.mrb[0].mxu0
    %877 = vmatprep.mubr.f32.mxu0 0.0
    %878 = vmatmul.mubr.f32.gmra.mrb[0].mxu0 %v792
    %v879 = vpop.f32.mrb[0].mxu0
    %v880 = vadd.f32 0.0, %v879
    %v881 = vpop.f32.mrb[0].mxu0
    %882 = vdwg.mxu0
    %v883 = vadd.f32 %v773, %v865
    %v884 = vadd.f32 %v774, %v870
    %v885 = vadd.f32 %v775, %v875
    %v886 = vadd.f32 %v776, %v880
    %v887 = vld [vmem:[%s15] sm:$0xff]
    %v888 = vld [vmem:[%s15 + $0x8] sm:$0xff]
    %v889 = vld [vmem:[%s15 + $0x10] sm:$0xff]
    %v890 = vld [vmem:[%s15 + $0x18] sm:$0xff]
    %v891 = vld [vmem:[%s15 + $0x20] sm:$0xff]
    %v892 = vld [vmem:[%s15 + $0x28] sm:$0xff]
    %v893 = vld [vmem:[%s15 + $0x30] sm:$0xff]
    %v894 = vld [vmem:[%s15 + $0x38] sm:$0xff]
    %v895 = vld [vmem:[%s15 + $0x40] sm:$0xff]
    %v896 = vld [vmem:[%s15 + $0x48] sm:$0xff]
    %v897 = vld [vmem:[%s15 + $0x50] sm:$0xff]
    %v898 = vld [vmem:[%s15 + $0x58] sm:$0xff]
    %v899 = vld [vmem:[%s15 + $0x60] sm:$0xff]
    %v900 = vld [vmem:[%s15 + $0x68] sm:$0xff]
    %v901 = vld [vmem:[%s15 + $0x70] sm:$0xff]
    %v902 = vld [vmem:[%s15 + $0x78] sm:$0xff]
    %v903 = vld [vmem:[%s15 + $0x80] sm:$0xff]
    %v904 = vld [vmem:[%s15 + $0x88] sm:$0xff]
    %v905 = vld [vmem:[%s15 + $0x90] sm:$0xff]
    %v906 = vld [vmem:[%s15 + $0x98] sm:$0xff]
    %v907 = vld [vmem:[%s15 + $0xa0] sm:$0xff]
    %v908 = vld [vmem:[%s15 + $0xa8] sm:$0xff]
    %v909 = vld [vmem:[%s15 + $0xb0] sm:$0xff]
    %v910 = vld [vmem:[%s15 + $0xb8] sm:$0xff]
    %v911 = vld [vmem:[%s15 + $0xc0] sm:$0xff]
    %v912 = vld [vmem:[%s15 + $0xc8] sm:$0xff]
    %v913 = vld [vmem:[%s15 + $0xd0] sm:$0xff]
    %v914 = vld [vmem:[%s15 + $0xd8] sm:$0xff]
    %v915 = vld [vmem:[%s15 + $0xe0] sm:$0xff]
    %v916 = vld [vmem:[%s15 + $0xe8] sm:$0xff]
    %v917 = vld [vmem:[%s15 + $0xf0] sm:$0xff]
    %v918 = vld [vmem:[%s15 + $0xf8] sm:$0xff]
    %v919 = vld [vmem:[%s17] sm:$0xff]
    %v920 = vld [vmem:[%s17 + $0x8] sm:$0xff]
    %v921 = vld [vmem:[%s17 + $0x10] sm:$0xff]
    %v922 = vld [vmem:[%s17 + $0x18] sm:$0xff]
    %v923 = vld [vmem:[%s17 + $0x20] sm:$0xff]
    %v924 = vld [vmem:[%s17 + $0x28] sm:$0xff]
    %v925 = vld [vmem:[%s17 + $0x30] sm:$0xff]
    %v926 = vld [vmem:[%s17 + $0x38] sm:$0xff]
    %v927 = vld [vmem:[%s17 + $0x40] sm:$0xff]
    %v928 = vld [vmem:[%s17 + $0x48] sm:$0xff]
    %v929 = vld [vmem:[%s17 + $0x50] sm:$0xff]
    %v930 = vld [vmem:[%s17 + $0x58] sm:$0xff]
    %v931 = vld [vmem:[%s17 + $0x60] sm:$0xff]
    %v932 = vld [vmem:[%s17 + $0x68] sm:$0xff]
    %v933 = vld [vmem:[%s17 + $0x70] sm:$0xff]
    %v934 = vld [vmem:[%s17 + $0x78] sm:$0xff]
    %v935 = vld [vmem:[%s17 + $0x80] sm:$0xff]
    %v936 = vld [vmem:[%s17 + $0x88] sm:$0xff]
    %v937 = vld [vmem:[%s17 + $0x90] sm:$0xff]
    %v938 = vld [vmem:[%s17 + $0x98] sm:$0xff]
    %v939 = vld [vmem:[%s17 + $0xa0] sm:$0xff]
    %v940 = vld [vmem:[%s17 + $0xa8] sm:$0xff]
    %v941 = vld [vmem:[%s17 + $0xb0] sm:$0xff]
    %v942 = vld [vmem:[%s17 + $0xb8] sm:$0xff]
    %v943 = vld [vmem:[%s17 + $0xc0] sm:$0xff]
    %v944 = vld [vmem:[%s17 + $0xc8] sm:$0xff]
    %v945 = vld [vmem:[%s17 + $0xd0] sm:$0xff]
    %v946 = vld [vmem:[%s17 + $0xd8] sm:$0xff]
    %v947 = vld [vmem:[%s17 + $0xe0] sm:$0xff]
    %v948 = vld [vmem:[%s17 + $0xe8] sm:$0xff]
    %v949 = vld [vmem:[%s17 + $0xf0] sm:$0xff]
    %v950 = vld [vmem:[%s17 + $0xf8] sm:$0xff]
    %v951 = vld [vmem:[%s19] sm:$0xff]
    %v952 = vld [vmem:[%s19 + $0x8] sm:$0xff]
    %v953 = vld [vmem:[%s19 + $0x10] sm:$0xff]
    %v954 = vld [vmem:[%s19 + $0x18] sm:$0xff]
    %v955 = vld [vmem:[%s19 + $0x20] sm:$0xff]
    %v956 = vld [vmem:[%s19 + $0x28] sm:$0xff]
    %v957 = vld [vmem:[%s19 + $0x30] sm:$0xff]
    %v958 = vld [vmem:[%s19 + $0x38] sm:$0xff]
    %v959 = vld [vmem:[%s19 + $0x40] sm:$0xff]
    %v960 = vld [vmem:[%s19 + $0x48] sm:$0xff]
    %v961 = vld [vmem:[%s19 + $0x50] sm:$0xff]
    %v962 = vld [vmem:[%s19 + $0x58] sm:$0xff]
    %v963 = vld [vmem:[%s19 + $0x60] sm:$0xff]
    %v964 = vld [vmem:[%s19 + $0x68] sm:$0xff]
    %v965 = vld [vmem:[%s19 + $0x70] sm:$0xff]
    %v966 = vld [vmem:[%s19 + $0x78] sm:$0xff]
    %v967 = vld [vmem:[%s19 + $0x80] sm:$0xff]
    %v968 = vld [vmem:[%s19 + $0x88] sm:$0xff]
    %v969 = vld [vmem:[%s19 + $0x90] sm:$0xff]
    %v970 = vld [vmem:[%s19 + $0x98] sm:$0xff]
    %v971 = vld [vmem:[%s19 + $0xa0] sm:$0xff]
    %v972 = vld [vmem:[%s19 + $0xa8] sm:$0xff]
    %v973 = vld [vmem:[%s19 + $0xb0] sm:$0xff]
    %v974 = vld [vmem:[%s19 + $0xb8] sm:$0xff]
    %v975 = vld [vmem:[%s19 + $0xc0] sm:$0xff]
    %v976 = vld [vmem:[%s19 + $0xc8] sm:$0xff]
    %v977 = vld [vmem:[%s19 + $0xd0] sm:$0xff]
    %v978 = vld [vmem:[%s19 + $0xd8] sm:$0xff]
    %v979 = vld [vmem:[%s19 + $0xe0] sm:$0xff]
    %v980 = vld [vmem:[%s19 + $0xe8] sm:$0xff]
    %v981 = vld [vmem:[%s19 + $0xf0] sm:$0xff]
    %v982 = vld [vmem:[%s19 + $0xf8] sm:$0xff]
    %v983 = vld [vmem:[%s21] sm:$0xff]
    %v984 = vld [vmem:[%s21 + $0x8] sm:$0xff]
    %v985 = vld [vmem:[%s23] sm:$0xff]
    %v986 = vld [vmem:[%s23 + $0x8] sm:$0xff]
    %v987 = vld [vmem:[%s23 + $0x10] sm:$0xff]
    %v988 = vld [vmem:[%s23 + $0x18] sm:$0xff]
    %v989 = vld [vmem:[%s23 + $0x20] sm:$0xff]
    %v990 = vld [vmem:[%s23 + $0x28] sm:$0xff]
    %v991 = vld [vmem:[%s23 + $0x30] sm:$0xf]
    %v992 = vld [vmem:[%s23 + $0x38] sm:$0xf]
    %v993 = vld [vmem:[%s45] sm:$0x1]
    %v994 = vld [vmem:[%s47] sm:$0x1]
    %v995 = vsel %vm374, %v883, 0.0
    %996 = vadd.xlane.f32.xlu0 %v995
    %v997 = vpop.xlane.xlu0 %996
    %v998 = vsel %vm374, %v884, 0.0
    %999 = vadd.xlane.f32.xlu0 %v998
    %v1000 = vpop.xlane.xlu0 %999
    %v1001 = vsel %vm374, %v885, 0.0
    %1002 = vadd.xlane.f32.xlu0 %v1001
    %v1003 = vpop.xlane.xlu0 %1002
    %vm1004 = vcmask 257024
    %v1005 = vsel %vm1004, %v886, 0.0
    %1006 = vadd.xlane.f32.xlu0 %v1005
    %v1007 = vpop.xlane.xlu0 %1006
    %v1008 = vmul.f32 %v997, %v381
    %v1009 = vmul.f32 %v1000, %v381
    %v1010 = vmul.f32 %v1003, %v381
    %v1011 = vmul.f32 %v1007, %v381
    %v1012 = vsub.f32 %v883, %v1008
    %v1013 = vsub.f32 %v884, %v1009
    %v1014 = vsub.f32 %v885, %v1010
    %v1015 = vsub.f32 %v886, %v1011
    %v1016 = vmul.f32 %v1012, %v1012
    %v1017 = vmul.f32 %v1013, %v1013
    %v1018 = vmul.f32 %v1014, %v1014
    %v1019 = vmul.f32 %v1015, %v1015
    %v1020 = vsel %vm374, %v1016, 0.0
    %1021 = vadd.xlane.f32.xlu0 %v1020
    %v1022 = vpop.xlane.xlu0 %1021
    %v1023 = vsel %vm374, %v1017, 0.0
    %1024 = vadd.xlane.f32.xlu0 %v1023
    %v1025 = vpop.xlane.xlu0 %1024
    %v1026 = vsel %vm374, %v1018, 0.0
    %1027 = vadd.xlane.f32.xlu0 %v1026
    %v1028 = vpop.xlane.xlu0 %1027
    %v1029 = vsel %vm1004, %v1019, 0.0
    %1030 = vadd.xlane.f32.xlu0 %v1029
    %v1031 = vpop.xlane.xlu0 %1030
    %v1032 = vmul.f32 %v1022, 0.032258064
    %v1033 = vmul.f32 %v1025, 0.032258064
    %v1034 = vmul.f32 %v1028, 0.032258064
    %v1035 = vmul.f32 %v1031, 0.032258064
    %v1036 = vlaneseq
    %v1037 = vshrl.u32 %v1036, 7
    %v1038 = vsub.s32 0, %v1037
    %v1039 = vrot.slane %v993, %v1038
    %v1040 = vmul.f32 %v1039, %v1012
    %v1041 = vmul.f32 %v1039, %v1013
    %v1042 = vmul.f32 %v1039, %v1014
    %v1043 = vmul.f32 %v1039, %v1015
    %v1044 = vadd.f32 %v1032, 1e-06
    %v1045 = vadd.f32 %v1033, 1e-06
    %v1046 = vadd.f32 %v1034, 1e-06
    %v1047 = vadd.f32 %v1035, 1e-06
    %v1048 = vrsqrt.pop %v1044
    %v1049 = vrsqrt.pop %v1045
    %v1050 = vrsqrt.pop %v1046
    %v1051 = vrsqrt.pop %v1047
    %v1052 = vmul.f32 %v1040, %v1048
    %v1053 = vmul.f32 %v1041, %v1049
    %v1054 = vmul.f32 %v1042, %v1050
    %v1055 = vmul.f32 %v1043, %v1051
    %v1056 = vlaneseq
    %v1057 = vshrl.u32 %v1056, 7
    %v1058 = vsub.s32 0, %v1057
    %v1059 = vrot.slane %v994, %v1058
    %v1060 = vadd.f32 %v1052, %v1059
    %v1061 = vadd.f32 %v1053, %v1059
    %v1062 = vadd.f32 %v1054, %v1059
    %v1063 = vadd.f32 %v1055, %v1059
    %v1064 = vld [vmem:[%s53] sm:$0xff]
    %v1065 = vld [vmem:[%s53 + $0x8] sm:$0xff]
    %v1066 = vld [vmem:[%s53 + $0x10] sm:$0xff]
    %v1067 = vld [vmem:[%s53 + $0x18] sm:$0xff]
    %v1068 = vld [vmem:[%s55] sm:$0x1]
    %v1069 = vlaneseq
    %v1070 = vshrl.u32 %v1069, 7
    %v1071 = vsub.s32 0, %v1070
    %v1072 = vrot.slane %v1068, %v1071
    %v1074 = vsel %vm374, %v1060, 0
    %v1077 = vsel %vm374, %v1061, 0
    %v1080 = vsel %vm374, %v1062, 0
    %v1083 = vsel %vm374, %v1063, 0
    %1085 = vmatprep.subr.mxu0 0.0
    %1086 = vmatpush1.msra.mxu0 %v1064
    %1087 = vmatprep.subr.mxu0 0.0
    %1088 = vmatpush1.msra.mxu0 %v1065
    %1089 = vmatprep.subr.mxu0 0.0
    %1090 = vmatpush1.msra.mxu0 %v1066
    %1091 = vmatprep.subr.mxu0 0.0
    %1092 = vmatpush1.msra.mxu0 %v1067
    %1093 = vmatprep.subr.mxu0 0.0
    %1094 = vmatpush1.msra.mxu0 0.0
    %1095 = vmatprep.subr.mxu0 0.0
    %1096 = vmatpush1.msra.mxu0 0.0
    %1097 = vmatprep.subr.mxu0 0.0
    %1098 = vmatpush1.msra.mxu0 0.0
    %1099 = vmatprep.subr.mxu0 0.0
    %1100 = vmatpush1.msra.mxu0 0.0
    %1101 = vmatprep.subr.mxu0 0.0
    %1102 = vmatpush1.msra.mxu0 0.0
    %1103 = vmatprep.subr.mxu0 0.0
    %1104 = vmatpush1.msra.mxu0 0.0
    %1105 = vmatprep.subr.mxu0 0.0
    %1106 = vmatpush1.msra.mxu0 0.0
    %1107 = vmatprep.subr.mxu0 0.0
    %1108 = vmatpush1.msra.mxu0 0.0
    %1109 = vmatprep.subr.mxu0 0.0
    %1110 = vmatpush1.msra.mxu0 0.0
    %1111 = vmatprep.subr.mxu0 0.0
    %1112 = vmatpush1.msra.mxu0 0.0
    %1113 = vmatprep.subr.mxu0 0.0
    %1114 = vmatpush1.msra.mxu0 0.0
    %1115 = vmatprep.subr.mxu0 0.0
    %1116 = vmatpush1.msra.mxu0 0.0
    %1117 = vmatprep.subr.mxu0 0.0
    %1118 = vmatpush1.msra.mxu0 0.0
    %1119 = vmatprep.subr.mxu0 0.0
    %1120 = vmatpush1.msra.mxu0 0.0
    %1121 = vmatprep.subr.mxu0 0.0
    %1122 = vmatpush1.msra.mxu0 0.0
    %1123 = vmatprep.subr.mxu0 0.0
    %1124 = vmatpush1.msra.mxu0 0.0
    %1125 = vmatprep.subr.mxu0 0.0
    %1126 = vmatpush1.msra.mxu0 0.0
    %1127 = vmatprep.subr.mxu0 0.0
    %1128 = vmatpush1.msra.mxu0 0.0
    %1129 = vmatprep.subr.mxu0 0.0
    %1130 = vmatpush1.msra.mxu0 0.0
    %1131 = vmatprep.subr.mxu0 0.0
    %1132 = vmatpush1.msra.mxu0 0.0
    %1133 = vmatprep.subr.mxu0 0.0
    %1134 = vmatpush1.msra.mxu0 0.0
    %1135 = vmatprep.subr.mxu0 0.0
    %1136 = vmatpush1.msra.mxu0 0.0
    %1137 = vmatprep.subr.mxu0 0.0
    %1138 = vmatpush1.msra.mxu0 0.0
    %1139 = vmatprep.subr.mxu0 0.0
    %1140 = vmatpush1.msra.mxu0 0.0
    %1141 = vmatprep.subr.mxu0 0.0
    %1142 = vmatpush1.msra.mxu0 0.0
    %1143 = vmatprep.subr.mxu0 0.0
    %1144 = vmatpush1.msra.mxu0 0.0
    %1145 = vmatprep.subr.mxu0 0.0
    %1146 = vmatpush1.msra.mxu0 0.0
    %1147 = vmatprep.subr.mxu0 0.0
    %1148 = vmatpush1.msra.mxu0 0.0
    %1149 = vmatprep.mubr.f32.mxu0 0.0
    %1150 = vmatmul.mubr.f32.gmra.mrb[0].mxu0 %v1074
    %v1151 = vpop.f32.mrb[0].mxu0
    %v1152 = vadd.f32 %v1072, %v1151
    %v1153 = vpop.f32.mrb[0].mxu0
    %1154 = vmatprep.mubr.f32.mxu0 0.0
    %1155 = vmatmul.mubr.f32.gmra.mrb[0].mxu0 %v1077
    %v1156 = vpop.f32.mrb[0].mxu0
    %v1157 = vadd.f32 %v1072, %v1156
    %v1158 = vpop.f32.mrb[0].mxu0
    %1159 = vmatprep.mubr.f32.mxu0 0.0
    %1160 = vmatmul.mubr.f32.gmra.mrb[0].mxu0 %v1080
    %v1161 = vpop.f32.mrb[0].mxu0
    %v1162 = vadd.f32 %v1072, %v1161
    %v1163 = vpop.f32.mrb[0].mxu0
    %1164 = vmatprep.mubr.f32.mxu0 0.0
    %1165 = vmatmul.mubr.f32.gmra.mrb[0].mxu0 %v1083
    %v1166 = vpop.f32.mrb[0].mxu0
    %v1167 = vadd.f32 %v1072, %v1166
    %v1168 = vpop.f32.mrb[0].mxu0
    %1169 = vdwg.mxu0
    %1174 = vrot.lane.b32.xlu0 %v1152, 96
    %v1175 = vpop.permute.xlu0 %1174
    %1176 = vrot.lane.b32.xlu0 %v1157, 96
    %v1177 = vpop.permute.xlu0 %1176
    %1178 = vrot.lane.b32.xlu0 %v1162, 96
    %v1179 = vpop.permute.xlu0 %1178
    %1180 = vrot.lane.b32.xlu0 %v1167, 96
    %v1181 = vpop.permute.xlu0 %1180
    %vm1185 = vcmask 228352
    %v1187 = vsel %vm1185, %v887, 0
    %v1190 = vsel %vm1185, %v888, 0
    %v1193 = vsel %vm1185, %v889, 0
    %v1196 = vsel %vm1185, %v890, 0
    %v1199 = vsel %vm1185, %v891, 0
    %v1202 = vsel %vm1185, %v892, 0
    %v1205 = vsel %vm1185, %v893, 0
    %v1208 = vsel %vm1185, %v894, 0
    %v1211 = vsel %vm1185, %v895, 0
    %v1214 = vsel %vm1185, %v896, 0
    %v1217 = vsel %vm1185, %v897, 0
    %v1220 = vsel %vm1185, %v898, 0
    %v1223 = vsel %vm1185, %v899, 0
    %v1226 = vsel %vm1185, %v900, 0
    %v1229 = vsel %vm1185, %v901, 0
    %v1232 = vsel %vm1185, %v902, 0
    %v1235 = vsel %vm1185, %v903, 0
    %v1238 = vsel %vm1185, %v904, 0
    %v1241 = vsel %vm1185, %v905, 0
    %v1244 = vsel %vm1185, %v906, 0
    %v1247 = vsel %vm1185, %v907, 0
    %v1250 = vsel %vm1185, %v908, 0
    %v1253 = vsel %vm1185, %v909, 0
    %v1256 = vsel %vm1185, %v910, 0
    %v1259 = vsel %vm1185, %v911, 0
    %v1262 = vsel %vm1185, %v912, 0
    %v1265 = vsel %vm1185, %v913, 0
    %v1268 = vsel %vm1185, %v914, 0
    %v1271 = vsel %vm1185, %v915, 0
    %v1274 = vsel %vm1185, %v916, 0
    %v1277 = vsel %vm1185, %v917, 0
    %v1280 = vsel %vm1185, %v918, 0
    %v1282 = vsel %vm218, %v1181, 0
    %1284 = vmatprep.subr.mxu0 0.0
    %1285 = vmatpush1.msra.mxu0 %v1175
    %1286 = vmatprep.subr.mxu0 0.0
    %1287 = vmatpush1.msra.mxu0 %v1177
    %1288 = vmatprep.subr.mxu0 0.0
    %1289 = vmatpush1.msra.mxu0 %v1179
    %1290 = vmatprep.subr.mxu0 0.0
    %1291 = vmatpush1.msra.mxu0 %v1282
    %1292 = vmatprep.subr.mxu0 0.0
    %1293 = vmatpush1.msra.mxu0 0.0
    %1294 = vmatprep.subr.mxu0 0.0
    %1295 = vmatpush1.msra.mxu0 0.0
    %1296 = vmatprep.subr.mxu0 0.0
    %1297 = vmatpush1.msra.mxu0 0.0
    %1298 = vmatprep.subr.mxu0 0.0
    %1299 = vmatpush1.msra.mxu0 0.0
    %1300 = vmatprep.subr.mxu0 0.0
    %1301 = vmatpush1.msra.mxu0 0.0
    %1302 = vmatprep.subr.mxu0 0.0
    %1303 = vmatpush1.msra.mxu0 0.0
    %1304 = vmatprep.subr.mxu0 0.0
    %1305 = vmatpush1.msra.mxu0 0.0
    %1306 = vmatprep.subr.mxu0 0.0
    %1307 = vmatpush1.msra.mxu0 0.0
    %1308 = vmatprep.subr.mxu0 0.0
    %1309 = vmatpush1.msra.mxu0 0.0
    %1310 = vmatprep.subr.mxu0 0.0
    %1311 = vmatpush1.msra.mxu0 0.0
    %1312 = vmatprep.subr.mxu0 0.0
    %1313 = vmatpush1.msra.mxu0 0.0
    %1314 = vmatprep.subr.mxu0 0.0
    %1315 = vmatpush1.msra.mxu0 0.0
    %1316 = vmatprep.subr.mxu0 0.0
    %1317 = vmatpush1.msra.mxu0 0.0
    %1318 = vmatprep.subr.mxu0 0.0
    %1319 = vmatpush1.msra.mxu0 0.0
    %1320 = vmatprep.subr.mxu0 0.0
    %1321 = vmatpush1.msra.mxu0 0.0
    %1322 = vmatprep.subr.mxu0 0.0
    %1323 = vmatpush1.msra.mxu0 0.0
    %1324 = vmatprep.subr.mxu0 0.0
    %1325 = vmatpush1.msra.mxu0 0.0
    %1326 = vmatprep.subr.mxu0 0.0
    %1327 = vmatpush1.msra.mxu0 0.0
    %1328 = vmatprep.subr.mxu0 0.0
    %1329 = vmatpush1.msra.mxu0 0.0
    %1330 = vmatprep.subr.mxu0 0.0
    %1331 = vmatpush1.msra.mxu0 0.0
    %1332 = vmatprep.subr.mxu0 0.0
    %1333 = vmatpush1.msra.mxu0 0.0
    %1334 = vmatprep.subr.mxu0 0.0
    %1335 = vmatpush1.msra.mxu0 0.0
    %1336 = vmatprep.subr.mxu0 0.0
    %1337 = vmatpush1.msra.mxu0 0.0
    %1338 = vmatprep.subr.mxu0 0.0
    %1339 = vmatpush1.msra.mxu0 0.0
    %1340 = vmatprep.subr.mxu0 0.0
    %1341 = vmatpush1.msra.mxu0 0.0
    %1342 = vmatprep.subr.mxu0 0.0
    %1343 = vmatpush1.msra.mxu0 0.0
    %1344 = vmatprep.subr.mxu0 0.0
    %1345 = vmatpush1.msra.mxu0 0.0
    %1346 = vmatprep.subr.mxu0 0.0
    %1347 = vmatpush1.msra.mxu0 0.0
    %1348 = vmatprep.mubr.f32.mxu0 0.0
    %1349 = vmatmul.mubr.f32.gmra.mrb[0].mxu0 %v1187
    %v1350 = vpop.f32.mrb[0].mxu0
    %v1351 = vadd.f32 0.0, %v1350
    %v1352 = vpop.f32.mrb[0].mxu0
    %1353 = vmatprep.mubr.f32.mxu0 0.0
    %1354 = vmatmul.mubr.f32.gmra.mrb[0].mxu0 %v1190
    %v1355 = vpop.f32.mrb[0].mxu0
    %v1356 = vadd.f32 0.0, %v1355
    %v1357 = vpop.f32.mrb[0].mxu0
    %1358 = vmatprep.mubr.f32.mxu0 0.0
    %1359 = vmatmul.mubr.f32.gmra.mrb[0].mxu0 %v1193
    %v1360 = vpop.f32.mrb[0].mxu0
    %v1361 = vadd.f32 0.0, %v1360
    %v1362 = vpop.f32.mrb[0].mxu0
    %1363 = vmatprep.mubr.f32.mxu0 0.0
    %1364 = vmatmul.mubr.f32.gmra.mrb[0].mxu0 %v1196
    %v1365 = vpop.f32.mrb[0].mxu0
    %v1366 = vadd.f32 0.0, %v1365
    %v1367 = vpop.f32.mrb[0].mxu0
    %1368 = vmatprep.mubr.f32.mxu0 0.0
    %1369 = vmatmul.mubr.f32.gmra.mrb[0].mxu0 %v1199
    %v1370 = vpop.f32.mrb[0].mxu0
    %v1371 = vadd.f32 0.0, %v1370
    %v1372 = vpop.f32.mrb[0].mxu0
    %1373 = vmatprep.mubr.f32.mxu0 0.0
    %1374 = vmatmul.mubr.f32.gmra.mrb[0].mxu0 %v1202
    %v1375 = vpop.f32.mrb[0].mxu0
    %v1376 = vadd.f32 0.0, %v1375
    %v1377 = vpop.f32.mrb[0].mxu0
    %1378 = vmatprep.mubr.f32.mxu0 0.0
    %1379 = vmatmul.mubr.f32.gmra.mrb[0].mxu0 %v1205
    %v1380 = vpop.f32.mrb[0].mxu0
    %v1381 = vadd.f32 0.0, %v1380
    %v1382 = vpop.f32.mrb[0].mxu0
    %1383 = vmatprep.mubr.f32.mxu0 0.0
    %1384 = vmatmul.mubr.f32.gmra.mrb[0].mxu0 %v1208
    %v1385 = vpop.f32.mrb[0].mxu0
    %v1386 = vadd.f32 0.0, %v1385
    %v1387 = vpop.f32.mrb[0].mxu0
    %1388 = vmatprep.mubr.f32.mxu0 0.0
    %1389 = vmatmul.mubr.f32.gmra.mrb[0].mxu0 %v1211
    %v1390 = vpop.f32.mrb[0].mxu0
    %v1391 = vadd.f32 0.0, %v1390
    %v1392 = vpop.f32.mrb[0].mxu0
    %1393 = vmatprep.mubr.f32.mxu0 0.0
    %1394 = vmatmul.mubr.f32.gmra.mrb[0].mxu0 %v1214
    %v1395 = vpop.f32.mrb[0].mxu0
    %v1396 = vadd.f32 0.0, %v1395
    %v1397 = vpop.f32.mrb[0].mxu0
    %1398 = vmatprep.mubr.f32.mxu0 0.0
    %1399 = vmatmul.mubr.f32.gmra.mrb[0].mxu0 %v1217
    %v1400 = vpop.f32.mrb[0].mxu0
    %v1401 = vadd.f32 0.0, %v1400
    %v1402 = vpop.f32.mrb[0].mxu0
    %1403 = vmatprep.mubr.f32.mxu0 0.0
    %1404 = vmatmul.mubr.f32.gmra.mrb[0].mxu0 %v1220
    %v1405 = vpop.f32.mrb[0].mxu0
    %v1406 = vadd.f32 0.0, %v1405
    %v1407 = vpop.f32.mrb[0].mxu0
    %1408 = vmatprep.mubr.f32.mxu0 0.0
    %1409 = vmatmul.mubr.f32.gmra.mrb[0].mxu0 %v1223
    %v1410 = vpop.f32.mrb[0].mxu0
    %v1411 = vadd.f32 0.0, %v1410
    %v1412 = vpop.f32.mrb[0].mxu0
    %1413 = vmatprep.mubr.f32.mxu0 0.0
    %1414 = vmatmul.mubr.f32.gmra.mrb[0].mxu0 %v1226
    %v1415 = vpop.f32.mrb[0].mxu0
    %v1416 = vadd.f32 0.0, %v1415
    %v1417 = vpop.f32.mrb[0].mxu0
    %1418 = vmatprep.mubr.f32.mxu0 0.0
    %1419 = vmatmul.mubr.f32.gmra.mrb[0].mxu0 %v1229
    %v1420 = vpop.f32.mrb[0].mxu0
    %v1421 = vadd.f32 0.0, %v1420
    %v1422 = vpop.f32.mrb[0].mxu0
    %1423 = vmatprep.mubr.f32.mxu0 0.0
    %1424 = vmatmul.mubr.f32.gmra.mrb[0].mxu0 %v1232
    %v1425 = vpop.f32.mrb[0].mxu0
    %v1426 = vadd.f32 0.0, %v1425
    %v1427 = vpop.f32.mrb[0].mxu0
    %1428 = vmatprep.mubr.f32.mxu0 0.0
    %1429 = vmatmul.mubr.f32.gmra.mrb[0].mxu0 %v1235
    %v1430 = vpop.f32.mrb[0].mxu0
    %v1431 = vadd.f32 0.0, %v1430
    %v1432 = vpop.f32.mrb[0].mxu0
    %1433 = vmatprep.mubr.f32.mxu0 0.0
    %1434 = vmatmul.mubr.f32.gmra.mrb[0].mxu0 %v1238
    %v1435 = vpop.f32.mrb[0].mxu0
    %v1436 = vadd.f32 0.0, %v1435
    %v1437 = vpop.f32.mrb[0].mxu0
    %1438 = vmatprep.mubr.f32.mxu0 0.0
    %1439 = vmatmul.mubr.f32.gmra.mrb[0].mxu0 %v1241
    %v1440 = vpop.f32.mrb[0].mxu0
    %v1441 = vadd.f32 0.0, %v1440
    %v1442 = vpop.f32.mrb[0].mxu0
    %1443 = vmatprep.mubr.f32.mxu0 0.0
    %1444 = vmatmul.mubr.f32.gmra.mrb[0].mxu0 %v1244
    %v1445 = vpop.f32.mrb[0].mxu0
    %v1446 = vadd.f32 0.0, %v1445
    %v1447 = vpop.f32.mrb[0].mxu0
    %1448 = vmatprep.mubr.f32.mxu0 0.0
    %1449 = vmatmul.mubr.f32.gmra.mrb[0].mxu0 %v1247
    %v1450 = vpop.f32.mrb[0].mxu0
    %v1451 = vadd.f32 0.0, %v1450
    %v1452 = vpop.f32.mrb[0].mxu0
    %1453 = vmatprep.mubr.f32.mxu0 0.0
    %1454 = vmatmul.mubr.f32.gmra.mrb[0].mxu0 %v1250
    %v1455 = vpop.f32.mrb[0].mxu0
    %v1456 = vadd.f32 0.0, %v1455
    %v1457 = vpop.f32.mrb[0].mxu0
    %1458 = vmatprep.mubr.f32.mxu0 0.0
    %1459 = vmatmul.mubr.f32.gmra.mrb[0].mxu0 %v1253
    %v1460 = vpop.f32.mrb[0].mxu0
    %v1461 = vadd.f32 0.0, %v1460
    %v1462 = vpop.f32.mrb[0].mxu0
    %1463 = vmatprep.mubr.f32.mxu0 0.0
    %1464 = vmatmul.mubr.f32.gmra.mrb[0].mxu0 %v1256
    %v1465 = vpop.f32.mrb[0].mxu0
    %v1466 = vadd.f32 0.0, %v1465
    %v1467 = vpop.f32.mrb[0].mxu0
    %1468 = vmatprep.mubr.f32.mxu0 0.0
    %1469 = vmatmul.mubr.f32.gmra.mrb[0].mxu0 %v1259
    %v1470 = vpop.f32.mrb[0].mxu0
    %v1471 = vadd.f32 0.0, %v1470
    %v1472 = vpop.f32.mrb[0].mxu0
    %1473 = vmatprep.mubr.f32.mxu0 0.0
    %1474 = vmatmul.mubr.f32.gmra.mrb[0].mxu0 %v1262
    %v1475 = vpop.f32.mrb[0].mxu0
    %v1476 = vadd.f32 0.0, %v1475
    %v1477 = vpop.f32.mrb[0].mxu0
    %1478 = vmatprep.mubr.f32.mxu0 0.0
    %1479 = vmatmul.mubr.f32.gmra.mrb[0].mxu0 %v1265
    %v1480 = vpop.f32.mrb[0].mxu0
    %v1481 = vadd.f32 0.0, %v1480
    %v1482 = vpop.f32.mrb[0].mxu0
    %1483 = vmatprep.mubr.f32.mxu0 0.0
    %1484 = vmatmul.mubr.f32.gmra.mrb[0].mxu0 %v1268
    %v1485 = vpop.f32.mrb[0].mxu0
    %v1486 = vadd.f32 0.0, %v1485
    %v1487 = vpop.f32.mrb[0].mxu0
    %1488 = vmatprep.mubr.f32.mxu0 0.0
    %1489 = vmatmul.mubr.f32.gmra.mrb[0].mxu0 %v1271
    %v1490 = vpop.f32.mrb[0].mxu0
    %v1491 = vadd.f32 0.0, %v1490
    %v1492 = vpop.f32.mrb[0].mxu0
    %1493 = vmatprep.mubr.f32.mxu0 0.0
    %1494 = vmatmul.mubr.f32.gmra.mrb[0].mxu0 %v1274
    %v1495 = vpop.f32.mrb[0].mxu0
    %v1496 = vadd.f32 0.0, %v1495
    %v1497 = vpop.f32.mrb[0].mxu0
    %1498 = vmatprep.mubr.f32.mxu0 0.0
    %1499 = vmatmul.mubr.f32.gmra.mrb[0].mxu0 %v1277
    %v1500 = vpop.f32.mrb[0].mxu0
    %v1501 = vadd.f32 0.0, %v1500
    %v1502 = vpop.f32.mrb[0].mxu0
    %1503 = vmatprep.mubr.f32.mxu0 0.0
    %1504 = vmatmul.mubr.f32.gmra.mrb[0].mxu0 %v1280
    %v1505 = vpop.f32.mrb[0].mxu0
    %v1506 = vadd.f32 0.0, %v1505
    %v1507 = vpop.f32.mrb[0].mxu0
    %1508 = vdwg.mxu0
    %v1509 = vmul.f32 %v1351, %v919
    %v1510 = vmul.f32 %v1356, %v920
    %v1511 = vmul.f32 %v1361, %v921
    %v1512 = vmul.f32 %v1366, %v922
    %v1513 = vmul.f32 %v1371, %v923
    %v1514 = vmul.f32 %v1376, %v924
    %v1515 = vmul.f32 %v1381, %v925
    %v1516 = vmul.f32 %v1386, %v926
    %v1517 = vmul.f32 %v1391, %v927
    %v1518 = vmul.f32 %v1396, %v928
    %v1519 = vmul.f32 %v1401, %v929
    %v1520 = vmul.f32 %v1406, %v930
    %v1521 = vmul.f32 %v1411, %v931
    %v1522 = vmul.f32 %v1416, %v932
    %v1523 = vmul.f32 %v1421, %v933
    %v1524 = vmul.f32 %v1426, %v934
    %v1525 = vmul.f32 %v1431, %v935
    %v1526 = vmul.f32 %v1436, %v936
    %v1527 = vmul.f32 %v1441, %v937
    %v1528 = vmul.f32 %v1446, %v938
    %v1529 = vmul.f32 %v1451, %v939
    %v1530 = vmul.f32 %v1456, %v940
    %v1531 = vmul.f32 %v1461, %v941
    %v1532 = vmul.f32 %v1466, %v942
    %v1533 = vmul.f32 %v1471, %v943
    %v1534 = vmul.f32 %v1476, %v944
    %v1535 = vmul.f32 %v1481, %v945
    %v1536 = vmul.f32 %v1486, %v946
    %v1537 = vmul.f32 %v1491, %v947
    %v1538 = vmul.f32 %v1496, %v948
    %v1539 = vmul.f32 %v1501, %v949
    %v1540 = vmul.f32 %v1506, %v950
    %1541 = vrot.lane.b32.xlu0 %v1152, 64
    %v1542 = vpop.permute.xlu0 %1541
    %1543 = vrot.lane.b32.xlu0 %v1157, 64
    %v1544 = vpop.permute.xlu0 %1543
    %1545 = vrot.lane.b32.xlu0 %v1162, 64
    %v1546 = vpop.permute.xlu0 %1545
    %1547 = vrot.lane.b32.xlu0 %v1167, 64
    %v1548 = vpop.permute.xlu0 %1547
    %v1552 = vsel %vm218, %v1548, 0
    %1554 = vmatprep.subr.mxu0 0.0
    %1555 = vmatpush1.msra.mxu0 %v1542
    %1556 = vmatprep.subr.mxu0 0.0
    %1557 = vmatpush1.msra.mxu0 %v1544
    %1558 = vmatprep.subr.mxu0 0.0
    %1559 = vmatpush1.msra.mxu0 %v1546
    %1560 = vmatprep.subr.mxu0 0.0
    %1561 = vmatpush1.msra.mxu0 %v1552
    %1562 = vmatprep.subr.mxu0 0.0
    %1563 = vmatpush1.msra.mxu0 0.0
    %1564 = vmatprep.subr.mxu0 0.0
    %1565 = vmatpush1.msra.mxu0 0.0
    %1566 = vmatprep.subr.mxu0 0.0
    %1567 = vmatpush1.msra.mxu0 0.0
    %1568 = vmatprep.subr.mxu0 0.0
    %1569 = vmatpush1.msra.mxu0 0.0
    %1570 = vmatprep.subr.mxu0 0.0
    %1571 = vmatpush1.msra.mxu0 0.0
    %1572 = vmatprep.subr.mxu0 0.0
    %1573 = vmatpush1.msra.mxu0 0.0
    %1574 = vmatprep.subr.mxu0 0.0
    %1575 = vmatpush1.msra.mxu0 0.0
    %1576 = vmatprep.subr.mxu0 0.0
    %1577 = vmatpush1.msra.mxu0 0.0
    %1578 = vmatprep.subr.mxu0 0.0
    %1579 = vmatpush1.msra.mxu0 0.0
    %1580 = vmatprep.subr.mxu0 0.0
    %1581 = vmatpush1.msra.mxu0 0.0
    %1582 = vmatprep.subr.mxu0 0.0
    %1583 = vmatpush1.msra.mxu0 0.0
    %1584 = vmatprep.subr.mxu0 0.0
    %1585 = vmatpush1.msra.mxu0 0.0
    %1586 = vmatprep.subr.mxu0 0.0
    %1587 = vmatpush1.msra.mxu0 0.0
    %1588 = vmatprep.subr.mxu0 0.0
    %1589 = vmatpush1.msra.mxu0 0.0
    %1590 = vmatprep.subr.mxu0 0.0
    %1591 = vmatpush1.msra.mxu0 0.0
    %1592 = vmatprep.subr.mxu0 0.0
    %1593 = vmatpush1.msra.mxu0 0.0
    %1594 = vmatprep.subr.mxu0 0.0
    %1595 = vmatpush1.msra.mxu0 0.0
    %1596 = vmatprep.subr.mxu0 0.0
    %1597 = vmatpush1.msra.mxu0 0.0
    %1598 = vmatprep.subr.mxu0 0.0
    %1599 = vmatpush1.msra.mxu0 0.0
    %1600 = vmatprep.subr.mxu0 0.0
    %1601 = vmatpush1.msra.mxu0 0.0
    %1602 = vmatprep.subr.mxu0 0.0
    %1603 = vmatpush1.msra.mxu0 0.0
    %1604 = vmatprep.subr.mxu0 0.0
    %1605 = vmatpush1.msra.mxu0 0.0
    %1606 = vmatprep.subr.mxu0 0.0
    %1607 = vmatpush1.msra.mxu0 0.0
    %1608 = vmatprep.subr.mxu0 0.0
    %1609 = vmatpush1.msra.mxu0 0.0
    %1610 = vmatprep.subr.mxu0 0.0
    %1611 = vmatpush1.msra.mxu0 0.0
    %1612 = vmatprep.subr.mxu0 0.0
    %1613 = vmatpush1.msra.mxu0 0.0
    %1614 = vmatprep.subr.mxu0 0.0
    %1615 = vmatpush1.msra.mxu0 0.0
    %1616 = vmatprep.subr.mxu0 0.0
    %1617 = vmatpush1.msra.mxu0 0.0
    %1618 = vmatprep.mubr.f32.mxu0 0.0
    %1619 = vmatmul.mubr.f32.gmra.mrb[0].mxu0 %v1187
    %v1620 = vpop.f32.mrb[0].mxu0
    %v1621 = vadd.f32 0.0, %v1620
    %v1622 = vpop.f32.mrb[0].mxu0
    %1623 = vmatprep.mubr.f32.mxu0 0.0
    %1624 = vmatmul.mubr.f32.gmra.mrb[0].mxu0 %v1190
    %v1625 = vpop.f32.mrb[0].mxu0
    %v1626 = vadd.f32 0.0, %v1625
    %v1627 = vpop.f32.mrb[0].mxu0
    %1628 = vmatprep.mubr.f32.mxu0 0.0
    %1629 = vmatmul.mubr.f32.gmra.mrb[0].mxu0 %v1193
    %v1630 = vpop.f32.mrb[0].mxu0
    %v1631 = vadd.f32 0.0, %v1630
    %v1632 = vpop.f32.mrb[0].mxu0
    %1633 = vmatprep.mubr.f32.mxu0 0.0
    %1634 = vmatmul.mubr.f32.gmra.mrb[0].mxu0 %v1196
    %v1635 = vpop.f32.mrb[0].mxu0
    %v1636 = vadd.f32 0.0, %v1635
    %v1637 = vpop.f32.mrb[0].mxu0
    %1638 = vmatprep.mubr.f32.mxu0 0.0
    %1639 = vmatmul.mubr.f32.gmra.mrb[0].mxu0 %v1199
    %v1640 = vpop.f32.mrb[0].mxu0
    %v1641 = vadd.f32 0.0, %v1640
    %v1642 = vpop.f32.mrb[0].mxu0
    %1643 = vmatprep.mubr.f32.mxu0 0.0
    %1644 = vmatmul.mubr.f32.gmra.mrb[0].mxu0 %v1202
    %v1645 = vpop.f32.mrb[0].mxu0
    %v1646 = vadd.f32 0.0, %v1645
    %v1647 = vpop.f32.mrb[0].mxu0
    %1648 = vmatprep.mubr.f32.mxu0 0.0
    %1649 = vmatmul.mubr.f32.gmra.mrb[0].mxu0 %v1205
    %v1650 = vpop.f32.mrb[0].mxu0
    %v1651 = vadd.f32 0.0, %v1650
    %v1652 = vpop.f32.mrb[0].mxu0
    %1653 = vmatprep.mubr.f32.mxu0 0.0
    %1654 = vmatmul.mubr.f32.gmra.mrb[0].mxu0 %v1208
    %v1655 = vpop.f32.mrb[0].mxu0
    %v1656 = vadd.f32 0.0, %v1655
    %v1657 = vpop.f32.mrb[0].mxu0
    %1658 = vmatprep.mubr.f32.mxu0 0.0
    %1659 = vmatmul.mubr.f32.gmra.mrb[0].mxu0 %v1211
    %v1660 = vpop.f32.mrb[0].mxu0
    %v1661 = vadd.f32 0.0, %v1660
    %v1662 = vpop.f32.mrb[0].mxu0
    %1663 = vmatprep.mubr.f32.mxu0 0.0
    %1664 = vmatmul.mubr.f32.gmra.mrb[0].mxu0 %v1214
    %v1665 = vpop.f32.mrb[0].mxu0
    %v1666 = vadd.f32 0.0, %v1665
    %v1667 = vpop.f32.mrb[0].mxu0
    %1668 = vmatprep.mubr.f32.mxu0 0.0
    %1669 = vmatmul.mubr.f32.gmra.mrb[0].mxu0 %v1217
    %v1670 = vpop.f32.mrb[0].mxu0
    %v1671 = vadd.f32 0.0, %v1670
    %v1672 = vpop.f32.mrb[0].mxu0
    %1673 = vmatprep.mubr.f32.mxu0 0.0
    %1674 = vmatmul.mubr.f32.gmra.mrb[0].mxu0 %v1220
    %v1675 = vpop.f32.mrb[0].mxu0
    %v1676 = vadd.f32 0.0, %v1675
    %v1677 = vpop.f32.mrb[0].mxu0
    %1678 = vmatprep.mubr.f32.mxu0 0.0
    %1679 = vmatmul.mubr.f32.gmra.mrb[0].mxu0 %v1223
    %v1680 = vpop.f32.mrb[0].mxu0
    %v1681 = vadd.f32 0.0, %v1680
    %v1682 = vpop.f32.mrb[0].mxu0
    %1683 = vmatprep.mubr.f32.mxu0 0.0
    %1684 = vmatmul.mubr.f32.gmra.mrb[0].mxu0 %v1226
    %v1685 = vpop.f32.mrb[0].mxu0
    %v1686 = vadd.f32 0.0, %v1685
    %v1687 = vpop.f32.mrb[0].mxu0
    %1688 = vmatprep.mubr.f32.mxu0 0.0
    %1689 = vmatmul.mubr.f32.gmra.mrb[0].mxu0 %v1229
    %v1690 = vpop.f32.mrb[0].mxu0
    %v1691 = vadd.f32 0.0, %v1690
    %v1692 = vpop.f32.mrb[0].mxu0
    %1693 = vmatprep.mubr.f32.mxu0 0.0
    %1694 = vmatmul.mubr.f32.gmra.mrb[0].mxu0 %v1232
    %v1695 = vpop.f32.mrb[0].mxu0
    %v1696 = vadd.f32 0.0, %v1695
    %v1697 = vpop.f32.mrb[0].mxu0
    %1698 = vmatprep.mubr.f32.mxu0 0.0
    %1699 = vmatmul.mubr.f32.gmra.mrb[0].mxu0 %v1235
    %v1700 = vpop.f32.mrb[0].mxu0
    %v1701 = vadd.f32 0.0, %v1700
    %v1702 = vpop.f32.mrb[0].mxu0
    %1703 = vmatprep.mubr.f32.mxu0 0.0
    %1704 = vmatmul.mubr.f32.gmra.mrb[0].mxu0 %v1238
    %v1705 = vpop.f32.mrb[0].mxu0
    %v1706 = vadd.f32 0.0, %v1705
    %v1707 = vpop.f32.mrb[0].mxu0
    %1708 = vmatprep.mubr.f32.mxu0 0.0
    %1709 = vmatmul.mubr.f32.gmra.mrb[0].mxu0 %v1241
    %v1710 = vpop.f32.mrb[0].mxu0
    %v1711 = vadd.f32 0.0, %v1710
    %v1712 = vpop.f32.mrb[0].mxu0
    %1713 = vmatprep.mubr.f32.mxu0 0.0
    %1714 = vmatmul.mubr.f32.gmra.mrb[0].mxu0 %v1244
    %v1715 = vpop.f32.mrb[0].mxu0
    %v1716 = vadd.f32 0.0, %v1715
    %v1717 = vpop.f32.mrb[0].mxu0
    %1718 = vmatprep.mubr.f32.mxu0 0.0
    %1719 = vmatmul.mubr.f32.gmra.mrb[0].mxu0 %v1247
    %v1720 = vpop.f32.mrb[0].mxu0
    %v1721 = vadd.f32 0.0, %v1720
    %v1722 = vpop.f32.mrb[0].mxu0
    %1723 = vmatprep.mubr.f32.mxu0 0.0
    %1724 = vmatmul.mubr.f32.gmra.mrb[0].mxu0 %v1250
    %v1725 = vpop.f32.mrb[0].mxu0
    %v1726 = vadd.f32 0.0, %v1725
    %v1727 = vpop.f32.mrb[0].mxu0
    %1728 = vmatprep.mubr.f32.mxu0 0.0
    %1729 = vmatmul.mubr.f32.gmra.mrb[0].mxu0 %v1253
    %v1730 = vpop.f32.mrb[0].mxu0
    %v1731 = vadd.f32 0.0, %v1730
    %v1732 = vpop.f32.mrb[0].mxu0
    %1733 = vmatprep.mubr.f32.mxu0 0.0
    %1734 = vmatmul.mubr.f32.gmra.mrb[0].mxu0 %v1256
    %v1735 = vpop.f32.mrb[0].mxu0
    %v1736 = vadd.f32 0.0, %v1735
    %v1737 = vpop.f32.mrb[0].mxu0
    %1738 = vmatprep.mubr.f32.mxu0 0.0
    %1739 = vmatmul.mubr.f32.gmra.mrb[0].mxu0 %v1259
    %v1740 = vpop.f32.mrb[0].mxu0
    %v1741 = vadd.f32 0.0, %v1740
    %v1742 = vpop.f32.mrb[0].mxu0
    %1743 = vmatprep.mubr.f32.mxu0 0.0
    %1744 = vmatmul.mubr.f32.gmra.mrb[0].mxu0 %v1262
    %v1745 = vpop.f32.mrb[0].mxu0
    %v1746 = vadd.f32 0.0, %v1745
    %v1747 = vpop.f32.mrb[0].mxu0
    %1748 = vmatprep.mubr.f32.mxu0 0.0
    %1749 = vmatmul.mubr.f32.gmra.mrb[0].mxu0 %v1265
    %v1750 = vpop.f32.mrb[0].mxu0
    %v1751 = vadd.f32 0.0, %v1750
    %v1752 = vpop.f32.mrb[0].mxu0
    %1753 = vmatprep.mubr.f32.mxu0 0.0
    %1754 = vmatmul.mubr.f32.gmra.mrb[0].mxu0 %v1268
    %v1755 = vpop.f32.mrb[0].mxu0
    %v1756 = vadd.f32 0.0, %v1755
    %v1757 = vpop.f32.mrb[0].mxu0
    %1758 = vmatprep.mubr.f32.mxu0 0.0
    %1759 = vmatmul.mubr.f32.gmra.mrb[0].mxu0 %v1271
    %v1760 = vpop.f32.mrb[0].mxu0
    %v1761 = vadd.f32 0.0, %v1760
    %v1762 = vpop.f32.mrb[0].mxu0
    %1763 = vmatprep.mubr.f32.mxu0 0.0
    %1764 = vmatmul.mubr.f32.gmra.mrb[0].mxu0 %v1274
    %v1765 = vpop.f32.mrb[0].mxu0
    %v1766 = vadd.f32 0.0, %v1765
    %v1767 = vpop.f32.mrb[0].mxu0
    %1768 = vmatprep.mubr.f32.mxu0 0.0
    %1769 = vmatmul.mubr.f32.gmra.mrb[0].mxu0 %v1277
    %v1770 = vpop.f32.mrb[0].mxu0
    %v1771 = vadd.f32 0.0, %v1770
    %v1772 = vpop.f32.mrb[0].mxu0
    %1773 = vmatprep.mubr.f32.mxu0 0.0
    %1774 = vmatmul.mubr.f32.gmra.mrb[0].mxu0 %v1280
    %v1775 = vpop.f32.mrb[0].mxu0
    %v1776 = vadd.f32 0.0, %v1775
    %v1777 = vpop.f32.mrb[0].mxu0
    %1778 = vdwg.mxu0
    %v1779 = vmul.f32 %v1621, %v919
    %v1780 = vmul.f32 %v1626, %v920
    %v1781 = vmul.f32 %v1631, %v921
    %v1782 = vmul.f32 %v1636, %v922
    %v1783 = vmul.f32 %v1641, %v923
    %v1784 = vmul.f32 %v1646, %v924
    %v1785 = vmul.f32 %v1651, %v925
    %v1786 = vmul.f32 %v1656, %v926
    %v1787 = vmul.f32 %v1661, %v927
    %v1788 = vmul.f32 %v1666, %v928
    %v1789 = vmul.f32 %v1671, %v929
    %v1790 = vmul.f32 %v1676, %v930
    %v1791 = vmul.f32 %v1681, %v931
    %v1792 = vmul.f32 %v1686, %v932
    %v1793 = vmul.f32 %v1691, %v933
    %v1794 = vmul.f32 %v1696, %v934
    %v1795 = vmul.f32 %v1701, %v935
    %v1796 = vmul.f32 %v1706, %v936
    %v1797 = vmul.f32 %v1711, %v937
    %v1798 = vmul.f32 %v1716, %v938
    %v1799 = vmul.f32 %v1721, %v939
    %v1800 = vmul.f32 %v1726, %v940
    %v1801 = vmul.f32 %v1731, %v941
    %v1802 = vmul.f32 %v1736, %v942
    %v1803 = vmul.f32 %v1741, %v943
    %v1804 = vmul.f32 %v1746, %v944
    %v1805 = vmul.f32 %v1751, %v945
    %v1806 = vmul.f32 %v1756, %v946
    %v1807 = vmul.f32 %v1761, %v947
    %v1808 = vmul.f32 %v1766, %v948
    %v1809 = vmul.f32 %v1771, %v949
    %v1810 = vmul.f32 %v1776, %v950
    %v1811 = vsel %vm374, %v1152, 0
    %v1813 = vsel %vm374, %v1157, 0
    %v1815 = vsel %vm374, %v1162, 0
    %v1817 = vsel %vm374, %v1167, 0
    %v1820 = vsel %vm374, %v1509, 0
    %v1823 = vsel %vm374, %v1510, 0
    %v1826 = vsel %vm374, %v1511, 0
    %v1829 = vsel %vm374, %v1512, 0
    %v1832 = vsel %vm374, %v1513, 0
    %v1835 = vsel %vm374, %v1514, 0
    %v1838 = vsel %vm374, %v1515, 0
    %v1841 = vsel %vm374, %v1516, 0
    %v1844 = vsel %vm374, %v1517, 0
    %v1847 = vsel %vm374, %v1518, 0
    %v1850 = vsel %vm374, %v1519, 0
    %v1853 = vsel %vm374, %v1520, 0
    %v1856 = vsel %vm374, %v1521, 0
    %v1859 = vsel %vm374, %v1522, 0
    %v1862 = vsel %vm374, %v1523, 0
    %v1865 = vsel %vm374, %v1524, 0
    %v1868 = vsel %vm374, %v1525, 0
    %v1871 = vsel %vm374, %v1526, 0
    %v1874 = vsel %vm374, %v1527, 0
    %v1877 = vsel %vm374, %v1528, 0
    %v1880 = vsel %vm374, %v1529, 0
    %v1883 = vsel %vm374, %v1530, 0
    %v1886 = vsel %vm374, %v1531, 0
    %v1889 = vsel %vm374, %v1532, 0
    %v1892 = vsel %vm374, %v1533, 0
    %v1895 = vsel %vm374, %v1534, 0
    %v1898 = vsel %vm374, %v1535, 0
    %v1901 = vsel %vm374, %v1536, 0
    %v1904 = vsel %vm374, %v1537, 0
    %v1907 = vsel %vm374, %v1538, 0
    %v1910 = vsel %vm374, %v1539, 0
    %v1913 = vsel %vm374, %v1540, 0
    %1915 = vmatprep.subr.mxu0 0.0
    %1916 = vmatpush1.xpose.msra.mxu0 %v1820
    %1917 = vmatprep.subr.mxu0 0.0
    %1918 = vmatpush1.xpose.msra.mxu0 %v1823
    %1919 = vmatprep.subr.mxu0 0.0
    %1920 = vmatpush1.xpose.msra.mxu0 %v1826
    %1921 = vmatprep.subr.mxu0 0.0
    %1922 = vmatpush1.xpose.msra.mxu0 %v1829
    %1923 = vmatprep.subr.mxu0 0.0
    %1924 = vmatpush1.xpose.msra.mxu0 %v1832
    %1925 = vmatprep.subr.mxu0 0.0
    %1926 = vmatpush1.xpose.msra.mxu0 %v1835
    %1927 = vmatprep.subr.mxu0 0.0
    %1928 = vmatpush1.xpose.msra.mxu0 %v1838
    %1929 = vmatprep.subr.mxu0 0.0
    %1930 = vmatpush1.xpose.msra.mxu0 %v1841
    %1931 = vmatprep.subr.mxu0 0.0
    %1932 = vmatpush1.xpose.msra.mxu0 %v1844
    %1933 = vmatprep.subr.mxu0 0.0
    %1934 = vmatpush1.xpose.msra.mxu0 %v1847
    %1935 = vmatprep.subr.mxu0 0.0
    %1936 = vmatpush1.xpose.msra.mxu0 %v1850
    %1937 = vmatprep.subr.mxu0 0.0
    %1938 = vmatpush1.xpose.msra.mxu0 %v1853
    %1939 = vmatprep.subr.mxu0 0.0
    %1940 = vmatpush1.xpose.msra.mxu0 %v1856
    %1941 = vmatprep.subr.mxu0 0.0
    %1942 = vmatpush1.xpose.msra.mxu0 %v1859
    %1943 = vmatprep.subr.mxu0 0.0
    %1944 = vmatpush1.xpose.msra.mxu0 %v1862
    %1945 = vmatprep.subr.mxu0 0.0
    %1946 = vmatpush1.xpose.msra.mxu0 %v1865
    %1947 = vmatprep.subr.mxu0 0.0
    %1948 = vmatpush1.xpose.msra.mxu0 %v1868
    %1949 = vmatprep.subr.mxu0 0.0
    %1950 = vmatpush1.xpose.msra.mxu0 %v1871
    %1951 = vmatprep.subr.mxu0 0.0
    %1952 = vmatpush1.xpose.msra.mxu0 %v1874
    %1953 = vmatprep.subr.mxu0 0.0
    %1954 = vmatpush1.xpose.msra.mxu0 %v1877
    %1955 = vmatprep.subr.mxu0 0.0
    %1956 = vmatpush1.xpose.msra.mxu0 %v1880
    %1957 = vmatprep.subr.mxu0 0.0
    %1958 = vmatpush1.xpose.msra.mxu0 %v1883
    %1959 = vmatprep.subr.mxu0 0.0
    %1960 = vmatpush1.xpose.msra.mxu0 %v1886
    %1961 = vmatprep.subr.mxu0 0.0
    %1962 = vmatpush1.xpose.msra.mxu0 %v1889
    %1963 = vmatprep.subr.mxu0 0.0
    %1964 = vmatpush1.xpose.msra.mxu0 %v1892
    %1965 = vmatprep.subr.mxu0 0.0
    %1966 = vmatpush1.xpose.msra.mxu0 %v1895
    %1967 = vmatprep.subr.mxu0 0.0
    %1968 = vmatpush1.xpose.msra.mxu0 %v1898
    %1969 = vmatprep.subr.mxu0 0.0
    %1970 = vmatpush1.xpose.msra.mxu0 %v1901
    %1971 = vmatprep.subr.mxu0 0.0
    %1972 = vmatpush1.xpose.msra.mxu0 %v1904
    %1973 = vmatprep.subr.mxu0 0.0
    %1974 = vmatpush1.xpose.msra.mxu0 %v1907
    %1975 = vmatprep.subr.mxu0 0.0
    %1976 = vmatpush1.xpose.msra.mxu0 %v1910
    %1977 = vmatprep.subr.mxu0 0.0
    %1978 = vmatpush1.xpose.msra.mxu0 %v1913
    %1979 = vmatprep.mubr.f32.mxu0 0.0
    %1980 = vmatmul.mubr.f32.gmra.mrb[0].mxu0 %v1811
    %v1981 = vpop.f32.mrb[0].mxu0
    %v1982 = vadd.f32 %v985, %v1981
    %v1983 = vpop.f32.mrb[0].mxu0
    %v1984 = vadd.f32 %v986, %v1983
    %1985 = vmatprep.mubr.f32.mxu0 0.0
    %1986 = vmatmul.mubr.f32.gmra.mrb[0].mxu0 %v1813
    %v1987 = vpop.f32.mrb[0].mxu0
    %v1988 = vadd.f32 %v987, %v1987
    %v1989 = vpop.f32.mrb[0].mxu0
    %v1990 = vadd.f32 %v988, %v1989
    %1991 = vmatprep.mubr.f32.mxu0 0.0
    %1992 = vmatmul.mubr.f32.gmra.mrb[0].mxu0 %v1815
    %v1993 = vpop.f32.mrb[0].mxu0
    %v1994 = vadd.f32 %v989, %v1993
    %v1995 = vpop.f32.mrb[0].mxu0
    %v1996 = vadd.f32 %v990, %v1995
    %1997 = vmatprep.mubr.f32.mxu0 0.0
    %1998 = vmatmul.mubr.f32.gmra.mrb[0].mxu0 %v1817
    %v1999 = vpop.f32.mrb[0].mxu0
    %v2000 = vadd.f32 %v991, %v1999
    %v2001 = vpop.f32.mrb[0].mxu0
    %v2002 = vadd.f32 %v992, %v2001
    %2003 = vdwg.mxu0
    %v2004 = vmax.f32 %v1982, %v1984
    %2005 = vmax.xlane.f32.xlu0 %v2004
    %v2006 = vpop.xlane.xlu0 %2005
    %v2007 = vmax.f32 %v1988, %v1990
    %2008 = vmax.xlane.f32.xlu0 %v2007
    %v2009 = vpop.xlane.xlu0 %2008
    %v2010 = vmax.f32 %v1994, %v1996
    %2011 = vmax.xlane.f32.xlu0 %v2010
    %v2012 = vpop.xlane.xlu0 %2011
    %v2013 = vsel %vm218, %v2000, -inf
    %v2014 = vsel %vm218, %v2002, -inf
    %v2015 = vmax.f32 %v2013, %v2014
    %2016 = vmax.xlane.f32.xlu0 %v2015
    %v2017 = vpop.xlane.xlu0 %2016
    %v2018 = vsub.f32 %v1982, %v2006
    %v2019 = vsub.f32 %v1984, %v2006
    %v2020 = vsub.f32 %v1988, %v2009
    %v2021 = vsub.f32 %v1990, %v2009
    %v2022 = vsub.f32 %v1994, %v2012
    %v2023 = vsub.f32 %v1996, %v2012
    %v2024 = vsub.f32 %v2000, %v2017
    %v2025 = vsub.f32 %v2002, %v2017
    %v2026 = vmul.f32 %v2018, 1.442695
    %v2027 = vpow.pop %v2026
    %v2028 = vmul.f32 %v2019, 1.442695
    %v2029 = vpow.pop %v2028
    %v2030 = vmul.f32 %v2020, 1.442695
    %v2031 = vpow.pop %v2030
    %v2032 = vmul.f32 %v2021, 1.442695
    %v2033 = vpow.pop %v2032
    %v2034 = vmul.f32 %v2022, 1.442695
    %v2035 = vpow.pop %v2034
    %v2036 = vmul.f32 %v2023, 1.442695
    %v2037 = vpow.pop %v2036
    %v2038 = vmul.f32 %v2024, 1.442695
    %v2039 = vpow.pop %v2038
    %v2040 = vmul.f32 %v2025, 1.442695
    %v2041 = vpow.pop %v2040
    %2042 = vmatprep.subr.mxu0 0.0
    %2043 = vmatpush1.msra.mxu0 %v951
    %2044 = vmatprep.subr.mxu0 0.0
    %2045 = vmatpush1.msra.mxu0 %v952
    %2046 = vmatprep.subr.mxu0 0.0
    %2047 = vmatpush1.msra.mxu0 %v953
    %2048 = vmatprep.subr.mxu0 0.0
    %2049 = vmatpush1.msra.mxu0 %v954
    %2050 = vmatprep.subr.mxu0 0.0
    %2051 = vmatpush1.msra.mxu0 %v955
    %2052 = vmatprep.subr.mxu0 0.0
    %2053 = vmatpush1.msra.mxu0 %v956
    %2054 = vmatprep.subr.mxu0 0.0
    %2055 = vmatpush1.msra.mxu0 %v957
    %2056 = vmatprep.subr.mxu0 0.0
    %2057 = vmatpush1.msra.mxu0 %v958
    %2058 = vmatprep.subr.mxu0 0.0
    %2059 = vmatpush1.msra.mxu0 %v959
    %2060 = vmatprep.subr.mxu0 0.0
    %2061 = vmatpush1.msra.mxu0 %v960
    %2062 = vmatprep.subr.mxu0 0.0
    %2063 = vmatpush1.msra.mxu0 %v961
    %2064 = vmatprep.subr.mxu0 0.0
    %2065 = vmatpush1.msra.mxu0 %v962
    %2066 = vmatprep.subr.mxu0 0.0
    %2067 = vmatpush1.msra.mxu0 %v963
    %2068 = vmatprep.subr.mxu0 0.0
    %2069 = vmatpush1.msra.mxu0 %v964
    %2070 = vmatprep.subr.mxu0 0.0
    %2071 = vmatpush1.msra.mxu0 %v965
    %2072 = vmatprep.subr.mxu0 0.0
    %2073 = vmatpush1.msra.mxu0 %v966
    %2074 = vmatprep.subr.mxu0 0.0
    %2075 = vmatpush1.msra.mxu0 %v967
    %2076 = vmatprep.subr.mxu0 0.0
    %2077 = vmatpush1.msra.mxu0 %v968
    %2078 = vmatprep.subr.mxu0 0.0
    %2079 = vmatpush1.msra.mxu0 %v969
    %2080 = vmatprep.subr.mxu0 0.0
    %2081 = vmatpush1.msra.mxu0 %v970
    %2082 = vmatprep.subr.mxu0 0.0
    %2083 = vmatpush1.msra.mxu0 %v971
    %2084 = vmatprep.subr.mxu0 0.0
    %2085 = vmatpush1.msra.mxu0 %v972
    %2086 = vmatprep.subr.mxu0 0.0
    %2087 = vmatpush1.msra.mxu0 %v973
    %2088 = vmatprep.subr.mxu0 0.0
    %2089 = vmatpush1.msra.mxu0 %v974
    %2090 = vmatprep.subr.mxu0 0.0
    %2091 = vmatpush1.msra.mxu0 %v975
    %2092 = vmatprep.subr.mxu0 0.0
    %2093 = vmatpush1.msra.mxu0 %v976
    %2094 = vmatprep.subr.mxu0 0.0
    %2095 = vmatpush1.msra.mxu0 %v977
    %2096 = vmatprep.subr.mxu0 0.0
    %2097 = vmatpush1.msra.mxu0 %v978
    %2098 = vmatprep.subr.mxu0 0.0
    %2099 = vmatpush1.msra.mxu0 %v979
    %2100 = vmatprep.subr.mxu0 0.0
    %2101 = vmatpush1.msra.mxu0 %v980
    %2102 = vmatprep.subr.mxu0 0.0
    %2103 = vmatpush1.msra.mxu0 %v981
    %2104 = vmatprep.subr.mxu0 0.0
    %2105 = vmatpush1.msra.mxu0 %v982
    %2106 = vmatprep.mubr.f32.mxu0 %v2029
    %2107 = vmatmul.mubr.f32.gmra.mrb[0].mxu0 %v2027
    %v2108 = vpop.f32.mrb[0].mxu0
    %v2109 = vadd.f32 0.0, %v2108
    %v2110 = vpop.f32.mrb[0].mxu0
    %2111 = vmatprep.mubr.f32.mxu0 %v2033
    %2112 = vmatmul.mubr.f32.gmra.mrb[0].mxu0 %v2031
    %v2113 = vpop.f32.mrb[0].mxu0
    %v2114 = vadd.f32 0.0, %v2113
    %v2115 = vpop.f32.mrb[0].mxu0
    %2116 = vmatprep.mubr.f32.mxu0 %v2037
    %2117 = vmatmul.mubr.f32.gmra.mrb[0].mxu0 %v2035
    %v2118 = vpop.f32.mrb[0].mxu0
    %v2119 = vadd.f32 0.0, %v2118
    %v2120 = vpop.f32.mrb[0].mxu0
    %2121 = vmatprep.mubr.f32.mxu0 %v2041
    %2122 = vmatmul.mubr.f32.gmra.mrb[0].mxu0 %v2039
    %v2123 = vpop.f32.mrb[0].mxu0
    %v2124 = vadd.f32 0.0, %v2123
    %v2125 = vpop.f32.mrb[0].mxu0
    %2126 = vdwg.mxu0
    %v2127 = vrcp.pop %v2109
    %v2128 = vrcp.pop %v2114
    %v2129 = vrcp.pop %v2119
    %v2130 = vrcp.pop %v2124
    %v2132 = vsel %vm675, %v2127, 0
    %v2135 = vsel %vm675, %v2128, 0
    %v2138 = vsel %vm675, %v2129, 0
    %v2141 = vsel %vm675, %v2130, 0
    %2143 = vmatprep.subr.mxu0 %v984
    %2144 = vmatpush1.msra.mxu0 %v983
    %2145 = vmatprep.subr.mxu0 0.0
    %2146 = vmatpush1.msra.mxu0 0.0
    %2147 = vmatprep.subr.mxu0 0.0
    %2148 = vmatpush1.msra.mxu0 0.0
    %2149 = vmatprep.subr.mxu0 0.0
    %2150 = vmatpush1.msra.mxu0 0.0
    %2151 = vmatprep.subr.mxu0 0.0
    %2152 = vmatpush1.msra.mxu0 0.0
    %2153 = vmatprep.subr.mxu0 0.0
    %2154 = vmatpush1.msra.mxu0 0.0
    %2155 = vmatprep.subr.mxu0 0.0
    %2156 = vmatpush1.msra.mxu0 0.0
    %2157 = vmatprep.subr.mxu0 0.0
    %2158 = vmatpush1.msra.mxu0 0.0
    %2159 = vmatprep.subr.mxu0 0.0
    %2160 = vmatpush1.msra.mxu0 0.0
    %2161 = vmatprep.subr.mxu0 0.0
    %2162 = vmatpush1.msra.mxu0 0.0
    %2163 = vmatprep.subr.mxu0 0.0
    %2164 = vmatpush1.msra.mxu0 0.0
    %2165 = vmatprep.subr.mxu0 0.0
    %2166 = vmatpush1.msra.mxu0 0.0
    %2167 = vmatprep.subr.mxu0 0.0
    %2168 = vmatpush1.msra.mxu0 0.0
    %2169 = vmatprep.subr.mxu0 0.0
    %2170 = vmatpush1.msra.mxu0 0.0
    %2171 = vmatprep.subr.mxu0 0.0
    %2172 = vmatpush1.msra.mxu0 0.0
    %2173 = vmatprep.subr.mxu0 0.0
    %2174 = vmatpush1.msra.mxu0 0.0
    %2175 = vmatprep.subr.mxu0 0.0
    %2176 = vmatpush1.msra.mxu0 0.0
    %2177 = vmatprep.subr.mxu0 0.0
    %2178 = vmatpush1.msra.mxu0 0.0
    %2179 = vmatprep.subr.mxu0 0.0
    %2180 = vmatpush1.msra.mxu0 0.0
    %2181 = vmatprep.subr.mxu0 0.0
    %2182 = vmatpush1.msra.mxu0 0.0
    %2183 = vmatprep.subr.mxu0 0.0
    %2184 = vmatpush1.msra.mxu0 0.0
    %2185 = vmatprep.subr.mxu0 0.0
    %2186 = vmatpush1.msra.mxu0 0.0
    %2187 = vmatprep.subr.mxu0 0.0
    %2188 = vmatpush1.msra.mxu0 0.0
    %2189 = vmatprep.subr.mxu0 0.0
    %2190 = vmatpush1.msra.mxu0 0.0
    %2191 = vmatprep.subr.mxu0 0.0
    %2192 = vmatpush1.msra.mxu0 0.0
    %2193 = vmatprep.subr.mxu0 0.0
    %2194 = vmatpush1.msra.mxu0 0.0
    %2195 = vmatprep.subr.mxu0 0.0
    %2196 = vmatpush1.msra.mxu0 0.0
    %2197 = vmatprep.subr.mxu0 0.0
    %2198 = vmatpush1.msra.mxu0 0.0
    %2199 = vmatprep.subr.mxu0 0.0
    %2200 = vmatpush1.msra.mxu0 0.0
    %2201 = vmatprep.subr.mxu0 0.0
    %2202 = vmatpush1.msra.mxu0 0.0
    %2203 = vmatprep.subr.mxu0 0.0
    %2204 = vmatpush1.msra.mxu0 0.0
    %2205 = vmatprep.subr.mxu0 0.0
    %2206 = vmatpush1.msra.mxu0 0.0
    %2207 = vmatprep.mubr.f32.mxu0 0.0
    %2208 = vmatmul.mubr.f32.gmra.mrb[0].mxu0 %v2132
    %v2209 = vpop.f32.mrb[0].mxu0
    %v2210 = vadd.f32 0.0, %v2209
    %v2211 = vpop.f32.mrb[0].mxu0
    %v2212 = vadd.f32 0.0, %v2211
    %2213 = vmatprep.mubr.f32.mxu0 0.0
    %2214 = vmatmul.mubr.f32.gmra.mrb[0].mxu0 %v2135
    %v2215 = vpop.f32.mrb[0].mxu0
    %v2216 = vadd.f32 0.0, %v2215
    %v2217 = vpop.f32.mrb[0].mxu0
    %v2218 = vadd.f32 0.0, %v2217
    %2219 = vmatprep.mubr.f32.mxu0 0.0
    %2220 = vmatmul.mubr.f32.gmra.mrb[0].mxu0 %v2138
    %v2221 = vpop.f32.mrb[0].mxu0
    %v2222 = vadd.f32 0.0, %v2221
    %v2223 = vpop.f32.mrb[0].mxu0
    %v2224 = vadd.f32 0.0, %v2223
    %2225 = vmatprep.mubr.f32.mxu0 0.0
    %2226 = vmatmul.mubr.f32.gmra.mrb[0].mxu0 %v2141
    %v2227 = vpop.f32.mrb[0].mxu0
    %v2228 = vadd.f32 0.0, %v2227
    %v2229 = vpop.f32.mrb[0].mxu0
    %v2230 = vadd.f32 0.0, %v2229
    %2231 = vdwg.mxu0
    %v2232 = vmul.f32 %v2027, %v2210
    %v2233 = vmul.f32 %v2029, %v2212
    %v2234 = vmul.f32 %v2031, %v2216
    %v2235 = vmul.f32 %v2033, %v2218
    %v2236 = vmul.f32 %v2035, %v2222
    %v2237 = vmul.f32 %v2037, %v2224
    %v2238 = vmul.f32 %v2039, %v2228
    %v2239 = vmul.f32 %v2041, %v2230
    %2240 = vmatprep.subr.mxu0 0.0
    %2241 = vmatpush1.msra.mxu0 %v1779
    %2242 = vmatprep.subr.mxu0 0.0
    %2243 = vmatpush1.msra.mxu0 %v1780
    %2244 = vmatprep.subr.mxu0 0.0
    %2245 = vmatpush1.msra.mxu0 %v1781
    %2246 = vmatprep.subr.mxu0 0.0
    %2247 = vmatpush1.msra.mxu0 %v1782
    %2248 = vmatprep.subr.mxu0 0.0
    %2249 = vmatpush1.msra.mxu0 %v1783
    %2250 = vmatprep.subr.mxu0 0.0
    %2251 = vmatpush1.msra.mxu0 %v1784
    %2252 = vmatprep.subr.mxu0 0.0
    %2253 = vmatpush1.msra.mxu0 %v1785
    %2254 = vmatprep.subr.mxu0 0.0
    %2255 = vmatpush1.msra.mxu0 %v1786
    %2256 = vmatprep.subr.mxu0 0.0
    %2257 = vmatpush1.msra.mxu0 %v1787
    %2258 = vmatprep.subr.mxu0 0.0
    %2259 = vmatpush1.msra.mxu0 %v1788
    %2260 = vmatprep.subr.mxu0 0.0
    %2261 = vmatpush1.msra.mxu0 %v1789
    %2262 = vmatprep.subr.mxu0 0.0
    %2263 = vmatpush1.msra.mxu0 %v1790
    %2264 = vmatprep.subr.mxu0 0.0
    %2265 = vmatpush1.msra.mxu0 %v1791
    %2266 = vmatprep.subr.mxu0 0.0
    %2267 = vmatpush1.msra.mxu0 %v1792
    %2268 = vmatprep.subr.mxu0 0.0
    %2269 = vmatpush1.msra.mxu0 %v1793
    %2270 = vmatprep.subr.mxu0 0.0
    %2271 = vmatpush1.msra.mxu0 %v1794
    %2272 = vmatprep.subr.mxu0 0.0
    %2273 = vmatpush1.msra.mxu0 %v1795
    %2274 = vmatprep.subr.mxu0 0.0
    %2275 = vmatpush1.msra.mxu0 %v1796
    %2276 = vmatprep.subr.mxu0 0.0
    %2277 = vmatpush1.msra.mxu0 %v1797
    %2278 = vmatprep.subr.mxu0 0.0
    %2279 = vmatpush1.msra.mxu0 %v1798
    %2280 = vmatprep.subr.mxu0 0.0
    %2281 = vmatpush1.msra.mxu0 %v1799
    %2282 = vmatprep.subr.mxu0 0.0
    %2283 = vmatpush1.msra.mxu0 %v1800
    %2284 = vmatprep.subr.mxu0 0.0
    %2285 = vmatpush1.msra.mxu0 %v1801
    %2286 = vmatprep.subr.mxu0 0.0
    %2287 = vmatpush1.msra.mxu0 %v1802
    %2288 = vmatprep.subr.mxu0 0.0
    %2289 = vmatpush1.msra.mxu0 %v1803
    %2290 = vmatprep.subr.mxu0 0.0
    %2291 = vmatpush1.msra.mxu0 %v1804
    %2292 = vmatprep.subr.mxu0 0.0
    %2293 = vmatpush1.msra.mxu0 %v1805
    %2294 = vmatprep.subr.mxu0 0.0
    %2295 = vmatpush1.msra.mxu0 %v1806
    %2296 = vmatprep.subr.mxu0 0.0
    %2297 = vmatpush1.msra.mxu0 %v1807
    %2298 = vmatprep.subr.mxu0 0.0
    %2299 = vmatpush1.msra.mxu0 %v1808
    %2300 = vmatprep.subr.mxu0 0.0
    %2301 = vmatpush1.msra.mxu0 %v1809
    %2302 = vmatprep.subr.mxu0 0.0
    %2303 = vmatpush1.msra.mxu0 %v1810
    %2304 = vmatprep.mubr.f32.mxu0 %v2233
    %2305 = vmatmul.mubr.f32.gmra.mrb[0].mxu0 %v2232
    %v2306 = vpop.f32.mrb[0].mxu0
    %v2307 = vadd.f32 0.0, %v2306
    %v2308 = vpop.f32.mrb[0].mxu0
    %2309 = vmatprep.mubr.f32.mxu0 %v2235
    %2310 = vmatmul.mubr.f32.gmra.mrb[0].mxu0 %v2234
    %v2311 = vpop.f32.mrb[0].mxu0
    %v2312 = vadd.f32 0.0, %v2311
    %v2313 = vpop.f32.mrb[0].mxu0
    %2314 = vmatprep.mubr.f32.mxu0 %v2237
    %2315 = vmatmul.mubr.f32.gmra.mrb[0].mxu0 %v2236
    %v2316 = vpop.f32.mrb[0].mxu0
    %v2317 = vadd.f32 0.0, %v2316
    %v2318 = vpop.f32.mrb[0].mxu0
    %2319 = vmatprep.mubr.f32.mxu0 %v2239
    %2320 = vmatmul.mubr.f32.gmra.mrb[0].mxu0 %v2238
    %v2321 = vpop.f32.mrb[0].mxu0
    %v2322 = vadd.f32 0.0, %v2321
    %v2323 = vpop.f32.mrb[0].mxu0
    %2324 = vdwg.mxu0
    %v2325 = vld [vmem:[%s57] sm:$0xff]
    %v2326 = vld [vmem:[%s57 + $0x8] sm:$0xff]
    %v2327 = vld [vmem:[%s57 + $0x10] sm:$0xff]
    %v2328 = vld [vmem:[%s57 + $0x18] sm:$0xff]
    %v2330 = vsel %vm374, %v2307, 0
    %v2333 = vsel %vm374, %v2312, 0
    %v2336 = vsel %vm374, %v2317, 0
    %v2339 = vsel %vm374, %v2322, 0
    %2341 = vmatprep.subr.mxu0 0.0
    %2342 = vmatpush1.msra.mxu0 %v2325
    %2343 = vmatprep.subr.mxu0 0.0
    %2344 = vmatpush1.msra.mxu0 %v2326
    %2345 = vmatprep.subr.mxu0 0.0
    %2346 = vmatpush1.msra.mxu0 %v2327
    %2347 = vmatprep.subr.mxu0 0.0
    %2348 = vmatpush1.msra.mxu0 %v2328
    %2349 = vmatprep.subr.mxu0 0.0
    %2350 = vmatpush1.msra.mxu0 0.0
    %2351 = vmatprep.subr.mxu0 0.0
    %2352 = vmatpush1.msra.mxu0 0.0
    %2353 = vmatprep.subr.mxu0 0.0
    %2354 = vmatpush1.msra.mxu0 0.0
    %2355 = vmatprep.subr.mxu0 0.0
    %2356 = vmatpush1.msra.mxu0 0.0
    %2357 = vmatprep.subr.mxu0 0.0
    %2358 = vmatpush1.msra.mxu0 0.0
    %2359 = vmatprep.subr.mxu0 0.0
    %2360 = vmatpush1.msra.mxu0 0.0
    %2361 = vmatprep.subr.mxu0 0.0
    %2362 = vmatpush1.msra.mxu0 0.0
    %2363 = vmatprep.subr.mxu0 0.0
    %2364 = vmatpush1.msra.mxu0 0.0
    %2365 = vmatprep.subr.mxu0 0.0
    %2366 = vmatpush1.msra.mxu0 0.0
    %2367 = vmatprep.subr.mxu0 0.0
    %2368 = vmatpush1.msra.mxu0 0.0
    %2369 = vmatprep.subr.mxu0 0.0
    %2370 = vmatpush1.msra.mxu0 0.0
    %2371 = vmatprep.subr.mxu0 0.0
    %2372 = vmatpush1.msra.mxu0 0.0
    %2373 = vmatprep.subr.mxu0 0.0
    %2374 = vmatpush1.msra.mxu0 0.0
    %2375 = vmatprep.subr.mxu0 0.0
    %2376 = vmatpush1.msra.mxu0 0.0
    %2377 = vmatprep.subr.mxu0 0.0
    %2378 = vmatpush1.msra.mxu0 0.0
    %2379 = vmatprep.subr.mxu0 0.0
    %2380 = vmatpush1.msra.mxu0 0.0
    %2381 = vmatprep.subr.mxu0 0.0
    %2382 = vmatpush1.msra.mxu0 0.0
    %2383 = vmatprep.subr.mxu0 0.0
    %2384 = vmatpush1.msra.mxu0 0.0
    %2385 = vmatprep.subr.mxu0 0.0
    %2386 = vmatpush1.msra.mxu0 0.0
    %2387 = vmatprep.subr.mxu0 0.0
    %2388 = vmatpush1.msra.mxu0 0.0
    %2389 = vmatprep.subr.mxu0 0.0
    %2390 = vmatpush1.msra.mxu0 0.0
    %2391 = vmatprep.subr.mxu0 0.0
    %2392 = vmatpush1.msra.mxu0 0.0
    %2393 = vmatprep.subr.mxu0 0.0
    %2394 = vmatpush1.msra.mxu0 0.0
    %2395 = vmatprep.subr.mxu0 0.0
    %2396 = vmatpush1.msra.mxu0 0.0
    %2397 = vmatprep.subr.mxu0 0.0
    %2398 = vmatpush1.msra.mxu0 0.0
    %2399 = vmatprep.subr.mxu0 0.0
    %2400 = vmatpush1.msra.mxu0 0.0
    %2401 = vmatprep.subr.mxu0 0.0
    %2402 = vmatpush1.msra.mxu0 0.0
    %2403 = vmatprep.subr.mxu0 0.0
    %2404 = vmatpush1.msra.mxu0 0.0
    %2405 = vmatprep.mubr.f32.mxu0 0.0
    %2406 = vmatmul.mubr.f32.gmra.mrb[0].mxu0 %v2330
    %v2407 = vpop.f32.mrb[0].mxu0
    %v2408 = vadd.f32 0.0, %v2407
    %v2409 = vpop.f32.mrb[0].mxu0
    %2410 = vmatprep.mubr.f32.mxu0 0.0
    %2411 = vmatmul.mubr.f32.gmra.mrb[0].mxu0 %v2333
    %v2412 = vpop.f32.mrb[0].mxu0
    %v2413 = vadd.f32 0.0, %v2412
    %v2414 = vpop.f32.mrb[0].mxu0
    %2415 = vmatprep.mubr.f32.mxu0 0.0
    %2416 = vmatmul.mubr.f32.gmra.mrb[0].mxu0 %v2336
    %v2417 = vpop.f32.mrb[0].mxu0
    %v2418 = vadd.f32 0.0, %v2417
    %v2419 = vpop.f32.mrb[0].mxu0
    %2420 = vmatprep.mubr.f32.mxu0 0.0
    %2421 = vmatmul.mubr.f32.gmra.mrb[0].mxu0 %v2339
    %v2422 = vpop.f32.mrb[0].mxu0
    %v2423 = vadd.f32 0.0, %v2422
    %v2424 = vpop.f32.mrb[0].mxu0
    %2425 = vdwg.mxu0
    %v2426 = vadd.f32 %v883, %v2408
    %v2427 = vadd.f32 %v884, %v2413
    %v2428 = vadd.f32 %v885, %v2418
    %v2429 = vadd.f32 %v886, %v2423
    %v2430 = vld [vmem:[%s59] sm:$0x1]
    %v2431 = vlaneseq
    %v2432 = vshrl.u32 %v2431, 7
    %v2433 = vsub.s32 0, %v2432
    %v2434 = vrot.slane %v2430, %v2433
    %v2435 = vadd.f32 %v2426, %v2434
    %v2436 = vadd.f32 %v2427, %v2434
    %v2437 = vadd.f32 %v2428, %v2434
    %v2438 = vadd.f32 %v2429, %v2434
    %v2439 = vld [vmem:[%s49] sm:$0x1]
    %v2440 = vld [vmem:[%s51] sm:$0x1]
    %v2441 = vsel %vm374, %v2435, 0.0
    %2442 = vadd.xlane.f32.xlu0 %v2441
    %v2443 = vpop.xlane.xlu0 %2442
    %v2444 = vsel %vm374, %v2436, 0.0
    %2445 = vadd.xlane.f32.xlu0 %v2444
    %v2446 = vpop.xlane.xlu0 %2445
    %v2447 = vsel %vm374, %v2437, 0.0
    %2448 = vadd.xlane.f32.xlu0 %v2447
    %v2449 = vpop.xlane.xlu0 %2448
    %v2450 = vsel %vm1004, %v2438, 0.0
    %2451 = vadd.xlane.f32.xlu0 %v2450
    %v2452 = vpop.xlane.xlu0 %2451
    %v2453 = vmul.f32 %v2443, %v381
    %v2454 = vmul.f32 %v2446, %v381
    %v2455 = vmul.f32 %v2449, %v381
    %v2456 = vmul.f32 %v2452, %v381
    %v2457 = vsub.f32 %v2435, %v2453
    %v2458 = vsub.f32 %v2436, %v2454
    %v2459 = vsub.f32 %v2437, %v2455
    %v2460 = vsub.f32 %v2438, %v2456
    %v2461 = vmul.f32 %v2457, %v2457
    %v2462 = vmul.f32 %v2458, %v2458
    %v2463 = vmul.f32 %v2459, %v2459
    %v2464 = vmul.f32 %v2460, %v2460
    %v2465 = vsel %vm374, %v2461, 0.0
    %2466 = vadd.xlane.f32.xlu0 %v2465
    %v2467 = vpop.xlane.xlu0 %2466
    %v2468 = vsel %vm374, %v2462, 0.0
    %2469 = vadd.xlane.f32.xlu0 %v2468
    %v2470 = vpop.xlane.xlu0 %2469
    %v2471 = vsel %vm374, %v2463, 0.0
    %2472 = vadd.xlane.f32.xlu0 %v2471
    %v2473 = vpop.xlane.xlu0 %2472
    %v2474 = vsel %vm1004, %v2464, 0.0
    %2475 = vadd.xlane.f32.xlu0 %v2474
    %v2476 = vpop.xlane.xlu0 %2475
    %v2477 = vmul.f32 %v2467, 0.032258064
    %v2478 = vmul.f32 %v2470, 0.032258064
    %v2479 = vmul.f32 %v2473, 0.032258064
    %v2480 = vmul.f32 %v2476, 0.032258064
    %v2481 = vlaneseq
    %v2482 = vshrl.u32 %v2481, 7
    %v2483 = vsub.s32 0, %v2482
    %v2484 = vrot.slane %v2439, %v2483
    %v2485 = vmul.f32 %v2484, %v2457
    %v2486 = vmul.f32 %v2484, %v2458
    %v2487 = vmul.f32 %v2484, %v2459
    %v2488 = vmul.f32 %v2484, %v2460
    %v2489 = vadd.f32 %v2477, 1e-06
    %v2490 = vadd.f32 %v2478, 1e-06
    %v2491 = vadd.f32 %v2479, 1e-06
    %v2492 = vadd.f32 %v2480, 1e-06
    %v2493 = vrsqrt.pop %v2489
    %v2494 = vrsqrt.pop %v2490
    %v2495 = vrsqrt.pop %v2491
    %v2496 = vrsqrt.pop %v2492
    %v2497 = vmul.f32 %v2485, %v2493
    %v2498 = vmul.f32 %v2486, %v2494
    %v2499 = vmul.f32 %v2487, %v2495
    %v2500 = vmul.f32 %v2488, %v2496
    %v2501 = vlaneseq
    %v2502 = vshrl.u32 %v2501, 7
    %v2503 = vsub.s32 0, %v2502
    %v2504 = vrot.slane %v2440, %v2503
    %v2505 = vadd.f32 %v2497, %v2504
    %v2506 = vadd.f32 %v2498, %v2504
    %v2507 = vadd.f32 %v2499, %v2504
    %v2508 = vadd.f32 %v2500, %v2504
    %v2509 = vpack.c.bf16 %v2506, %v2505
    %v2510 = vpack.c.bf16 %v2508, %v2507
    %v2511 = vld [vmem:[%s61] sm:$0xff]
    %v2512 = vld [vmem:[%s61 + $0x8] sm:$0xff]
    %v2513 = vld [vmem:[%s61 + $0x10] sm:$0xff]
    %v2514 = vld [vmem:[%s61 + $0x18] sm:$0xff]
    %v2515 = vld [vmem:[%s61 + $0x20] sm:$0xff]
    %v2516 = vld [vmem:[%s61 + $0x28] sm:$0xff]
    %v2517 = vld [vmem:[%s61 + $0x30] sm:$0xff]
    %v2518 = vld [vmem:[%s61 + $0x38] sm:$0xff]
    %v2519 = vld [vmem:[%s61 + $0x40] sm:$0xff]
    %v2520 = vld [vmem:[%s61 + $0x48] sm:$0xff]
    %v2521 = vld [vmem:[%s61 + $0x50] sm:$0xff]
    %v2522 = vld [vmem:[%s61 + $0x58] sm:$0xff]
    %v2523 = vld [vmem:[%s61 + $0x60] sm:$0xff]
    %v2524 = vld [vmem:[%s61 + $0x68] sm:$0xff]
    %v2525 = vld [vmem:[%s61 + $0x70] sm:$0xff]
    %v2526 = vld [vmem:[%s61 + $0x78] sm:$0xff]
    %v2527 = vld [vmem:[%s63] ss:$2 sm:$0xff]
    %v2529 = vlaneseq
    %v2530 = vshrl.u32 %v2529, 7
    %v2531 = vsub.s32 0, %v2530
    %v2532 = vrot.slane %v2527, %v2531
    %v2533 = vlaneseq
    %v2534 = vshrl.u32 %v2533, 7
    %v2535 = vsub.s32 1, %v2534
    %v2536 = vrot.slane %v2527, %v2535
    %v2537 = vlaneseq
    %v2538 = vshrl.u32 %v2537, 7
    %v2539 = vsub.s32 2, %v2538
    %v2540 = vrot.slane %v2527, %v2539
    %v2541 = vlaneseq
    %v2542 = vshrl.u32 %v2541, 7
    %v2543 = vsub.s32 3, %v2542
    %v2544 = vrot.slane %v2527, %v2543
    %v2545 = vlaneseq
    %v2546 = vshrl.u32 %v2545, 7
    %v2547 = vsub.s32 4, %v2546
    %v2548 = vrot.slane %v2527, %v2547
    %v2549 = vlaneseq
    %v2550 = vshrl.u32 %v2549, 7
    %v2551 = vsub.s32 5, %v2550
    %v2552 = vrot.slane %v2527, %v2551
    %v2553 = vlaneseq
    %v2554 = vshrl.u32 %v2553, 7
    %v2555 = vsub.s32 6, %v2554
    %v2556 = vrot.slane %v2527, %v2555
    %v2557 = vlaneseq
    %v2558 = vshrl.u32 %v2557, 7
    %v2559 = vsub.s32 7, %v2558
    %v2560 = vrot.slane %v2527, %v2559
    %v2585 = vunpack.c.l.b16 %v2511
    %v2586 = vunpack.c.h.b16 %v2511
    %v2587 = vunpack.c.l.b16 %v2512
    %v2588 = vunpack.c.h.b16 %v2512
    %v2589 = vunpack.c.l.b16 %v2513
    %v2590 = vunpack.c.h.b16 %v2513
    %v2591 = vunpack.c.l.b16 %v2514
    %v2592 = vunpack.c.h.b16 %v2514
    %v2593 = vunpack.c.l.b16 %v2515
    %v2594 = vunpack.c.h.b16 %v2515
    %v2595 = vunpack.c.l.b16 %v2516
    %v2596 = vunpack.c.h.b16 %v2516
    %v2597 = vunpack.c.l.b16 %v2517
    %v2598 = vunpack.c.h.b16 %v2517
    %v2599 = vunpack.c.l.b16 %v2518
    %v2600 = vunpack.c.h.b16 %v2518
    %v2601 = vunpack.c.l.b16 %v2519
    %v2602 = vunpack.c.h.b16 %v2519
    %v2603 = vunpack.c.l.b16 %v2520
    %v2604 = vunpack.c.h.b16 %v2520
    %v2605 = vunpack.c.l.b16 %v2521
    %v2606 = vunpack.c.h.b16 %v2521
    %v2607 = vunpack.c.l.b16 %v2522
    %v2608 = vunpack.c.h.b16 %v2522
    %v2609 = vunpack.c.l.b16 %v2523
    %v2610 = vunpack.c.h.b16 %v2523
    %v2611 = vunpack.c.l.b16 %v2524
    %v2612 = vunpack.c.h.b16 %v2524
    %v2613 = vunpack.c.l.b16 %v2525
    %v2614 = vunpack.c.h.b16 %v2525
    %v2615 = vunpack.c.l.b16 %v2526
    %v2616 = vunpack.c.h.b16 %v2526
    %v2617 = vpack.c.b16 %v2593, %v2585
    %v2618 = vpack.c.b16 %v2594, %v2586
    %v2619 = vpack.c.b16 %v2595, %v2587
    %v2620 = vpack.c.b16 %v2596, %v2588
    %v2621 = vpack.c.b16 %v2597, %v2589
    %v2622 = vpack.c.b16 %v2598, %v2590
    %v2623 = vpack.c.b16 %v2599, %v2591
    %v2624 = vpack.c.b16 %v2600, %v2592
    %v2625 = vpack.c.b16 %v2609, %v2601
    %v2626 = vpack.c.b16 %v2610, %v2602
    %v2627 = vpack.c.b16 %v2611, %v2603
    %v2628 = vpack.c.b16 %v2612, %v2604
    %v2629 = vpack.c.b16 %v2613, %v2605
    %v2630 = vpack.c.b16 %v2614, %v2606
    %v2631 = vpack.c.b16 %v2615, %v2607
    %v2632 = vpack.c.b16 %v2616, %v2608
    %v2650 = vsel %vm374, %v2509, 0
    %v2653 = vsel %vm374, %v2510, 0
    %2655 = vmatprep.subr.bf16.mxu0 %v2618
    %2656 = vmatpush1.bf16.msra.mxu0 %v2617
    %2657 = vmatprep.subr.bf16.mxu0 %v2626
    %2658 = vmatpush1.bf16.msra.mxu0 %v2625
    %2659 = vmatprep.subr.bf16.mxu0 0
    %2660 = vmatpush1.bf16.msra.mxu0 0
    %2661 = vmatprep.subr.bf16.mxu0 0
    %2662 = vmatpush1.bf16.msra.mxu0 0
    %2663 = vmatprep.subr.bf16.mxu0 0
    %2664 = vmatpush1.bf16.msra.mxu0 0
    %2665 = vmatprep.subr.bf16.mxu0 0
    %2666 = vmatpush1.bf16.msra.mxu0 0
    %2667 = vmatprep.subr.bf16.mxu0 0
    %2668 = vmatpush1.bf16.msra.mxu0 0
    %2669 = vmatprep.subr.bf16.mxu0 0
    %2670 = vmatpush1.bf16.msra.mxu0 0
    %2671 = vmatprep.subr.bf16.mxu0 0
    %2672 = vmatpush1.bf16.msra.mxu0 0
    %2673 = vmatprep.subr.bf16.mxu0 0
    %2674 = vmatpush1.bf16.msra.mxu0 0
    %2675 = vmatprep.subr.bf16.mxu0 0
    %2676 = vmatpush1.bf16.msra.mxu0 0
    %2677 = vmatprep.subr.bf16.mxu0 0
    %2678 = vmatpush1.bf16.msra.mxu0 0
    %2679 = vmatprep.subr.bf16.mxu0 0
    %2680 = vmatpush1.bf16.msra.mxu0 0
    %2681 = vmatprep.subr.bf16.mxu0 0
    %2682 = vmatpush1.bf16.msra.mxu0 0
    %2683 = vmatprep.subr.bf16.mxu0 0
    %2684 = vmatpush1.bf16.msra.mxu0 0
    %2685 = vmatprep.subr.bf16.mxu0 0
    %2686 = vmatpush1.bf16.msra.mxu0 0
    %2687 = vmatprep.mubr.bf16.mxu0 0
    %2688 = vmatmul.mubr.bf16.gmra.mrb[0].mxu0 %v2650
    %v2689 = vpop.f32.mrb[0].mxu0
    %v2690 = vadd.f32 %v2532, %v2689
    %v2691 = vpop.f32.mrb[0].mxu0
    %v2692 = vadd.f32 %v2536, %v2691
    %v2693 = vpop.f32.mrb[0].mxu0
    %v2694 = vadd.f32 %v2532, %v2693
    %v2695 = vpop.f32.mrb[0].mxu0
    %v2696 = vadd.f32 %v2536, %v2695
    %2697 = vmatprep.mubr.bf16.mxu0 0
    %2698 = vmatmul.mubr.bf16.gmra.mrb[0].mxu0 %v2653
    %v2699 = vpop.f32.mrb[0].mxu0
    %v2700 = vadd.f32 %v2532, %v2699
    %v2701 = vpop.f32.mrb[0].mxu0
    %v2702 = vadd.f32 %v2536, %v2701
    %v2703 = vpop.f32.mrb[0].mxu0
    %v2704 = vadd.f32 %v2532, %v2703
    %v2705 = vpop.f32.mrb[0].mxu0
    %v2706 = vadd.f32 %v2536, %v2705
    %2707 = vdwg.mxu0
    %2708 = vmatprep.subr.bf16.mxu0 %v2620
    %2709 = vmatpush1.bf16.msra.mxu0 %v2619
    %2710 = vmatprep.subr.bf16.mxu0 %v2628
    %2711 = vmatpush1.bf16.msra.mxu0 %v2627
    %2712 = vmatprep.subr.bf16.mxu0 0
    %2713 = vmatpush1.bf16.msra.mxu0 0
    %2714 = vmatprep.subr.bf16.mxu0 0
    %2715 = vmatpush1.bf16.msra.mxu0 0
    %2716 = vmatprep.subr.bf16.mxu0 0
    %2717 = vmatpush1.bf16.msra.mxu0 0
    %2718 = vmatprep.subr.bf16.mxu0 0
    %2719 = vmatpush1.bf16.msra.mxu0 0
    %2720 = vmatprep.subr.bf16.mxu0 0
    %2721 = vmatpush1.bf16.msra.mxu0 0
    %2722 = vmatprep.subr.bf16.mxu0 0
    %2723 = vmatpush1.bf16.msra.mxu0 0
    %2724 = vmatprep.subr.bf16.mxu0 0
    %2725 = vmatpush1.bf16.msra.mxu0 0
    %2726 = vmatprep.subr.bf16.mxu0 0
    %2727 = vmatpush1.bf16.msra.mxu0 0
    %2728 = vmatprep.subr.bf16.mxu0 0
    %2729 = vmatpush1.bf16.msra.mxu0 0
    %2730 = vmatprep.subr.bf16.mxu0 0
    %2731 = vmatpush1.bf16.msra.mxu0 0
    %2732 = vmatprep.subr.bf16.mxu0 0
    %2733 = vmatpush1.bf16.msra.mxu0 0
    %2734 = vmatprep.subr.bf16.mxu0 0
    %2735 = vmatpush1.bf16.msra.mxu0 0
    %2736 = vmatprep.subr.bf16.mxu0 0
    %2737 = vmatpush1.bf16.msra.mxu0 0
    %2738 = vmatprep.subr.bf16.mxu0 0
    %2739 = vmatpush1.bf16.msra.mxu0 0
    %2740 = vmatprep.mubr.bf16.mxu0 0
    %2741 = vmatmul.mubr.bf16.gmra.mrb[0].mxu0 %v2650
    %v2742 = vpop.f32.mrb[0].mxu0
    %v2743 = vadd.f32 %v2540, %v2742
    %v2744 = vpop.f32.mrb[0].mxu0
    %v2745 = vadd.f32 %v2544, %v2744
    %v2746 = vpop.f32.mrb[0].mxu0
    %v2747 = vadd.f32 %v2540, %v2746
    %v2748 = vpop.f32.mrb[0].mxu0
    %v2749 = vadd.f32 %v2544, %v2748
    %2750 = vmatprep.mubr.bf16.mxu0 0
    %2751 = vmatmul.mubr.bf16.gmra.mrb[0].mxu0 %v2653
    %v2752 = vpop.f32.mrb[0].mxu0
    %v2753 = vadd.f32 %v2540, %v2752
    %v2754 = vpop.f32.mrb[0].mxu0
    %v2755 = vadd.f32 %v2544, %v2754
    %v2756 = vpop.f32.mrb[0].mxu0
    %v2757 = vadd.f32 %v2540, %v2756
    %v2758 = vpop.f32.mrb[0].mxu0
    %v2759 = vadd.f32 %v2544, %v2758
    %2760 = vdwg.mxu0
    %2761 = vmatprep.subr.bf16.mxu0 %v2622
    %2762 = vmatpush1.bf16.msra.mxu0 %v2621
    %2763 = vmatprep.subr.bf16.mxu0 %v2630
    %2764 = vmatpush1.bf16.msra.mxu0 %v2629
    %2765 = vmatprep.subr.bf16.mxu0 0
    %2766 = vmatpush1.bf16.msra.mxu0 0
    %2767 = vmatprep.subr.bf16.mxu0 0
    %2768 = vmatpush1.bf16.msra.mxu0 0
    %2769 = vmatprep.subr.bf16.mxu0 0
    %2770 = vmatpush1.bf16.msra.mxu0 0
    %2771 = vmatprep.subr.bf16.mxu0 0
    %2772 = vmatpush1.bf16.msra.mxu0 0
    %2773 = vmatprep.subr.bf16.mxu0 0
    %2774 = vmatpush1.bf16.msra.mxu0 0
    %2775 = vmatprep.subr.bf16.mxu0 0
    %2776 = vmatpush1.bf16.msra.mxu0 0
    %2777 = vmatprep.subr.bf16.mxu0 0
    %2778 = vmatpush1.bf16.msra.mxu0 0
    %2779 = vmatprep.subr.bf16.mxu0 0
    %2780 = vmatpush1.bf16.msra.mxu0 0
    %2781 = vmatprep.subr.bf16.mxu0 0
    %2782 = vmatpush1.bf16.msra.mxu0 0
    %2783 = vmatprep.subr.bf16.mxu0 0
    %2784 = vmatpush1.bf16.msra.mxu0 0
    %2785 = vmatprep.subr.bf16.mxu0 0
    %2786 = vmatpush1.bf16.msra.mxu0 0
    %2787 = vmatprep.subr.bf16.mxu0 0
    %2788 = vmatpush1.bf16.msra.mxu0 0
    %2789 = vmatprep.subr.bf16.mxu0 0
    %2790 = vmatpush1.bf16.msra.mxu0 0
    %2791 = vmatprep.subr.bf16.mxu0 0
    %2792 = vmatpush1.bf16.msra.mxu0 0
    %2793 = vmatprep.mubr.bf16.mxu0 0
    %2794 = vmatmul.mubr.bf16.gmra.mrb[0].mxu0 %v2650
    %v2795 = vpop.f32.mrb[0].mxu0
    %v2796 = vadd.f32 %v2548, %v2795
    %v2797 = vpop.f32.mrb[0].mxu0
    %v2798 = vadd.f32 %v2552, %v2797
    %v2799 = vpop.f32.mrb[0].mxu0
    %v2800 = vadd.f32 %v2548, %v2799
    %v2801 = vpop.f32.mrb[0].mxu0
    %v2802 = vadd.f32 %v2552, %v2801
    %2803 = vmatprep.mubr.bf16.mxu0 0
    %2804 = vmatmul.mubr.bf16.gmra.mrb[0].mxu0 %v2653
    %v2805 = vpop.f32.mrb[0].mxu0
    %v2806 = vadd.f32 %v2548, %v2805
    %v2807 = vpop.f32.mrb[0].mxu0
    %v2808 = vadd.f32 %v2552, %v2807
    %v2809 = vpop.f32.mrb[0].mxu0
    %v2810 = vadd.f32 %v2548, %v2809
    %v2811 = vpop.f32.mrb[0].mxu0
    %v2812 = vadd.f32 %v2552, %v2811
    %2813 = vdwg.mxu0
    %2814 = vmatprep.subr.bf16.mxu0 %v2624
    %2815 = vmatpush1.bf16.msra.mxu0 %v2623
    %2816 = vmatprep.subr.bf16.mxu0 %v2632
    %2817 = vmatpush1.bf16.msra.mxu0 %v2631
    %2818 = vmatprep.subr.bf16.mxu0 0
    %2819 = vmatpush1.bf16.msra.mxu0 0
    %2820 = vmatprep.subr.bf16.mxu0 0
    %2821 = vmatpush1.bf16.msra.mxu0 0
    %2822 = vmatprep.subr.bf16.mxu0 0
    %2823 = vmatpush1.bf16.msra.mxu0 0
    %2824 = vmatprep.subr.bf16.mxu0 0
    %2825 = vmatpush1.bf16.msra.mxu0 0
    %2826 = vmatprep.subr.bf16.mxu0 0
    %2827 = vmatpush1.bf16.msra.mxu0 0
    %2828 = vmatprep.subr.bf16.mxu0 0
    %2829 = vmatpush1.bf16.msra.mxu0 0
    %2830 = vmatprep.subr.bf16.mxu0 0
    %2831 = vmatpush1.bf16.msra.mxu0 0
    %2832 = vmatprep.subr.bf16.mxu0 0
    %2833 = vmatpush1.bf16.msra.mxu0 0
    %2834 = vmatprep.subr.bf16.mxu0 0
    %2835 = vmatpush1.bf16.msra.mxu0 0
    %2836 = vmatprep.subr.bf16.mxu0 0
    %2837 = vmatpush1.bf16.msra.mxu0 0
    %2838 = vmatprep.subr.bf16.mxu0 0
    %2839 = vmatpush1.bf16.msra.mxu0 0
    %2840 = vmatprep.subr.bf16.mxu0 0
    %2841 = vmatpush1.bf16.msra.mxu0 0
    %2842 = vmatprep.subr.bf16.mxu0 0
    %2843 = vmatpush1.bf16.msra.mxu0 0
    %2844 = vmatprep.subr.bf16.mxu0 0
    %2845 = vmatpush1.bf16.msra.mxu0 0
    %2846 = vmatprep.mubr.bf16.mxu0 0
    %2847 = vmatmul.mubr.bf16.gmra.mrb[0].mxu0 %v2650
    %v2848 = vpop.f32.mrb[0].mxu0
    %v2849 = vadd.f32 %v2556, %v2848
    %v2850 = vpop.f32.mrb[0].mxu0
    %v2851 = vadd.f32 %v2560, %v2850
    %v2852 = vpop.f32.mrb[0].mxu0
    %v2853 = vadd.f32 %v2556, %v2852
    %v2854 = vpop.f32.mrb[0].mxu0
    %v2855 = vadd.f32 %v2560, %v2854
    %2856 = vmatprep.mubr.bf16.mxu0 0
    %2857 = vmatmul.mubr.bf16.gmra.mrb[0].mxu0 %v2653
    %v2858 = vpop.f32.mrb[0].mxu0
    %v2859 = vadd.f32 %v2556, %v2858
    %v2860 = vpop.f32.mrb[0].mxu0
    %v2861 = vadd.f32 %v2560, %v2860
    %v2862 = vpop.f32.mrb[0].mxu0
    %v2863 = vadd.f32 %v2556, %v2862
    %v2864 = vpop.f32.mrb[0].mxu0
    %v2865 = vadd.f32 %v2560, %v2864
    %2866 = vdwg.mxu0
    %v2867 = vmax.f32 %v2690, 0.0
    %v2868 = vmax.f32 %v2692, 0.0
    %v2869 = vmax.f32 %v2743, 0.0
    %v2870 = vmax.f32 %v2745, 0.0
    %v2871 = vmax.f32 %v2796, 0.0
    %v2872 = vmax.f32 %v2798, 0.0
    %v2873 = vmax.f32 %v2849, 0.0
    %v2874 = vmax.f32 %v2851, 0.0
    %v2875 = vmax.f32 %v2694, 0.0
    %v2876 = vmax.f32 %v2696, 0.0
    %v2877 = vmax.f32 %v2747, 0.0
    %v2878 = vmax.f32 %v2749, 0.0
    %v2879 = vmax.f32 %v2800, 0.0
    %v2880 = vmax.f32 %v2802, 0.0
    %v2881 = vmax.f32 %v2853, 0.0
    %v2882 = vmax.f32 %v2855, 0.0
    %v2883 = vmax.f32 %v2700, 0.0
    %v2884 = vmax.f32 %v2702, 0.0
    %v2885 = vmax.f32 %v2753, 0.0
    %v2886 = vmax.f32 %v2755, 0.0
    %v2887 = vmax.f32 %v2806, 0.0
    %v2888 = vmax.f32 %v2808, 0.0
    %v2889 = vmax.f32 %v2859, 0.0
    %v2890 = vmax.f32 %v2861, 0.0
    %v2891 = vmax.f32 %v2704, 0.0
    %v2892 = vmax.f32 %v2706, 0.0
    %v2893 = vmax.f32 %v2757, 0.0
    %v2894 = vmax.f32 %v2759, 0.0
    %v2895 = vmax.f32 %v2810, 0.0
    %v2896 = vmax.f32 %v2812, 0.0
    %v2897 = vmax.f32 %v2863, 0.0
    %v2898 = vmax.f32 %v2865, 0.0
    %v2899 = vpack.c.bf16 %v2875, %v2867
    %v2900 = vpack.c.bf16 %v2876, %v2868
    %v2901 = vpack.c.bf16 %v2877, %v2869
    %v2902 = vpack.c.bf16 %v2878, %v2870
    %v2903 = vpack.c.bf16 %v2879, %v2871
    %v2904 = vpack.c.bf16 %v2880, %v2872
    %v2905 = vpack.c.bf16 %v2881, %v2873
    %v2906 = vpack.c.bf16 %v2882, %v2874
    %v2907 = vpack.c.bf16 %v2891, %v2883
    %v2908 = vpack.c.bf16 %v2892, %v2884
    %v2909 = vpack.c.bf16 %v2893, %v2885
    %v2910 = vpack.c.bf16 %v2894, %v2886
    %v2911 = vpack.c.bf16 %v2895, %v2887
    %v2912 = vpack.c.bf16 %v2896, %v2888
    %v2913 = vpack.c.bf16 %v2897, %v2889
    %v2914 = vpack.c.bf16 %v2898, %v2890
    %v2915 = vld [vmem:[%s65] sm:$0xf]
    %v2916 = vld [vmem:[%s65 + $0x4] sm:$0xf]
    %v2917 = vld [vmem:[%s65 + $0x8] sm:$0xf]
    %v2918 = vld [vmem:[%s65 + $0xc] sm:$0xf]
    %v2919 = vld [vmem:[%s65 + $0x10] sm:$0xf]
    %v2920 = vld [vmem:[%s65 + $0x14] sm:$0xf]
    %v2921 = vld [vmem:[%s65 + $0x18] sm:$0xf]
    %v2922 = vld [vmem:[%s65 + $0x1c] sm:$0xf]
    %v2923 = vld [vmem:[%s65 + $0x20] sm:$0xf]
    %v2924 = vld [vmem:[%s65 + $0x24] sm:$0xf]
    %v2925 = vld [vmem:[%s65 + $0x28] sm:$0xf]
    %v2926 = vld [vmem:[%s65 + $0x2c] sm:$0xf]
    %v2927 = vld [vmem:[%s65 + $0x30] sm:$0xf]
    %v2928 = vld [vmem:[%s65 + $0x34] sm:$0xf]
    %v2929 = vld [vmem:[%s65 + $0x38] sm:$0xf]
    %v2930 = vld [vmem:[%s65 + $0x3c] sm:$0xf]
    %v2931 = vld [vmem:[%s65 + $0x40] sm:$0xf]
    %v2932 = vld [vmem:[%s65 + $0x44] sm:$0xf]
    %v2933 = vld [vmem:[%s65 + $0x48] sm:$0xf]
    %v2934 = vld [vmem:[%s65 + $0x4c] sm:$0xf]
    %v2935 = vld [vmem:[%s65 + $0x50] sm:$0xf]
    %v2936 = vld [vmem:[%s65 + $0x54] sm:$0xf]
    %v2937 = vld [vmem:[%s65 + $0x58] sm:$0xf]
    %v2938 = vld [vmem:[%s65 + $0x5c] sm:$0xf]
    %v2939 = vld [vmem:[%s65 + $0x60] sm:$0xf]
    %v2940 = vld [vmem:[%s65 + $0x64] sm:$0xf]
    %v2941 = vld [vmem:[%s65 + $0x68] sm:$0xf]
    %v2942 = vld [vmem:[%s65 + $0x6c] sm:$0xf]
    %v2943 = vld [vmem:[%s65 + $0x70] sm:$0xf]
    %v2944 = vld [vmem:[%s65 + $0x74] sm:$0xf]
    %v2945 = vld [vmem:[%s65 + $0x78] sm:$0xf]
    %v2946 = vld [vmem:[%s65 + $0x7c] sm:$0xf]
    %v2947 = vld [vmem:[%s65 + $0x80] sm:$0xf]
    %v2948 = vld [vmem:[%s65 + $0x84] sm:$0xf]
    %v2949 = vld [vmem:[%s65 + $0x88] sm:$0xf]
    %v2950 = vld [vmem:[%s65 + $0x8c] sm:$0xf]
    %v2951 = vld [vmem:[%s65 + $0x90] sm:$0xf]
    %v2952 = vld [vmem:[%s65 + $0x94] sm:$0xf]
    %v2953 = vld [vmem:[%s65 + $0x98] sm:$0xf]
    %v2954 = vld [vmem:[%s65 + $0x9c] sm:$0xf]
    %v2955 = vld [vmem:[%s65 + $0xa0] sm:$0xf]
    %v2956 = vld [vmem:[%s65 + $0xa4] sm:$0xf]
    %v2957 = vld [vmem:[%s65 + $0xa8] sm:$0xf]
    %v2958 = vld [vmem:[%s65 + $0xac] sm:$0xf]
    %v2959 = vld [vmem:[%s65 + $0xb0] sm:$0xf]
    %v2960 = vld [vmem:[%s65 + $0xb4] sm:$0xf]
    %v2961 = vld [vmem:[%s65 + $0xb8] sm:$0xf]
    %v2962 = vld [vmem:[%s65 + $0xbc] sm:$0xf]
    %v2963 = vld [vmem:[%s65 + $0xc0] sm:$0xf]
    %v2964 = vld [vmem:[%s65 + $0xc4] sm:$0xf]
    %v2965 = vld [vmem:[%s65 + $0xc8] sm:$0xf]
    %v2966 = vld [vmem:[%s65 + $0xcc] sm:$0xf]
    %v2967 = vld [vmem:[%s65 + $0xd0] sm:$0xf]
    %v2968 = vld [vmem:[%s65 + $0xd4] sm:$0xf]
    %v2969 = vld [vmem:[%s65 + $0xd8] sm:$0xf]
    %v2970 = vld [vmem:[%s65 + $0xdc] sm:$0xf]
    %v2971 = vld [vmem:[%s65 + $0xe0] sm:$0xf]
    %v2972 = vld [vmem:[%s65 + $0xe4] sm:$0xf]
    %v2973 = vld [vmem:[%s65 + $0xe8] sm:$0xf]
    %v2974 = vld [vmem:[%s65 + $0xec] sm:$0xf]
    %v2975 = vld [vmem:[%s65 + $0xf0] sm:$0xf]
    %v2976 = vld [vmem:[%s65 + $0xf4] sm:$0xf]
    %v2977 = vld [vmem:[%s65 + $0xf8] sm:$0xf]
    %v2978 = vld [vmem:[%s65 + $0xfc] sm:$0xf]
    %v2979 = vld [vmem:[%s65 + $0x100] sm:$0xf]
    %v2980 = vld [vmem:[%s65 + $0x104] sm:$0xf]
    %v2981 = vld [vmem:[%s65 + $0x108] sm:$0xf]
    %v2982 = vld [vmem:[%s65 + $0x10c] sm:$0xf]
    %v2983 = vld [vmem:[%s65 + $0x110] sm:$0xf]
    %v2984 = vld [vmem:[%s65 + $0x114] sm:$0xf]
    %v2985 = vld [vmem:[%s65 + $0x118] sm:$0xf]
    %v2986 = vld [vmem:[%s65 + $0x11c] sm:$0xf]
    %v2987 = vld [vmem:[%s65 + $0x120] sm:$0xf]
    %v2988 = vld [vmem:[%s65 + $0x124] sm:$0xf]
    %v2989 = vld [vmem:[%s65 + $0x128] sm:$0xf]
    %v2990 = vld [vmem:[%s65 + $0x12c] sm:$0xf]
    %v2991 = vld [vmem:[%s65 + $0x130] sm:$0xf]
    %v2992 = vld [vmem:[%s65 + $0x134] sm:$0xf]
    %v2993 = vld [vmem:[%s65 + $0x138] sm:$0xf]
    %v2994 = vld [vmem:[%s65 + $0x13c] sm:$0xf]
    %v2995 = vld [vmem:[%s65 + $0x140] sm:$0xf]
    %v2996 = vld [vmem:[%s65 + $0x144] sm:$0xf]
    %v2997 = vld [vmem:[%s65 + $0x148] sm:$0xf]
    %v2998 = vld [vmem:[%s65 + $0x14c] sm:$0xf]
    %v2999 = vld [vmem:[%s65 + $0x150] sm:$0xf]
    %v3000 = vld [vmem:[%s65 + $0x154] sm:$0xf]
    %v3001 = vld [vmem:[%s65 + $0x158] sm:$0xf]
    %v3002 = vld [vmem:[%s65 + $0x15c] sm:$0xf]
    %v3003 = vld [vmem:[%s65 + $0x160] sm:$0xf]
    %v3004 = vld [vmem:[%s65 + $0x164] sm:$0xf]
    %v3005 = vld [vmem:[%s65 + $0x168] sm:$0xf]
    %v3006 = vld [vmem:[%s65 + $0x16c] sm:$0xf]
    %v3007 = vld [vmem:[%s65 + $0x170] sm:$0xf]
    %v3008 = vld [vmem:[%s65 + $0x174] sm:$0xf]
    %v3009 = vld [vmem:[%s65 + $0x178] sm:$0xf]
    %v3010 = vld [vmem:[%s65 + $0x17c] sm:$0xf]
    %v3011 = vld [vmem:[%s65 + $0x180] sm:$0xf]
    %v3012 = vld [vmem:[%s65 + $0x184] sm:$0xf]
    %v3013 = vld [vmem:[%s65 + $0x188] sm:$0xf]
    %v3014 = vld [vmem:[%s65 + $0x18c] sm:$0xf]
    %v3015 = vld [vmem:[%s65 + $0x190] sm:$0xf]
    %v3016 = vld [vmem:[%s65 + $0x194] sm:$0xf]
    %v3017 = vld [vmem:[%s65 + $0x198] sm:$0xf]
    %v3018 = vld [vmem:[%s65 + $0x19c] sm:$0xf]
    %v3019 = vld [vmem:[%s65 + $0x1a0] sm:$0xf]
    %v3020 = vld [vmem:[%s65 + $0x1a4] sm:$0xf]
    %v3021 = vld [vmem:[%s65 + $0x1a8] sm:$0xf]
    %v3022 = vld [vmem:[%s65 + $0x1ac] sm:$0xf]
    %v3023 = vld [vmem:[%s65 + $0x1b0] sm:$0xf]
    %v3024 = vld [vmem:[%s65 + $0x1b4] sm:$0xf]
    %v3025 = vld [vmem:[%s65 + $0x1b8] sm:$0xf]
    %v3026 = vld [vmem:[%s65 + $0x1bc] sm:$0xf]
    %v3027 = vld [vmem:[%s65 + $0x1c0] sm:$0xf]
    %v3028 = vld [vmem:[%s65 + $0x1c4] sm:$0xf]
    %v3029 = vld [vmem:[%s65 + $0x1c8] sm:$0xf]
    %v3030 = vld [vmem:[%s65 + $0x1cc] sm:$0xf]
    %v3031 = vld [vmem:[%s65 + $0x1d0] sm:$0xf]
    %v3032 = vld [vmem:[%s65 + $0x1d4] sm:$0xf]
    %v3033 = vld [vmem:[%s65 + $0x1d8] sm:$0xf]
    %v3034 = vld [vmem:[%s65 + $0x1dc] sm:$0xf]
    %v3035 = vld [vmem:[%s65 + $0x1e0] sm:$0xf]
    %v3036 = vld [vmem:[%s65 + $0x1e4] sm:$0xf]
    %v3037 = vld [vmem:[%s65 + $0x1e8] sm:$0xf]
    %v3038 = vld [vmem:[%s65 + $0x1ec] sm:$0xf]
    %v3039 = vld [vmem:[%s65 + $0x1f0] sm:$0xf]
    %v3040 = vld [vmem:[%s65 + $0x1f4] sm:$0xf]
    %v3041 = vld [vmem:[%s65 + $0x1f8] sm:$0xf]
    %v3042 = vld [vmem:[%s65 + $0x1fc] sm:$0xf]
    %v3171 = vunpack.c.l.b16 %v2915
    %v3172 = vunpack.c.l.b16 %v2916
    %v3173 = vunpack.c.l.b16 %v2917
    %v3174 = vunpack.c.l.b16 %v2918
    %v3175 = vunpack.c.l.b16 %v2919
    %v3176 = vunpack.c.l.b16 %v2920
    %v3177 = vunpack.c.l.b16 %v2921
    %v3178 = vunpack.c.l.b16 %v2922
    %v3179 = vunpack.c.l.b16 %v2923
    %v3180 = vunpack.c.l.b16 %v2924
    %v3181 = vunpack.c.l.b16 %v2925
    %v3182 = vunpack.c.l.b16 %v2926
    %v3183 = vunpack.c.l.b16 %v2927
    %v3184 = vunpack.c.l.b16 %v2928
    %v3185 = vunpack.c.l.b16 %v2929
    %v3186 = vunpack.c.l.b16 %v2930
    %v3187 = vunpack.c.l.b16 %v2931
    %v3188 = vunpack.c.l.b16 %v2932
    %v3189 = vunpack.c.l.b16 %v2933
    %v3190 = vunpack.c.l.b16 %v2934
    %v3191 = vunpack.c.l.b16 %v2935
    %v3192 = vunpack.c.l.b16 %v2936
    %v3193 = vunpack.c.l.b16 %v2937
    %v3194 = vunpack.c.l.b16 %v2938
    %v3195 = vunpack.c.l.b16 %v2939
    %v3196 = vunpack.c.l.b16 %v2940
    %v3197 = vunpack.c.l.b16 %v2941
    %v3198 = vunpack.c.l.b16 %v2942
    %v3199 = vunpack.c.l.b16 %v2943
    %v3200 = vunpack.c.l.b16 %v2944
    %v3201 = vunpack.c.l.b16 %v2945
    %v3202 = vunpack.c.l.b16 %v2946
    %v3203 = vunpack.c.l.b16 %v2947
    %v3204 = vunpack.c.l.b16 %v2948
    %v3205 = vunpack.c.l.b16 %v2949
    %v3206 = vunpack.c.l.b16 %v2950
    %v3207 = vunpack.c.l.b16 %v2951
    %v3208 = vunpack.c.l.b16 %v2952
    %v3209 = vunpack.c.l.b16 %v2953
    %v3210 = vunpack.c.l.b16 %v2954
    %v3211 = vunpack.c.l.b16 %v2955
    %v3212 = vunpack.c.l.b16 %v2956
    %v3213 = vunpack.c.l.b16 %v2957
    %v3214 = vunpack.c.l.b16 %v2958
    %v3215 = vunpack.c.l.b16 %v2959
    %v3216 = vunpack.c.l.b16 %v2960
    %v3217 = vunpack.c.l.b16 %v2961
    %v3218 = vunpack.c.l.b16 %v2962
    %v3219 = vunpack.c.l.b16 %v2963
    %v3220 = vunpack.c.l.b16 %v2964
    %v3221 = vunpack.c.l.b16 %v2965
    %v3222 = vunpack.c.l.b16 %v2966
    %v3223 = vunpack.c.l.b16 %v2967
    %v3224 = vunpack.c.l.b16 %v2968
    %v3225 = vunpack.c.l.b16 %v2969
    %v3226 = vunpack.c.l.b16 %v2970
    %v3227 = vunpack.c.l.b16 %v2971
    %v3228 = vunpack.c.l.b16 %v2972
    %v3229 = vunpack.c.l.b16 %v2973
    %v3230 = vunpack.c.l.b16 %v2974
    %v3231 = vunpack.c.l.b16 %v2975
    %v3232 = vunpack.c.l.b16 %v2976
    %v3233 = vunpack.c.l.b16 %v2977
    %v3234 = vunpack.c.l.b16 %v2978
    %v3235 = vunpack.c.l.b16 %v2979
    %v3236 = vunpack.c.l.b16 %v2980
    %v3237 = vunpack.c.l.b16 %v2981
    %v3238 = vunpack.c.l.b16 %v2982
    %v3239 = vunpack.c.l.b16 %v2983
    %v3240 = vunpack.c.l.b16 %v2984
    %v3241 = vunpack.c.l.b16 %v2985
    %v3242 = vunpack.c.l.b16 %v2986
    %v3243 = vunpack.c.l.b16 %v2987
    %v3244 = vunpack.c.l.b16 %v2988
    %v3245 = vunpack.c.l.b16 %v2989
    %v3246 = vunpack.c.l.b16 %v2990
    %v3247 = vunpack.c.l.b16 %v2991
    %v3248 = vunpack.c.l.b16 %v2992
    %v3249 = vunpack.c.l.b16 %v2993
    %v3250 = vunpack.c.l.b16 %v2994
    %v3251 = vunpack.c.l.b16 %v2995
    %v3252 = vunpack.c.l.b16 %v2996
    %v3253 = vunpack.c.l.b16 %v2997
    %v3254 = vunpack.c.l.b16 %v2998
    %v3255 = vunpack.c.l.b16 %v2999
    %v3256 = vunpack.c.l.b16 %v3000
    %v3257 = vunpack.c.l.b16 %v3001
    %v3258 = vunpack.c.l.b16 %v3002
    %v3259 = vunpack.c.l.b16 %v3003
    %v3260 = vunpack.c.l.b16 %v3004
    %v3261 = vunpack.c.l.b16 %v3005
    %v3262 = vunpack.c.l.b16 %v3006
    %v3263 = vunpack.c.l.b16 %v3007
    %v3264 = vunpack.c.l.b16 %v3008
    %v3265 = vunpack.c.l.b16 %v3009
    %v3266 = vunpack.c.l.b16 %v3010
    %v3267 = vunpack.c.l.b16 %v3011
    %v3268 = vunpack.c.l.b16 %v3012
    %v3269 = vunpack.c.l.b16 %v3013
    %v3270 = vunpack.c.l.b16 %v3014
    %v3271 = vunpack.c.l.b16 %v3015
    %v3272 = vunpack.c.l.b16 %v3016
    %v3273 = vunpack.c.l.b16 %v3017
    %v3274 = vunpack.c.l.b16 %v3018
    %v3275 = vunpack.c.l.b16 %v3019
    %v3276 = vunpack.c.l.b16 %v3020
    %v3277 = vunpack.c.l.b16 %v3021
    %v3278 = vunpack.c.l.b16 %v3022
    %v3279 = vunpack.c.l.b16 %v3023
    %v3280 = vunpack.c.l.b16 %v3024
    %v3281 = vunpack.c.l.b16 %v3025
    %v3282 = vunpack.c.l.b16 %v3026
    %v3283 = vunpack.c.l.b16 %v3027
    %v3284 = vunpack.c.l.b16 %v3028
    %v3285 = vunpack.c.l.b16 %v3029
    %v3286 = vunpack.c.l.b16 %v3030
    %v3287 = vunpack.c.l.b16 %v3031
    %v3288 = vunpack.c.l.b16 %v3032
    %v3289 = vunpack.c.l.b16 %v3033
    %v3290 = vunpack.c.l.b16 %v3034
    %v3291 = vunpack.c.l.b16 %v3035
    %v3292 = vunpack.c.l.b16 %v3036
    %v3293 = vunpack.c.l.b16 %v3037
    %v3294 = vunpack.c.l.b16 %v3038
    %v3295 = vunpack.c.l.b16 %v3039
    %v3296 = vunpack.c.l.b16 %v3040
    %v3297 = vunpack.c.l.b16 %v3041
    %v3298 = vunpack.c.l.b16 %v3042
    %v3299 = vpack.c.b16 %v3172, %v3171
    %v3300 = vpack.c.b16 %v3174, %v3173
    %v3301 = vpack.c.b16 %v3176, %v3175
    %v3302 = vpack.c.b16 %v3178, %v3177
    %v3303 = vpack.c.b16 %v3180, %v3179
    %v3304 = vpack.c.b16 %v3182, %v3181
    %v3305 = vpack.c.b16 %v3184, %v3183
    %v3306 = vpack.c.b16 %v3186, %v3185
    %v3307 = vpack.c.b16 %v3188, %v3187
    %v3308 = vpack.c.b16 %v3190, %v3189
    %v3309 = vpack.c.b16 %v3192, %v3191
    %v3310 = vpack.c.b16 %v3194, %v3193
    %v3311 = vpack.c.b16 %v3196, %v3195
    %v3312 = vpack.c.b16 %v3198, %v3197
    %v3313 = vpack.c.b16 %v3200, %v3199
    %v3314 = vpack.c.b16 %v3202, %v3201
    %v3315 = vpack.c.b16 %v3204, %v3203
    %v3316 = vpack.c.b16 %v3206, %v3205
    %v3317 = vpack.c.b16 %v3208, %v3207
    %v3318 = vpack.c.b16 %v3210, %v3209
    %v3319 = vpack.c.b16 %v3212, %v3211
    %v3320 = vpack.c.b16 %v3214, %v3213
    %v3321 = vpack.c.b16 %v3216, %v3215
    %v3322 = vpack.c.b16 %v3218, %v3217
    %v3323 = vpack.c.b16 %v3220, %v3219
    %v3324 = vpack.c.b16 %v3222, %v3221
    %v3325 = vpack.c.b16 %v3224, %v3223
    %v3326 = vpack.c.b16 %v3226, %v3225
    %v3327 = vpack.c.b16 %v3228, %v3227
    %v3328 = vpack.c.b16 %v3230, %v3229
    %v3329 = vpack.c.b16 %v3232, %v3231
    %v3330 = vpack.c.b16 %v3234, %v3233
    %v3331 = vpack.c.b16 %v3236, %v3235
    %v3332 = vpack.c.b16 %v3238, %v3237
    %v3333 = vpack.c.b16 %v3240, %v3239
    %v3334 = vpack.c.b16 %v3242, %v3241
    %v3335 = vpack.c.b16 %v3244, %v3243
    %v3336 = vpack.c.b16 %v3246, %v3245
    %v3337 = vpack.c.b16 %v3248, %v3247
    %v3338 = vpack.c.b16 %v3250, %v3249
    %v3339 = vpack.c.b16 %v3252, %v3251
    %v3340 = vpack.c.b16 %v3254, %v3253
    %v3341 = vpack.c.b16 %v3256, %v3255
    %v3342 = vpack.c.b16 %v3258, %v3257
    %v3343 = vpack.c.b16 %v3260, %v3259
    %v3344 = vpack.c.b16 %v3262, %v3261
    %v3345 = vpack.c.b16 %v3264, %v3263
    %v3346 = vpack.c.b16 %v3266, %v3265
    %v3347 = vpack.c.b16 %v3268, %v3267
    %v3348 = vpack.c.b16 %v3270, %v3269
    %v3349 = vpack.c.b16 %v3272, %v3271
    %v3350 = vpack.c.b16 %v3274, %v3273
    %v3351 = vpack.c.b16 %v3276, %v3275
    %v3352 = vpack.c.b16 %v3278, %v3277
    %v3353 = vpack.c.b16 %v3280, %v3279
    %v3354 = vpack.c.b16 %v3282, %v3281
    %v3355 = vpack.c.b16 %v3284, %v3283
    %v3356 = vpack.c.b16 %v3286, %v3285
    %v3357 = vpack.c.b16 %v3288, %v3287
    %v3358 = vpack.c.b16 %v3290, %v3289
    %v3359 = vpack.c.b16 %v3292, %v3291
    %v3360 = vpack.c.b16 %v3294, %v3293
    %v3361 = vpack.c.b16 %v3296, %v3295
    %v3362 = vpack.c.b16 %v3298, %v3297
    %3427 = vmatprep.subr.bf16.mxu0 0
    %3428 = vmatpush1.bf16.msra.mxu0 %v3299
    %3429 = vmatprep.subr.bf16.mxu0 0
    %3430 = vmatpush1.bf16.msra.mxu0 %v3300
    %3431 = vmatprep.subr.bf16.mxu0 0
    %3432 = vmatpush1.bf16.msra.mxu0 %v3301
    %3433 = vmatprep.subr.bf16.mxu0 0
    %3434 = vmatpush1.bf16.msra.mxu0 %v3302
    %3435 = vmatprep.subr.bf16.mxu0 0
    %3436 = vmatpush1.bf16.msra.mxu0 %v3303
    %3437 = vmatprep.subr.bf16.mxu0 0
    %3438 = vmatpush1.bf16.msra.mxu0 %v3304
    %3439 = vmatprep.subr.bf16.mxu0 0
    %3440 = vmatpush1.bf16.msra.mxu0 %v3305
    %3441 = vmatprep.subr.bf16.mxu0 0
    %3442 = vmatpush1.bf16.msra.mxu0 %v3306
    %3443 = vmatprep.subr.bf16.mxu0 0
    %3444 = vmatpush1.bf16.msra.mxu0 %v3307
    %3445 = vmatprep.subr.bf16.mxu0 0
    %3446 = vmatpush1.bf16.msra.mxu0 %v3308
    %3447 = vmatprep.subr.bf16.mxu0 0
    %3448 = vmatpush1.bf16.msra.mxu0 %v3309
    %3449 = vmatprep.subr.bf16.mxu0 0
    %3450 = vmatpush1.bf16.msra.mxu0 %v3310
    %3451 = vmatprep.subr.bf16.mxu0 0
    %3452 = vmatpush1.bf16.msra.mxu0 %v3311
    %3453 = vmatprep.subr.bf16.mxu0 0
    %3454 = vmatpush1.bf16.msra.mxu0 %v3312
    %3455 = vmatprep.subr.bf16.mxu0 0
    %3456 = vmatpush1.bf16.msra.mxu0 %v3313
    %3457 = vmatprep.subr.bf16.mxu0 0
    %3458 = vmatpush1.bf16.msra.mxu0 %v3314
    %3459 = vmatprep.mubr.bf16.mxu0 %v2900
    %3460 = vmatmul.mubr.bf16.gmra.mrb[0].mxu0 %v2899
    %v3461 = vpop.f32.mrb[0].mxu0
    %v3462 = vadd.f32 0.0, %v3461
    %v3463 = vpop.f32.mrb[0].mxu0
    %v3464 = vpop.f32.mrb[0].mxu0
    %v3465 = vadd.f32 0.0, %v3464
    %v3466 = vpop.f32.mrb[0].mxu0
    %3467 = vmatprep.mubr.bf16.mxu0 %v2908
    %3468 = vmatmul.mubr.bf16.gmra.mrb[0].mxu0 %v2907
    %v3469 = vpop.f32.mrb[0].mxu0
    %v3470 = vadd.f32 0.0, %v3469
    %v3471 = vpop.f32.mrb[0].mxu0
    %v3472 = vpop.f32.mrb[0].mxu0
    %v3473 = vadd.f32 0.0, %v3472
    %v3474 = vpop.f32.mrb[0].mxu0
    %3475 = vdwg.mxu0
    %3476 = vmatprep.subr.bf16.mxu0 0
    %3477 = vmatpush1.bf16.msra.mxu0 %v3315
    %3478 = vmatprep.subr.bf16.mxu0 0
    %3479 = vmatpush1.bf16.msra.mxu0 %v3316
    %3480 = vmatprep.subr.bf16.mxu0 0
    %3481 = vmatpush1.bf16.msra.mxu0 %v3317
    %3482 = vmatprep.subr.bf16.mxu0 0
    %3483 = vmatpush1.bf16.msra.mxu0 %v3318
    %3484 = vmatprep.subr.bf16.mxu0 0
    %3485 = vmatpush1.bf16.msra.mxu0 %v3319
    %3486 = vmatprep.subr.bf16.mxu0 0
    %3487 = vmatpush1.bf16.msra.mxu0 %v3320
    %3488 = vmatprep.subr.bf16.mxu0 0
    %3489 = vmatpush1.bf16.msra.mxu0 %v3321
    %3490 = vmatprep.subr.bf16.mxu0 0
    %3491 = vmatpush1.bf16.msra.mxu0 %v3322
    %3492 = vmatprep.subr.bf16.mxu0 0
    %3493 = vmatpush1.bf16.msra.mxu0 %v3323
    %3494 = vmatprep.subr.bf16.mxu0 0
    %3495 = vmatpush1.bf16.msra.mxu0 %v3324
    %3496 = vmatprep.subr.bf16.mxu0 0
    %3497 = vmatpush1.bf16.msra.mxu0 %v3325
    %3498 = vmatprep.subr.bf16.mxu0 0
    %3499 = vmatpush1.bf16.msra.mxu0 %v3326
    %3500 = vmatprep.subr.bf16.mxu0 0
    %3501 = vmatpush1.bf16.msra.mxu0 %v3327
    %3502 = vmatprep.subr.bf16.mxu0 0
    %3503 = vmatpush1.bf16.msra.mxu0 %v3328
    %3504 = vmatprep.subr.bf16.mxu0 0
    %3505 = vmatpush1.bf16.msra.mxu0 %v3329
    %3506 = vmatprep.subr.bf16.mxu0 0
    %3507 = vmatpush1.bf16.msra.mxu0 %v3330
    %3508 = vmatprep.mubr.bf16.mxu0 %v2902
    %3509 = vmatmul.mubr.bf16.gmra.mrb[0].mxu0 %v2901
    %v3510 = vpop.f32.mrb[0].mxu0
    %v3511 = vadd.f32 %v3462, %v3510
    %v3512 = vpop.f32.mrb[0].mxu0
    %v3513 = vpop.f32.mrb[0].mxu0
    %v3514 = vadd.f32 %v3465, %v3513
    %v3515 = vpop.f32.mrb[0].mxu0
    %3516 = vmatprep.mubr.bf16.mxu0 %v2910
    %3517 = vmatmul.mubr.bf16.gmra.mrb[0].mxu0 %v2909
    %v3518 = vpop.f32.mrb[0].mxu0
    %v3519 = vadd.f32 %v3470, %v3518
    %v3520 = vpop.f32.mrb[0].mxu0
    %v3521 = vpop.f32.mrb[0].mxu0
    %v3522 = vadd.f32 %v3473, %v3521
    %v3523 = vpop.f32.mrb[0].mxu0
    %3524 = vdwg.mxu0
    %3525 = vmatprep.subr.bf16.mxu0 0
    %3526 = vmatpush1.bf16.msra.mxu0 %v3331
    %3527 = vmatprep.subr.bf16.mxu0 0
    %3528 = vmatpush1.bf16.msra.mxu0 %v3332
    %3529 = vmatprep.subr.bf16.mxu0 0
    %3530 = vmatpush1.bf16.msra.mxu0 %v3333
    %3531 = vmatprep.subr.bf16.mxu0 0
    %3532 = vmatpush1.bf16.msra.mxu0 %v3334
    %3533 = vmatprep.subr.bf16.mxu0 0
    %3534 = vmatpush1.bf16.msra.mxu0 %v3335
    %3535 = vmatprep.subr.bf16.mxu0 0
    %3536 = vmatpush1.bf16.msra.mxu0 %v3336
    %3537 = vmatprep.subr.bf16.mxu0 0
    %3538 = vmatpush1.bf16.msra.mxu0 %v3337
    %3539 = vmatprep.subr.bf16.mxu0 0
    %3540 = vmatpush1.bf16.msra.mxu0 %v3338
    %3541 = vmatprep.subr.bf16.mxu0 0
    %3542 = vmatpush1.bf16.msra.mxu0 %v3339
    %3543 = vmatprep.subr.bf16.mxu0 0
    %3544 = vmatpush1.bf16.msra.mxu0 %v3340
    %3545 = vmatprep.subr.bf16.mxu0 0
    %3546 = vmatpush1.bf16.msra.mxu0 %v3341
    %3547 = vmatprep.subr.bf16.mxu0 0
    %3548 = vmatpush1.bf16.msra.mxu0 %v3342
    %3549 = vmatprep.subr.bf16.mxu0 0
    %3550 = vmatpush1.bf16.msra.mxu0 %v3343
    %3551 = vmatprep.subr.bf16.mxu0 0
    %3552 = vmatpush1.bf16.msra.mxu0 %v3344
    %3553 = vmatprep.subr.bf16.mxu0 0
    %3554 = vmatpush1.bf16.msra.mxu0 %v3345
    %3555 = vmatprep.subr.bf16.mxu0 0
    %3556 = vmatpush1.bf16.msra.mxu0 %v3346
    %3557 = vmatprep.mubr.bf16.mxu0 %v2904
    %3558 = vmatmul.mubr.bf16.gmra.mrb[0].mxu0 %v2903
    %v3559 = vpop.f32.mrb[0].mxu0
    %v3560 = vadd.f32 %v3511, %v3559
    %v3561 = vpop.f32.mrb[0].mxu0
    %v3562 = vpop.f32.mrb[0].mxu0
    %v3563 = vadd.f32 %v3514, %v3562
    %v3564 = vpop.f32.mrb[0].mxu0
    %3565 = vmatprep.mubr.bf16.mxu0 %v2912
    %3566 = vmatmul.mubr.bf16.gmra.mrb[0].mxu0 %v2911
    %v3567 = vpop.f32.mrb[0].mxu0
    %v3568 = vadd.f32 %v3519, %v3567
    %v3569 = vpop.f32.mrb[0].mxu0
    %v3570 = vpop.f32.mrb[0].mxu0
    %v3571 = vadd.f32 %v3522, %v3570
    %v3572 = vpop.f32.mrb[0].mxu0
    %3573 = vdwg.mxu0
    %3574 = vmatprep.subr.bf16.mxu0 0
    %3575 = vmatpush1.bf16.msra.mxu0 %v3347
    %3576 = vmatprep.subr.bf16.mxu0 0
    %3577 = vmatpush1.bf16.msra.mxu0 %v3348
    %3578 = vmatprep.subr.bf16.mxu0 0
    %3579 = vmatpush1.bf16.msra.mxu0 %v3349
    %3580 = vmatprep.subr.bf16.mxu0 0
    %3581 = vmatpush1.bf16.msra.mxu0 %v3350
    %3582 = vmatprep.subr.bf16.mxu0 0
    %3583 = vmatpush1.bf16.msra.mxu0 %v3351
    %3584 = vmatprep.subr.bf16.mxu0 0
    %3585 = vmatpush1.bf16.msra.mxu0 %v3352
    %3586 = vmatprep.subr.bf16.mxu0 0
    %3587 = vmatpush1.bf16.msra.mxu0 %v3353
    %3588 = vmatprep.subr.bf16.mxu0 0
    %3589 = vmatpush1.bf16.msra.mxu0 %v3354
    %3590 = vmatprep.subr.bf16.mxu0 0
    %3591 = vmatpush1.bf16.msra.mxu0 %v3355
    %3592 = vmatprep.subr.bf16.mxu0 0
    %3593 = vmatpush1.bf16.msra.mxu0 %v3356
    %3594 = vmatprep.subr.bf16.mxu0 0
    %3595 = vmatpush1.bf16.msra.mxu0 %v3357
    %3596 = vmatprep.subr.bf16.mxu0 0
    %3597 = vmatpush1.bf16.msra.mxu0 %v3358
    %3598 = vmatprep.subr.bf16.mxu0 0
    %3599 = vmatpush1.bf16.msra.mxu0 %v3359
    %3600 = vmatprep.subr.bf16.mxu0 0
    %3601 = vmatpush1.bf16.msra.mxu0 %v3360
    %3602 = vmatprep.subr.bf16.mxu0 0
    %3603 = vmatpush1.bf16.msra.mxu0 %v3361
    %3604 = vmatprep.subr.bf16.mxu0 0
    %3605 = vmatpush1.bf16.msra.mxu0 %v3362
    %3606 = vmatprep.mubr.bf16.mxu0 %v2906
    %3607 = vmatmul.mubr.bf16.gmra.mrb[0].mxu0 %v2905
    %v3608 = vpop.f32.mrb[0].mxu0
    %v3609 = vadd.f32 %v3560, %v3608
    %v3610 = vpop.f32.mrb[0].mxu0
    %v3611 = vpop.f32.mrb[0].mxu0
    %v3612 = vadd.f32 %v3563, %v3611
    %v3613 = vpop.f32.mrb[0].mxu0
    %3614 = vmatprep.mubr.bf16.mxu0 %v2914
    %3615 = vmatmul.mubr.bf16.gmra.mrb[0].mxu0 %v2913
    %v3616 = vpop.f32.mrb[0].mxu0
    %v3617 = vadd.f32 %v3568, %v3616
    %v3618 = vpop.f32.mrb[0].mxu0
    %v3619 = vpop.f32.mrb[0].mxu0
    %v3620 = vadd.f32 %v3571, %v3619
    %v3621 = vpop.f32.mrb[0].mxu0
    %3622 = vdwg.mxu0
    %v3623 = vadd.f32 %v2435, %v3609
    %v3624 = vadd.f32 %v2436, %v3612
    %v3625 = vadd.f32 %v2437, %v3617
    %v3626 = vadd.f32 %v2438, %v3620
    %v3627 = vld [vmem:[%s67] sm:$0x1]
    %v3628 = vlaneseq
    %v3629 = vshrl.u32 %v3628, 7
    %v3630 = vsub.s32 0, %v3629
    %v3631 = vrot.slane %v3627, %v3630
    %v3632 = vadd.f32 %v3623, %v3631
    %v3633 = vadd.f32 %v3624, %v3631
    %v3634 = vadd.f32 %v3625, %v3631
    %v3635 = vadd.f32 %v3626, %v3631
    %v3636 = vld [vmem:[%s45 + $0x1] sm:$0x1]
    %v3637 = vld [vmem:[%s47 + $0x1] sm:$0x1]
    %v3638 = vsel %vm374, %v3632, 0.0
    %3639 = vadd.xlane.f32.xlu0 %v3638
    %v3640 = vpop.xlane.xlu0 %3639
    %v3641 = vsel %vm374, %v3633, 0.0
    %3642 = vadd.xlane.f32.xlu0 %v3641
    %v3643 = vpop.xlane.xlu0 %3642
    %v3644 = vsel %vm374, %v3634, 0.0
    %3645 = vadd.xlane.f32.xlu0 %v3644
    %v3646 = vpop.xlane.xlu0 %3645
    %v3647 = vsel %vm1004, %v3635, 0.0
    %3648 = vadd.xlane.f32.xlu0 %v3647
    %v3649 = vpop.xlane.xlu0 %3648
    %v3650 = vmul.f32 %v3640, %v381
    %v3651 = vmul.f32 %v3643, %v381
    %v3652 = vmul.f32 %v3646, %v381
    %v3653 = vmul.f32 %v3649, %v381
    %v3654 = vsub.f32 %v3632, %v3650
    %v3655 = vsub.f32 %v3633, %v3651
    %v3656 = vsub.f32 %v3634, %v3652
    %v3657 = vsub.f32 %v3635, %v3653
    %v3658 = vmul.f32 %v3654, %v3654
    %v3659 = vmul.f32 %v3655, %v3655
    %v3660 = vmul.f32 %v3656, %v3656
    %v3661 = vmul.f32 %v3657, %v3657
    %v3662 = vsel %vm374, %v3658, 0.0
    %3663 = vadd.xlane.f32.xlu0 %v3662
    %v3664 = vpop.xlane.xlu0 %3663
    %v3665 = vsel %vm374, %v3659, 0.0
    %3666 = vadd.xlane.f32.xlu0 %v3665
    %v3667 = vpop.xlane.xlu0 %3666
    %v3668 = vsel %vm374, %v3660, 0.0
    %3669 = vadd.xlane.f32.xlu0 %v3668
    %v3670 = vpop.xlane.xlu0 %3669
    %v3671 = vsel %vm1004, %v3661, 0.0
    %3672 = vadd.xlane.f32.xlu0 %v3671
    %v3673 = vpop.xlane.xlu0 %3672
    %v3674 = vmul.f32 %v3664, 0.032258064
    %v3675 = vmul.f32 %v3667, 0.032258064
    %v3676 = vmul.f32 %v3670, 0.032258064
    %v3677 = vmul.f32 %v3673, 0.032258064
    %v3678 = vlaneseq
    %v3679 = vshrl.u32 %v3678, 7
    %v3680 = vsub.s32 0, %v3679
    %v3681 = vrot.slane %v3636, %v3680
    %v3682 = vmul.f32 %v3681, %v3654
    %v3683 = vmul.f32 %v3681, %v3655
    %v3684 = vmul.f32 %v3681, %v3656
    %v3685 = vmul.f32 %v3681, %v3657
    %v3686 = vadd.f32 %v3674, 1e-06
    %v3687 = vadd.f32 %v3675, 1e-06
    %v3688 = vadd.f32 %v3676, 1e-06
    %v3689 = vadd.f32 %v3677, 1e-06
    %v3690 = vrsqrt.pop %v3686
    %v3691 = vrsqrt.pop %v3687
    %v3692 = vrsqrt.pop %v3688
    %v3693 = vrsqrt.pop %v3689
    %v3694 = vmul.f32 %v3682, %v3690
    %v3695 = vmul.f32 %v3683, %v3691
    %v3696 = vmul.f32 %v3684, %v3692
    %v3697 = vmul.f32 %v3685, %v3693
    %v3698 = vlaneseq
    %v3699 = vshrl.u32 %v3698, 7
    %v3700 = vsub.s32 0, %v3699
    %v3701 = vrot.slane %v3637, %v3700
    %v3702 = vadd.f32 %v3694, %v3701
    %v3703 = vadd.f32 %v3695, %v3701
    %v3704 = vadd.f32 %v3696, %v3701
    %v3705 = vadd.f32 %v3697, %v3701
    %s3706 = scalar_lea.vmem %s53, 32
    %v3707 = vld [vmem:[%s3706] sm:$0xff]
    %v3708 = vld [vmem:[%s3706 + $0x8] sm:$0xff]
    %v3709 = vld [vmem:[%s3706 + $0x10] sm:$0xff]
    %v3710 = vld [vmem:[%s3706 + $0x18] sm:$0xff]
    %v3711 = vld [vmem:[%s55 + $0x1] sm:$0x1]
    %v3712 = vlaneseq
    %v3713 = vshrl.u32 %v3712, 7
    %v3714 = vsub.s32 0, %v3713
    %v3715 = vrot.slane %v3711, %v3714
    %v3717 = vsel %vm374, %v3702, 0
    %v3720 = vsel %vm374, %v3703, 0
    %v3723 = vsel %vm374, %v3704, 0
    %v3726 = vsel %vm374, %v3705, 0
    %3728 = vmatprep.subr.mxu0 0.0
    %3729 = vmatpush1.msra.mxu0 %v3707
    %3730 = vmatprep.subr.mxu0 0.0
    %3731 = vmatpush1.msra.mxu0 %v3708
    %3732 = vmatprep.subr.mxu0 0.0
    %3733 = vmatpush1.msra.mxu0 %v3709
    %3734 = vmatprep.subr.mxu0 0.0
    %3735 = vmatpush1.msra.mxu0 %v3710
    %3736 = vmatprep.subr.mxu0 0.0
    %3737 = vmatpush1.msra.mxu0 0.0
    %3738 = vmatprep.subr.mxu0 0.0
    %3739 = vmatpush1.msra.mxu0 0.0
    %3740 = vmatprep.subr.mxu0 0.0
    %3741 = vmatpush1.msra.mxu0 0.0
    %3742 = vmatprep.subr.mxu0 0.0
    %3743 = vmatpush1.msra.mxu0 0.0
    %3744 = vmatprep.subr.mxu0 0.0
    %3745 = vmatpush1.msra.mxu0 0.0
    %3746 = vmatprep.subr.mxu0 0.0
    %3747 = vmatpush1.msra.mxu0 0.0
    %3748 = vmatprep.subr.mxu0 0.0
    %3749 = vmatpush1.msra.mxu0 0.0
    %3750 = vmatprep.subr.mxu0 0.0
    %3751 = vmatpush1.msra.mxu0 0.0
    %3752 = vmatprep.subr.mxu0 0.0
    %3753 = vmatpush1.msra.mxu0 0.0
    %3754 = vmatprep.subr.mxu0 0.0
    %3755 = vmatpush1.msra.mxu0 0.0
    %3756 = vmatprep.subr.mxu0 0.0
    %3757 = vmatpush1.msra.mxu0 0.0
    %3758 = vmatprep.subr.mxu0 0.0
    %3759 = vmatpush1.msra.mxu0 0.0
    %3760 = vmatprep.subr.mxu0 0.0
    %3761 = vmatpush1.msra.mxu0 0.0
    %3762 = vmatprep.subr.mxu0 0.0
    %3763 = vmatpush1.msra.mxu0 0.0
    %3764 = vmatprep.subr.mxu0 0.0
    %3765 = vmatpush1.msra.mxu0 0.0
    %3766 = vmatprep.subr.mxu0 0.0
    %3767 = vmatpush1.msra.mxu0 0.0
    %3768 = vmatprep.subr.mxu0 0.0
    %3769 = vmatpush1.msra.mxu0 0.0
    %3770 = vmatprep.subr.mxu0 0.0
    %3771 = vmatpush1.msra.mxu0 0.0
    %3772 = vmatprep.subr.mxu0 0.0
    %3773 = vmatpush1.msra.mxu0 0.0
    %3774 = vmatprep.subr.mxu0 0.0
    %3775 = vmatpush1.msra.mxu0 0.0
    %3776 = vmatprep.subr.mxu0 0.0
    %3777 = vmatpush1.msra.mxu0 0.0
    %3778 = vmatprep.subr.mxu0 0.0
    %3779 = vmatpush1.msra.mxu0 0.0
    %3780 = vmatprep.subr.mxu0 0.0
    %3781 = vmatpush1.msra.mxu0 0.0
    %3782 = vmatprep.subr.mxu0 0.0
    %3783 = vmatpush1.msra.mxu0 0.0
    %3784 = vmatprep.subr.mxu0 0.0
    %3785 = vmatpush1.msra.mxu0 0.0
    %3786 = vmatprep.subr.mxu0 0.0
    %3787 = vmatpush1.msra.mxu0 0.0
    %3788 = vmatprep.subr.mxu0 0.0
    %3789 = vmatpush1.msra.mxu0 0.0
    %3790 = vmatprep.subr.mxu0 0.0
    %3791 = vmatpush1.msra.mxu0 0.0
    %3792 = vmatprep.mubr.f32.mxu0 0.0
    %3793 = vmatmul.mubr.f32.gmra.mrb[0].mxu0 %v3717
    %v3794 = vpop.f32.mrb[0].mxu0
    %v3795 = vadd.f32 %v3715, %v3794
    %v3796 = vpop.f32.mrb[0].mxu0
    %3797 = vmatprep.mubr.f32.mxu0 0.0
    %3798 = vmatmul.mubr.f32.gmra.mrb[0].mxu0 %v3720
    %v3799 = vpop.f32.mrb[0].mxu0
    %v3800 = vadd.f32 %v3715, %v3799
    %v3801 = vpop.f32.mrb[0].mxu0
    %3802 = vmatprep.mubr.f32.mxu0 0.0
    %3803 = vmatmul.mubr.f32.gmra.mrb[0].mxu0 %v3723
    %v3804 = vpop.f32.mrb[0].mxu0
    %v3805 = vadd.f32 %v3715, %v3804
    %v3806 = vpop.f32.mrb[0].mxu0
    %3807 = vmatprep.mubr.f32.mxu0 0.0
    %3808 = vmatmul.mubr.f32.gmra.mrb[0].mxu0 %v3726
    %v3809 = vpop.f32.mrb[0].mxu0
    %v3810 = vadd.f32 %v3715, %v3809
    %v3811 = vpop.f32.mrb[0].mxu0
    %3812 = vdwg.mxu0
    %3817 = vrot.lane.b32.xlu0 %v3795, 96
    %v3818 = vpop.permute.xlu0 %3817
    %3819 = vrot.lane.b32.xlu0 %v3800, 96
    %v3820 = vpop.permute.xlu0 %3819
    %3821 = vrot.lane.b32.xlu0 %v3805, 96
    %v3822 = vpop.permute.xlu0 %3821
    %3823 = vrot.lane.b32.xlu0 %v3810, 96
    %v3824 = vpop.permute.xlu0 %3823
    %v3828 = vsel %vm218, %v3824, 0
    %3830 = vmatprep.subr.mxu0 0.0
    %3831 = vmatpush1.msra.mxu0 %v3818
    %3832 = vmatprep.subr.mxu0 0.0
    %3833 = vmatpush1.msra.mxu0 %v3820
    %3834 = vmatprep.subr.mxu0 0.0
    %3835 = vmatpush1.msra.mxu0 %v3822
    %3836 = vmatprep.subr.mxu0 0.0
    %3837 = vmatpush1.msra.mxu0 %v3828
    %3838 = vmatprep.subr.mxu0 0.0
    %3839 = vmatpush1.msra.mxu0 0.0
    %3840 = vmatprep.subr.mxu0 0.0
    %3841 = vmatpush1.msra.mxu0 0.0
    %3842 = vmatprep.subr.mxu0 0.0
    %3843 = vmatpush1.msra.mxu0 0.0
    %3844 = vmatprep.subr.mxu0 0.0
    %3845 = vmatpush1.msra.mxu0 0.0
    %3846 = vmatprep.subr.mxu0 0.0
    %3847 = vmatpush1.msra.mxu0 0.0
    %3848 = vmatprep.subr.mxu0 0.0
    %3849 = vmatpush1.msra.mxu0 0.0
    %3850 = vmatprep.subr.mxu0 0.0
    %3851 = vmatpush1.msra.mxu0 0.0
    %3852 = vmatprep.subr.mxu0 0.0
    %3853 = vmatpush1.msra.mxu0 0.0
    %3854 = vmatprep.subr.mxu0 0.0
    %3855 = vmatpush1.msra.mxu0 0.0
    %3856 = vmatprep.subr.mxu0 0.0
    %3857 = vmatpush1.msra.mxu0 0.0
    %3858 = vmatprep.subr.mxu0 0.0
    %3859 = vmatpush1.msra.mxu0 0.0
    %3860 = vmatprep.subr.mxu0 0.0
    %3861 = vmatpush1.msra.mxu0 0.0
    %3862 = vmatprep.subr.mxu0 0.0
    %3863 = vmatpush1.msra.mxu0 0.0
    %3864 = vmatprep.subr.mxu0 0.0
    %3865 = vmatpush1.msra.mxu0 0.0
    %3866 = vmatprep.subr.mxu0 0.0
    %3867 = vmatpush1.msra.mxu0 0.0
    %3868 = vmatprep.subr.mxu0 0.0
    %3869 = vmatpush1.msra.mxu0 0.0
    %3870 = vmatprep.subr.mxu0 0.0
    %3871 = vmatpush1.msra.mxu0 0.0
    %3872 = vmatprep.subr.mxu0 0.0
    %3873 = vmatpush1.msra.mxu0 0.0
    %3874 = vmatprep.subr.mxu0 0.0
    %3875 = vmatpush1.msra.mxu0 0.0
    %3876 = vmatprep.subr.mxu0 0.0
    %3877 = vmatpush1.msra.mxu0 0.0
    %3878 = vmatprep.subr.mxu0 0.0
    %3879 = vmatpush1.msra.mxu0 0.0
    %3880 = vmatprep.subr.mxu0 0.0
    %3881 = vmatpush1.msra.mxu0 0.0
    %3882 = vmatprep.subr.mxu0 0.0
    %3883 = vmatpush1.msra.mxu0 0.0
    %3884 = vmatprep.subr.mxu0 0.0
    %3885 = vmatpush1.msra.mxu0 0.0
    %3886 = vmatprep.subr.mxu0 0.0
    %3887 = vmatpush1.msra.mxu0 0.0
    %3888 = vmatprep.subr.mxu0 0.0
    %3889 = vmatpush1.msra.mxu0 0.0
    %3890 = vmatprep.subr.mxu0 0.0
    %3891 = vmatpush1.msra.mxu0 0.0
    %3892 = vmatprep.subr.mxu0 0.0
    %3893 = vmatpush1.msra.mxu0 0.0
    %3894 = vmatprep.mubr.f32.mxu0 0.0
    %3895 = vmatmul.mubr.f32.gmra.mrb[0].mxu0 %v1187
    %v3896 = vpop.f32.mrb[0].mxu0
    %v3897 = vadd.f32 0.0, %v3896
    %v3898 = vpop.f32.mrb[0].mxu0
    %3899 = vmatprep.mubr.f32.mxu0 0.0
    %3900 = vmatmul.mubr.f32.gmra.mrb[0].mxu0 %v1190
    %v3901 = vpop.f32.mrb[0].mxu0
    %v3902 = vadd.f32 0.0, %v3901
    %v3903 = vpop.f32.mrb[0].mxu0
    %3904 = vmatprep.mubr.f32.mxu0 0.0
    %3905 = vmatmul.mubr.f32.gmra.mrb[0].mxu0 %v1193
    %v3906 = vpop.f32.mrb[0].mxu0
    %v3907 = vadd.f32 0.0, %v3906
    %v3908 = vpop.f32.mrb[0].mxu0
    %3909 = vmatprep.mubr.f32.mxu0 0.0
    %3910 = vmatmul.mubr.f32.gmra.mrb[0].mxu0 %v1196
    %v3911 = vpop.f32.mrb[0].mxu0
    %v3912 = vadd.f32 0.0, %v3911
    %v3913 = vpop.f32.mrb[0].mxu0
    %3914 = vmatprep.mubr.f32.mxu0 0.0
    %3915 = vmatmul.mubr.f32.gmra.mrb[0].mxu0 %v1199
    %v3916 = vpop.f32.mrb[0].mxu0
    %v3917 = vadd.f32 0.0, %v3916
    %v3918 = vpop.f32.mrb[0].mxu0
    %3919 = vmatprep.mubr.f32.mxu0 0.0
    %3920 = vmatmul.mubr.f32.gmra.mrb[0].mxu0 %v1202
    %v3921 = vpop.f32.mrb[0].mxu0
    %v3922 = vadd.f32 0.0, %v3921
    %v3923 = vpop.f32.mrb[0].mxu0
    %3924 = vmatprep.mubr.f32.mxu0 0.0
    %3925 = vmatmul.mubr.f32.gmra.mrb[0].mxu0 %v1205
    %v3926 = vpop.f32.mrb[0].mxu0
    %v3927 = vadd.f32 0.0, %v3926
    %v3928 = vpop.f32.mrb[0].mxu0
    %3929 = vmatprep.mubr.f32.mxu0 0.0
    %3930 = vmatmul.mubr.f32.gmra.mrb[0].mxu0 %v1208
    %v3931 = vpop.f32.mrb[0].mxu0
    %v3932 = vadd.f32 0.0, %v3931
    %v3933 = vpop.f32.mrb[0].mxu0
    %3934 = vmatprep.mubr.f32.mxu0 0.0
    %3935 = vmatmul.mubr.f32.gmra.mrb[0].mxu0 %v1211
    %v3936 = vpop.f32.mrb[0].mxu0
    %v3937 = vadd.f32 0.0, %v3936
    %v3938 = vpop.f32.mrb[0].mxu0
    %3939 = vmatprep.mubr.f32.mxu0 0.0
    %3940 = vmatmul.mubr.f32.gmra.mrb[0].mxu0 %v1214
    %v3941 = vpop.f32.mrb[0].mxu0
    %v3942 = vadd.f32 0.0, %v3941
    %v3943 = vpop.f32.mrb[0].mxu0
    %3944 = vmatprep.mubr.f32.mxu0 0.0
    %3945 = vmatmul.mubr.f32.gmra.mrb[0].mxu0 %v1217
    %v3946 = vpop.f32.mrb[0].mxu0
    %v3947 = vadd.f32 0.0, %v3946
    %v3948 = vpop.f32.mrb[0].mxu0
    %3949 = vmatprep.mubr.f32.mxu0 0.0
    %3950 = vmatmul.mubr.f32.gmra.mrb[0].mxu0 %v1220
    %v3951 = vpop.f32.mrb[0].mxu0
    %v3952 = vadd.f32 0.0, %v3951
    %v3953 = vpop.f32.mrb[0].mxu0
    %3954 = vmatprep.mubr.f32.mxu0 0.0
    %3955 = vmatmul.mubr.f32.gmra.mrb[0].mxu0 %v1223
    %v3956 = vpop.f32.mrb[0].mxu0
    %v3957 = vadd.f32 0.0, %v3956
    %v3958 = vpop.f32.mrb[0].mxu0
    %3959 = vmatprep.mubr.f32.mxu0 0.0
    %3960 = vmatmul.mubr.f32.gmra.mrb[0].mxu0 %v1226
    %v3961 = vpop.f32.mrb[0].mxu0
    %v3962 = vadd.f32 0.0, %v3961
    %v3963 = vpop.f32.mrb[0].mxu0
    %3964 = vmatprep.mubr.f32.mxu0 0.0
    %3965 = vmatmul.mubr.f32.gmra.mrb[0].mxu0 %v1229
    %v3966 = vpop.f32.mrb[0].mxu0
    %v3967 = vadd.f32 0.0, %v3966
    %v3968 = vpop.f32.mrb[0].mxu0
    %3969 = vmatprep.mubr.f32.mxu0 0.0
    %3970 = vmatmul.mubr.f32.gmra.mrb[0].mxu0 %v1232
    %v3971 = vpop.f32.mrb[0].mxu0
    %v3972 = vadd.f32 0.0, %v3971
    %v3973 = vpop.f32.mrb[0].mxu0
    %3974 = vmatprep.mubr.f32.mxu0 0.0
    %3975 = vmatmul.mubr.f32.gmra.mrb[0].mxu0 %v1235
    %v3976 = vpop.f32.mrb[0].mxu0
    %v3977 = vadd.f32 0.0, %v3976
    %v3978 = vpop.f32.mrb[0].mxu0
    %3979 = vmatprep.mubr.f32.mxu0 0.0
    %3980 = vmatmul.mubr.f32.gmra.mrb[0].mxu0 %v1238
    %v3981 = vpop.f32.mrb[0].mxu0
    %v3982 = vadd.f32 0.0, %v3981
    %v3983 = vpop.f32.mrb[0].mxu0
    %3984 = vmatprep.mubr.f32.mxu0 0.0
    %3985 = vmatmul.mubr.f32.gmra.mrb[0].mxu0 %v1241
    %v3986 = vpop.f32.mrb[0].mxu0
    %v3987 = vadd.f32 0.0, %v3986
    %v3988 = vpop.f32.mrb[0].mxu0
    %3989 = vmatprep.mubr.f32.mxu0 0.0
    %3990 = vmatmul.mubr.f32.gmra.mrb[0].mxu0 %v1244
    %v3991 = vpop.f32.mrb[0].mxu0
    %v3992 = vadd.f32 0.0, %v3991
    %v3993 = vpop.f32.mrb[0].mxu0
    %3994 = vmatprep.mubr.f32.mxu0 0.0
    %3995 = vmatmul.mubr.f32.gmra.mrb[0].mxu0 %v1247
    %v3996 = vpop.f32.mrb[0].mxu0
    %v3997 = vadd.f32 0.0, %v3996
    %v3998 = vpop.f32.mrb[0].mxu0
    %3999 = vmatprep.mubr.f32.mxu0 0.0
    %4000 = vmatmul.mubr.f32.gmra.mrb[0].mxu0 %v1250
    %v4001 = vpop.f32.mrb[0].mxu0
    %v4002 = vadd.f32 0.0, %v4001
    %v4003 = vpop.f32.mrb[0].mxu0
    %4004 = vmatprep.mubr.f32.mxu0 0.0
    %4005 = vmatmul.mubr.f32.gmra.mrb[0].mxu0 %v1253
    %v4006 = vpop.f32.mrb[0].mxu0
    %v4007 = vadd.f32 0.0, %v4006
    %v4008 = vpop.f32.mrb[0].mxu0
    %4009 = vmatprep.mubr.f32.mxu0 0.0
    %4010 = vmatmul.mubr.f32.gmra.mrb[0].mxu0 %v1256
    %v4011 = vpop.f32.mrb[0].mxu0
    %v4012 = vadd.f32 0.0, %v4011
    %v4013 = vpop.f32.mrb[0].mxu0
    %4014 = vmatprep.mubr.f32.mxu0 0.0
    %4015 = vmatmul.mubr.f32.gmra.mrb[0].mxu0 %v1259
    %v4016 = vpop.f32.mrb[0].mxu0
    %v4017 = vadd.f32 0.0, %v4016
    %v4018 = vpop.f32.mrb[0].mxu0
    %4019 = vmatprep.mubr.f32.mxu0 0.0
    %4020 = vmatmul.mubr.f32.gmra.mrb[0].mxu0 %v1262
    %v4021 = vpop.f32.mrb[0].mxu0
    %v4022 = vadd.f32 0.0, %v4021
    %v4023 = vpop.f32.mrb[0].mxu0
    %4024 = vmatprep.mubr.f32.mxu0 0.0
    %4025 = vmatmul.mubr.f32.gmra.mrb[0].mxu0 %v1265
    %v4026 = vpop.f32.mrb[0].mxu0
    %v4027 = vadd.f32 0.0, %v4026
    %v4028 = vpop.f32.mrb[0].mxu0
    %4029 = vmatprep.mubr.f32.mxu0 0.0
    %4030 = vmatmul.mubr.f32.gmra.mrb[0].mxu0 %v1268
    %v4031 = vpop.f32.mrb[0].mxu0
    %v4032 = vadd.f32 0.0, %v4031
    %v4033 = vpop.f32.mrb[0].mxu0
    %4034 = vmatprep.mubr.f32.mxu0 0.0
    %4035 = vmatmul.mubr.f32.gmra.mrb[0].mxu0 %v1271
    %v4036 = vpop.f32.mrb[0].mxu0
    %v4037 = vadd.f32 0.0, %v4036
    %v4038 = vpop.f32.mrb[0].mxu0
    %4039 = vmatprep.mubr.f32.mxu0 0.0
    %4040 = vmatmul.mubr.f32.gmra.mrb[0].mxu0 %v1274
    %v4041 = vpop.f32.mrb[0].mxu0
    %v4042 = vadd.f32 0.0, %v4041
    %v4043 = vpop.f32.mrb[0].mxu0
    %4044 = vmatprep.mubr.f32.mxu0 0.0
    %4045 = vmatmul.mubr.f32.gmra.mrb[0].mxu0 %v1277
    %v4046 = vpop.f32.mrb[0].mxu0
    %v4047 = vadd.f32 0.0, %v4046
    %v4048 = vpop.f32.mrb[0].mxu0
    %4049 = vmatprep.mubr.f32.mxu0 0.0
    %4050 = vmatmul.mubr.f32.gmra.mrb[0].mxu0 %v1280
    %v4051 = vpop.f32.mrb[0].mxu0
    %v4052 = vadd.f32 0.0, %v4051
    %v4053 = vpop.f32.mrb[0].mxu0
    %4054 = vdwg.mxu0
    %v4055 = vmul.f32 %v3897, %v919
    %v4056 = vmul.f32 %v3902, %v920
    %v4057 = vmul.f32 %v3907, %v921
    %v4058 = vmul.f32 %v3912, %v922
    %v4059 = vmul.f32 %v3917, %v923
    %v4060 = vmul.f32 %v3922, %v924
    %v4061 = vmul.f32 %v3927, %v925
    %v4062 = vmul.f32 %v3932, %v926
    %v4063 = vmul.f32 %v3937, %v927
    %v4064 = vmul.f32 %v3942, %v928
    %v4065 = vmul.f32 %v3947, %v929
    %v4066 = vmul.f32 %v3952, %v930
    %v4067 = vmul.f32 %v3957, %v931
    %v4068 = vmul.f32 %v3962, %v932
    %v4069 = vmul.f32 %v3967, %v933
    %v4070 = vmul.f32 %v3972, %v934
    %v4071 = vmul.f32 %v3977, %v935
    %v4072 = vmul.f32 %v3982, %v936
    %v4073 = vmul.f32 %v3987, %v937
    %v4074 = vmul.f32 %v3992, %v938
    %v4075 = vmul.f32 %v3997, %v939
    %v4076 = vmul.f32 %v4002, %v940
    %v4077 = vmul.f32 %v4007, %v941
    %v4078 = vmul.f32 %v4012, %v942
    %v4079 = vmul.f32 %v4017, %v943
    %v4080 = vmul.f32 %v4022, %v944
    %v4081 = vmul.f32 %v4027, %v945
    %v4082 = vmul.f32 %v4032, %v946
    %v4083 = vmul.f32 %v4037, %v947
    %v4084 = vmul.f32 %v4042, %v948
    %v4085 = vmul.f32 %v4047, %v949
    %v4086 = vmul.f32 %v4052, %v950
    %4087 = vrot.lane.b32.xlu0 %v3795, 64
    %v4088 = vpop.permute.xlu0 %4087
    %4089 = vrot.lane.b32.xlu0 %v3800, 64
    %v4090 = vpop.permute.xlu0 %4089
    %4091 = vrot.lane.b32.xlu0 %v3805, 64
    %v4092 = vpop.permute.xlu0 %4091
    %4093 = vrot.lane.b32.xlu0 %v3810, 64
    %v4094 = vpop.permute.xlu0 %4093
    %v4098 = vsel %vm218, %v4094, 0
    %4100 = vmatprep.subr.mxu0 0.0
    %4101 = vmatpush1.msra.mxu0 %v4088
    %4102 = vmatprep.subr.mxu0 0.0
    %4103 = vmatpush1.msra.mxu0 %v4090
    %4104 = vmatprep.subr.mxu0 0.0
    %4105 = vmatpush1.msra.mxu0 %v4092
    %4106 = vmatprep.subr.mxu0 0.0
    %4107 = vmatpush1.msra.mxu0 %v4098
    %4108 = vmatprep.subr.mxu0 0.0
    %4109 = vmatpush1.msra.mxu0 0.0
    %4110 = vmatprep.subr.mxu0 0.0
    %4111 = vmatpush1.msra.mxu0 0.0
    %4112 = vmatprep.subr.mxu0 0.0
    %4113 = vmatpush1.msra.mxu0 0.0
    %4114 = vmatprep.subr.mxu0 0.0
    %4115 = vmatpush1.msra.mxu0 0.0
    %4116 = vmatprep.subr.mxu0 0.0
    %4117 = vmatpush1.msra.mxu0 0.0
    %4118 = vmatprep.subr.mxu0 0.0
    %4119 = vmatpush1.msra.mxu0 0.0
    %4120 = vmatprep.subr.mxu0 0.0
    %4121 = vmatpush1.msra.mxu0 0.0
    %4122 = vmatprep.subr.mxu0 0.0
    %4123 = vmatpush1.msra.mxu0 0.0
    %4124 = vmatprep.subr.mxu0 0.0
    %4125 = vmatpush1.msra.mxu0 0.0
    %4126 = vmatprep.subr.mxu0 0.0
    %4127 = vmatpush1.msra.mxu0 0.0
    %4128 = vmatprep.subr.mxu0 0.0
    %4129 = vmatpush1.msra.mxu0 0.0
    %4130 = vmatprep.subr.mxu0 0.0
    %4131 = vmatpush1.msra.mxu0 0.0
    %4132 = vmatprep.subr.mxu0 0.0
    %4133 = vmatpush1.msra.mxu0 0.0
    %4134 = vmatprep.subr.mxu0 0.0
    %4135 = vmatpush1.msra.mxu0 0.0
    %4136 = vmatprep.subr.mxu0 0.0
    %4137 = vmatpush1.msra.mxu0 0.0
    %4138 = vmatprep.subr.mxu0 0.0
    %4139 = vmatpush1.msra.mxu0 0.0
    %4140 = vmatprep.subr.mxu0 0.0
    %4141 = vmatpush1.msra.mxu0 0.0
    %4142 = vmatprep.subr.mxu0 0.0
    %4143 = vmatpush1.msra.mxu0 0.0
    %4144 = vmatprep.subr.mxu0 0.0
    %4145 = vmatpush1.msra.mxu0 0.0
    %4146 = vmatprep.subr.mxu0 0.0
    %4147 = vmatpush1.msra.mxu0 0.0
    %4148 = vmatprep.subr.mxu0 0.0
    %4149 = vmatpush1.msra.mxu0 0.0
    %4150 = vmatprep.subr.mxu0 0.0
    %4151 = vmatpush1.msra.mxu0 0.0
    %4152 = vmatprep.subr.mxu0 0.0
    %4153 = vmatpush1.msra.mxu0 0.0
    %4154 = vmatprep.subr.mxu0 0.0
    %4155 = vmatpush1.msra.mxu0 0.0
    %4156 = vmatprep.subr.mxu0 0.0
    %4157 = vmatpush1.msra.mxu0 0.0
    %4158 = vmatprep.subr.mxu0 0.0
    %4159 = vmatpush1.msra.mxu0 0.0
    %4160 = vmatprep.subr.mxu0 0.0
    %4161 = vmatpush1.msra.mxu0 0.0
    %4162 = vmatprep.subr.mxu0 0.0
    %4163 = vmatpush1.msra.mxu0 0.0
    %4164 = vmatprep.mubr.f32.mxu0 0.0
    %4165 = vmatmul.mubr.f32.gmra.mrb[0].mxu0 %v1187
    %v4166 = vpop.f32.mrb[0].mxu0
    %v4167 = vadd.f32 0.0, %v4166
    %v4168 = vpop.f32.mrb[0].mxu0
    %4169 = vmatprep.mubr.f32.mxu0 0.0
    %4170 = vmatmul.mubr.f32.gmra.mrb[0].mxu0 %v1190
    %v4171 = vpop.f32.mrb[0].mxu0
    %v4172 = vadd.f32 0.0, %v4171
    %v4173 = vpop.f32.mrb[0].mxu0
    %4174 = vmatprep.mubr.f32.mxu0 0.0
    %4175 = vmatmul.mubr.f32.gmra.mrb[0].mxu0 %v1193
    %v4176 = vpop.f32.mrb[0].mxu0
    %v4177 = vadd.f32 0.0, %v4176
    %v4178 = vpop.f32.mrb[0].mxu0
    %4179 = vmatprep.mubr.f32.mxu0 0.0
    %4180 = vmatmul.mubr.f32.gmra.mrb[0].mxu0 %v1196
    %v4181 = vpop.f32.mrb[0].mxu0
    %v4182 = vadd.f32 0.0, %v4181
    %v4183 = vpop.f32.mrb[0].mxu0
    %4184 = vmatprep.mubr.f32.mxu0 0.0
    %4185 = vmatmul.mubr.f32.gmra.mrb[0].mxu0 %v1199
    %v4186 = vpop.f32.mrb[0].mxu0
    %v4187 = vadd.f32 0.0, %v4186
    %v4188 = vpop.f32.mrb[0].mxu0
    %4189 = vmatprep.mubr.f32.mxu0 0.0
    %4190 = vmatmul.mubr.f32.gmra.mrb[0].mxu0 %v1202
    %v4191 = vpop.f32.mrb[0].mxu0
    %v4192 = vadd.f32 0.0, %v4191
    %v4193 = vpop.f32.mrb[0].mxu0
    %4194 = vmatprep.mubr.f32.mxu0 0.0
    %4195 = vmatmul.mubr.f32.gmra.mrb[0].mxu0 %v1205
    %v4196 = vpop.f32.mrb[0].mxu0
    %v4197 = vadd.f32 0.0, %v4196
    %v4198 = vpop.f32.mrb[0].mxu0
    %4199 = vmatprep.mubr.f32.mxu0 0.0
    %4200 = vmatmul.mubr.f32.gmra.mrb[0].mxu0 %v1208
    %v4201 = vpop.f32.mrb[0].mxu0
    %v4202 = vadd.f32 0.0, %v4201
    %v4203 = vpop.f32.mrb[0].mxu0
    %4204 = vmatprep.mubr.f32.mxu0 0.0
    %4205 = vmatmul.mubr.f32.gmra.mrb[0].mxu0 %v1211
    %v4206 = vpop.f32.mrb[0].mxu0
    %v4207 = vadd.f32 0.0, %v4206
    %v4208 = vpop.f32.mrb[0].mxu0
    %4209 = vmatprep.mubr.f32.mxu0 0.0
    %4210 = vmatmul.mubr.f32.gmra.mrb[0].mxu0 %v1214
    %v4211 = vpop.f32.mrb[0].mxu0
    %v4212 = vadd.f32 0.0, %v4211
    %v4213 = vpop.f32.mrb[0].mxu0
    %4214 = vmatprep.mubr.f32.mxu0 0.0
    %4215 = vmatmul.mubr.f32.gmra.mrb[0].mxu0 %v1217
    %v4216 = vpop.f32.mrb[0].mxu0
    %v4217 = vadd.f32 0.0, %v4216
    %v4218 = vpop.f32.mrb[0].mxu0
    %4219 = vmatprep.mubr.f32.mxu0 0.0
    %4220 = vmatmul.mubr.f32.gmra.mrb[0].mxu0 %v1220
    %v4221 = vpop.f32.mrb[0].mxu0
    %v4222 = vadd.f32 0.0, %v4221
    %v4223 = vpop.f32.mrb[0].mxu0
    %4224 = vmatprep.mubr.f32.mxu0 0.0
    %4225 = vmatmul.mubr.f32.gmra.mrb[0].mxu0 %v1223
    %v4226 = vpop.f32.mrb[0].mxu0
    %v4227 = vadd.f32 0.0, %v4226
    %v4228 = vpop.f32.mrb[0].mxu0
    %4229 = vmatprep.mubr.f32.mxu0 0.0
    %4230 = vmatmul.mubr.f32.gmra.mrb[0].mxu0 %v1226
    %v4231 = vpop.f32.mrb[0].mxu0
    %v4232 = vadd.f32 0.0, %v4231
    %v4233 = vpop.f32.mrb[0].mxu0
    %4234 = vmatprep.mubr.f32.mxu0 0.0
    %4235 = vmatmul.mubr.f32.gmra.mrb[0].mxu0 %v1229
    %v4236 = vpop.f32.mrb[0].mxu0
    %v4237 = vadd.f32 0.0, %v4236
    %v4238 = vpop.f32.mrb[0].mxu0
    %4239 = vmatprep.mubr.f32.mxu0 0.0
    %4240 = vmatmul.mubr.f32.gmra.mrb[0].mxu0 %v1232
    %v4241 = vpop.f32.mrb[0].mxu0
    %v4242 = vadd.f32 0.0, %v4241
    %v4243 = vpop.f32.mrb[0].mxu0
    %4244 = vmatprep.mubr.f32.mxu0 0.0
    %4245 = vmatmul.mubr.f32.gmra.mrb[0].mxu0 %v1235
    %v4246 = vpop.f32.mrb[0].mxu0
    %v4247 = vadd.f32 0.0, %v4246
    %v4248 = vpop.f32.mrb[0].mxu0
    %4249 = vmatprep.mubr.f32.mxu0 0.0
    %4250 = vmatmul.mubr.f32.gmra.mrb[0].mxu0 %v1238
    %v4251 = vpop.f32.mrb[0].mxu0
    %v4252 = vadd.f32 0.0, %v4251
    %v4253 = vpop.f32.mrb[0].mxu0
    %4254 = vmatprep.mubr.f32.mxu0 0.0
    %4255 = vmatmul.mubr.f32.gmra.mrb[0].mxu0 %v1241
    %v4256 = vpop.f32.mrb[0].mxu0
    %v4257 = vadd.f32 0.0, %v4256
    %v4258 = vpop.f32.mrb[0].mxu0
    %4259 = vmatprep.mubr.f32.mxu0 0.0
    %4260 = vmatmul.mubr.f32.gmra.mrb[0].mxu0 %v1244
    %v4261 = vpop.f32.mrb[0].mxu0
    %v4262 = vadd.f32 0.0, %v4261
    %v4263 = vpop.f32.mrb[0].mxu0
    %4264 = vmatprep.mubr.f32.mxu0 0.0
    %4265 = vmatmul.mubr.f32.gmra.mrb[0].mxu0 %v1247
    %v4266 = vpop.f32.mrb[0].mxu0
    %v4267 = vadd.f32 0.0, %v4266
    %v4268 = vpop.f32.mrb[0].mxu0
    %4269 = vmatprep.mubr.f32.mxu0 0.0
    %4270 = vmatmul.mubr.f32.gmra.mrb[0].mxu0 %v1250
    %v4271 = vpop.f32.mrb[0].mxu0
    %v4272 = vadd.f32 0.0, %v4271
    %v4273 = vpop.f32.mrb[0].mxu0
    %4274 = vmatprep.mubr.f32.mxu0 0.0
    %4275 = vmatmul.mubr.f32.gmra.mrb[0].mxu0 %v1253
    %v4276 = vpop.f32.mrb[0].mxu0
    %v4277 = vadd.f32 0.0, %v4276
    %v4278 = vpop.f32.mrb[0].mxu0
    %4279 = vmatprep.mubr.f32.mxu0 0.0
    %4280 = vmatmul.mubr.f32.gmra.mrb[0].mxu0 %v1256
    %v4281 = vpop.f32.mrb[0].mxu0
    %v4282 = vadd.f32 0.0, %v4281
    %v4283 = vpop.f32.mrb[0].mxu0
    %4284 = vmatprep.mubr.f32.mxu0 0.0
    %4285 = vmatmul.mubr.f32.gmra.mrb[0].mxu0 %v1259
    %v4286 = vpop.f32.mrb[0].mxu0
    %v4287 = vadd.f32 0.0, %v4286
    %v4288 = vpop.f32.mrb[0].mxu0
    %4289 = vmatprep.mubr.f32.mxu0 0.0
    %4290 = vmatmul.mubr.f32.gmra.mrb[0].mxu0 %v1262
    %v4291 = vpop.f32.mrb[0].mxu0
    %v4292 = vadd.f32 0.0, %v4291
    %v4293 = vpop.f32.mrb[0].mxu0
    %4294 = vmatprep.mubr.f32.mxu0 0.0
    %4295 = vmatmul.mubr.f32.gmra.mrb[0].mxu0 %v1265
    %v4296 = vpop.f32.mrb[0].mxu0
    %v4297 = vadd.f32 0.0, %v4296
    %v4298 = vpop.f32.mrb[0].mxu0
    %4299 = vmatprep.mubr.f32.mxu0 0.0
    %4300 = vmatmul.mubr.f32.gmra.mrb[0].mxu0 %v1268
    %v4301 = vpop.f32.mrb[0].mxu0
    %v4302 = vadd.f32 0.0, %v4301
    %v4303 = vpop.f32.mrb[0].mxu0
    %4304 = vmatprep.mubr.f32.mxu0 0.0
    %4305 = vmatmul.mubr.f32.gmra.mrb[0].mxu0 %v1271
    %v4306 = vpop.f32.mrb[0].mxu0
    %v4307 = vadd.f32 0.0, %v4306
    %v4308 = vpop.f32.mrb[0].mxu0
    %4309 = vmatprep.mubr.f32.mxu0 0.0
    %4310 = vmatmul.mubr.f32.gmra.mrb[0].mxu0 %v1274
    %v4311 = vpop.f32.mrb[0].mxu0
    %v4312 = vadd.f32 0.0, %v4311
    %v4313 = vpop.f32.mrb[0].mxu0
    %4314 = vmatprep.mubr.f32.mxu0 0.0
    %4315 = vmatmul.mubr.f32.gmra.mrb[0].mxu0 %v1277
    %v4316 = vpop.f32.mrb[0].mxu0
    %v4317 = vadd.f32 0.0, %v4316
    %v4318 = vpop.f32.mrb[0].mxu0
    %4319 = vmatprep.mubr.f32.mxu0 0.0
    %4320 = vmatmul.mubr.f32.gmra.mrb[0].mxu0 %v1280
    %v4321 = vpop.f32.mrb[0].mxu0
    %v4322 = vadd.f32 0.0, %v4321
    %v4323 = vpop.f32.mrb[0].mxu0
    %4324 = vdwg.mxu0
    %v4325 = vmul.f32 %v4167, %v919
    %v4326 = vmul.f32 %v4172, %v920
    %v4327 = vmul.f32 %v4177, %v921
    %v4328 = vmul.f32 %v4182, %v922
    %v4329 = vmul.f32 %v4187, %v923
    %v4330 = vmul.f32 %v4192, %v924
    %v4331 = vmul.f32 %v4197, %v925
    %v4332 = vmul.f32 %v4202, %v926
    %v4333 = vmul.f32 %v4207, %v927
    %v4334 = vmul.f32 %v4212, %v928
    %v4335 = vmul.f32 %v4217, %v929
    %v4336 = vmul.f32 %v4222, %v930
    %v4337 = vmul.f32 %v4227, %v931
    %v4338 = vmul.f32 %v4232, %v932
    %v4339 = vmul.f32 %v4237, %v933
    %v4340 = vmul.f32 %v4242, %v934
    %v4341 = vmul.f32 %v4247, %v935
    %v4342 = vmul.f32 %v4252, %v936
    %v4343 = vmul.f32 %v4257, %v937
    %v4344 = vmul.f32 %v4262, %v938
    %v4345 = vmul.f32 %v4267, %v939
    %v4346 = vmul.f32 %v4272, %v940
    %v4347 = vmul.f32 %v4277, %v941
    %v4348 = vmul.f32 %v4282, %v942
    %v4349 = vmul.f32 %v4287, %v943
    %v4350 = vmul.f32 %v4292, %v944
    %v4351 = vmul.f32 %v4297, %v945
    %v4352 = vmul.f32 %v4302, %v946
    %v4353 = vmul.f32 %v4307, %v947
    %v4354 = vmul.f32 %v4312, %v948
    %v4355 = vmul.f32 %v4317, %v949
    %v4356 = vmul.f32 %v4322, %v950
    %v4357 = vsel %vm374, %v3795, 0
    %v4359 = vsel %vm374, %v3800, 0
    %v4361 = vsel %vm374, %v3805, 0
    %v4363 = vsel %vm374, %v3810, 0
    %v4366 = vsel %vm374, %v4055, 0
    %v4369 = vsel %vm374, %v4056, 0
    %v4372 = vsel %vm374, %v4057, 0
    %v4375 = vsel %vm374, %v4058, 0
    %v4378 = vsel %vm374, %v4059, 0
    %v4381 = vsel %vm374, %v4060, 0
    %v4384 = vsel %vm374, %v4061, 0
    %v4387 = vsel %vm374, %v4062, 0
    %v4390 = vsel %vm374, %v4063, 0
    %v4393 = vsel %vm374, %v4064, 0
    %v4396 = vsel %vm374, %v4065, 0
    %v4399 = vsel %vm374, %v4066, 0
    %v4402 = vsel %vm374, %v4067, 0
    %v4405 = vsel %vm374, %v4068, 0
    %v4408 = vsel %vm374, %v4069, 0
    %v4411 = vsel %vm374, %v4070, 0
    %v4414 = vsel %vm374, %v4071, 0
    %v4417 = vsel %vm374, %v4072, 0
    %v4420 = vsel %vm374, %v4073, 0
    %v4423 = vsel %vm374, %v4074, 0
    %v4426 = vsel %vm374, %v4075, 0
    %v4429 = vsel %vm374, %v4076, 0
    %v4432 = vsel %vm374, %v4077, 0
    %v4435 = vsel %vm374, %v4078, 0
    %v4438 = vsel %vm374, %v4079, 0
    %v4441 = vsel %vm374, %v4080, 0
    %v4444 = vsel %vm374, %v4081, 0
    %v4447 = vsel %vm374, %v4082, 0
    %v4450 = vsel %vm374, %v4083, 0
    %v4453 = vsel %vm374, %v4084, 0
    %v4456 = vsel %vm374, %v4085, 0
    %v4459 = vsel %vm374, %v4086, 0
    %4461 = vmatprep.subr.mxu0 0.0
    %4462 = vmatpush1.xpose.msra.mxu0 %v4366
    %4463 = vmatprep.subr.mxu0 0.0
    %4464 = vmatpush1.xpose.msra.mxu0 %v4369
    %4465 = vmatprep.subr.mxu0 0.0
    %4466 = vmatpush1.xpose.msra.mxu0 %v4372
    %4467 = vmatprep.subr.mxu0 0.0
    %4468 = vmatpush1.xpose.msra.mxu0 %v4375
    %4469 = vmatprep.subr.mxu0 0.0
    %4470 = vmatpush1.xpose.msra.mxu0 %v4378
    %4471 = vmatprep.subr.mxu0 0.0
    %4472 = vmatpush1.xpose.msra.mxu0 %v4381
    %4473 = vmatprep.subr.mxu0 0.0
    %4474 = vmatpush1.xpose.msra.mxu0 %v4384
    %4475 = vmatprep.subr.mxu0 0.0
    %4476 = vmatpush1.xpose.msra.mxu0 %v4387
    %4477 = vmatprep.subr.mxu0 0.0
    %4478 = vmatpush1.xpose.msra.mxu0 %v4390
    %4479 = vmatprep.subr.mxu0 0.0
    %4480 = vmatpush1.xpose.msra.mxu0 %v4393
    %4481 = vmatprep.subr.mxu0 0.0
    %4482 = vmatpush1.xpose.msra.mxu0 %v4396
    %4483 = vmatprep.subr.mxu0 0.0
    %4484 = vmatpush1.xpose.msra.mxu0 %v4399
    %4485 = vmatprep.subr.mxu0 0.0
    %4486 = vmatpush1.xpose.msra.mxu0 %v4402
    %4487 = vmatprep.subr.mxu0 0.0
    %4488 = vmatpush1.xpose.msra.mxu0 %v4405
    %4489 = vmatprep.subr.mxu0 0.0
    %4490 = vmatpush1.xpose.msra.mxu0 %v4408
    %4491 = vmatprep.subr.mxu0 0.0
    %4492 = vmatpush1.xpose.msra.mxu0 %v4411
    %4493 = vmatprep.subr.mxu0 0.0
    %4494 = vmatpush1.xpose.msra.mxu0 %v4414
    %4495 = vmatprep.subr.mxu0 0.0
    %4496 = vmatpush1.xpose.msra.mxu0 %v4417
    %4497 = vmatprep.subr.mxu0 0.0
    %4498 = vmatpush1.xpose.msra.mxu0 %v4420
    %4499 = vmatprep.subr.mxu0 0.0
    %4500 = vmatpush1.xpose.msra.mxu0 %v4423
    %4501 = vmatprep.subr.mxu0 0.0
    %4502 = vmatpush1.xpose.msra.mxu0 %v4426
    %4503 = vmatprep.subr.mxu0 0.0
    %4504 = vmatpush1.xpose.msra.mxu0 %v4429
    %4505 = vmatprep.subr.mxu0 0.0
    %4506 = vmatpush1.xpose.msra.mxu0 %v4432
    %4507 = vmatprep.subr.mxu0 0.0
    %4508 = vmatpush1.xpose.msra.mxu0 %v4435
    %4509 = vmatprep.subr.mxu0 0.0
    %4510 = vmatpush1.xpose.msra.mxu0 %v4438
    %4511 = vmatprep.subr.mxu0 0.0
    %4512 = vmatpush1.xpose.msra.mxu0 %v4441
    %4513 = vmatprep.subr.mxu0 0.0
    %4514 = vmatpush1.xpose.msra.mxu0 %v4444
    %4515 = vmatprep.subr.mxu0 0.0
    %4516 = vmatpush1.xpose.msra.mxu0 %v4447
    %4517 = vmatprep.subr.mxu0 0.0
    %4518 = vmatpush1.xpose.msra.mxu0 %v4450
    %4519 = vmatprep.subr.mxu0 0.0
    %4520 = vmatpush1.xpose.msra.mxu0 %v4453
    %4521 = vmatprep.subr.mxu0 0.0
    %4522 = vmatpush1.xpose.msra.mxu0 %v4456
    %4523 = vmatprep.subr.mxu0 0.0
    %4524 = vmatpush1.xpose.msra.mxu0 %v4459
    %4525 = vmatprep.mubr.f32.mxu0 0.0
    %4526 = vmatmul.mubr.f32.gmra.mrb[0].mxu0 %v4357
    %v4527 = vpop.f32.mrb[0].mxu0
    %v4528 = vadd.f32 %v985, %v4527
    %v4529 = vpop.f32.mrb[0].mxu0
    %v4530 = vadd.f32 %v986, %v4529
    %4531 = vmatprep.mubr.f32.mxu0 0.0
    %4532 = vmatmul.mubr.f32.gmra.mrb[0].mxu0 %v4359
    %v4533 = vpop.f32.mrb[0].mxu0
    %v4534 = vadd.f32 %v987, %v4533
    %v4535 = vpop.f32.mrb[0].mxu0
    %v4536 = vadd.f32 %v988, %v4535
    %4537 = vmatprep.mubr.f32.mxu0 0.0
    %4538 = vmatmul.mubr.f32.gmra.mrb[0].mxu0 %v4361
    %v4539 = vpop.f32.mrb[0].mxu0
    %v4540 = vadd.f32 %v989, %v4539
    %v4541 = vpop.f32.mrb[0].mxu0
    %v4542 = vadd.f32 %v990, %v4541
    %4543 = vmatprep.mubr.f32.mxu0 0.0
    %4544 = vmatmul.mubr.f32.gmra.mrb[0].mxu0 %v4363
    %v4545 = vpop.f32.mrb[0].mxu0
    %v4546 = vadd.f32 %v991, %v4545
    %v4547 = vpop.f32.mrb[0].mxu0
    %v4548 = vadd.f32 %v992, %v4547
    %4549 = vdwg.mxu0
    %v4550 = vmax.f32 %v4528, %v4530
    %4551 = vmax.xlane.f32.xlu0 %v4550
    %v4552 = vpop.xlane.xlu0 %4551
    %v4553 = vmax.f32 %v4534, %v4536
    %4554 = vmax.xlane.f32.xlu0 %v4553
    %v4555 = vpop.xlane.xlu0 %4554
    %v4556 = vmax.f32 %v4540, %v4542
    %4557 = vmax.xlane.f32.xlu0 %v4556
    %v4558 = vpop.xlane.xlu0 %4557
    %v4559 = vsel %vm218, %v4546, -inf
    %v4560 = vsel %vm218, %v4548, -inf
    %v4561 = vmax.f32 %v4559, %v4560
    %4562 = vmax.xlane.f32.xlu0 %v4561
    %v4563 = vpop.xlane.xlu0 %4562
    %v4564 = vsub.f32 %v4528, %v4552
    %v4565 = vsub.f32 %v4530, %v4552
    %v4566 = vsub.f32 %v4534, %v4555
    %v4567 = vsub.f32 %v4536, %v4555
    %v4568 = vsub.f32 %v4540, %v4558
    %v4569 = vsub.f32 %v4542, %v4558
    %v4570 = vsub.f32 %v4546, %v4563
    %v4571 = vsub.f32 %v4548, %v4563
    %v4572 = vmul.f32 %v4564, 1.442695
    %v4573 = vpow.pop %v4572
    %v4574 = vmul.f32 %v4565, 1.442695
    %v4575 = vpow.pop %v4574
    %v4576 = vmul.f32 %v4566, 1.442695
    %v4577 = vpow.pop %v4576
    %v4578 = vmul.f32 %v4567, 1.442695
    %v4579 = vpow.pop %v4578
    %v4580 = vmul.f32 %v4568, 1.442695
    %v4581 = vpow.pop %v4580
    %v4582 = vmul.f32 %v4569, 1.442695
    %v4583 = vpow.pop %v4582
    %v4584 = vmul.f32 %v4570, 1.442695
    %v4585 = vpow.pop %v4584
    %v4586 = vmul.f32 %v4571, 1.442695
    %v4587 = vpow.pop %v4586
    %4588 = vmatprep.subr.mxu0 0.0
    %4589 = vmatpush1.msra.mxu0 %v951
    %4590 = vmatprep.subr.mxu0 0.0
    %4591 = vmatpush1.msra.mxu0 %v952
    %4592 = vmatprep.subr.mxu0 0.0
    %4593 = vmatpush1.msra.mxu0 %v953
    %4594 = vmatprep.subr.mxu0 0.0
    %4595 = vmatpush1.msra.mxu0 %v954
    %4596 = vmatprep.subr.mxu0 0.0
    %4597 = vmatpush1.msra.mxu0 %v955
    %4598 = vmatprep.subr.mxu0 0.0
    %4599 = vmatpush1.msra.mxu0 %v956
    %4600 = vmatprep.subr.mxu0 0.0
    %4601 = vmatpush1.msra.mxu0 %v957
    %4602 = vmatprep.subr.mxu0 0.0
    %4603 = vmatpush1.msra.mxu0 %v958
    %4604 = vmatprep.subr.mxu0 0.0
    %4605 = vmatpush1.msra.mxu0 %v959
    %4606 = vmatprep.subr.mxu0 0.0
    %4607 = vmatpush1.msra.mxu0 %v960
    %4608 = vmatprep.subr.mxu0 0.0
    %4609 = vmatpush1.msra.mxu0 %v961
    %4610 = vmatprep.subr.mxu0 0.0
    %4611 = vmatpush1.msra.mxu0 %v962
    %4612 = vmatprep.subr.mxu0 0.0
    %4613 = vmatpush1.msra.mxu0 %v963
    %4614 = vmatprep.subr.mxu0 0.0
    %4615 = vmatpush1.msra.mxu0 %v964
    %4616 = vmatprep.subr.mxu0 0.0
    %4617 = vmatpush1.msra.mxu0 %v965
    %4618 = vmatprep.subr.mxu0 0.0
    %4619 = vmatpush1.msra.mxu0 %v966
    %4620 = vmatprep.subr.mxu0 0.0
    %4621 = vmatpush1.msra.mxu0 %v967
    %4622 = vmatprep.subr.mxu0 0.0
    %4623 = vmatpush1.msra.mxu0 %v968
    %4624 = vmatprep.subr.mxu0 0.0
    %4625 = vmatpush1.msra.mxu0 %v969
    %4626 = vmatprep.subr.mxu0 0.0
    %4627 = vmatpush1.msra.mxu0 %v970
    %4628 = vmatprep.subr.mxu0 0.0
    %4629 = vmatpush1.msra.mxu0 %v971
    %4630 = vmatprep.subr.mxu0 0.0
    %4631 = vmatpush1.msra.mxu0 %v972
    %4632 = vmatprep.subr.mxu0 0.0
    %4633 = vmatpush1.msra.mxu0 %v973
    %4634 = vmatprep.subr.mxu0 0.0
    %4635 = vmatpush1.msra.mxu0 %v974
    %4636 = vmatprep.subr.mxu0 0.0
    %4637 = vmatpush1.msra.mxu0 %v975
    %4638 = vmatprep.subr.mxu0 0.0
    %4639 = vmatpush1.msra.mxu0 %v976
    %4640 = vmatprep.subr.mxu0 0.0
    %4641 = vmatpush1.msra.mxu0 %v977
    %4642 = vmatprep.subr.mxu0 0.0
    %4643 = vmatpush1.msra.mxu0 %v978
    %4644 = vmatprep.subr.mxu0 0.0
    %4645 = vmatpush1.msra.mxu0 %v979
    %4646 = vmatprep.subr.mxu0 0.0
    %4647 = vmatpush1.msra.mxu0 %v980
    %4648 = vmatprep.subr.mxu0 0.0
    %4649 = vmatpush1.msra.mxu0 %v981
    %4650 = vmatprep.subr.mxu0 0.0
    %4651 = vmatpush1.msra.mxu0 %v982
    %4652 = vmatprep.mubr.f32.mxu0 %v4575
    %4653 = vmatmul.mubr.f32.gmra.mrb[0].mxu0 %v4573
    %v4654 = vpop.f32.mrb[0].mxu0
    %v4655 = vadd.f32 0.0, %v4654
    %v4656 = vpop.f32.mrb[0].mxu0
    %4657 = vmatprep.mubr.f32.mxu0 %v4579
    %4658 = vmatmul.mubr.f32.gmra.mrb[0].mxu0 %v4577
    %v4659 = vpop.f32.mrb[0].mxu0
    %v4660 = vadd.f32 0.0, %v4659
    %v4661 = vpop.f32.mrb[0].mxu0
    %4662 = vmatprep.mubr.f32.mxu0 %v4583
    %4663 = vmatmul.mubr.f32.gmra.mrb[0].mxu0 %v4581
    %v4664 = vpop.f32.mrb[0].mxu0
    %v4665 = vadd.f32 0.0, %v4664
    %v4666 = vpop.f32.mrb[0].mxu0
    %4667 = vmatprep.mubr.f32.mxu0 %v4587
    %4668 = vmatmul.mubr.f32.gmra.mrb[0].mxu0 %v4585
    %v4669 = vpop.f32.mrb[0].mxu0
    %v4670 = vadd.f32 0.0, %v4669
    %v4671 = vpop.f32.mrb[0].mxu0
    %4672 = vdwg.mxu0
    %v4673 = vrcp.pop %v4655
    %v4674 = vrcp.pop %v4660
    %v4675 = vrcp.pop %v4665
    %v4676 = vrcp.pop %v4670
    %v4678 = vsel %vm675, %v4673, 0
    %v4681 = vsel %vm675, %v4674, 0
    %v4684 = vsel %vm675, %v4675, 0
    %v4687 = vsel %vm675, %v4676, 0
    %4689 = vmatprep.subr.mxu0 %v984
    %4690 = vmatpush1.msra.mxu0 %v983
    %4691 = vmatprep.subr.mxu0 0.0
    %4692 = vmatpush1.msra.mxu0 0.0
    %4693 = vmatprep.subr.mxu0 0.0
    %4694 = vmatpush1.msra.mxu0 0.0
    %4695 = vmatprep.subr.mxu0 0.0
    %4696 = vmatpush1.msra.mxu0 0.0
    %4697 = vmatprep.subr.mxu0 0.0
    %4698 = vmatpush1.msra.mxu0 0.0
    %4699 = vmatprep.subr.mxu0 0.0
    %4700 = vmatpush1.msra.mxu0 0.0
    %4701 = vmatprep.subr.mxu0 0.0
    %4702 = vmatpush1.msra.mxu0 0.0
    %4703 = vmatprep.subr.mxu0 0.0
    %4704 = vmatpush1.msra.mxu0 0.0
    %4705 = vmatprep.subr.mxu0 0.0
    %4706 = vmatpush1.msra.mxu0 0.0
    %4707 = vmatprep.subr.mxu0 0.0
    %4708 = vmatpush1.msra.mxu0 0.0
    %4709 = vmatprep.subr.mxu0 0.0
    %4710 = vmatpush1.msra.mxu0 0.0
    %4711 = vmatprep.subr.mxu0 0.0
    %4712 = vmatpush1.msra.mxu0 0.0
    %4713 = vmatprep.subr.mxu0 0.0
    %4714 = vmatpush1.msra.mxu0 0.0
    %4715 = vmatprep.subr.mxu0 0.0
    %4716 = vmatpush1.msra.mxu0 0.0
    %4717 = vmatprep.subr.mxu0 0.0
    %4718 = vmatpush1.msra.mxu0 0.0
    %4719 = vmatprep.subr.mxu0 0.0
    %4720 = vmatpush1.msra.mxu0 0.0
    %4721 = vmatprep.subr.mxu0 0.0
    %4722 = vmatpush1.msra.mxu0 0.0
    %4723 = vmatprep.subr.mxu0 0.0
    %4724 = vmatpush1.msra.mxu0 0.0
    %4725 = vmatprep.subr.mxu0 0.0
    %4726 = vmatpush1.msra.mxu0 0.0
    %4727 = vmatprep.subr.mxu0 0.0
    %4728 = vmatpush1.msra.mxu0 0.0
    %4729 = vmatprep.subr.mxu0 0.0
    %4730 = vmatpush1.msra.mxu0 0.0
    %4731 = vmatprep.subr.mxu0 0.0
    %4732 = vmatpush1.msra.mxu0 0.0
    %4733 = vmatprep.subr.mxu0 0.0
    %4734 = vmatpush1.msra.mxu0 0.0
    %4735 = vmatprep.subr.mxu0 0.0
    %4736 = vmatpush1.msra.mxu0 0.0
    %4737 = vmatprep.subr.mxu0 0.0
    %4738 = vmatpush1.msra.mxu0 0.0
    %4739 = vmatprep.subr.mxu0 0.0
    %4740 = vmatpush1.msra.mxu0 0.0
    %4741 = vmatprep.subr.mxu0 0.0
    %4742 = vmatpush1.msra.mxu0 0.0
    %4743 = vmatprep.subr.mxu0 0.0
    %4744 = vmatpush1.msra.mxu0 0.0
    %4745 = vmatprep.subr.mxu0 0.0
    %4746 = vmatpush1.msra.mxu0 0.0
    %4747 = vmatprep.subr.mxu0 0.0
    %4748 = vmatpush1.msra.mxu0 0.0
    %4749 = vmatprep.subr.mxu0 0.0
    %4750 = vmatpush1.msra.mxu0 0.0
    %4751 = vmatprep.subr.mxu0 0.0
    %4752 = vmatpush1.msra.mxu0 0.0
    %4753 = vmatprep.mubr.f32.mxu0 0.0
    %4754 = vmatmul.mubr.f32.gmra.mrb[0].mxu0 %v4678
    %v4755 = vpop.f32.mrb[0].mxu0
    %v4756 = vadd.f32 0.0, %v4755
    %v4757 = vpop.f32.mrb[0].mxu0
    %v4758 = vadd.f32 0.0, %v4757
    %4759 = vmatprep.mubr.f32.mxu0 0.0
    %4760 = vmatmul.mubr.f32.gmra.mrb[0].mxu0 %v4681
    %v4761 = vpop.f32.mrb[0].mxu0
    %v4762 = vadd.f32 0.0, %v4761
    %v4763 = vpop.f32.mrb[0].mxu0
    %v4764 = vadd.f32 0.0, %v4763
    %4765 = vmatprep.mubr.f32.mxu0 0.0
    %4766 = vmatmul.mubr.f32.gmra.mrb[0].mxu0 %v4684
    %v4767 = vpop.f32.mrb[0].mxu0
    %v4768 = vadd.f32 0.0, %v4767
    %v4769 = vpop.f32.mrb[0].mxu0
    %v4770 = vadd.f32 0.0, %v4769
    %4771 = vmatprep.mubr.f32.mxu0 0.0
    %4772 = vmatmul.mubr.f32.gmra.mrb[0].mxu0 %v4687
    %v4773 = vpop.f32.mrb[0].mxu0
    %v4774 = vadd.f32 0.0, %v4773
    %v4775 = vpop.f32.mrb[0].mxu0
    %v4776 = vadd.f32 0.0, %v4775
    %4777 = vdwg.mxu0
    %v4778 = vmul.f32 %v4573, %v4756
    %v4779 = vmul.f32 %v4575, %v4758
    %v4780 = vmul.f32 %v4577, %v4762
    %v4781 = vmul.f32 %v4579, %v4764
    %v4782 = vmul.f32 %v4581, %v4768
    %v4783 = vmul.f32 %v4583, %v4770
    %v4784 = vmul.f32 %v4585, %v4774
    %v4785 = vmul.f32 %v4587, %v4776
    %4786 = vmatprep.subr.mxu0 0.0
    %4787 = vmatpush1.msra.mxu0 %v4325
    %4788 = vmatprep.subr.mxu0 0.0
    %4789 = vmatpush1.msra.mxu0 %v4326
    %4790 = vmatprep.subr.mxu0 0.0
    %4791 = vmatpush1.msra.mxu0 %v4327
    %4792 = vmatprep.subr.mxu0 0.0
    %4793 = vmatpush1.msra.mxu0 %v4328
    %4794 = vmatprep.subr.mxu0 0.0
    %4795 = vmatpush1.msra.mxu0 %v4329
    %4796 = vmatprep.subr.mxu0 0.0
    %4797 = vmatpush1.msra.mxu0 %v4330
    %4798 = vmatprep.subr.mxu0 0.0
    %4799 = vmatpush1.msra.mxu0 %v4331
    %4800 = vmatprep.subr.mxu0 0.0
    %4801 = vmatpush1.msra.mxu0 %v4332
    %4802 = vmatprep.subr.mxu0 0.0
    %4803 = vmatpush1.msra.mxu0 %v4333
    %4804 = vmatprep.subr.mxu0 0.0
    %4805 = vmatpush1.msra.mxu0 %v4334
    %4806 = vmatprep.subr.mxu0 0.0
    %4807 = vmatpush1.msra.mxu0 %v4335
    %4808 = vmatprep.subr.mxu0 0.0
    %4809 = vmatpush1.msra.mxu0 %v4336
    %4810 = vmatprep.subr.mxu0 0.0
    %4811 = vmatpush1.msra.mxu0 %v4337
    %4812 = vmatprep.subr.mxu0 0.0
    %4813 = vmatpush1.msra.mxu0 %v4338
    %4814 = vmatprep.subr.mxu0 0.0
    %4815 = vmatpush1.msra.mxu0 %v4339
    %4816 = vmatprep.subr.mxu0 0.0
    %4817 = vmatpush1.msra.mxu0 %v4340
    %4818 = vmatprep.subr.mxu0 0.0
    %4819 = vmatpush1.msra.mxu0 %v4341
    %4820 = vmatprep.subr.mxu0 0.0
    %4821 = vmatpush1.msra.mxu0 %v4342
    %4822 = vmatprep.subr.mxu0 0.0
    %4823 = vmatpush1.msra.mxu0 %v4343
    %4824 = vmatprep.subr.mxu0 0.0
    %4825 = vmatpush1.msra.mxu0 %v4344
    %4826 = vmatprep.subr.mxu0 0.0
    %4827 = vmatpush1.msra.mxu0 %v4345
    %4828 = vmatprep.subr.mxu0 0.0
    %4829 = vmatpush1.msra.mxu0 %v4346
    %4830 = vmatprep.subr.mxu0 0.0
    %4831 = vmatpush1.msra.mxu0 %v4347
    %4832 = vmatprep.subr.mxu0 0.0
    %4833 = vmatpush1.msra.mxu0 %v4348
    %4834 = vmatprep.subr.mxu0 0.0
    %4835 = vmatpush1.msra.mxu0 %v4349
    %4836 = vmatprep.subr.mxu0 0.0
    %4837 = vmatpush1.msra.mxu0 %v4350
    %4838 = vmatprep.subr.mxu0 0.0
    %4839 = vmatpush1.msra.mxu0 %v4351
    %4840 = vmatprep.subr.mxu0 0.0
    %4841 = vmatpush1.msra.mxu0 %v4352
    %4842 = vmatprep.subr.mxu0 0.0
    %4843 = vmatpush1.msra.mxu0 %v4353
    %4844 = vmatprep.subr.mxu0 0.0
    %4845 = vmatpush1.msra.mxu0 %v4354
    %4846 = vmatprep.subr.mxu0 0.0
    %4847 = vmatpush1.msra.mxu0 %v4355
    %4848 = vmatprep.subr.mxu0 0.0
    %4849 = vmatpush1.msra.mxu0 %v4356
    %4850 = vmatprep.mubr.f32.mxu0 %v4779
    %4851 = vmatmul.mubr.f32.gmra.mrb[0].mxu0 %v4778
    %v4852 = vpop.f32.mrb[0].mxu0
    %v4853 = vadd.f32 0.0, %v4852
    %v4854 = vpop.f32.mrb[0].mxu0
    %4855 = vmatprep.mubr.f32.mxu0 %v4781
    %4856 = vmatmul.mubr.f32.gmra.mrb[0].mxu0 %v4780
    %v4857 = vpop.f32.mrb[0].mxu0
    %v4858 = vadd.f32 0.0, %v4857
    %v4859 = vpop.f32.mrb[0].mxu0
    %4860 = vmatprep.mubr.f32.mxu0 %v4783
    %4861 = vmatmul.mubr.f32.gmra.mrb[0].mxu0 %v4782
    %v4862 = vpop.f32.mrb[0].mxu0
    %v4863 = vadd.f32 0.0, %v4862
    %v4864 = vpop.f32.mrb[0].mxu0
    %4865 = vmatprep.mubr.f32.mxu0 %v4785
    %4866 = vmatmul.mubr.f32.gmra.mrb[0].mxu0 %v4784
    %v4867 = vpop.f32.mrb[0].mxu0
    %v4868 = vadd.f32 0.0, %v4867
    %v4869 = vpop.f32.mrb[0].mxu0
    %4870 = vdwg.mxu0
    %s4871 = scalar_lea.vmem %s57, 32
    %v4872 = vld [vmem:[%s4871] sm:$0xff]
    %v4873 = vld [vmem:[%s4871 + $0x8] sm:$0xff]
    %v4874 = vld [vmem:[%s4871 + $0x10] sm:$0xff]
    %v4875 = vld [vmem:[%s4871 + $0x18] sm:$0xff]
    %v4877 = vsel %vm374, %v4853, 0
    %v4880 = vsel %vm374, %v4858, 0
    %v4883 = vsel %vm374, %v4863, 0
    %v4886 = vsel %vm374, %v4868, 0
    %4888 = vmatprep.subr.mxu0 0.0
    %4889 = vmatpush1.msra.mxu0 %v4872
    %4890 = vmatprep.subr.mxu0 0.0
    %4891 = vmatpush1.msra.mxu0 %v4873
    %4892 = vmatprep.subr.mxu0 0.0
    %4893 = vmatpush1.msra.mxu0 %v4874
    %4894 = vmatprep.subr.mxu0 0.0
    %4895 = vmatpush1.msra.mxu0 %v4875
    %4896 = vmatprep.subr.mxu0 0.0
    %4897 = vmatpush1.msra.mxu0 0.0
    %4898 = vmatprep.subr.mxu0 0.0
    %4899 = vmatpush1.msra.mxu0 0.0
    %4900 = vmatprep.subr.mxu0 0.0
    %4901 = vmatpush1.msra.mxu0 0.0
    %4902 = vmatprep.subr.mxu0 0.0
    %4903 = vmatpush1.msra.mxu0 0.0
    %4904 = vmatprep.subr.mxu0 0.0
    %4905 = vmatpush1.msra.mxu0 0.0
    %4906 = vmatprep.subr.mxu0 0.0
    %4907 = vmatpush1.msra.mxu0 0.0
    %4908 = vmatprep.subr.mxu0 0.0
    %4909 = vmatpush1.msra.mxu0 0.0
    %4910 = vmatprep.subr.mxu0 0.0
    %4911 = vmatpush1.msra.mxu0 0.0
    %4912 = vmatprep.subr.mxu0 0.0
    %4913 = vmatpush1.msra.mxu0 0.0
    %4914 = vmatprep.subr.mxu0 0.0
    %4915 = vmatpush1.msra.mxu0 0.0
    %4916 = vmatprep.subr.mxu0 0.0
    %4917 = vmatpush1.msra.mxu0 0.0
    %4918 = vmatprep.subr.mxu0 0.0
    %4919 = vmatpush1.msra.mxu0 0.0
    %4920 = vmatprep.subr.mxu0 0.0
    %4921 = vmatpush1.msra.mxu0 0.0
    %4922 = vmatprep.subr.mxu0 0.0
    %4923 = vmatpush1.msra.mxu0 0.0
    %4924 = vmatprep.subr.mxu0 0.0
    %4925 = vmatpush1.msra.mxu0 0.0
    %4926 = vmatprep.subr.mxu0 0.0
    %4927 = vmatpush1.msra.mxu0 0.0
    %4928 = vmatprep.subr.mxu0 0.0
    %4929 = vmatpush1.msra.mxu0 0.0
    %4930 = vmatprep.subr.mxu0 0.0
    %4931 = vmatpush1.msra.mxu0 0.0
    %4932 = vmatprep.subr.mxu0 0.0
    %4933 = vmatpush1.msra.mxu0 0.0
    %4934 = vmatprep.subr.mxu0 0.0
    %4935 = vmatpush1.msra.mxu0 0.0
    %4936 = vmatprep.subr.mxu0 0.0
    %4937 = vmatpush1.msra.mxu0 0.0
    %4938 = vmatprep.subr.mxu0 0.0
    %4939 = vmatpush1.msra.mxu0 0.0
    %4940 = vmatprep.subr.mxu0 0.0
    %4941 = vmatpush1.msra.mxu0 0.0
    %4942 = vmatprep.subr.mxu0 0.0
    %4943 = vmatpush1.msra.mxu0 0.0
    %4944 = vmatprep.subr.mxu0 0.0
    %4945 = vmatpush1.msra.mxu0 0.0
    %4946 = vmatprep.subr.mxu0 0.0
    %4947 = vmatpush1.msra.mxu0 0.0
    %4948 = vmatprep.subr.mxu0 0.0
    %4949 = vmatpush1.msra.mxu0 0.0
    %4950 = vmatprep.subr.mxu0 0.0
    %4951 = vmatpush1.msra.mxu0 0.0
    %4952 = vmatprep.mubr.f32.mxu0 0.0
    %4953 = vmatmul.mubr.f32.gmra.mrb[0].mxu0 %v4877
    %v4954 = vpop.f32.mrb[0].mxu0
    %v4955 = vadd.f32 0.0, %v4954
    %v4956 = vpop.f32.mrb[0].mxu0
    %4957 = vmatprep.mubr.f32.mxu0 0.0
    %4958 = vmatmul.mubr.f32.gmra.mrb[0].mxu0 %v4880
    %v4959 = vpop.f32.mrb[0].mxu0
    %v4960 = vadd.f32 0.0, %v4959
    %v4961 = vpop.f32.mrb[0].mxu0
    %4962 = vmatprep.mubr.f32.mxu0 0.0
    %4963 = vmatmul.mubr.f32.gmra.mrb[0].mxu0 %v4883
    %v4964 = vpop.f32.mrb[0].mxu0
    %v4965 = vadd.f32 0.0, %v4964
    %v4966 = vpop.f32.mrb[0].mxu0
    %4967 = vmatprep.mubr.f32.mxu0 0.0
    %4968 = vmatmul.mubr.f32.gmra.mrb[0].mxu0 %v4886
    %v4969 = vpop.f32.mrb[0].mxu0
    %v4970 = vadd.f32 0.0, %v4969
    %v4971 = vpop.f32.mrb[0].mxu0
    %4972 = vdwg.mxu0
    %v4973 = vadd.f32 %v3632, %v4955
    %v4974 = vadd.f32 %v3633, %v4960
    %v4975 = vadd.f32 %v3634, %v4965
    %v4976 = vadd.f32 %v3635, %v4970
    %v4977 = vld [vmem:[%s59 + $0x1] sm:$0x1]
    %v4978 = vlaneseq
    %v4979 = vshrl.u32 %v4978, 7
    %v4980 = vsub.s32 0, %v4979
    %v4981 = vrot.slane %v4977, %v4980
    %v4982 = vadd.f32 %v4973, %v4981
    %v4983 = vadd.f32 %v4974, %v4981
    %v4984 = vadd.f32 %v4975, %v4981
    %v4985 = vadd.f32 %v4976, %v4981
    %v4986 = vld [vmem:[%s49 + $0x1] sm:$0x1]
    %v4987 = vld [vmem:[%s51 + $0x1] sm:$0x1]
    %v4988 = vsel %vm374, %v4982, 0.0
    %4989 = vadd.xlane.f32.xlu0 %v4988
    %v4990 = vpop.xlane.xlu0 %4989
    %v4991 = vsel %vm374, %v4983, 0.0
    %4992 = vadd.xlane.f32.xlu0 %v4991
    %v4993 = vpop.xlane.xlu0 %4992
    %v4994 = vsel %vm374, %v4984, 0.0
    %4995 = vadd.xlane.f32.xlu0 %v4994
    %v4996 = vpop.xlane.xlu0 %4995
    %v4997 = vsel %vm1004, %v4985, 0.0
    %4998 = vadd.xlane.f32.xlu0 %v4997
    %v4999 = vpop.xlane.xlu0 %4998
    %v5000 = vmul.f32 %v4990, %v381
    %v5001 = vmul.f32 %v4993, %v381
    %v5002 = vmul.f32 %v4996, %v381
    %v5003 = vmul.f32 %v4999, %v381
    %v5004 = vsub.f32 %v4982, %v5000
    %v5005 = vsub.f32 %v4983, %v5001
    %v5006 = vsub.f32 %v4984, %v5002
    %v5007 = vsub.f32 %v4985, %v5003
    %v5008 = vmul.f32 %v5004, %v5004
    %v5009 = vmul.f32 %v5005, %v5005
    %v5010 = vmul.f32 %v5006, %v5006
    %v5011 = vmul.f32 %v5007, %v5007
    %v5012 = vsel %vm374, %v5008, 0.0
    %5013 = vadd.xlane.f32.xlu0 %v5012
    %v5014 = vpop.xlane.xlu0 %5013
    %v5015 = vsel %vm374, %v5009, 0.0
    %5016 = vadd.xlane.f32.xlu0 %v5015
    %v5017 = vpop.xlane.xlu0 %5016
    %v5018 = vsel %vm374, %v5010, 0.0
    %5019 = vadd.xlane.f32.xlu0 %v5018
    %v5020 = vpop.xlane.xlu0 %5019
    %v5021 = vsel %vm1004, %v5011, 0.0
    %5022 = vadd.xlane.f32.xlu0 %v5021
    %v5023 = vpop.xlane.xlu0 %5022
    %v5024 = vmul.f32 %v5014, 0.032258064
    %v5025 = vmul.f32 %v5017, 0.032258064
    %v5026 = vmul.f32 %v5020, 0.032258064
    %v5027 = vmul.f32 %v5023, 0.032258064
    %v5028 = vlaneseq
    %v5029 = vshrl.u32 %v5028, 7
    %v5030 = vsub.s32 0, %v5029
    %v5031 = vrot.slane %v4986, %v5030
    %v5032 = vmul.f32 %v5031, %v5004
    %v5033 = vmul.f32 %v5031, %v5005
    %v5034 = vmul.f32 %v5031, %v5006
    %v5035 = vmul.f32 %v5031, %v5007
    %v5036 = vadd.f32 %v5024, 1e-06
    %v5037 = vadd.f32 %v5025, 1e-06
    %v5038 = vadd.f32 %v5026, 1e-06
    %v5039 = vadd.f32 %v5027, 1e-06
    %v5040 = vrsqrt.pop %v5036
    %v5041 = vrsqrt.pop %v5037
    %v5042 = vrsqrt.pop %v5038
    %v5043 = vrsqrt.pop %v5039
    %v5044 = vmul.f32 %v5032, %v5040
    %v5045 = vmul.f32 %v5033, %v5041
    %v5046 = vmul.f32 %v5034, %v5042
    %v5047 = vmul.f32 %v5035, %v5043
    %v5048 = vlaneseq
    %v5049 = vshrl.u32 %v5048, 7
    %v5050 = vsub.s32 0, %v5049
    %v5051 = vrot.slane %v4987, %v5050
    %v5052 = vadd.f32 %v5044, %v5051
    %v5053 = vadd.f32 %v5045, %v5051
    %v5054 = vadd.f32 %v5046, %v5051
    %v5055 = vadd.f32 %v5047, %v5051
    %v5056 = vpack.c.bf16 %v5053, %v5052
    %v5057 = vpack.c.bf16 %v5055, %v5054
    %s5058 = scalar_lea.vmem %s61, 128
    %v5059 = vld [vmem:[%s5058] sm:$0xff]
    %v5060 = vld [vmem:[%s5058 + $0x8] sm:$0xff]
    %v5061 = vld [vmem:[%s5058 + $0x10] sm:$0xff]
    %v5062 = vld [vmem:[%s5058 + $0x18] sm:$0xff]
    %v5063 = vld [vmem:[%s5058 + $0x20] sm:$0xff]
    %v5064 = vld [vmem:[%s5058 + $0x28] sm:$0xff]
    %v5065 = vld [vmem:[%s5058 + $0x30] sm:$0xff]
    %v5066 = vld [vmem:[%s5058 + $0x38] sm:$0xff]
    %v5067 = vld [vmem:[%s5058 + $0x40] sm:$0xff]
    %v5068 = vld [vmem:[%s5058 + $0x48] sm:$0xff]
    %v5069 = vld [vmem:[%s5058 + $0x50] sm:$0xff]
    %v5070 = vld [vmem:[%s5058 + $0x58] sm:$0xff]
    %v5071 = vld [vmem:[%s5058 + $0x60] sm:$0xff]
    %v5072 = vld [vmem:[%s5058 + $0x68] sm:$0xff]
    %v5073 = vld [vmem:[%s5058 + $0x70] sm:$0xff]
    %v5074 = vld [vmem:[%s5058 + $0x78] sm:$0xff]
    %s5075 = scalar_lea.vmem %s63, 1
    %v5076 = vld [vmem:[%s5075] ss:$2 sm:$0xff]
    %v5078 = vlaneseq
    %v5079 = vshrl.u32 %v5078, 7
    %v5080 = vsub.s32 0, %v5079
    %v5081 = vrot.slane %v5076, %v5080
    %v5082 = vlaneseq
    %v5083 = vshrl.u32 %v5082, 7
    %v5084 = vsub.s32 1, %v5083
    %v5085 = vrot.slane %v5076, %v5084
    %v5086 = vlaneseq
    %v5087 = vshrl.u32 %v5086, 7
    %v5088 = vsub.s32 2, %v5087
    %v5089 = vrot.slane %v5076, %v5088
    %v5090 = vlaneseq
    %v5091 = vshrl.u32 %v5090, 7
    %v5092 = vsub.s32 3, %v5091
    %v5093 = vrot.slane %v5076, %v5092
    %v5094 = vlaneseq
    %v5095 = vshrl.u32 %v5094, 7
    %v5096 = vsub.s32 4, %v5095
    %v5097 = vrot.slane %v5076, %v5096
    %v5098 = vlaneseq
    %v5099 = vshrl.u32 %v5098, 7
    %v5100 = vsub.s32 5, %v5099
    %v5101 = vrot.slane %v5076, %v5100
    %v5102 = vlaneseq
    %v5103 = vshrl.u32 %v5102, 7
    %v5104 = vsub.s32 6, %v5103
    %v5105 = vrot.slane %v5076, %v5104
    %v5106 = vlaneseq
    %v5107 = vshrl.u32 %v5106, 7
    %v5108 = vsub.s32 7, %v5107
    %v5109 = vrot.slane %v5076, %v5108
    %v5134 = vunpack.c.l.b16 %v5059
    %v5135 = vunpack.c.h.b16 %v5059
    %v5136 = vunpack.c.l.b16 %v5060
    %v5137 = vunpack.c.h.b16 %v5060
    %v5138 = vunpack.c.l.b16 %v5061
    %v5139 = vunpack.c.h.b16 %v5061
    %v5140 = vunpack.c.l.b16 %v5062
    %v5141 = vunpack.c.h.b16 %v5062
    %v5142 = vunpack.c.l.b16 %v5063
    %v5143 = vunpack.c.h.b16 %v5063
    %v5144 = vunpack.c.l.b16 %v5064
    %v5145 = vunpack.c.h.b16 %v5064
    %v5146 = vunpack.c.l.b16 %v5065
    %v5147 = vunpack.c.h.b16 %v5065
    %v5148 = vunpack.c.l.b16 %v5066
    %v5149 = vunpack.c.h.b16 %v5066
    %v5150 = vunpack.c.l.b16 %v5067
    %v5151 = vunpack.c.h.b16 %v5067
    %v5152 = vunpack.c.l.b16 %v5068
    %v5153 = vunpack.c.h.b16 %v5068
    %v5154 = vunpack.c.l.b16 %v5069
    %v5155 = vunpack.c.h.b16 %v5069
    %v5156 = vunpack.c.l.b16 %v5070
    %v5157 = vunpack.c.h.b16 %v5070
    %v5158 = vunpack.c.l.b16 %v5071
    %v5159 = vunpack.c.h.b16 %v5071
    %v5160 = vunpack.c.l.b16 %v5072
    %v5161 = vunpack.c.h.b16 %v5072
    %v5162 = vunpack.c.l.b16 %v5073
    %v5163 = vunpack.c.h.b16 %v5073
    %v5164 = vunpack.c.l.b16 %v5074
    %v5165 = vunpack.c.h.b16 %v5074
    %v5166 = vpack.c.b16 %v5142, %v5134
    %v5167 = vpack.c.b16 %v5143, %v5135
    %v5168 = vpack.c.b16 %v5144, %v5136
    %v5169 = vpack.c.b16 %v5145, %v5137
    %v5170 = vpack.c.b16 %v5146, %v5138
    %v5171 = vpack.c.b16 %v5147, %v5139
    %v5172 = vpack.c.b16 %v5148, %v5140
    %v5173 = vpack.c.b16 %v5149, %v5141
    %v5174 = vpack.c.b16 %v5158, %v5150
    %v5175 = vpack.c.b16 %v5159, %v5151
    %v5176 = vpack.c.b16 %v5160, %v5152
    %v5177 = vpack.c.b16 %v5161, %v5153
    %v5178 = vpack.c.b16 %v5162, %v5154
    %v5179 = vpack.c.b16 %v5163, %v5155
    %v5180 = vpack.c.b16 %v5164, %v5156
    %v5181 = vpack.c.b16 %v5165, %v5157
    %v5199 = vsel %vm374, %v5056, 0
    %v5202 = vsel %vm374, %v5057, 0
    %5204 = vmatprep.subr.bf16.mxu0 %v5167
    %5205 = vmatpush1.bf16.msra.mxu0 %v5166
    %5206 = vmatprep.subr.bf16.mxu0 %v5175
    %5207 = vmatpush1.bf16.msra.mxu0 %v5174
    %5208 = vmatprep.subr.bf16.mxu0 0
    %5209 = vmatpush1.bf16.msra.mxu0 0
    %5210 = vmatprep.subr.bf16.mxu0 0
    %5211 = vmatpush1.bf16.msra.mxu0 0
    %5212 = vmatprep.subr.bf16.mxu0 0
    %5213 = vmatpush1.bf16.msra.mxu0 0
    %5214 = vmatprep.subr.bf16.mxu0 0
    %5215 = vmatpush1.bf16.msra.mxu0 0
    %5216 = vmatprep.subr.bf16.mxu0 0
    %5217 = vmatpush1.bf16.msra.mxu0 0
    %5218 = vmatprep.subr.bf16.mxu0 0
    %5219 = vmatpush1.bf16.msra.mxu0 0
    %5220 = vmatprep.subr.bf16.mxu0 0
    %5221 = vmatpush1.bf16.msra.mxu0 0
    %5222 = vmatprep.subr.bf16.mxu0 0
    %5223 = vmatpush1.bf16.msra.mxu0 0
    %5224 = vmatprep.subr.bf16.mxu0 0
    %5225 = vmatpush1.bf16.msra.mxu0 0
    %5226 = vmatprep.subr.bf16.mxu0 0
    %5227 = vmatpush1.bf16.msra.mxu0 0
    %5228 = vmatprep.subr.bf16.mxu0 0
    %5229 = vmatpush1.bf16.msra.mxu0 0
    %5230 = vmatprep.subr.bf16.mxu0 0
    %5231 = vmatpush1.bf16.msra.mxu0 0
    %5232 = vmatprep.subr.bf16.mxu0 0
    %5233 = vmatpush1.bf16.msra.mxu0 0
    %5234 = vmatprep.subr.bf16.mxu0 0
    %5235 = vmatpush1.bf16.msra.mxu0 0
    %5236 = vmatprep.mubr.bf16.mxu0 0
    %5237 = vmatmul.mubr.bf16.gmra.mrb[0].mxu0 %v5199
    %v5238 = vpop.f32.mrb[0].mxu0
    %v5239 = vadd.f32 %v5081, %v5238
    %v5240 = vpop.f32.mrb[0].mxu0
    %v5241 = vadd.f32 %v5085, %v5240
    %v5242 = vpop.f32.mrb[0].mxu0
    %v5243 = vadd.f32 %v5081, %v5242
    %v5244 = vpop.f32.mrb[0].mxu0
    %v5245 = vadd.f32 %v5085, %v5244
    %5246 = vmatprep.mubr.bf16.mxu0 0
    %5247 = vmatmul.mubr.bf16.gmra.mrb[0].mxu0 %v5202
    %v5248 = vpop.f32.mrb[0].mxu0
    %v5249 = vadd.f32 %v5081, %v5248
    %v5250 = vpop.f32.mrb[0].mxu0
    %v5251 = vadd.f32 %v5085, %v5250
    %v5252 = vpop.f32.mrb[0].mxu0
    %v5253 = vadd.f32 %v5081, %v5252
    %v5254 = vpop.f32.mrb[0].mxu0
    %v5255 = vadd.f32 %v5085, %v5254
    %5256 = vdwg.mxu0
    %5257 = vmatprep.subr.bf16.mxu0 %v5169
    %5258 = vmatpush1.bf16.msra.mxu0 %v5168
    %5259 = vmatprep.subr.bf16.mxu0 %v5177
    %5260 = vmatpush1.bf16.msra.mxu0 %v5176
    %5261 = vmatprep.subr.bf16.mxu0 0
    %5262 = vmatpush1.bf16.msra.mxu0 0
    %5263 = vmatprep.subr.bf16.mxu0 0
    %5264 = vmatpush1.bf16.msra.mxu0 0
    %5265 = vmatprep.subr.bf16.mxu0 0
    %5266 = vmatpush1.bf16.msra.mxu0 0
    %5267 = vmatprep.subr.bf16.mxu0 0
    %5268 = vmatpush1.bf16.msra.mxu0 0
    %5269 = vmatprep.subr.bf16.mxu0 0
    %5270 = vmatpush1.bf16.msra.mxu0 0
    %5271 = vmatprep.subr.bf16.mxu0 0
    %5272 = vmatpush1.bf16.msra.mxu0 0
    %5273 = vmatprep.subr.bf16.mxu0 0
    %5274 = vmatpush1.bf16.msra.mxu0 0
    %5275 = vmatprep.subr.bf16.mxu0 0
    %5276 = vmatpush1.bf16.msra.mxu0 0
    %5277 = vmatprep.subr.bf16.mxu0 0
    %5278 = vmatpush1.bf16.msra.mxu0 0
    %5279 = vmatprep.subr.bf16.mxu0 0
    %5280 = vmatpush1.bf16.msra.mxu0 0
    %5281 = vmatprep.subr.bf16.mxu0 0
    %5282 = vmatpush1.bf16.msra.mxu0 0
    %5283 = vmatprep.subr.bf16.mxu0 0
    %5284 = vmatpush1.bf16.msra.mxu0 0
    %5285 = vmatprep.subr.bf16.mxu0 0
    %5286 = vmatpush1.bf16.msra.mxu0 0
    %5287 = vmatprep.subr.bf16.mxu0 0
    %5288 = vmatpush1.bf16.msra.mxu0 0
    %5289 = vmatprep.mubr.bf16.mxu0 0
    %5290 = vmatmul.mubr.bf16.gmra.mrb[0].mxu0 %v5199
    %v5291 = vpop.f32.mrb[0].mxu0
    %v5292 = vadd.f32 %v5089, %v5291
    %v5293 = vpop.f32.mrb[0].mxu0
    %v5294 = vadd.f32 %v5093, %v5293
    %v5295 = vpop.f32.mrb[0].mxu0
    %v5296 = vadd.f32 %v5089, %v5295
    %v5297 = vpop.f32.mrb[0].mxu0
    %v5298 = vadd.f32 %v5093, %v5297
    %5299 = vmatprep.mubr.bf16.mxu0 0
    %5300 = vmatmul.mubr.bf16.gmra.mrb[0].mxu0 %v5202
    %v5301 = vpop.f32.mrb[0].mxu0
    %v5302 = vadd.f32 %v5089, %v5301
    %v5303 = vpop.f32.mrb[0].mxu0
    %v5304 = vadd.f32 %v5093, %v5303
    %v5305 = vpop.f32.mrb[0].mxu0
    %v5306 = vadd.f32 %v5089, %v5305
    %v5307 = vpop.f32.mrb[0].mxu0
    %v5308 = vadd.f32 %v5093, %v5307
    %5309 = vdwg.mxu0
    %5310 = vmatprep.subr.bf16.mxu0 %v5171
    %5311 = vmatpush1.bf16.msra.mxu0 %v5170
    %5312 = vmatprep.subr.bf16.mxu0 %v5179
    %5313 = vmatpush1.bf16.msra.mxu0 %v5178
    %5314 = vmatprep.subr.bf16.mxu0 0
    %5315 = vmatpush1.bf16.msra.mxu0 0
    %5316 = vmatprep.subr.bf16.mxu0 0
    %5317 = vmatpush1.bf16.msra.mxu0 0
    %5318 = vmatprep.subr.bf16.mxu0 0
    %5319 = vmatpush1.bf16.msra.mxu0 0
    %5320 = vmatprep.subr.bf16.mxu0 0
    %5321 = vmatpush1.bf16.msra.mxu0 0
    %5322 = vmatprep.subr.bf16.mxu0 0
    %5323 = vmatpush1.bf16.msra.mxu0 0
    %5324 = vmatprep.subr.bf16.mxu0 0
    %5325 = vmatpush1.bf16.msra.mxu0 0
    %5326 = vmatprep.subr.bf16.mxu0 0
    %5327 = vmatpush1.bf16.msra.mxu0 0
    %5328 = vmatprep.subr.bf16.mxu0 0
    %5329 = vmatpush1.bf16.msra.mxu0 0
    %5330 = vmatprep.subr.bf16.mxu0 0
    %5331 = vmatpush1.bf16.msra.mxu0 0
    %5332 = vmatprep.subr.bf16.mxu0 0
    %5333 = vmatpush1.bf16.msra.mxu0 0
    %5334 = vmatprep.subr.bf16.mxu0 0
    %5335 = vmatpush1.bf16.msra.mxu0 0
    %5336 = vmatprep.subr.bf16.mxu0 0
    %5337 = vmatpush1.bf16.msra.mxu0 0
    %5338 = vmatprep.subr.bf16.mxu0 0
    %5339 = vmatpush1.bf16.msra.mxu0 0
    %5340 = vmatprep.subr.bf16.mxu0 0
    %5341 = vmatpush1.bf16.msra.mxu0 0
    %5342 = vmatprep.mubr.bf16.mxu0 0
    %5343 = vmatmul.mubr.bf16.gmra.mrb[0].mxu0 %v5199
    %v5344 = vpop.f32.mrb[0].mxu0
    %v5345 = vadd.f32 %v5097, %v5344
    %v5346 = vpop.f32.mrb[0].mxu0
    %v5347 = vadd.f32 %v5101, %v5346
    %v5348 = vpop.f32.mrb[0].mxu0
    %v5349 = vadd.f32 %v5097, %v5348
    %v5350 = vpop.f32.mrb[0].mxu0
    %v5351 = vadd.f32 %v5101, %v5350
    %5352 = vmatprep.mubr.bf16.mxu0 0
    %5353 = vmatmul.mubr.bf16.gmra.mrb[0].mxu0 %v5202
    %v5354 = vpop.f32.mrb[0].mxu0
    %v5355 = vadd.f32 %v5097, %v5354
    %v5356 = vpop.f32.mrb[0].mxu0
    %v5357 = vadd.f32 %v5101, %v5356
    %v5358 = vpop.f32.mrb[0].mxu0
    %v5359 = vadd.f32 %v5097, %v5358
    %v5360 = vpop.f32.mrb[0].mxu0
    %v5361 = vadd.f32 %v5101, %v5360
    %5362 = vdwg.mxu0
    %5363 = vmatprep.subr.bf16.mxu0 %v5173
    %5364 = vmatpush1.bf16.msra.mxu0 %v5172
    %5365 = vmatprep.subr.bf16.mxu0 %v5181
    %5366 = vmatpush1.bf16.msra.mxu0 %v5180
    %5367 = vmatprep.subr.bf16.mxu0 0
    %5368 = vmatpush1.bf16.msra.mxu0 0
    %5369 = vmatprep.subr.bf16.mxu0 0
    %5370 = vmatpush1.bf16.msra.mxu0 0
    %5371 = vmatprep.subr.bf16.mxu0 0
    %5372 = vmatpush1.bf16.msra.mxu0 0
    %5373 = vmatprep.subr.bf16.mxu0 0
    %5374 = vmatpush1.bf16.msra.mxu0 0
    %5375 = vmatprep.subr.bf16.mxu0 0
    %5376 = vmatpush1.bf16.msra.mxu0 0
    %5377 = vmatprep.subr.bf16.mxu0 0
    %5378 = vmatpush1.bf16.msra.mxu0 0
    %5379 = vmatprep.subr.bf16.mxu0 0
    %5380 = vmatpush1.bf16.msra.mxu0 0
    %5381 = vmatprep.subr.bf16.mxu0 0
    %5382 = vmatpush1.bf16.msra.mxu0 0
    %5383 = vmatprep.subr.bf16.mxu0 0
    %5384 = vmatpush1.bf16.msra.mxu0 0
    %5385 = vmatprep.subr.bf16.mxu0 0
    %5386 = vmatpush1.bf16.msra.mxu0 0
    %5387 = vmatprep.subr.bf16.mxu0 0
    %5388 = vmatpush1.bf16.msra.mxu0 0
    %5389 = vmatprep.subr.bf16.mxu0 0
    %5390 = vmatpush1.bf16.msra.mxu0 0
    %5391 = vmatprep.subr.bf16.mxu0 0
    %5392 = vmatpush1.bf16.msra.mxu0 0
    %5393 = vmatprep.subr.bf16.mxu0 0
    %5394 = vmatpush1.bf16.msra.mxu0 0
    %5395 = vmatprep.mubr.bf16.mxu0 0
    %5396 = vmatmul.mubr.bf16.gmra.mrb[0].mxu0 %v5199
    %v5397 = vpop.f32.mrb[0].mxu0
    %v5398 = vadd.f32 %v5105, %v5397
    %v5399 = vpop.f32.mrb[0].mxu0
    %v5400 = vadd.f32 %v5109, %v5399
    %v5401 = vpop.f32.mrb[0].mxu0
    %v5402 = vadd.f32 %v5105, %v5401
    %v5403 = vpop.f32.mrb[0].mxu0
    %v5404 = vadd.f32 %v5109, %v5403
    %5405 = vmatprep.mubr.bf16.mxu0 0
    %5406 = vmatmul.mubr.bf16.gmra.mrb[0].mxu0 %v5202
    %v5407 = vpop.f32.mrb[0].mxu0
    %v5408 = vadd.f32 %v5105, %v5407
    %v5409 = vpop.f32.mrb[0].mxu0
    %v5410 = vadd.f32 %v5109, %v5409
    %v5411 = vpop.f32.mrb[0].mxu0
    %v5412 = vadd.f32 %v5105, %v5411
    %v5413 = vpop.f32.mrb[0].mxu0
    %v5414 = vadd.f32 %v5109, %v5413
    %5415 = vdwg.mxu0
    %v5416 = vmax.f32 %v5239, 0.0
    %v5417 = vmax.f32 %v5241, 0.0
    %v5418 = vmax.f32 %v5292, 0.0
    %v5419 = vmax.f32 %v5294, 0.0
    %v5420 = vmax.f32 %v5345, 0.0
    %v5421 = vmax.f32 %v5347, 0.0
    %v5422 = vmax.f32 %v5398, 0.0
    %v5423 = vmax.f32 %v5400, 0.0
    %v5424 = vmax.f32 %v5243, 0.0
    %v5425 = vmax.f32 %v5245, 0.0
    %v5426 = vmax.f32 %v5296, 0.0
    %v5427 = vmax.f32 %v5298, 0.0
    %v5428 = vmax.f32 %v5349, 0.0
    %v5429 = vmax.f32 %v5351, 0.0
    %v5430 = vmax.f32 %v5402, 0.0
    %v5431 = vmax.f32 %v5404, 0.0
    %v5432 = vmax.f32 %v5249, 0.0
    %v5433 = vmax.f32 %v5251, 0.0
    %v5434 = vmax.f32 %v5302, 0.0
    %v5435 = vmax.f32 %v5304, 0.0
    %v5436 = vmax.f32 %v5355, 0.0
    %v5437 = vmax.f32 %v5357, 0.0
    %v5438 = vmax.f32 %v5408, 0.0
    %v5439 = vmax.f32 %v5410, 0.0
    %v5440 = vmax.f32 %v5253, 0.0
    %v5441 = vmax.f32 %v5255, 0.0
    %v5442 = vmax.f32 %v5306, 0.0
    %v5443 = vmax.f32 %v5308, 0.0
    %v5444 = vmax.f32 %v5359, 0.0
    %v5445 = vmax.f32 %v5361, 0.0
    %v5446 = vmax.f32 %v5412, 0.0
    %v5447 = vmax.f32 %v5414, 0.0
    %v5448 = vpack.c.bf16 %v5424, %v5416
    %v5449 = vpack.c.bf16 %v5425, %v5417
    %v5450 = vpack.c.bf16 %v5426, %v5418
    %v5451 = vpack.c.bf16 %v5427, %v5419
    %v5452 = vpack.c.bf16 %v5428, %v5420
    %v5453 = vpack.c.bf16 %v5429, %v5421
    %v5454 = vpack.c.bf16 %v5430, %v5422
    %v5455 = vpack.c.bf16 %v5431, %v5423
    %v5456 = vpack.c.bf16 %v5440, %v5432
    %v5457 = vpack.c.bf16 %v5441, %v5433
    %v5458 = vpack.c.bf16 %v5442, %v5434
    %v5459 = vpack.c.bf16 %v5443, %v5435
    %v5460 = vpack.c.bf16 %v5444, %v5436
    %v5461 = vpack.c.bf16 %v5445, %v5437
    %v5462 = vpack.c.bf16 %v5446, %v5438
    %v5463 = vpack.c.bf16 %v5447, %v5439
    %s5464 = scalar_lea.vmem %s65, 512
    %v5465 = vld [vmem:[%s5464] sm:$0xf]
    %v5466 = vld [vmem:[%s5464 + $0x4] sm:$0xf]
    %v5467 = vld [vmem:[%s5464 + $0x8] sm:$0xf]
    %v5468 = vld [vmem:[%s5464 + $0xc] sm:$0xf]
    %v5469 = vld [vmem:[%s5464 + $0x10] sm:$0xf]
    %v5470 = vld [vmem:[%s5464 + $0x14] sm:$0xf]
    %v5471 = vld [vmem:[%s5464 + $0x18] sm:$0xf]
    %v5472 = vld [vmem:[%s5464 + $0x1c] sm:$0xf]
    %v5473 = vld [vmem:[%s5464 + $0x20] sm:$0xf]
    %v5474 = vld [vmem:[%s5464 + $0x24] sm:$0xf]
    %v5475 = vld [vmem:[%s5464 + $0x28] sm:$0xf]
    %v5476 = vld [vmem:[%s5464 + $0x2c] sm:$0xf]
    %v5477 = vld [vmem:[%s5464 + $0x30] sm:$0xf]
    %v5478 = vld [vmem:[%s5464 + $0x34] sm:$0xf]
    %v5479 = vld [vmem:[%s5464 + $0x38] sm:$0xf]
    %v5480 = vld [vmem:[%s5464 + $0x3c] sm:$0xf]
    %v5481 = vld [vmem:[%s5464 + $0x40] sm:$0xf]
    %v5482 = vld [vmem:[%s5464 + $0x44] sm:$0xf]
    %v5483 = vld [vmem:[%s5464 + $0x48] sm:$0xf]
    %v5484 = vld [vmem:[%s5464 + $0x4c] sm:$0xf]
    %v5485 = vld [vmem:[%s5464 + $0x50] sm:$0xf]
    %v5486 = vld [vmem:[%s5464 + $0x54] sm:$0xf]
    %v5487 = vld [vmem:[%s5464 + $0x58] sm:$0xf]
    %v5488 = vld [vmem:[%s5464 + $0x5c] sm:$0xf]
    %v5489 = vld [vmem:[%s5464 + $0x60] sm:$0xf]
    %v5490 = vld [vmem:[%s5464 + $0x64] sm:$0xf]
    %v5491 = vld [vmem:[%s5464 + $0x68] sm:$0xf]
    %v5492 = vld [vmem:[%s5464 + $0x6c] sm:$0xf]
    %v5493 = vld [vmem:[%s5464 + $0x70] sm:$0xf]
    %v5494 = vld [vmem:[%s5464 + $0x74] sm:$0xf]
    %v5495 = vld [vmem:[%s5464 + $0x78] sm:$0xf]
    %v5496 = vld [vmem:[%s5464 + $0x7c] sm:$0xf]
    %v5497 = vld [vmem:[%s5464 + $0x80] sm:$0xf]
    %v5498 = vld [vmem:[%s5464 + $0x84] sm:$0xf]
    %v5499 = vld [vmem:[%s5464 + $0x88] sm:$0xf]
    %v5500 = vld [vmem:[%s5464 + $0x8c] sm:$0xf]
    %v5501 = vld [vmem:[%s5464 + $0x90] sm:$0xf]
    %v5502 = vld [vmem:[%s5464 + $0x94] sm:$0xf]
    %v5503 = vld [vmem:[%s5464 + $0x98] sm:$0xf]
    %v5504 = vld [vmem:[%s5464 + $0x9c] sm:$0xf]
    %v5505 = vld [vmem:[%s5464 + $0xa0] sm:$0xf]
    %v5506 = vld [vmem:[%s5464 + $0xa4] sm:$0xf]
    %v5507 = vld [vmem:[%s5464 + $0xa8] sm:$0xf]
    %v5508 = vld [vmem:[%s5464 + $0xac] sm:$0xf]
    %v5509 = vld [vmem:[%s5464 + $0xb0] sm:$0xf]
    %v5510 = vld [vmem:[%s5464 + $0xb4] sm:$0xf]
    %v5511 = vld [vmem:[%s5464 + $0xb8] sm:$0xf]
    %v5512 = vld [vmem:[%s5464 + $0xbc] sm:$0xf]
    %v5513 = vld [vmem:[%s5464 + $0xc0] sm:$0xf]
    %v5514 = vld [vmem:[%s5464 + $0xc4] sm:$0xf]
    %v5515 = vld [vmem:[%s5464 + $0xc8] sm:$0xf]
    %v5516 = vld [vmem:[%s5464 + $0xcc] sm:$0xf]
    %v5517 = vld [vmem:[%s5464 + $0xd0] sm:$0xf]
    %v5518 = vld [vmem:[%s5464 + $0xd4] sm:$0xf]
    %v5519 = vld [vmem:[%s5464 + $0xd8] sm:$0xf]
    %v5520 = vld [vmem:[%s5464 + $0xdc] sm:$0xf]
    %v5521 = vld [vmem:[%s5464 + $0xe0] sm:$0xf]
    %v5522 = vld [vmem:[%s5464 + $0xe4] sm:$0xf]
    %v5523 = vld [vmem:[%s5464 + $0xe8] sm:$0xf]
    %v5524 = vld [vmem:[%s5464 + $0xec] sm:$0xf]
    %v5525 = vld [vmem:[%s5464 + $0xf0] sm:$0xf]
    %v5526 = vld [vmem:[%s5464 + $0xf4] sm:$0xf]
    %v5527 = vld [vmem:[%s5464 + $0xf8] sm:$0xf]
    %v5528 = vld [vmem:[%s5464 + $0xfc] sm:$0xf]
    %v5529 = vld [vmem:[%s5464 + $0x100] sm:$0xf]
    %v5530 = vld [vmem:[%s5464 + $0x104] sm:$0xf]
    %v5531 = vld [vmem:[%s5464 + $0x108] sm:$0xf]
    %v5532 = vld [vmem:[%s5464 + $0x10c] sm:$0xf]
    %v5533 = vld [vmem:[%s5464 + $0x110] sm:$0xf]
    %v5534 = vld [vmem:[%s5464 + $0x114] sm:$0xf]
    %v5535 = vld [vmem:[%s5464 + $0x118] sm:$0xf]
    %v5536 = vld [vmem:[%s5464 + $0x11c] sm:$0xf]
    %v5537 = vld [vmem:[%s5464 + $0x120] sm:$0xf]
    %v5538 = vld [vmem:[%s5464 + $0x124] sm:$0xf]
    %v5539 = vld [vmem:[%s5464 + $0x128] sm:$0xf]
    %v5540 = vld [vmem:[%s5464 + $0x12c] sm:$0xf]
    %v5541 = vld [vmem:[%s5464 + $0x130] sm:$0xf]
    %v5542 = vld [vmem:[%s5464 + $0x134] sm:$0xf]
    %v5543 = vld [vmem:[%s5464 + $0x138] sm:$0xf]
    %v5544 = vld [vmem:[%s5464 + $0x13c] sm:$0xf]
    %v5545 = vld [vmem:[%s5464 + $0x140] sm:$0xf]
    %v5546 = vld [vmem:[%s5464 + $0x144] sm:$0xf]
    %v5547 = vld [vmem:[%s5464 + $0x148] sm:$0xf]
    %v5548 = vld [vmem:[%s5464 + $0x14c] sm:$0xf]
    %v5549 = vld [vmem:[%s5464 + $0x150] sm:$0xf]
    %v5550 = vld [vmem:[%s5464 + $0x154] sm:$0xf]
    %v5551 = vld [vmem:[%s5464 + $0x158] sm:$0xf]
    %v5552 = vld [vmem:[%s5464 + $0x15c] sm:$0xf]
    %v5553 = vld [vmem:[%s5464 + $0x160] sm:$0xf]
    %v5554 = vld [vmem:[%s5464 + $0x164] sm:$0xf]
    %v5555 = vld [vmem:[%s5464 + $0x168] sm:$0xf]
    %v5556 = vld [vmem:[%s5464 + $0x16c] sm:$0xf]
    %v5557 = vld [vmem:[%s5464 + $0x170] sm:$0xf]
    %v5558 = vld [vmem:[%s5464 + $0x174] sm:$0xf]
    %v5559 = vld [vmem:[%s5464 + $0x178] sm:$0xf]
    %v5560 = vld [vmem:[%s5464 + $0x17c] sm:$0xf]
    %v5561 = vld [vmem:[%s5464 + $0x180] sm:$0xf]
    %v5562 = vld [vmem:[%s5464 + $0x184] sm:$0xf]
    %v5563 = vld [vmem:[%s5464 + $0x188] sm:$0xf]
    %v5564 = vld [vmem:[%s5464 + $0x18c] sm:$0xf]
    %v5565 = vld [vmem:[%s5464 + $0x190] sm:$0xf]
    %v5566 = vld [vmem:[%s5464 + $0x194] sm:$0xf]
    %v5567 = vld [vmem:[%s5464 + $0x198] sm:$0xf]
    %v5568 = vld [vmem:[%s5464 + $0x19c] sm:$0xf]
    %v5569 = vld [vmem:[%s5464 + $0x1a0] sm:$0xf]
    %v5570 = vld [vmem:[%s5464 + $0x1a4] sm:$0xf]
    %v5571 = vld [vmem:[%s5464 + $0x1a8] sm:$0xf]
    %v5572 = vld [vmem:[%s5464 + $0x1ac] sm:$0xf]
    %v5573 = vld [vmem:[%s5464 + $0x1b0] sm:$0xf]
    %v5574 = vld [vmem:[%s5464 + $0x1b4] sm:$0xf]
    %v5575 = vld [vmem:[%s5464 + $0x1b8] sm:$0xf]
    %v5576 = vld [vmem:[%s5464 + $0x1bc] sm:$0xf]
    %v5577 = vld [vmem:[%s5464 + $0x1c0] sm:$0xf]
    %v5578 = vld [vmem:[%s5464 + $0x1c4] sm:$0xf]
    %v5579 = vld [vmem:[%s5464 + $0x1c8] sm:$0xf]
    %v5580 = vld [vmem:[%s5464 + $0x1cc] sm:$0xf]
    %v5581 = vld [vmem:[%s5464 + $0x1d0] sm:$0xf]
    %v5582 = vld [vmem:[%s5464 + $0x1d4] sm:$0xf]
    %v5583 = vld [vmem:[%s5464 + $0x1d8] sm:$0xf]
    %v5584 = vld [vmem:[%s5464 + $0x1dc] sm:$0xf]
    %v5585 = vld [vmem:[%s5464 + $0x1e0] sm:$0xf]
    %v5586 = vld [vmem:[%s5464 + $0x1e4] sm:$0xf]
    %v5587 = vld [vmem:[%s5464 + $0x1e8] sm:$0xf]
    %v5588 = vld [vmem:[%s5464 + $0x1ec] sm:$0xf]
    %v5589 = vld [vmem:[%s5464 + $0x1f0] sm:$0xf]
    %v5590 = vld [vmem:[%s5464 + $0x1f4] sm:$0xf]
    %v5591 = vld [vmem:[%s5464 + $0x1f8] sm:$0xf]
    %v5592 = vld [vmem:[%s5464 + $0x1fc] sm:$0xf]
    %v5721 = vunpack.c.l.b16 %v5465
    %v5722 = vunpack.c.l.b16 %v5466
    %v5723 = vunpack.c.l.b16 %v5467
    %v5724 = vunpack.c.l.b16 %v5468
    %v5725 = vunpack.c.l.b16 %v5469
    %v5726 = vunpack.c.l.b16 %v5470
    %v5727 = vunpack.c.l.b16 %v5471
    %v5728 = vunpack.c.l.b16 %v5472
    %v5729 = vunpack.c.l.b16 %v5473
    %v5730 = vunpack.c.l.b16 %v5474
    %v5731 = vunpack.c.l.b16 %v5475
    %v5732 = vunpack.c.l.b16 %v5476
    %v5733 = vunpack.c.l.b16 %v5477
    %v5734 = vunpack.c.l.b16 %v5478
    %v5735 = vunpack.c.l.b16 %v5479
    %v5736 = vunpack.c.l.b16 %v5480
    %v5737 = vunpack.c.l.b16 %v5481
    %v5738 = vunpack.c.l.b16 %v5482
    %v5739 = vunpack.c.l.b16 %v5483
    %v5740 = vunpack.c.l.b16 %v5484
    %v5741 = vunpack.c.l.b16 %v5485
    %v5742 = vunpack.c.l.b16 %v5486
    %v5743 = vunpack.c.l.b16 %v5487
    %v5744 = vunpack.c.l.b16 %v5488
    %v5745 = vunpack.c.l.b16 %v5489
    %v5746 = vunpack.c.l.b16 %v5490
    %v5747 = vunpack.c.l.b16 %v5491
    %v5748 = vunpack.c.l.b16 %v5492
    %v5749 = vunpack.c.l.b16 %v5493
    %v5750 = vunpack.c.l.b16 %v5494
    %v5751 = vunpack.c.l.b16 %v5495
    %v5752 = vunpack.c.l.b16 %v5496
    %v5753 = vunpack.c.l.b16 %v5497
    %v5754 = vunpack.c.l.b16 %v5498
    %v5755 = vunpack.c.l.b16 %v5499
    %v5756 = vunpack.c.l.b16 %v5500
    %v5757 = vunpack.c.l.b16 %v5501
    %v5758 = vunpack.c.l.b16 %v5502
    %v5759 = vunpack.c.l.b16 %v5503
    %v5760 = vunpack.c.l.b16 %v5504
    %v5761 = vunpack.c.l.b16 %v5505
    %v5762 = vunpack.c.l.b16 %v5506
    %v5763 = vunpack.c.l.b16 %v5507
    %v5764 = vunpack.c.l.b16 %v5508
    %v5765 = vunpack.c.l.b16 %v5509
    %v5766 = vunpack.c.l.b16 %v5510
    %v5767 = vunpack.c.l.b16 %v5511
    %v5768 = vunpack.c.l.b16 %v5512
    %v5769 = vunpack.c.l.b16 %v5513
    %v5770 = vunpack.c.l.b16 %v5514
    %v5771 = vunpack.c.l.b16 %v5515
    %v5772 = vunpack.c.l.b16 %v5516
    %v5773 = vunpack.c.l.b16 %v5517
    %v5774 = vunpack.c.l.b16 %v5518
    %v5775 = vunpack.c.l.b16 %v5519
    %v5776 = vunpack.c.l.b16 %v5520
    %v5777 = vunpack.c.l.b16 %v5521
    %v5778 = vunpack.c.l.b16 %v5522
    %v5779 = vunpack.c.l.b16 %v5523
    %v5780 = vunpack.c.l.b16 %v5524
    %v5781 = vunpack.c.l.b16 %v5525
    %v5782 = vunpack.c.l.b16 %v5526
    %v5783 = vunpack.c.l.b16 %v5527
    %v5784 = vunpack.c.l.b16 %v5528
    %v5785 = vunpack.c.l.b16 %v5529
    %v5786 = vunpack.c.l.b16 %v5530
    %v5787 = vunpack.c.l.b16 %v5531
    %v5788 = vunpack.c.l.b16 %v5532
    %v5789 = vunpack.c.l.b16 %v5533
    %v5790 = vunpack.c.l.b16 %v5534
    %v5791 = vunpack.c.l.b16 %v5535
    %v5792 = vunpack.c.l.b16 %v5536
    %v5793 = vunpack.c.l.b16 %v5537
    %v5794 = vunpack.c.l.b16 %v5538
    %v5795 = vunpack.c.l.b16 %v5539
    %v5796 = vunpack.c.l.b16 %v5540
    %v5797 = vunpack.c.l.b16 %v5541
    %v5798 = vunpack.c.l.b16 %v5542
    %v5799 = vunpack.c.l.b16 %v5543
    %v5800 = vunpack.c.l.b16 %v5544
    %v5801 = vunpack.c.l.b16 %v5545
    %v5802 = vunpack.c.l.b16 %v5546
    %v5803 = vunpack.c.l.b16 %v5547
    %v5804 = vunpack.c.l.b16 %v5548
    %v5805 = vunpack.c.l.b16 %v5549
    %v5806 = vunpack.c.l.b16 %v5550
    %v5807 = vunpack.c.l.b16 %v5551
    %v5808 = vunpack.c.l.b16 %v5552
    %v5809 = vunpack.c.l.b16 %v5553
    %v5810 = vunpack.c.l.b16 %v5554
    %v5811 = vunpack.c.l.b16 %v5555
    %v5812 = vunpack.c.l.b16 %v5556
    %v5813 = vunpack.c.l.b16 %v5557
    %v5814 = vunpack.c.l.b16 %v5558
    %v5815 = vunpack.c.l.b16 %v5559
    %v5816 = vunpack.c.l.b16 %v5560
    %v5817 = vunpack.c.l.b16 %v5561
    %v5818 = vunpack.c.l.b16 %v5562
    %v5819 = vunpack.c.l.b16 %v5563
    %v5820 = vunpack.c.l.b16 %v5564
    %v5821 = vunpack.c.l.b16 %v5565
    %v5822 = vunpack.c.l.b16 %v5566
    %v5823 = vunpack.c.l.b16 %v5567
    %v5824 = vunpack.c.l.b16 %v5568
    %v5825 = vunpack.c.l.b16 %v5569
    %v5826 = vunpack.c.l.b16 %v5570
    %v5827 = vunpack.c.l.b16 %v5571
    %v5828 = vunpack.c.l.b16 %v5572
    %v5829 = vunpack.c.l.b16 %v5573
    %v5830 = vunpack.c.l.b16 %v5574
    %v5831 = vunpack.c.l.b16 %v5575
    %v5832 = vunpack.c.l.b16 %v5576
    %v5833 = vunpack.c.l.b16 %v5577
    %v5834 = vunpack.c.l.b16 %v5578
    %v5835 = vunpack.c.l.b16 %v5579
    %v5836 = vunpack.c.l.b16 %v5580
    %v5837 = vunpack.c.l.b16 %v5581
    %v5838 = vunpack.c.l.b16 %v5582
    %v5839 = vunpack.c.l.b16 %v5583
    %v5840 = vunpack.c.l.b16 %v5584
    %v5841 = vunpack.c.l.b16 %v5585
    %v5842 = vunpack.c.l.b16 %v5586
    %v5843 = vunpack.c.l.b16 %v5587
    %v5844 = vunpack.c.l.b16 %v5588
    %v5845 = vunpack.c.l.b16 %v5589
    %v5846 = vunpack.c.l.b16 %v5590
    %v5847 = vunpack.c.l.b16 %v5591
    %v5848 = vunpack.c.l.b16 %v5592
    %v5849 = vpack.c.b16 %v5722, %v5721
    %v5850 = vpack.c.b16 %v5724, %v5723
    %v5851 = vpack.c.b16 %v5726, %v5725
    %v5852 = vpack.c.b16 %v5728, %v5727
    %v5853 = vpack.c.b16 %v5730, %v5729
    %v5854 = vpack.c.b16 %v5732, %v5731
    %v5855 = vpack.c.b16 %v5734, %v5733
    %v5856 = vpack.c.b16 %v5736, %v5735
    %v5857 = vpack.c.b16 %v5738, %v5737
    %v5858 = vpack.c.b16 %v5740, %v5739
    %v5859 = vpack.c.b16 %v5742, %v5741
    %v5860 = vpack.c.b16 %v5744, %v5743
    %v5861 = vpack.c.b16 %v5746, %v5745
    %v5862 = vpack.c.b16 %v5748, %v5747
    %v5863 = vpack.c.b16 %v5750, %v5749
    %v5864 = vpack.c.b16 %v5752, %v5751
    %v5865 = vpack.c.b16 %v5754, %v5753
    %v5866 = vpack.c.b16 %v5756, %v5755
    %v5867 = vpack.c.b16 %v5758, %v5757
    %v5868 = vpack.c.b16 %v5760, %v5759
    %v5869 = vpack.c.b16 %v5762, %v5761
    %v5870 = vpack.c.b16 %v5764, %v5763
    %v5871 = vpack.c.b16 %v5766, %v5765
    %v5872 = vpack.c.b16 %v5768, %v5767
    %v5873 = vpack.c.b16 %v5770, %v5769
    %v5874 = vpack.c.b16 %v5772, %v5771
    %v5875 = vpack.c.b16 %v5774, %v5773
    %v5876 = vpack.c.b16 %v5776, %v5775
    %v5877 = vpack.c.b16 %v5778, %v5777
    %v5878 = vpack.c.b16 %v5780, %v5779
    %v5879 = vpack.c.b16 %v5782, %v5781
    %v5880 = vpack.c.b16 %v5784, %v5783
    %v5881 = vpack.c.b16 %v5786, %v5785
    %v5882 = vpack.c.b16 %v5788, %v5787
    %v5883 = vpack.c.b16 %v5790, %v5789
    %v5884 = vpack.c.b16 %v5792, %v5791
    %v5885 = vpack.c.b16 %v5794, %v5793
    %v5886 = vpack.c.b16 %v5796, %v5795
    %v5887 = vpack.c.b16 %v5798, %v5797
    %v5888 = vpack.c.b16 %v5800, %v5799
    %v5889 = vpack.c.b16 %v5802, %v5801
    %v5890 = vpack.c.b16 %v5804, %v5803
    %v5891 = vpack.c.b16 %v5806, %v5805
    %v5892 = vpack.c.b16 %v5808, %v5807
    %v5893 = vpack.c.b16 %v5810, %v5809
    %v5894 = vpack.c.b16 %v5812, %v5811
    %v5895 = vpack.c.b16 %v5814, %v5813
    %v5896 = vpack.c.b16 %v5816, %v5815
    %v5897 = vpack.c.b16 %v5818, %v5817
    %v5898 = vpack.c.b16 %v5820, %v5819
    %v5899 = vpack.c.b16 %v5822, %v5821
    %v5900 = vpack.c.b16 %v5824, %v5823
    %v5901 = vpack.c.b16 %v5826, %v5825
    %v5902 = vpack.c.b16 %v5828, %v5827
    %v5903 = vpack.c.b16 %v5830, %v5829
    %v5904 = vpack.c.b16 %v5832, %v5831
    %v5905 = vpack.c.b16 %v5834, %v5833
    %v5906 = vpack.c.b16 %v5836, %v5835
    %v5907 = vpack.c.b16 %v5838, %v5837
    %v5908 = vpack.c.b16 %v5840, %v5839
    %v5909 = vpack.c.b16 %v5842, %v5841
    %v5910 = vpack.c.b16 %v5844, %v5843
    %v5911 = vpack.c.b16 %v5846, %v5845
    %v5912 = vpack.c.b16 %v5848, %v5847
    %5977 = vmatprep.subr.bf16.mxu0 0
    %5978 = vmatpush1.bf16.msra.mxu0 %v5849
    %5979 = vmatprep.subr.bf16.mxu0 0
    %5980 = vmatpush1.bf16.msra.mxu0 %v5850
    %5981 = vmatprep.subr.bf16.mxu0 0
    %5982 = vmatpush1.bf16.msra.mxu0 %v5851
    %5983 = vmatprep.subr.bf16.mxu0 0
    %5984 = vmatpush1.bf16.msra.mxu0 %v5852
    %5985 = vmatprep.subr.bf16.mxu0 0
    %5986 = vmatpush1.bf16.msra.mxu0 %v5853
    %5987 = vmatprep.subr.bf16.mxu0 0
    %5988 = vmatpush1.bf16.msra.mxu0 %v5854
    %5989 = vmatprep.subr.bf16.mxu0 0
    %5990 = vmatpush1.bf16.msra.mxu0 %v5855
    %5991 = vmatprep.subr.bf16.mxu0 0
    %5992 = vmatpush1.bf16.msra.mxu0 %v5856
    %5993 = vmatprep.subr.bf16.mxu0 0
    %5994 = vmatpush1.bf16.msra.mxu0 %v5857
    %5995 = vmatprep.subr.bf16.mxu0 0
    %5996 = vmatpush1.bf16.msra.mxu0 %v5858
    %5997 = vmatprep.subr.bf16.mxu0 0
    %5998 = vmatpush1.bf16.msra.mxu0 %v5859
    %5999 = vmatprep.subr.bf16.mxu0 0
    %6000 = vmatpush1.bf16.msra.mxu0 %v5860
    %6001 = vmatprep.subr.bf16.mxu0 0
    %6002 = vmatpush1.bf16.msra.mxu0 %v5861
    %6003 = vmatprep.subr.bf16.mxu0 0
    %6004 = vmatpush1.bf16.msra.mxu0 %v5862
    %6005 = vmatprep.subr.bf16.mxu0 0
    %6006 = vmatpush1.bf16.msra.mxu0 %v5863
    %6007 = vmatprep.subr.bf16.mxu0 0
    %6008 = vmatpush1.bf16.msra.mxu0 %v5864
    %6009 = vmatprep.mubr.bf16.mxu0 %v5449
    %6010 = vmatmul.mubr.bf16.gmra.mrb[0].mxu0 %v5448
    %v6011 = vpop.f32.mrb[0].mxu0
    %v6012 = vadd.f32 0.0, %v6011
    %v6013 = vpop.f32.mrb[0].mxu0
    %v6014 = vpop.f32.mrb[0].mxu0
    %v6015 = vadd.f32 0.0, %v6014
    %v6016 = vpop.f32.mrb[0].mxu0
    %6017 = vmatprep.mubr.bf16.mxu0 %v5457
    %6018 = vmatmul.mubr.bf16.gmra.mrb[0].mxu0 %v5456
    %v6019 = vpop.f32.mrb[0].mxu0
    %v6020 = vadd.f32 0.0, %v6019
    %v6021 = vpop.f32.mrb[0].mxu0
    %v6022 = vpop.f32.mrb[0].mxu0
    %v6023 = vadd.f32 0.0, %v6022
    %v6024 = vpop.f32.mrb[0].mxu0
    %6025 = vdwg.mxu0
    %6026 = vmatprep.subr.bf16.mxu0 0
    %6027 = vmatpush1.bf16.msra.mxu0 %v5865
    %6028 = vmatprep.subr.bf16.mxu0 0
    %6029 = vmatpush1.bf16.msra.mxu0 %v5866
    %6030 = vmatprep.subr.bf16.mxu0 0
    %6031 = vmatpush1.bf16.msra.mxu0 %v5867
    %6032 = vmatprep.subr.bf16.mxu0 0
    %6033 = vmatpush1.bf16.msra.mxu0 %v5868
    %6034 = vmatprep.subr.bf16.mxu0 0
    %6035 = vmatpush1.bf16.msra.mxu0 %v5869
    %6036 = vmatprep.subr.bf16.mxu0 0
    %6037 = vmatpush1.bf16.msra.mxu0 %v5870
    %6038 = vmatprep.subr.bf16.mxu0 0
    %6039 = vmatpush1.bf16.msra.mxu0 %v5871
    %6040 = vmatprep.subr.bf16.mxu0 0
    %6041 = vmatpush1.bf16.msra.mxu0 %v5872
    %6042 = vmatprep.subr.bf16.mxu0 0
    %6043 = vmatpush1.bf16.msra.mxu0 %v5873
    %6044 = vmatprep.subr.bf16.mxu0 0
    %6045 = vmatpush1.bf16.msra.mxu0 %v5874
    %6046 = vmatprep.subr.bf16.mxu0 0
    %6047 = vmatpush1.bf16.msra.mxu0 %v5875
    %6048 = vmatprep.subr.bf16.mxu0 0
    %6049 = vmatpush1.bf16.msra.mxu0 %v5876
    %6050 = vmatprep.subr.bf16.mxu0 0
    %6051 = vmatpush1.bf16.msra.mxu0 %v5877
    %6052 = vmatprep.subr.bf16.mxu0 0
    %6053 = vmatpush1.bf16.msra.mxu0 %v5878
    %6054 = vmatprep.subr.bf16.mxu0 0
    %6055 = vmatpush1.bf16.msra.mxu0 %v5879
    %6056 = vmatprep.subr.bf16.mxu0 0
    %6057 = vmatpush1.bf16.msra.mxu0 %v5880
    %6058 = vmatprep.mubr.bf16.mxu0 %v5451
    %6059 = vmatmul.mubr.bf16.gmra.mrb[0].mxu0 %v5450
    %v6060 = vpop.f32.mrb[0].mxu0
    %v6061 = vadd.f32 %v6012, %v6060
    %v6062 = vpop.f32.mrb[0].mxu0
    %v6063 = vpop.f32.mrb[0].mxu0
    %v6064 = vadd.f32 %v6015, %v6063
    %v6065 = vpop.f32.mrb[0].mxu0
    %6066 = vmatprep.mubr.bf16.mxu0 %v5459
    %6067 = vmatmul.mubr.bf16.gmra.mrb[0].mxu0 %v5458
    %v6068 = vpop.f32.mrb[0].mxu0
    %v6069 = vadd.f32 %v6020, %v6068
    %v6070 = vpop.f32.mrb[0].mxu0
    %v6071 = vpop.f32.mrb[0].mxu0
    %v6072 = vadd.f32 %v6023, %v6071
    %v6073 = vpop.f32.mrb[0].mxu0
    %6074 = vdwg.mxu0
    %6075 = vmatprep.subr.bf16.mxu0 0
    %6076 = vmatpush1.bf16.msra.mxu0 %v5881
    %6077 = vmatprep.subr.bf16.mxu0 0
    %6078 = vmatpush1.bf16.msra.mxu0 %v5882
    %6079 = vmatprep.subr.bf16.mxu0 0
    %6080 = vmatpush1.bf16.msra.mxu0 %v5883
    %6081 = vmatprep.subr.bf16.mxu0 0
    %6082 = vmatpush1.bf16.msra.mxu0 %v5884
    %6083 = vmatprep.subr.bf16.mxu0 0
    %6084 = vmatpush1.bf16.msra.mxu0 %v5885
    %6085 = vmatprep.subr.bf16.mxu0 0
    %6086 = vmatpush1.bf16.msra.mxu0 %v5886
    %6087 = vmatprep.subr.bf16.mxu0 0
    %6088 = vmatpush1.bf16.msra.mxu0 %v5887
    %6089 = vmatprep.subr.bf16.mxu0 0
    %6090 = vmatpush1.bf16.msra.mxu0 %v5888
    %6091 = vmatprep.subr.bf16.mxu0 0
    %6092 = vmatpush1.bf16.msra.mxu0 %v5889
    %6093 = vmatprep.subr.bf16.mxu0 0
    %6094 = vmatpush1.bf16.msra.mxu0 %v5890
    %6095 = vmatprep.subr.bf16.mxu0 0
    %6096 = vmatpush1.bf16.msra.mxu0 %v5891
    %6097 = vmatprep.subr.bf16.mxu0 0
    %6098 = vmatpush1.bf16.msra.mxu0 %v5892
    %6099 = vmatprep.subr.bf16.mxu0 0
    %6100 = vmatpush1.bf16.msra.mxu0 %v5893
    %6101 = vmatprep.subr.bf16.mxu0 0
    %6102 = vmatpush1.bf16.msra.mxu0 %v5894
    %6103 = vmatprep.subr.bf16.mxu0 0
    %6104 = vmatpush1.bf16.msra.mxu0 %v5895
    %6105 = vmatprep.subr.bf16.mxu0 0
    %6106 = vmatpush1.bf16.msra.mxu0 %v5896
    %6107 = vmatprep.mubr.bf16.mxu0 %v5453
    %6108 = vmatmul.mubr.bf16.gmra.mrb[0].mxu0 %v5452
    %v6109 = vpop.f32.mrb[0].mxu0
    %v6110 = vadd.f32 %v6061, %v6109
    %v6111 = vpop.f32.mrb[0].mxu0
    %v6112 = vpop.f32.mrb[0].mxu0
    %v6113 = vadd.f32 %v6064, %v6112
    %v6114 = vpop.f32.mrb[0].mxu0
    %6115 = vmatprep.mubr.bf16.mxu0 %v5461
    %6116 = vmatmul.mubr.bf16.gmra.mrb[0].mxu0 %v5460
    %v6117 = vpop.f32.mrb[0].mxu0
    %v6118 = vadd.f32 %v6069, %v6117
    %v6119 = vpop.f32.mrb[0].mxu0
    %v6120 = vpop.f32.mrb[0].mxu0
    %v6121 = vadd.f32 %v6072, %v6120
    %v6122 = vpop.f32.mrb[0].mxu0
    %6123 = vdwg.mxu0
    %6124 = vmatprep.subr.bf16.mxu0 0
    %6125 = vmatpush1.bf16.msra.mxu0 %v5897
    %6126 = vmatprep.subr.bf16.mxu0 0
    %6127 = vmatpush1.bf16.msra.mxu0 %v5898
    %6128 = vmatprep.subr.bf16.mxu0 0
    %6129 = vmatpush1.bf16.msra.mxu0 %v5899
    %6130 = vmatprep.subr.bf16.mxu0 0
    %6131 = vmatpush1.bf16.msra.mxu0 %v5900
    %6132 = vmatprep.subr.bf16.mxu0 0
    %6133 = vmatpush1.bf16.msra.mxu0 %v5901
    %6134 = vmatprep.subr.bf16.mxu0 0
    %6135 = vmatpush1.bf16.msra.mxu0 %v5902
    %6136 = vmatprep.subr.bf16.mxu0 0
    %6137 = vmatpush1.bf16.msra.mxu0 %v5903
    %6138 = vmatprep.subr.bf16.mxu0 0
    %6139 = vmatpush1.bf16.msra.mxu0 %v5904
    %6140 = vmatprep.subr.bf16.mxu0 0
    %6141 = vmatpush1.bf16.msra.mxu0 %v5905
    %6142 = vmatprep.subr.bf16.mxu0 0
    %6143 = vmatpush1.bf16.msra.mxu0 %v5906
    %6144 = vmatprep.subr.bf16.mxu0 0
    %6145 = vmatpush1.bf16.msra.mxu0 %v5907
    %6146 = vmatprep.subr.bf16.mxu0 0
    %6147 = vmatpush1.bf16.msra.mxu0 %v5908
    %6148 = vmatprep.subr.bf16.mxu0 0
    %6149 = vmatpush1.bf16.msra.mxu0 %v5909
    %6150 = vmatprep.subr.bf16.mxu0 0
    %6151 = vmatpush1.bf16.msra.mxu0 %v5910
    %6152 = vmatprep.subr.bf16.mxu0 0
    %6153 = vmatpush1.bf16.msra.mxu0 %v5911
    %6154 = vmatprep.subr.bf16.mxu0 0
    %6155 = vmatpush1.bf16.msra.mxu0 %v5912
    %6156 = vmatprep.mubr.bf16.mxu0 %v5455
    %6157 = vmatmul.mubr.bf16.gmra.mrb[0].mxu0 %v5454
    %v6158 = vpop.f32.mrb[0].mxu0
    %v6159 = vadd.f32 %v6110, %v6158
    %v6160 = vpop.f32.mrb[0].mxu0
    %v6161 = vpop.f32.mrb[0].mxu0
    %v6162 = vadd.f32 %v6113, %v6161
    %v6163 = vpop.f32.mrb[0].mxu0
    %6164 = vmatprep.mubr.bf16.mxu0 %v5463
    %6165 = vmatmul.mubr.bf16.gmra.mrb[0].mxu0 %v5462
    %v6166 = vpop.f32.mrb[0].mxu0
    %v6167 = vadd.f32 %v6118, %v6166
    %v6168 = vpop.f32.mrb[0].mxu0
    %v6169 = vpop.f32.mrb[0].mxu0
    %v6170 = vadd.f32 %v6121, %v6169
    %v6171 = vpop.f32.mrb[0].mxu0
    %6172 = vdwg.mxu0
    %v6173 = vadd.f32 %v4982, %v6159
    %v6174 = vadd.f32 %v4983, %v6162
    %v6175 = vadd.f32 %v4984, %v6167
    %v6176 = vadd.f32 %v4985, %v6170
    %v6177 = vld [vmem:[%s67 + $0x1] sm:$0x1]
    %v6178 = vlaneseq
    %v6179 = vshrl.u32 %v6178, 7
    %v6180 = vsub.s32 0, %v6179
    %v6181 = vrot.slane %v6177, %v6180
    %v6182 = vadd.f32 %v6173, %v6181
    %v6183 = vadd.f32 %v6174, %v6181
    %v6184 = vadd.f32 %v6175, %v6181
    %v6185 = vadd.f32 %v6176, %v6181
    %v6186 = vld [vmem:[%s69] sm:$0x1]
    %v6187 = vld [vmem:[%s71] sm:$0x1]
    %v6188 = vsel %vm374, %v6182, 0.0
    %6189 = vadd.xlane.f32.xlu0 %v6188
    %v6190 = vpop.xlane.xlu0 %6189
    %v6191 = vsel %vm374, %v6183, 0.0
    %6192 = vadd.xlane.f32.xlu0 %v6191
    %v6193 = vpop.xlane.xlu0 %6192
    %v6194 = vsel %vm374, %v6184, 0.0
    %6195 = vadd.xlane.f32.xlu0 %v6194
    %v6196 = vpop.xlane.xlu0 %6195
    %v6197 = vsel %vm1004, %v6185, 0.0
    %6198 = vadd.xlane.f32.xlu0 %v6197
    %v6199 = vpop.xlane.xlu0 %6198
    %v6200 = vmul.f32 %v6190, %v381
    %v6201 = vmul.f32 %v6193, %v381
    %v6202 = vmul.f32 %v6196, %v381
    %v6203 = vmul.f32 %v6199, %v381
    %v6204 = vsub.f32 %v6182, %v6200
    %v6205 = vsub.f32 %v6183, %v6201
    %v6206 = vsub.f32 %v6184, %v6202
    %v6207 = vsub.f32 %v6185, %v6203
    %v6208 = vmul.f32 %v6204, %v6204
    %v6209 = vmul.f32 %v6205, %v6205
    %v6210 = vmul.f32 %v6206, %v6206
    %v6211 = vmul.f32 %v6207, %v6207
    %v6212 = vsel %vm374, %v6208, 0.0
    %6213 = vadd.xlane.f32.xlu0 %v6212
    %v6214 = vpop.xlane.xlu0 %6213
    %v6215 = vsel %vm374, %v6209, 0.0
    %6216 = vadd.xlane.f32.xlu0 %v6215
    %v6217 = vpop.xlane.xlu0 %6216
    %v6218 = vsel %vm374, %v6210, 0.0
    %6219 = vadd.xlane.f32.xlu0 %v6218
    %v6220 = vpop.xlane.xlu0 %6219
    %v6221 = vsel %vm1004, %v6211, 0.0
    %6222 = vadd.xlane.f32.xlu0 %v6221
    %v6223 = vpop.xlane.xlu0 %6222
    %v6224 = vmul.f32 %v6214, 0.032258064
    %v6225 = vmul.f32 %v6217, 0.032258064
    %v6226 = vmul.f32 %v6220, 0.032258064
    %v6227 = vmul.f32 %v6223, 0.032258064
    %v6229 = vlaneseq
    %v6230 = vshrl.u32 %v6229, 7
    %v6231 = vsub.s32 0, %v6230
    %v6232 = vrot.slane %v6186, %v6231
    %v6234 = vmul.f32 %v6232, %v6204
    %v6235 = vmul.f32 %v6232, %v6205
    %v6236 = vmul.f32 %v6232, %v6206
    %v6237 = vmul.f32 %v6232, %v6207
    %v6238 = vadd.f32 %v6224, 1e-06
    %v6239 = vadd.f32 %v6225, 1e-06
    %v6240 = vadd.f32 %v6226, 1e-06
    %v6241 = vadd.f32 %v6227, 1e-06
    %v6242 = vrsqrt.pop %v6238
    %v6243 = vrsqrt.pop %v6239
    %v6244 = vrsqrt.pop %v6240
    %v6245 = vrsqrt.pop %v6241
    %v6246 = vmul.f32 %v6234, %v6242
    %v6247 = vmul.f32 %v6235, %v6243
    %v6248 = vmul.f32 %v6236, %v6244
    %v6249 = vmul.f32 %v6237, %v6245
    %v6251 = vlaneseq
    %v6252 = vshrl.u32 %v6251, 7
    %v6253 = vsub.s32 0, %v6252
    %v6254 = vrot.slane %v6187, %v6253
    %v6256 = vadd.f32 %v6246, %v6254
    %v6257 = vadd.f32 %v6247, %v6254
    %v6258 = vadd.f32 %v6248, %v6254
    %v6259 = vadd.f32 %v6249, %v6254
    %v6260 = vld [vmem:[%s25] sm:$0x3]
    %v6262 = vsel %vm1185, %v6260, 0
    %v6265 = vsel %vm218, %v6259, 0
    %6267 = vmatprep.subr.mxu0 0.0
    %6268 = vmatpush1.msra.mxu0 %v6256
    %6269 = vmatprep.subr.mxu0 0.0
    %6270 = vmatpush1.msra.mxu0 %v6257
    %6271 = vmatprep.subr.mxu0 0.0
    %6272 = vmatpush1.msra.mxu0 %v6258
    %6273 = vmatprep.subr.mxu0 0.0
    %6274 = vmatpush1.msra.mxu0 %v6265
    %6275 = vmatprep.subr.mxu0 0.0
    %6276 = vmatpush1.msra.mxu0 0.0
    %6277 = vmatprep.subr.mxu0 0.0
    %6278 = vmatpush1.msra.mxu0 0.0
    %6279 = vmatprep.subr.mxu0 0.0
    %6280 = vmatpush1.msra.mxu0 0.0
    %6281 = vmatprep.subr.mxu0 0.0
    %6282 = vmatpush1.msra.mxu0 0.0
    %6283 = vmatprep.subr.mxu0 0.0
    %6284 = vmatpush1.msra.mxu0 0.0
    %6285 = vmatprep.subr.mxu0 0.0
    %6286 = vmatpush1.msra.mxu0 0.0
    %6287 = vmatprep.subr.mxu0 0.0
    %6288 = vmatpush1.msra.mxu0 0.0
    %6289 = vmatprep.subr.mxu0 0.0
    %6290 = vmatpush1.msra.mxu0 0.0
    %6291 = vmatprep.subr.mxu0 0.0
    %6292 = vmatpush1.msra.mxu0 0.0
    %6293 = vmatprep.subr.mxu0 0.0
    %6294 = vmatpush1.msra.mxu0 0.0
    %6295 = vmatprep.subr.mxu0 0.0
    %6296 = vmatpush1.msra.mxu0 0.0
    %6297 = vmatprep.subr.mxu0 0.0
    %6298 = vmatpush1.msra.mxu0 0.0
    %6299 = vmatprep.subr.mxu0 0.0
    %6300 = vmatpush1.msra.mxu0 0.0
    %6301 = vmatprep.subr.mxu0 0.0
    %6302 = vmatpush1.msra.mxu0 0.0
    %6303 = vmatprep.subr.mxu0 0.0
    %6304 = vmatpush1.msra.mxu0 0.0
    %6305 = vmatprep.subr.mxu0 0.0
    %6306 = vmatpush1.msra.mxu0 0.0
    %6307 = vmatprep.subr.mxu0 0.0
    %6308 = vmatpush1.msra.mxu0 0.0
    %6309 = vmatprep.subr.mxu0 0.0
    %6310 = vmatpush1.msra.mxu0 0.0
    %6311 = vmatprep.subr.mxu0 0.0
    %6312 = vmatpush1.msra.mxu0 0.0
    %6313 = vmatprep.subr.mxu0 0.0
    %6314 = vmatpush1.msra.mxu0 0.0
    %6315 = vmatprep.subr.mxu0 0.0
    %6316 = vmatpush1.msra.mxu0 0.0
    %6317 = vmatprep.subr.mxu0 0.0
    %6318 = vmatpush1.msra.mxu0 0.0
    %6319 = vmatprep.subr.mxu0 0.0
    %6320 = vmatpush1.msra.mxu0 0.0
    %6321 = vmatprep.subr.mxu0 0.0
    %6322 = vmatpush1.msra.mxu0 0.0
    %6323 = vmatprep.subr.mxu0 0.0
    %6324 = vmatpush1.msra.mxu0 0.0
    %6325 = vmatprep.subr.mxu0 0.0
    %6326 = vmatpush1.msra.mxu0 0.0
    %6327 = vmatprep.subr.mxu0 0.0
    %6328 = vmatpush1.msra.mxu0 0.0
    %6329 = vmatprep.subr.mxu0 0.0
    %6330 = vmatpush1.msra.mxu0 0.0
    %6331 = vmatprep.mubr.f32.mxu0 0.0
    %6332 = vmatmul.mubr.f32.gmra.mrb[0].mxu0 %v6262
    %v6333 = vpop.f32.mrb[0].mxu0
    %v6334 = vadd.f32 0.0, %v6333
    %v6335 = vpop.f32.mrb[0].mxu0
    %6336 = vdwg.mxu0
    %v6337 = vmax.f32 %v6334, 0.0
    %v6338 = vld [vmem:[%s73] sm:$0xff]
    %v6339 = vld [vmem:[%s73 + $0x8] sm:$0xff]
    %v6340 = vld [vmem:[%s73 + $0x10] sm:$0xff]
    %v6341 = vld [vmem:[%s73 + $0x18] sm:$0xff]
    %v6342 = vld [vmem:[%s75] sm:$0x1]
    %v6344 = vlaneseq
    %v6345 = vshrl.u32 %v6344, 7
    %v6346 = vsub.s32 0, %v6345
    %v6347 = vrot.slane %v6342, %v6346
    %v6350 = vsel %vm374, %v6337, 0
    %6352 = vmatprep.subr.mxu0 0.0
    %6353 = vmatpush1.msra.mxu0 %v6338
    %6354 = vmatprep.subr.mxu0 0.0
    %6355 = vmatpush1.msra.mxu0 %v6339
    %6356 = vmatprep.subr.mxu0 0.0
    %6357 = vmatpush1.msra.mxu0 %v6340
    %6358 = vmatprep.subr.mxu0 0.0
    %6359 = vmatpush1.msra.mxu0 %v6341
    %6360 = vmatprep.subr.mxu0 0.0
    %6361 = vmatpush1.msra.mxu0 0.0
    %6362 = vmatprep.subr.mxu0 0.0
    %6363 = vmatpush1.msra.mxu0 0.0
    %6364 = vmatprep.subr.mxu0 0.0
    %6365 = vmatpush1.msra.mxu0 0.0
    %6366 = vmatprep.subr.mxu0 0.0
    %6367 = vmatpush1.msra.mxu0 0.0
    %6368 = vmatprep.subr.mxu0 0.0
    %6369 = vmatpush1.msra.mxu0 0.0
    %6370 = vmatprep.subr.mxu0 0.0
    %6371 = vmatpush1.msra.mxu0 0.0
    %6372 = vmatprep.subr.mxu0 0.0
    %6373 = vmatpush1.msra.mxu0 0.0
    %6374 = vmatprep.subr.mxu0 0.0
    %6375 = vmatpush1.msra.mxu0 0.0
    %6376 = vmatprep.subr.mxu0 0.0
    %6377 = vmatpush1.msra.mxu0 0.0
    %6378 = vmatprep.subr.mxu0 0.0
    %6379 = vmatpush1.msra.mxu0 0.0
    %6380 = vmatprep.subr.mxu0 0.0
    %6381 = vmatpush1.msra.mxu0 0.0
    %6382 = vmatprep.subr.mxu0 0.0
    %6383 = vmatpush1.msra.mxu0 0.0
    %6384 = vmatprep.subr.mxu0 0.0
    %6385 = vmatpush1.msra.mxu0 0.0
    %6386 = vmatprep.subr.mxu0 0.0
    %6387 = vmatpush1.msra.mxu0 0.0
    %6388 = vmatprep.subr.mxu0 0.0
    %6389 = vmatpush1.msra.mxu0 0.0
    %6390 = vmatprep.subr.mxu0 0.0
    %6391 = vmatpush1.msra.mxu0 0.0
    %6392 = vmatprep.subr.mxu0 0.0
    %6393 = vmatpush1.msra.mxu0 0.0
    %6394 = vmatprep.subr.mxu0 0.0
    %6395 = vmatpush1.msra.mxu0 0.0
    %6396 = vmatprep.subr.mxu0 0.0
    %6397 = vmatpush1.msra.mxu0 0.0
    %6398 = vmatprep.subr.mxu0 0.0
    %6399 = vmatpush1.msra.mxu0 0.0
    %6400 = vmatprep.subr.mxu0 0.0
    %6401 = vmatpush1.msra.mxu0 0.0
    %6402 = vmatprep.subr.mxu0 0.0
    %6403 = vmatpush1.msra.mxu0 0.0
    %6404 = vmatprep.subr.mxu0 0.0
    %6405 = vmatpush1.msra.mxu0 0.0
    %6406 = vmatprep.subr.mxu0 0.0
    %6407 = vmatpush1.msra.mxu0 0.0
    %6408 = vmatprep.subr.mxu0 0.0
    %6409 = vmatpush1.msra.mxu0 0.0
    %6410 = vmatprep.subr.mxu0 0.0
    %6411 = vmatpush1.msra.mxu0 0.0
    %6412 = vmatprep.subr.mxu0 0.0
    %6413 = vmatpush1.msra.mxu0 0.0
    %6414 = vmatprep.subr.mxu0 0.0
    %6415 = vmatpush1.msra.mxu0 0.0
    %6416 = vmatprep.mubr.f32.mxu0 0.0
    %6417 = vmatmul.mubr.f32.gmra.mrb[0].mxu0 %v6350
    %v6418 = vpop.f32.mrb[0].mxu0
    %v6419 = vadd.f32 %v6347, %v6418
    %v6420 = vpop.f32.mrb[0].mxu0
    %6421 = vdwg.mxu0
    %6422 = vst.msk [vmem:[#allocation2] sm:$0x3] %vm533, %v6419
    // Predicated region
    $region154: #{tpu_custom_call.1} parent=1 // pred_check
      _
    $region155: #{tpu_custom_call.1} parent=1 // pred_check_branch
      %6424 = sbr.rel (0) target = $region157
    $region156: #{tpu_custom_call.1} parent=1 // pred_region
      %s6426 = ssub.s32 32, 32
      %6427 = vsyncadd [#allocation3], %s6426
      %s6429 = sshll.u32 [#allocation2], 4
      %s6430 = int_to_ptr.vmem [resolvable:$true] %s6429
      %6432 = dma.vmem_to_hbm [thread:$0]  %s6430, 32, %s77, [#allocation3]
    $region157: #{tpu_custom_call.1} parent=1 // pred_fallthru
      _
    // Predicated region
    $region158: #{tpu_custom_call.1} parent=1 // pred_check
      _
    $region159: #{tpu_custom_call.1} parent=1 // pred_check_branch
      %6434 = sbr.rel (0) target = $region161
    $region160: #{tpu_custom_call.1} parent=1 // pred_region
      %6435 = dma.done [#allocation3], 32
    $region161: #{tpu_custom_call.1} parent=1 // pred_fallthru
      _
    %6436 = vsyncpa [#allocation3], 1

</llo_original>
